<compile_context>
chip_gen: v7x
topology: tpu7x:2x2x1
jax: 0.10.0
libtpu: 0.0.40
codegen_flags: <defaults>
</compile_context>

<pallas_src>
import functools
import math

import jax
import jax.numpy as jnp
from jax.experimental import pallas as pl
from jax.experimental.pallas import tpu as pltpu

EPS = 1e-5          # nn.LayerNorm default eps
NEG_SLOPE = 0.01    # LeakyReLU negative_slope
KS = (3, 5, 7, 9, 11)
KMAX = 11
PMAX = KMAX // 2
# Static (branch, shift) schedule for the per-tap accumulation (35 taps total).
TAP_SCHED = tuple((i, j - k // 2) for i, k in enumerate(KS) for j in range(k))
N_TAPS = len(TAP_SCHED)
VMEM_LIMIT = 64 * 1024 * 1024


# ---------------------------------------------------------------------------
# In-kernel helpers
# ---------------------------------------------------------------------------
def _leaky(x):
    return jnp.where(x > 0, x, NEG_SLOPE * x)


def _layernorm(y, g, b):
    mu = jnp.mean(y, axis=-1, keepdims=True)
    var = jnp.mean((y - mu) ** 2, axis=-1, keepdims=True)
    return (y - mu) * jax.lax.rsqrt(var + EPS) * g + b


# ---------------------------------------------------------------------------
# Kernel 1: fused CharCNN (5 conv branches w/ pre-composed sep convs + c3_prime
#           + residual + LayerNorm). Per-tap bf16 matmuls, f32 accumulation.
# ---------------------------------------------------------------------------
def charcnn_kernel(x_ref, wtap_ref, bbr_ref, wp_ref, bp_ref, g_ref, beta_ref,
                   o_ref, *, tap_sched):
    x = x_ref[0]                                       # (L, E) f32
    L, E = x.shape
    row = jax.lax.broadcasted_iota(jnp.int32, (L, 1), 0)

    def shifted(v, d):
        # y[t, :] = v[t + d, :] for 0 <= t + d < L, else 0 (conv zero padding).
        if d == 0:
            return v
        vs = pltpu.roll(v, shift=(-d) % L, axis=0)     # XLU sublane rotate (cheap)
        valid = (row + d >= 0) & (row + d < L)
        return jnp.where(valid, vs, jnp.zeros_like(vs))

    # 11 shifted+masked copies of the input, cast once to bf16, shared by all branches.
    xsh = {d: shifted(x, d).astype(jnp.bfloat16) for d in range(-PMAX, PMAX + 1)}

    # Branch convolutions: the 1x1 sep conv is pre-composed into each tap weight at init,
    # so branch_i = LeakyReLU( b_eff_i + sum_taps shifted(x, d) @ W_eff[i, d] ).
    branch = [jnp.zeros((L, E), jnp.float32) + bbr_ref[i] for i in range(len(KS))]
    for t, (i, d) in enumerate(tap_sched):
        branch[i] = branch[i] + jnp.dot(xsh[d], wtap_ref[t],
                                        preferred_element_type=jnp.float32)
    cat = [_leaky(b).astype(jnp.bfloat16) for b in branch]   # the 5 "concat" pieces, bf16

    # c3_prime over the concatenated branches without materializing the (L, 5E) concat:
    #   acc = bp + sum_j shifted( sum_i cat_i @ Wp[j, i], j - 1 )
    acc = jnp.zeros((L, E), jnp.float32) + bp_ref[...]
    for j in range(3):
        t_j = jnp.zeros((L, E), jnp.float32)
        for i in range(len(KS)):
            t_j = t_j + jnp.dot(cat[i], wp_ref[j * len(KS) + i],
                                preferred_element_type=jnp.float32)
        acc = acc + shifted(t_j, j - 1)

    y = _leaky(acc) + x                                 # residual with CNN input
    o_ref[0] = _layernorm(y, g_ref[...], beta_ref[...])


# ---------------------------------------------------------------------------
# Kernel 2: ln_1 + per-head QKV + softmax + distributed out_proj + residual.
#           Grid = (batch, head); head axis is "arbitrary" with scratch accumulators.
# ---------------------------------------------------------------------------
def attn_kernel(x_ref, g1_ref, b1_ref, wqkv_ref, bqkv_ref, wout_ref, bout_ref,
                y_ref, p_ref, xn_ref, acc_ref, psum_ref, *, n_heads):
    h = pl.program_id(1)

    @pl.when(h == 0)
    def _():
        # ln_1 computed once per batch row, kept resident (bf16) for all heads.
        xn_ref[...] = _layernorm(x_ref[0], g1_ref[...], b1_ref[...]).astype(jnp.bfloat16)
        acc_ref[...] = jnp.zeros_like(acc_ref)
        psum_ref[...] = jnp.zeros_like(psum_ref)

    xn = xn_ref[...]                                    # (L, E) bf16
    wq, wk, wv = wqkv_ref[0, 0], wqkv_ref[0, 1], wqkv_ref[0, 2]   # (E, hd) bf16
    bq, bk, bv = bqkv_ref[0, 0], bqkv_ref[0, 1], bqkv_ref[0, 2]   # (1, hd) f32

    # 1/sqrt(hd) softmax scale is pre-folded into wq / bq at init.
    q = (jnp.dot(xn, wq, preferred_element_type=jnp.float32) + bq).astype(jnp.bfloat16)
    k = (jnp.dot(xn, wk, preferred_element_type=jnp.float32) + bk).astype(jnp.bfloat16)
    v = (jnp.dot(xn, wv, preferred_element_type=jnp.float32) + bv).astype(jnp.bfloat16)

    s = jax.lax.dot_general(q, k, (((1,), (1,)), ((), ())),
                            preferred_element_type=jnp.float32)   # (L, L) f32
    m = jnp.max(s, axis=-1, keepdims=True)
    e = jnp.exp(s - m)
    p = e * pl.reciprocal(jnp.sum(e, axis=-1, keepdims=True))     # exact: rows sum to 1
    psum_ref[...] += p

    ctx = jnp.dot(p.astype(jnp.bfloat16), v, preferred_element_type=jnp.float32)  # (L, hd)
    # concat_h(ctx_h) @ Wout == sum_h ctx_h @ Wout_h  (per-head weight slab, accumulated)
    acc_ref[...] += jnp.dot(ctx.astype(jnp.bfloat16), wout_ref[0],
                            preferred_element_type=jnp.float32)

    @pl.when(h == n_heads - 1)
    def _():
        y_ref[0] = acc_ref[...] + bout_ref[...] + x_ref[0]   # out_proj bias + residual
        p_ref[0] = psum_ref[...] * (1.0 / n_heads)           # head-averaged attn weights


# ---------------------------------------------------------------------------
# Kernel 3: ln_2 + Linear + GELU(tanh) + Linear + residual (row-tiled).
# ---------------------------------------------------------------------------
def mlp_kernel(x_ref, g_ref, b_ref, w1_ref, b1_ref, w2_ref, b2_ref, o_ref):
    x = x_ref[...]
    xn = _layernorm(x, g_ref[...], b_ref[...]).astype(jnp.bfloat16)
    h = jnp.dot(xn, w1_ref[...], preferred_element_type=jnp.float32) + b1_ref[...]
    # tanh-approx GELU: moves the activation to the EUP slot (accepted delta vs exact erf).
    h = jax.nn.gelu(h, approximate=True)
    o_ref[...] = (jnp.dot(h.astype(jnp.bfloat16), w2_ref[...],
                          preferred_element_type=jnp.float32) + b2_ref[...] + x)


# ---------------------------------------------------------------------------
# Parameter initialization (deterministic, synthetic; packed in matmul layout).
# Matmul weights are stored bf16; biases / LayerNorm params stay f32.
# ---------------------------------------------------------------------------
def init_params(key, E, H, hidden):
    keys = iter(jax.random.split(key, 64))
    hd = E // H

    def rnd(shape, fan_in):
        bound = 1.0 / math.sqrt(fan_in)
        return jax.random.uniform(next(keys), shape, jnp.float32, -bound, bound)

    p = {}

    # --- CharCNN: per-tap weights with the 1x1 sep conv pre-composed (exact linear fold).
    wtaps, bbr = [], []
    for i, k in enumerate(KS):
        pad = k // 2
        wc = rnd((E, E, k), E * k)          # torch Conv1d weight (out, in, k)
        bc = rnd((E,), E * k)
        ws = rnd((E, E, 1), E)              # 1x1 sep conv
        bs = rnd((E,), E)
        wsep = jnp.transpose(ws[:, :, 0])   # matmul layout (in, out)
        for j in range(k):
            wtaps.append(jnp.transpose(wc[:, :, j]) @ wsep)   # composed tap weight (E, E)
        bbr.append((bc @ wsep + bs).reshape(1, E))            # conv bias folded through sep
    p["wtap"] = jnp.stack(wtaps).astype(jnp.bfloat16)         # (35, E, E) bf16
    p["bbr"] = jnp.stack(bbr)                                 # (5, 1, E) f32

    wcp = rnd((E, 5 * E, 3), 5 * E * 3)     # c3_prime torch weight (out, in, k)
    p["wp"] = jnp.stack([jnp.transpose(wcp[:, i * E:(i + 1) * E, j])
                         for j in range(3) for i in range(len(KS))]
                        ).astype(jnp.bfloat16)                # (15, E, E) bf16
    p["bp"] = rnd((E,), 5 * E * 3).reshape(1, E)
    p["cnn_ln"] = (jnp.ones((1, E), jnp.float32), jnp.zeros((1, E), jnp.float32))

    # --- Multihead attention: per-head weight slabs; softmax scale folded into Q.
    in_w = rnd((3 * E, E), E)               # torch in_proj_weight (3E, E)
    in_b = rnd((3 * E,), E)
    scale = 1.0 / math.sqrt(hd)
    wq, wk, wv = in_w[:E], in_w[E:2 * E], in_w[2 * E:]
    bq, bk, bv = in_b[:E], in_b[E:2 * E], in_b[2 * E:]
    p["wqkv"] = jnp.stack([
        jnp.stack([jnp.transpose(wq[h * hd:(h + 1) * hd]) * scale,
                   jnp.transpose(wk[h * hd:(h + 1) * hd]),
                   jnp.transpose(wv[h * hd:(h + 1) * hd])])
        for h in range(H)]).astype(jnp.bfloat16)              # (H, 3, E, hd) bf16
    p["bqkv"] = jnp.stack([
        jnp.stack([(bq[h * hd:(h + 1) * hd] * scale).reshape(1, hd),
                   bk[h * hd:(h + 1) * hd].reshape(1, hd),
                   bv[h * hd:(h + 1) * hd].reshape(1, hd)])
        for h in range(H)])                                   # (H, 3, 1, hd) f32
    out_w = rnd((E, E), E)
    out_b = rnd((E,), E)
    p["wout"] = jnp.stack([jnp.transpose(out_w[:, h * hd:(h + 1) * hd])
                           for h in range(H)]).astype(jnp.bfloat16)   # (H, hd, E) bf16
    p["bout"] = out_b.reshape(1, E)

    # --- LayerNorms and MLP.
    p["ln_1"] = (jnp.ones((1, E), jnp.float32), jnp.zeros((1, E), jnp.float32))
    p["ln_2"] = (jnp.ones((1, E), jnp.float32), jnp.zeros((1, E), jnp.float32))
    p["mlp"] = (jnp.transpose(rnd((hidden, E), E)).astype(jnp.bfloat16),
                rnd((hidden,), E).reshape(1, hidden),
                jnp.transpose(rnd((E, hidden), hidden)).astype(jnp.bfloat16),
                rnd((E,), hidden).reshape(1, E))
    return p


# ---------------------------------------------------------------------------
# pallas_call wrappers
# ---------------------------------------------------------------------------
def char_cnn(x, p):
    B, L, E = x.shape
    return pl.pallas_call(
        functools.partial(charcnn_kernel, tap_sched=TAP_SCHED),
        grid=(B,),
        in_specs=[
            pl.BlockSpec((1, L, E), lambda b: (b, 0, 0)),
            pl.BlockSpec((N_TAPS, E, E), lambda b: (0, 0, 0)),
            pl.BlockSpec((len(KS), 1, E), lambda b: (0, 0, 0)),
            pl.BlockSpec((3 * len(KS), E, E), lambda b: (0, 0, 0)),
            pl.BlockSpec((1, E), lambda b: (0, 0)),
            pl.BlockSpec((1, E), lambda b: (0, 0)),
            pl.BlockSpec((1, E), lambda b: (0, 0)),
        ],
        out_specs=pl.BlockSpec((1, L, E), lambda b: (b, 0, 0)),
        out_shape=jax.ShapeDtypeStruct((B, L, E), jnp.float32),
        compiler_params=pltpu.CompilerParams(
            dimension_semantics=("parallel",), vmem_limit_bytes=VMEM_LIMIT),
    )(x, p["wtap"], p["bbr"], p["wp"], p["bp"], p["cnn_ln"][0], p["cnn_ln"][1])


def attention_block(x, p, n_heads):
    B, L, E = x.shape
    hd = E // n_heads
    y, attn_w = pl.pallas_call(
        functools.partial(attn_kernel, n_heads=n_heads),
        grid=(B, n_heads),
        in_specs=[
            pl.BlockSpec((1, L, E), lambda b, h: (b, 0, 0)),
            pl.BlockSpec((1, E), lambda b, h: (0, 0)),
            pl.BlockSpec((1, E), lambda b, h: (0, 0)),
            pl.BlockSpec((1, 3, E, hd), lambda b, h: (h, 0, 0, 0)),
            pl.BlockSpec((1, 3, 1, hd), lambda b, h: (h, 0, 0, 0)),
            pl.BlockSpec((1, hd, E), lambda b, h: (h, 0, 0)),
            pl.BlockSpec((1, E), lambda b, h: (0, 0)),
        ],
        out_specs=[
            pl.BlockSpec((1, L, E), lambda b, h: (b, 0, 0)),
            pl.BlockSpec((1, L, L), lambda b, h: (b, 0, 0)),
        ],
        out_shape=[
            jax.ShapeDtypeStruct((B, L, E), jnp.float32),
            jax.ShapeDtypeStruct((B, L, L), jnp.float32),
        ],
        scratch_shapes=[
            pltpu.VMEM((L, E), jnp.bfloat16),   # resident ln_1(x)
            pltpu.VMEM((L, E), jnp.float32),    # out_proj accumulator
            pltpu.VMEM((L, L), jnp.float32),    # head-summed attention weights
        ],
        compiler_params=pltpu.CompilerParams(
            dimension_semantics=("parallel", "arbitrary"), vmem_limit_bytes=VMEM_LIMIT),
    )(x, p["ln_1"][0], p["ln_1"][1], p["wqkv"], p["bqkv"], p["wout"], p["bout"])
    return y, attn_w


def _mlp_row_tile(rows, E, hidden, vmem_budget=40 * 1024 * 1024):
    # Cap the row tile so bf16 weights (double-buffered), double-buffered f32 in/out tiles
    # and the (tr, hidden) f32 GELU intermediate stay within a conservative VMEM budget.
    wbytes = 2 * 2 * 2 * E * hidden
    rows8 = ((rows + 7) // 8) * 8
    for t in (512, 256, 128, 64, 32, 16, 8):
        act = 4 * t * (4 * E + hidden)
        if wbytes + act <= vmem_budget:
            return min(t, rows8)
    return 8


def mlp_block(x, p):
    B, L, E = x.shape
    rows = B * L
    g, b = p["ln_2"]
    w1, bb1, w2, bb2 = p["mlp"]
    hidden = w1.shape[1]
    tr = _mlp_row_tile(rows, E, hidden)
    rows_p = ((rows + tr - 1) // tr) * tr
    xf = x.reshape(rows, E)
    if rows_p != rows:
        xf = jnp.pad(xf, ((0, rows_p - rows), (0, 0)))
    y = pl.pallas_call(
        mlp_kernel,
        grid=(rows_p // tr,),
        in_specs=[
            pl.BlockSpec((tr, E), lambda i: (i, 0)),
            pl.BlockSpec((1, E), lambda i: (0, 0)),
            pl.BlockSpec((1, E), lambda i: (0, 0)),
            pl.BlockSpec((E, hidden), lambda i: (0, 0)),
            pl.BlockSpec((1, hidden), lambda i: (0, 0)),
            pl.BlockSpec((hidden, E), lambda i: (0, 0)),
            pl.BlockSpec((1, E), lambda i: (0, 0)),
        ],
        out_specs=pl.BlockSpec((tr, E), lambda i: (i, 0)),
        out_shape=jax.ShapeDtypeStruct((rows_p, E), jnp.float32),
        compiler_params=pltpu.CompilerParams(
            dimension_semantics=("parallel",), vmem_limit_bytes=VMEM_LIMIT),
    )(xf, g, b, w1, bb1, w2, bb2)
    return y[:rows].reshape(B, L, E)


def transformer_block(x, p, n_heads):
    x = char_cnn(x, p)                            # CharCNN (fused, grid over B)
    y1, attn_w = attention_block(x, p, n_heads)   # ln_1 + MHA + out_proj + residual
    out = mlp_block(y1, p)                        # ln_2 + MLP + residual
    return out, attn_w


# ---------------------------------------------------------------------------
if __name__ == "__main__":
    B, L, E, H = 2, 8, 32, 4            # small shapes consistent with the module
    hidden = 4 * E                      # expansion_factor = 4
    # NOTE: production sizes should keep E a multiple of 128 and L a multiple of 8
    # for lane-dense output stores; the toy shape is for correctness only.

    key = jax.random.PRNGKey(0)
    k_param, k_x = jax.random.split(key)
    params = init_params(k_param, E, H, hidden)
    x = jax.random.normal(k_x, (B, L, E), jnp.float32)

    fwd = jax.jit(transformer_block, static_argnums=2)
    out, attn_w = fwd(x, params, H)
    jax.block_until_ready(out)
    jax.block_until_ready(attn_w)
    assert out.shape == (B, L, E) and attn_w.shape == (B, L, L)
    print("KERNEL_OK")
</pallas_src>

<mosaic_0001>
module attributes {stable_mosaic.version = 11 : i64} {
  func.func @charcnn_kernel(%arg0: i32, %arg1: memref<1x8x32xf32, #tpu.memory_space<vmem>>, %arg2: memref<35x32x32xbf16, #tpu.memory_space<vmem>>, %arg3: memref<5x1x32xf32, #tpu.memory_space<vmem>>, %arg4: memref<15x32x32xbf16, #tpu.memory_space<vmem>>, %arg5: memref<1x32xf32, #tpu.memory_space<vmem>>, %arg6: memref<1x32xf32, #tpu.memory_space<vmem>>, %arg7: memref<1x32xf32, #tpu.memory_space<vmem>>, %arg8: memref<1x8x32xf32, #tpu.memory_space<vmem>>) attributes {dimension_semantics = [#tpu.dimension_semantics<parallel>], iteration_bounds = array<i64: 2>, scalar_prefetch = 0 : i64, scratch_operands = 0 : i64, tpu.core_type = #tpu.core_type<tc>, window_params = [{transform_indices = @transform_0, window_bounds = array<i64: 1, 8, 32>}, {pipeline_mode = #tpu.pipeline_mode<synchronous>, transform_indices = @transform_1, window_bounds = array<i64: 35, 32, 32>}, {pipeline_mode = #tpu.pipeline_mode<synchronous>, transform_indices = @transform_2, window_bounds = array<i64: 5, 1, 32>}, {pipeline_mode = #tpu.pipeline_mode<synchronous>, transform_indices = @transform_3, window_bounds = array<i64: 15, 32, 32>}, {pipeline_mode = #tpu.pipeline_mode<synchronous>, transform_indices = @transform_4, window_bounds = array<i64: 1, 32>}, {pipeline_mode = #tpu.pipeline_mode<synchronous>, transform_indices = @transform_5, window_bounds = array<i64: 1, 32>}, {pipeline_mode = #tpu.pipeline_mode<synchronous>, transform_indices = @transform_6, window_bounds = array<i64: 1, 32>}, {transform_indices = @transform_7, window_bounds = array<i64: 1, 8, 32>}]} {
    %c0 = arith.constant 0 : index
    %c0_0 = arith.constant 0 : index
    %c0_1 = arith.constant 0 : index
    %0 = vector.load %arg1[%c0, %c0_0, %c0_1] : memref<1x8x32xf32, #tpu.memory_space<vmem>>, vector<1x8x32xf32>
    %1 = vector.shape_cast %0 : vector<1x8x32xf32> to vector<8x32xf32>
    %2 = tpu.iota {dimensions = array<i32: 0>} : vector<8x1xi32>
    %c5_i32 = arith.constant 5 : i32
    %3 = tpu.dynamic_rotate %1 by %c5_i32 dim 0 : vector<8x32xf32>, i32 -> vector<8x32xf32>
    %c-5_i32 = arith.constant -5 : i32
    %4 = vector.broadcast %c-5_i32 : i32 to vector<8x1xi32>
    %5 = arith.addi %2, %4 : vector<8x1xi32>
    %c0_i32 = arith.constant 0 : i32
    %6 = vector.broadcast %c0_i32 : i32 to vector<8x1xi32>
    %7 = arith.cmpi sge, %5, %6 : vector<8x1xi32>
    %c-5_i32_2 = arith.constant -5 : i32
    %8 = vector.broadcast %c-5_i32_2 : i32 to vector<8x1xi32>
    %9 = arith.addi %2, %8 : vector<8x1xi32>
    %c8_i32 = arith.constant 8 : i32
    %10 = vector.broadcast %c8_i32 : i32 to vector<8x1xi32>
    %11 = arith.cmpi slt, %9, %10 : vector<8x1xi32>
    %12 = arith.andi %7, %11 : vector<8x1xi1>
    %cst = arith.constant 0.000000e+00 : f32
    %13 = vector.broadcast %cst : f32 to vector<8x32xf32>
    %14 = vector.shape_cast %12 : vector<8x1xi1> to vector<8x1xi1>
    %15 = vector.broadcast %14 : vector<8x1xi1> to vector<8x32xi1>
    %16 = arith.select %15, %3, %13 : vector<8x32xi1>, vector<8x32xf32>
    %17 = arith.truncf %16 : vector<8x32xf32> to vector<8x32xbf16>
    %c4_i32 = arith.constant 4 : i32
    %18 = tpu.dynamic_rotate %1 by %c4_i32 dim 0 : vector<8x32xf32>, i32 -> vector<8x32xf32>
    %c-4_i32 = arith.constant -4 : i32
    %19 = vector.broadcast %c-4_i32 : i32 to vector<8x1xi32>
    %20 = arith.addi %2, %19 : vector<8x1xi32>
    %c0_i32_3 = arith.constant 0 : i32
    %21 = vector.broadcast %c0_i32_3 : i32 to vector<8x1xi32>
    %22 = arith.cmpi sge, %20, %21 : vector<8x1xi32>
    %c-4_i32_4 = arith.constant -4 : i32
    %23 = vector.broadcast %c-4_i32_4 : i32 to vector<8x1xi32>
    %24 = arith.addi %2, %23 : vector<8x1xi32>
    %c8_i32_5 = arith.constant 8 : i32
    %25 = vector.broadcast %c8_i32_5 : i32 to vector<8x1xi32>
    %26 = arith.cmpi slt, %24, %25 : vector<8x1xi32>
    %27 = arith.andi %22, %26 : vector<8x1xi1>
    %cst_6 = arith.constant 0.000000e+00 : f32
    %28 = vector.broadcast %cst_6 : f32 to vector<8x32xf32>
    %29 = vector.shape_cast %27 : vector<8x1xi1> to vector<8x1xi1>
    %30 = vector.broadcast %29 : vector<8x1xi1> to vector<8x32xi1>
    %31 = arith.select %30, %18, %28 : vector<8x32xi1>, vector<8x32xf32>
    %32 = arith.truncf %31 : vector<8x32xf32> to vector<8x32xbf16>
    %c3_i32 = arith.constant 3 : i32
    %33 = tpu.dynamic_rotate %1 by %c3_i32 dim 0 : vector<8x32xf32>, i32 -> vector<8x32xf32>
    %c-3_i32 = arith.constant -3 : i32
    %34 = vector.broadcast %c-3_i32 : i32 to vector<8x1xi32>
    %35 = arith.addi %2, %34 : vector<8x1xi32>
    %c0_i32_7 = arith.constant 0 : i32
    %36 = vector.broadcast %c0_i32_7 : i32 to vector<8x1xi32>
    %37 = arith.cmpi sge, %35, %36 : vector<8x1xi32>
    %c-3_i32_8 = arith.constant -3 : i32
    %38 = vector.broadcast %c-3_i32_8 : i32 to vector<8x1xi32>
    %39 = arith.addi %2, %38 : vector<8x1xi32>
    %c8_i32_9 = arith.constant 8 : i32
    %40 = vector.broadcast %c8_i32_9 : i32 to vector<8x1xi32>
    %41 = arith.cmpi slt, %39, %40 : vector<8x1xi32>
    %42 = arith.andi %37, %41 : vector<8x1xi1>
    %cst_10 = arith.constant 0.000000e+00 : f32
    %43 = vector.broadcast %cst_10 : f32 to vector<8x32xf32>
    %44 = vector.shape_cast %42 : vector<8x1xi1> to vector<8x1xi1>
    %45 = vector.broadcast %44 : vector<8x1xi1> to vector<8x32xi1>
    %46 = arith.select %45, %33, %43 : vector<8x32xi1>, vector<8x32xf32>
    %47 = arith.truncf %46 : vector<8x32xf32> to vector<8x32xbf16>
    %c2_i32 = arith.constant 2 : i32
    %48 = tpu.dynamic_rotate %1 by %c2_i32 dim 0 : vector<8x32xf32>, i32 -> vector<8x32xf32>
    %c-2_i32 = arith.constant -2 : i32
    %49 = vector.broadcast %c-2_i32 : i32 to vector<8x1xi32>
    %50 = arith.addi %2, %49 : vector<8x1xi32>
    %c0_i32_11 = arith.constant 0 : i32
    %51 = vector.broadcast %c0_i32_11 : i32 to vector<8x1xi32>
    %52 = arith.cmpi sge, %50, %51 : vector<8x1xi32>
    %c-2_i32_12 = arith.constant -2 : i32
    %53 = vector.broadcast %c-2_i32_12 : i32 to vector<8x1xi32>
    %54 = arith.addi %2, %53 : vector<8x1xi32>
    %c8_i32_13 = arith.constant 8 : i32
    %55 = vector.broadcast %c8_i32_13 : i32 to vector<8x1xi32>
    %56 = arith.cmpi slt, %54, %55 : vector<8x1xi32>
    %57 = arith.andi %52, %56 : vector<8x1xi1>
    %cst_14 = arith.constant 0.000000e+00 : f32
    %58 = vector.broadcast %cst_14 : f32 to vector<8x32xf32>
    %59 = vector.shape_cast %57 : vector<8x1xi1> to vector<8x1xi1>
    %60 = vector.broadcast %59 : vector<8x1xi1> to vector<8x32xi1>
    %61 = arith.select %60, %48, %58 : vector<8x32xi1>, vector<8x32xf32>
    %62 = arith.truncf %61 : vector<8x32xf32> to vector<8x32xbf16>
    %c1_i32 = arith.constant 1 : i32
    %63 = tpu.dynamic_rotate %1 by %c1_i32 dim 0 : vector<8x32xf32>, i32 -> vector<8x32xf32>
    %c-1_i32 = arith.constant -1 : i32
    %64 = vector.broadcast %c-1_i32 : i32 to vector<8x1xi32>
    %65 = arith.addi %2, %64 : vector<8x1xi32>
    %c0_i32_15 = arith.constant 0 : i32
    %66 = vector.broadcast %c0_i32_15 : i32 to vector<8x1xi32>
    %67 = arith.cmpi sge, %65, %66 : vector<8x1xi32>
    %c-1_i32_16 = arith.constant -1 : i32
    %68 = vector.broadcast %c-1_i32_16 : i32 to vector<8x1xi32>
    %69 = arith.addi %2, %68 : vector<8x1xi32>
    %c8_i32_17 = arith.constant 8 : i32
    %70 = vector.broadcast %c8_i32_17 : i32 to vector<8x1xi32>
    %71 = arith.cmpi slt, %69, %70 : vector<8x1xi32>
    %72 = arith.andi %67, %71 : vector<8x1xi1>
    %cst_18 = arith.constant 0.000000e+00 : f32
    %73 = vector.broadcast %cst_18 : f32 to vector<8x32xf32>
    %74 = vector.shape_cast %72 : vector<8x1xi1> to vector<8x1xi1>
    %75 = vector.broadcast %74 : vector<8x1xi1> to vector<8x32xi1>
    %76 = arith.select %75, %63, %73 : vector<8x32xi1>, vector<8x32xf32>
    %77 = arith.truncf %76 : vector<8x32xf32> to vector<8x32xbf16>
    %78 = arith.truncf %1 : vector<8x32xf32> to vector<8x32xbf16>
    %c7_i32 = arith.constant 7 : i32
    %79 = tpu.dynamic_rotate %1 by %c7_i32 dim 0 : vector<8x32xf32>, i32 -> vector<8x32xf32>
    %c1_i32_19 = arith.constant 1 : i32
    %80 = vector.broadcast %c1_i32_19 : i32 to vector<8x1xi32>
    %81 = arith.addi %2, %80 : vector<8x1xi32>
    %c0_i32_20 = arith.constant 0 : i32
    %82 = vector.broadcast %c0_i32_20 : i32 to vector<8x1xi32>
    %83 = arith.cmpi sge, %81, %82 : vector<8x1xi32>
    %c1_i32_21 = arith.constant 1 : i32
    %84 = vector.broadcast %c1_i32_21 : i32 to vector<8x1xi32>
    %85 = arith.addi %2, %84 : vector<8x1xi32>
    %c8_i32_22 = arith.constant 8 : i32
    %86 = vector.broadcast %c8_i32_22 : i32 to vector<8x1xi32>
    %87 = arith.cmpi slt, %85, %86 : vector<8x1xi32>
    %88 = arith.andi %83, %87 : vector<8x1xi1>
    %cst_23 = arith.constant 0.000000e+00 : f32
    %89 = vector.broadcast %cst_23 : f32 to vector<8x32xf32>
    %90 = vector.shape_cast %88 : vector<8x1xi1> to vector<8x1xi1>
    %91 = vector.broadcast %90 : vector<8x1xi1> to vector<8x32xi1>
    %92 = arith.select %91, %79, %89 : vector<8x32xi1>, vector<8x32xf32>
    %93 = arith.truncf %92 : vector<8x32xf32> to vector<8x32xbf16>
    %c6_i32 = arith.constant 6 : i32
    %94 = tpu.dynamic_rotate %1 by %c6_i32 dim 0 : vector<8x32xf32>, i32 -> vector<8x32xf32>
    %c2_i32_24 = arith.constant 2 : i32
    %95 = vector.broadcast %c2_i32_24 : i32 to vector<8x1xi32>
    %96 = arith.addi %2, %95 : vector<8x1xi32>
    %c0_i32_25 = arith.constant 0 : i32
    %97 = vector.broadcast %c0_i32_25 : i32 to vector<8x1xi32>
    %98 = arith.cmpi sge, %96, %97 : vector<8x1xi32>
    %c2_i32_26 = arith.constant 2 : i32
    %99 = vector.broadcast %c2_i32_26 : i32 to vector<8x1xi32>
    %100 = arith.addi %2, %99 : vector<8x1xi32>
    %c8_i32_27 = arith.constant 8 : i32
    %101 = vector.broadcast %c8_i32_27 : i32 to vector<8x1xi32>
    %102 = arith.cmpi slt, %100, %101 : vector<8x1xi32>
    %103 = arith.andi %98, %102 : vector<8x1xi1>
    %cst_28 = arith.constant 0.000000e+00 : f32
    %104 = vector.broadcast %cst_28 : f32 to vector<8x32xf32>
    %105 = vector.shape_cast %103 : vector<8x1xi1> to vector<8x1xi1>
    %106 = vector.broadcast %105 : vector<8x1xi1> to vector<8x32xi1>
    %107 = arith.select %106, %94, %104 : vector<8x32xi1>, vector<8x32xf32>
    %108 = arith.truncf %107 : vector<8x32xf32> to vector<8x32xbf16>
    %c5_i32_29 = arith.constant 5 : i32
    %109 = tpu.dynamic_rotate %1 by %c5_i32_29 dim 0 : vector<8x32xf32>, i32 -> vector<8x32xf32>
    %c3_i32_30 = arith.constant 3 : i32
    %110 = vector.broadcast %c3_i32_30 : i32 to vector<8x1xi32>
    %111 = arith.addi %2, %110 : vector<8x1xi32>
    %c0_i32_31 = arith.constant 0 : i32
    %112 = vector.broadcast %c0_i32_31 : i32 to vector<8x1xi32>
    %113 = arith.cmpi sge, %111, %112 : vector<8x1xi32>
    %c3_i32_32 = arith.constant 3 : i32
    %114 = vector.broadcast %c3_i32_32 : i32 to vector<8x1xi32>
    %115 = arith.addi %2, %114 : vector<8x1xi32>
    %c8_i32_33 = arith.constant 8 : i32
    %116 = vector.broadcast %c8_i32_33 : i32 to vector<8x1xi32>
    %117 = arith.cmpi slt, %115, %116 : vector<8x1xi32>
    %118 = arith.andi %113, %117 : vector<8x1xi1>
    %cst_34 = arith.constant 0.000000e+00 : f32
    %119 = vector.broadcast %cst_34 : f32 to vector<8x32xf32>
    %120 = vector.shape_cast %118 : vector<8x1xi1> to vector<8x1xi1>
    %121 = vector.broadcast %120 : vector<8x1xi1> to vector<8x32xi1>
    %122 = arith.select %121, %109, %119 : vector<8x32xi1>, vector<8x32xf32>
    %123 = arith.truncf %122 : vector<8x32xf32> to vector<8x32xbf16>
    %c4_i32_35 = arith.constant 4 : i32
    %124 = tpu.dynamic_rotate %1 by %c4_i32_35 dim 0 : vector<8x32xf32>, i32 -> vector<8x32xf32>
    %c4_i32_36 = arith.constant 4 : i32
    %125 = vector.broadcast %c4_i32_36 : i32 to vector<8x1xi32>
    %126 = arith.addi %2, %125 : vector<8x1xi32>
    %c0_i32_37 = arith.constant 0 : i32
    %127 = vector.broadcast %c0_i32_37 : i32 to vector<8x1xi32>
    %128 = arith.cmpi sge, %126, %127 : vector<8x1xi32>
    %c4_i32_38 = arith.constant 4 : i32
    %129 = vector.broadcast %c4_i32_38 : i32 to vector<8x1xi32>
    %130 = arith.addi %2, %129 : vector<8x1xi32>
    %c8_i32_39 = arith.constant 8 : i32
    %131 = vector.broadcast %c8_i32_39 : i32 to vector<8x1xi32>
    %132 = arith.cmpi slt, %130, %131 : vector<8x1xi32>
    %133 = arith.andi %128, %132 : vector<8x1xi1>
    %cst_40 = arith.constant 0.000000e+00 : f32
    %134 = vector.broadcast %cst_40 : f32 to vector<8x32xf32>
    %135 = vector.shape_cast %133 : vector<8x1xi1> to vector<8x1xi1>
    %136 = vector.broadcast %135 : vector<8x1xi1> to vector<8x32xi1>
    %137 = arith.select %136, %124, %134 : vector<8x32xi1>, vector<8x32xf32>
    %138 = arith.truncf %137 : vector<8x32xf32> to vector<8x32xbf16>
    %c3_i32_41 = arith.constant 3 : i32
    %139 = tpu.dynamic_rotate %1 by %c3_i32_41 dim 0 : vector<8x32xf32>, i32 -> vector<8x32xf32>
    %c5_i32_42 = arith.constant 5 : i32
    %140 = vector.broadcast %c5_i32_42 : i32 to vector<8x1xi32>
    %141 = arith.addi %2, %140 : vector<8x1xi32>
    %c0_i32_43 = arith.constant 0 : i32
    %142 = vector.broadcast %c0_i32_43 : i32 to vector<8x1xi32>
    %143 = arith.cmpi sge, %141, %142 : vector<8x1xi32>
    %c5_i32_44 = arith.constant 5 : i32
    %144 = vector.broadcast %c5_i32_44 : i32 to vector<8x1xi32>
    %145 = arith.addi %2, %144 : vector<8x1xi32>
    %c8_i32_45 = arith.constant 8 : i32
    %146 = vector.broadcast %c8_i32_45 : i32 to vector<8x1xi32>
    %147 = arith.cmpi slt, %145, %146 : vector<8x1xi32>
    %148 = arith.andi %143, %147 : vector<8x1xi1>
    %cst_46 = arith.constant 0.000000e+00 : f32
    %149 = vector.broadcast %cst_46 : f32 to vector<8x32xf32>
    %150 = vector.shape_cast %148 : vector<8x1xi1> to vector<8x1xi1>
    %151 = vector.broadcast %150 : vector<8x1xi1> to vector<8x32xi1>
    %152 = arith.select %151, %139, %149 : vector<8x32xi1>, vector<8x32xf32>
    %153 = arith.truncf %152 : vector<8x32xf32> to vector<8x32xbf16>
    %cst_47 = arith.constant 0.000000e+00 : f32
    %154 = vector.broadcast %cst_47 : f32 to vector<8x32xf32>
    %c0_48 = arith.constant 0 : index
    %c0_49 = arith.constant 0 : index
    %c0_50 = arith.constant 0 : index
    %155 = vector.load %arg3[%c0_48, %c0_49, %c0_50] : memref<5x1x32xf32, #tpu.memory_space<vmem>>, vector<1x1x32xf32>
    %156 = vector.shape_cast %155 : vector<1x1x32xf32> to vector<1x32xf32>
    %157 = vector.broadcast %156 : vector<1x32xf32> to vector<8x32xf32>
    %158 = arith.addf %154, %157 : vector<8x32xf32>
    %cst_51 = arith.constant 0.000000e+00 : f32
    %159 = vector.broadcast %cst_51 : f32 to vector<8x32xf32>
    %c1 = arith.constant 1 : index
    %c0_52 = arith.constant 0 : index
    %c0_53 = arith.constant 0 : index
    %160 = vector.load %arg3[%c1, %c0_52, %c0_53] : memref<5x1x32xf32, #tpu.memory_space<vmem>>, vector<1x1x32xf32>
    %161 = vector.shape_cast %160 : vector<1x1x32xf32> to vector<1x32xf32>
    %162 = vector.broadcast %161 : vector<1x32xf32> to vector<8x32xf32>
    %163 = arith.addf %159, %162 : vector<8x32xf32>
    %cst_54 = arith.constant 0.000000e+00 : f32
    %164 = vector.broadcast %cst_54 : f32 to vector<8x32xf32>
    %c2 = arith.constant 2 : index
    %c0_55 = arith.constant 0 : index
    %c0_56 = arith.constant 0 : index
    %165 = vector.load %arg3[%c2, %c0_55, %c0_56] : memref<5x1x32xf32, #tpu.memory_space<vmem>>, vector<1x1x32xf32>
    %166 = vector.shape_cast %165 : vector<1x1x32xf32> to vector<1x32xf32>
    %167 = vector.broadcast %166 : vector<1x32xf32> to vector<8x32xf32>
    %168 = arith.addf %164, %167 : vector<8x32xf32>
    %cst_57 = arith.constant 0.000000e+00 : f32
    %169 = vector.broadcast %cst_57 : f32 to vector<8x32xf32>
    %c3 = arith.constant 3 : index
    %c0_58 = arith.constant 0 : index
    %c0_59 = arith.constant 0 : index
    %170 = vector.load %arg3[%c3, %c0_58, %c0_59] : memref<5x1x32xf32, #tpu.memory_space<vmem>>, vector<1x1x32xf32>
    %171 = vector.shape_cast %170 : vector<1x1x32xf32> to vector<1x32xf32>
    %172 = vector.broadcast %171 : vector<1x32xf32> to vector<8x32xf32>
    %173 = arith.addf %169, %172 : vector<8x32xf32>
    %cst_60 = arith.constant 0.000000e+00 : f32
    %174 = vector.broadcast %cst_60 : f32 to vector<8x32xf32>
    %c4 = arith.constant 4 : index
    %c0_61 = arith.constant 0 : index
    %c0_62 = arith.constant 0 : index
    %175 = vector.load %arg3[%c4, %c0_61, %c0_62] : memref<5x1x32xf32, #tpu.memory_space<vmem>>, vector<1x1x32xf32>
    %176 = vector.shape_cast %175 : vector<1x1x32xf32> to vector<1x32xf32>
    %177 = vector.broadcast %176 : vector<1x32xf32> to vector<8x32xf32>
    %178 = arith.addf %174, %177 : vector<8x32xf32>
    %c0_63 = arith.constant 0 : index
    %c0_64 = arith.constant 0 : index
    %c0_65 = arith.constant 0 : index
    %179 = vector.load %arg2[%c0_63, %c0_64, %c0_65] : memref<35x32x32xbf16, #tpu.memory_space<vmem>>, vector<1x32x32xbf16>
    %180 = vector.shape_cast %179 : vector<1x32x32xbf16> to vector<32x32xbf16>
    %cst_66 = arith.constant dense<0.000000e+00> : vector<8x32xf32>
    %181 = tpu.matmul %77, %180, %cst_66 {dimension_numbers = #tpu.dot_dimension_numbers<[1], [0], [0], [1], [0, 0, 1, 1], [], []>} : vector<8x32xbf16>, vector<32x32xbf16>, vector<8x32xf32> -> vector<8x32xf32>
    %182 = arith.addf %158, %181 : vector<8x32xf32>
    %c1_67 = arith.constant 1 : index
    %c0_68 = arith.constant 0 : index
    %c0_69 = arith.constant 0 : index
    %183 = vector.load %arg2[%c1_67, %c0_68, %c0_69] : memref<35x32x32xbf16, #tpu.memory_space<vmem>>, vector<1x32x32xbf16>
    %184 = vector.shape_cast %183 : vector<1x32x32xbf16> to vector<32x32xbf16>
    %cst_70 = arith.constant dense<0.000000e+00> : vector<8x32xf32>
    %185 = tpu.matmul %78, %184, %cst_70 {dimension_numbers = #tpu.dot_dimension_numbers<[1], [0], [0], [1], [0, 0, 1, 1], [], []>} : vector<8x32xbf16>, vector<32x32xbf16>, vector<8x32xf32> -> vector<8x32xf32>
    %186 = arith.addf %182, %185 : vector<8x32xf32>
    %c2_71 = arith.constant 2 : index
    %c0_72 = arith.constant 0 : index
    %c0_73 = arith.constant 0 : index
    %187 = vector.load %arg2[%c2_71, %c0_72, %c0_73] : memref<35x32x32xbf16, #tpu.memory_space<vmem>>, vector<1x32x32xbf16>
    %188 = vector.shape_cast %187 : vector<1x32x32xbf16> to vector<32x32xbf16>
    %cst_74 = arith.constant dense<0.000000e+00> : vector<8x32xf32>
    %189 = tpu.matmul %93, %188, %cst_74 {dimension_numbers = #tpu.dot_dimension_numbers<[1], [0], [0], [1], [0, 0, 1, 1], [], []>} : vector<8x32xbf16>, vector<32x32xbf16>, vector<8x32xf32> -> vector<8x32xf32>
    %190 = arith.addf %186, %189 : vector<8x32xf32>
    %c3_75 = arith.constant 3 : index
    %c0_76 = arith.constant 0 : index
    %c0_77 = arith.constant 0 : index
    %191 = vector.load %arg2[%c3_75, %c0_76, %c0_77] : memref<35x32x32xbf16, #tpu.memory_space<vmem>>, vector<1x32x32xbf16>
    %192 = vector.shape_cast %191 : vector<1x32x32xbf16> to vector<32x32xbf16>
    %cst_78 = arith.constant dense<0.000000e+00> : vector<8x32xf32>
    %193 = tpu.matmul %62, %192, %cst_78 {dimension_numbers = #tpu.dot_dimension_numbers<[1], [0], [0], [1], [0, 0, 1, 1], [], []>} : vector<8x32xbf16>, vector<32x32xbf16>, vector<8x32xf32> -> vector<8x32xf32>
    %194 = arith.addf %163, %193 : vector<8x32xf32>
    %c4_79 = arith.constant 4 : index
    %c0_80 = arith.constant 0 : index
    %c0_81 = arith.constant 0 : index
    %195 = vector.load %arg2[%c4_79, %c0_80, %c0_81] : memref<35x32x32xbf16, #tpu.memory_space<vmem>>, vector<1x32x32xbf16>
    %196 = vector.shape_cast %195 : vector<1x32x32xbf16> to vector<32x32xbf16>
    %cst_82 = arith.constant dense<0.000000e+00> : vector<8x32xf32>
    %197 = tpu.matmul %77, %196, %cst_82 {dimension_numbers = #tpu.dot_dimension_numbers<[1], [0], [0], [1], [0, 0, 1, 1], [], []>} : vector<8x32xbf16>, vector<32x32xbf16>, vector<8x32xf32> -> vector<8x32xf32>
    %198 = arith.addf %194, %197 : vector<8x32xf32>
    %c5 = arith.constant 5 : index
    %c0_83 = arith.constant 0 : index
    %c0_84 = arith.constant 0 : index
    %199 = vector.load %arg2[%c5, %c0_83, %c0_84] : memref<35x32x32xbf16, #tpu.memory_space<vmem>>, vector<1x32x32xbf16>
    %200 = vector.shape_cast %199 : vector<1x32x32xbf16> to vector<32x32xbf16>
    %cst_85 = arith.constant dense<0.000000e+00> : vector<8x32xf32>
    %201 = tpu.matmul %78, %200, %cst_85 {dimension_numbers = #tpu.dot_dimension_numbers<[1], [0], [0], [1], [0, 0, 1, 1], [], []>} : vector<8x32xbf16>, vector<32x32xbf16>, vector<8x32xf32> -> vector<8x32xf32>
    %202 = arith.addf %198, %201 : vector<8x32xf32>
    %c6 = arith.constant 6 : index
    %c0_86 = arith.constant 0 : index
    %c0_87 = arith.constant 0 : index
    %203 = vector.load %arg2[%c6, %c0_86, %c0_87] : memref<35x32x32xbf16, #tpu.memory_space<vmem>>, vector<1x32x32xbf16>
    %204 = vector.shape_cast %203 : vector<1x32x32xbf16> to vector<32x32xbf16>
    %cst_88 = arith.constant dense<0.000000e+00> : vector<8x32xf32>
    %205 = tpu.matmul %93, %204, %cst_88 {dimension_numbers = #tpu.dot_dimension_numbers<[1], [0], [0], [1], [0, 0, 1, 1], [], []>} : vector<8x32xbf16>, vector<32x32xbf16>, vector<8x32xf32> -> vector<8x32xf32>
    %206 = arith.addf %202, %205 : vector<8x32xf32>
    %c7 = arith.constant 7 : index
    %c0_89 = arith.constant 0 : index
    %c0_90 = arith.constant 0 : index
    %207 = vector.load %arg2[%c7, %c0_89, %c0_90] : memref<35x32x32xbf16, #tpu.memory_space<vmem>>, vector<1x32x32xbf16>
    %208 = vector.shape_cast %207 : vector<1x32x32xbf16> to vector<32x32xbf16>
    %cst_91 = arith.constant dense<0.000000e+00> : vector<8x32xf32>
    %209 = tpu.matmul %108, %208, %cst_91 {dimension_numbers = #tpu.dot_dimension_numbers<[1], [0], [0], [1], [0, 0, 1, 1], [], []>} : vector<8x32xbf16>, vector<32x32xbf16>, vector<8x32xf32> -> vector<8x32xf32>
    %210 = arith.addf %206, %209 : vector<8x32xf32>
    %c8 = arith.constant 8 : index
    %c0_92 = arith.constant 0 : index
    %c0_93 = arith.constant 0 : index
    %211 = vector.load %arg2[%c8, %c0_92, %c0_93] : memref<35x32x32xbf16, #tpu.memory_space<vmem>>, vector<1x32x32xbf16>
    %212 = vector.shape_cast %211 : vector<1x32x32xbf16> to vector<32x32xbf16>
    %cst_94 = arith.constant dense<0.000000e+00> : vector<8x32xf32>
    %213 = tpu.matmul %47, %212, %cst_94 {dimension_numbers = #tpu.dot_dimension_numbers<[1], [0], [0], [1], [0, 0, 1, 1], [], []>} : vector<8x32xbf16>, vector<32x32xbf16>, vector<8x32xf32> -> vector<8x32xf32>
    %214 = arith.addf %168, %213 : vector<8x32xf32>
    %c9 = arith.constant 9 : index
    %c0_95 = arith.constant 0 : index
    %c0_96 = arith.constant 0 : index
    %215 = vector.load %arg2[%c9, %c0_95, %c0_96] : memref<35x32x32xbf16, #tpu.memory_space<vmem>>, vector<1x32x32xbf16>
    %216 = vector.shape_cast %215 : vector<1x32x32xbf16> to vector<32x32xbf16>
    %cst_97 = arith.constant dense<0.000000e+00> : vector<8x32xf32>
    %217 = tpu.matmul %62, %216, %cst_97 {dimension_numbers = #tpu.dot_dimension_numbers<[1], [0], [0], [1], [0, 0, 1, 1], [], []>} : vector<8x32xbf16>, vector<32x32xbf16>, vector<8x32xf32> -> vector<8x32xf32>
    %218 = arith.addf %214, %217 : vector<8x32xf32>
    %c10 = arith.constant 10 : index
    %c0_98 = arith.constant 0 : index
    %c0_99 = arith.constant 0 : index
    %219 = vector.load %arg2[%c10, %c0_98, %c0_99] : memref<35x32x32xbf16, #tpu.memory_space<vmem>>, vector<1x32x32xbf16>
    %220 = vector.shape_cast %219 : vector<1x32x32xbf16> to vector<32x32xbf16>
    %cst_100 = arith.constant dense<0.000000e+00> : vector<8x32xf32>
    %221 = tpu.matmul %77, %220, %cst_100 {dimension_numbers = #tpu.dot_dimension_numbers<[1], [0], [0], [1], [0, 0, 1, 1], [], []>} : vector<8x32xbf16>, vector<32x32xbf16>, vector<8x32xf32> -> vector<8x32xf32>
    %222 = arith.addf %218, %221 : vector<8x32xf32>
    %c11 = arith.constant 11 : index
    %c0_101 = arith.constant 0 : index
    %c0_102 = arith.constant 0 : index
    %223 = vector.load %arg2[%c11, %c0_101, %c0_102] : memref<35x32x32xbf16, #tpu.memory_space<vmem>>, vector<1x32x32xbf16>
    %224 = vector.shape_cast %223 : vector<1x32x32xbf16> to vector<32x32xbf16>
    %cst_103 = arith.constant dense<0.000000e+00> : vector<8x32xf32>
    %225 = tpu.matmul %78, %224, %cst_103 {dimension_numbers = #tpu.dot_dimension_numbers<[1], [0], [0], [1], [0, 0, 1, 1], [], []>} : vector<8x32xbf16>, vector<32x32xbf16>, vector<8x32xf32> -> vector<8x32xf32>
    %226 = arith.addf %222, %225 : vector<8x32xf32>
    %c12 = arith.constant 12 : index
    %c0_104 = arith.constant 0 : index
    %c0_105 = arith.constant 0 : index
    %227 = vector.load %arg2[%c12, %c0_104, %c0_105] : memref<35x32x32xbf16, #tpu.memory_space<vmem>>, vector<1x32x32xbf16>
    %228 = vector.shape_cast %227 : vector<1x32x32xbf16> to vector<32x32xbf16>
    %cst_106 = arith.constant dense<0.000000e+00> : vector<8x32xf32>
    %229 = tpu.matmul %93, %228, %cst_106 {dimension_numbers = #tpu.dot_dimension_numbers<[1], [0], [0], [1], [0, 0, 1, 1], [], []>} : vector<8x32xbf16>, vector<32x32xbf16>, vector<8x32xf32> -> vector<8x32xf32>
    %230 = arith.addf %226, %229 : vector<8x32xf32>
    %c13 = arith.constant 13 : index
    %c0_107 = arith.constant 0 : index
    %c0_108 = arith.constant 0 : index
    %231 = vector.load %arg2[%c13, %c0_107, %c0_108] : memref<35x32x32xbf16, #tpu.memory_space<vmem>>, vector<1x32x32xbf16>
    %232 = vector.shape_cast %231 : vector<1x32x32xbf16> to vector<32x32xbf16>
    %cst_109 = arith.constant dense<0.000000e+00> : vector<8x32xf32>
    %233 = tpu.matmul %108, %232, %cst_109 {dimension_numbers = #tpu.dot_dimension_numbers<[1], [0], [0], [1], [0, 0, 1, 1], [], []>} : vector<8x32xbf16>, vector<32x32xbf16>, vector<8x32xf32> -> vector<8x32xf32>
    %234 = arith.addf %230, %233 : vector<8x32xf32>
    %c14 = arith.constant 14 : index
    %c0_110 = arith.constant 0 : index
    %c0_111 = arith.constant 0 : index
    %235 = vector.load %arg2[%c14, %c0_110, %c0_111] : memref<35x32x32xbf16, #tpu.memory_space<vmem>>, vector<1x32x32xbf16>
    %236 = vector.shape_cast %235 : vector<1x32x32xbf16> to vector<32x32xbf16>
    %cst_112 = arith.constant dense<0.000000e+00> : vector<8x32xf32>
    %237 = tpu.matmul %123, %236, %cst_112 {dimension_numbers = #tpu.dot_dimension_numbers<[1], [0], [0], [1], [0, 0, 1, 1], [], []>} : vector<8x32xbf16>, vector<32x32xbf16>, vector<8x32xf32> -> vector<8x32xf32>
    %238 = arith.addf %234, %237 : vector<8x32xf32>
    %c15 = arith.constant 15 : index
    %c0_113 = arith.constant 0 : index
    %c0_114 = arith.constant 0 : index
    %239 = vector.load %arg2[%c15, %c0_113, %c0_114] : memref<35x32x32xbf16, #tpu.memory_space<vmem>>, vector<1x32x32xbf16>
    %240 = vector.shape_cast %239 : vector<1x32x32xbf16> to vector<32x32xbf16>
    %cst_115 = arith.constant dense<0.000000e+00> : vector<8x32xf32>
    %241 = tpu.matmul %32, %240, %cst_115 {dimension_numbers = #tpu.dot_dimension_numbers<[1], [0], [0], [1], [0, 0, 1, 1], [], []>} : vector<8x32xbf16>, vector<32x32xbf16>, vector<8x32xf32> -> vector<8x32xf32>
    %242 = arith.addf %173, %241 : vector<8x32xf32>
    %c16 = arith.constant 16 : index
    %c0_116 = arith.constant 0 : index
    %c0_117 = arith.constant 0 : index
    %243 = vector.load %arg2[%c16, %c0_116, %c0_117] : memref<35x32x32xbf16, #tpu.memory_space<vmem>>, vector<1x32x32xbf16>
    %244 = vector.shape_cast %243 : vector<1x32x32xbf16> to vector<32x32xbf16>
    %cst_118 = arith.constant dense<0.000000e+00> : vector<8x32xf32>
    %245 = tpu.matmul %47, %244, %cst_118 {dimension_numbers = #tpu.dot_dimension_numbers<[1], [0], [0], [1], [0, 0, 1, 1], [], []>} : vector<8x32xbf16>, vector<32x32xbf16>, vector<8x32xf32> -> vector<8x32xf32>
    %246 = arith.addf %242, %245 : vector<8x32xf32>
    %c17 = arith.constant 17 : index
    %c0_119 = arith.constant 0 : index
    %c0_120 = arith.constant 0 : index
    %247 = vector.load %arg2[%c17, %c0_119, %c0_120] : memref<35x32x32xbf16, #tpu.memory_space<vmem>>, vector<1x32x32xbf16>
    %248 = vector.shape_cast %247 : vector<1x32x32xbf16> to vector<32x32xbf16>
    %cst_121 = arith.constant dense<0.000000e+00> : vector<8x32xf32>
    %249 = tpu.matmul %62, %248, %cst_121 {dimension_numbers = #tpu.dot_dimension_numbers<[1], [0], [0], [1], [0, 0, 1, 1], [], []>} : vector<8x32xbf16>, vector<32x32xbf16>, vector<8x32xf32> -> vector<8x32xf32>
    %250 = arith.addf %246, %249 : vector<8x32xf32>
    %c18 = arith.constant 18 : index
    %c0_122 = arith.constant 0 : index
    %c0_123 = arith.constant 0 : index
    %251 = vector.load %arg2[%c18, %c0_122, %c0_123] : memref<35x32x32xbf16, #tpu.memory_space<vmem>>, vector<1x32x32xbf16>
    %252 = vector.shape_cast %251 : vector<1x32x32xbf16> to vector<32x32xbf16>
    %cst_124 = arith.constant dense<0.000000e+00> : vector<8x32xf32>
    %253 = tpu.matmul %77, %252, %cst_124 {dimension_numbers = #tpu.dot_dimension_numbers<[1], [0], [0], [1], [0, 0, 1, 1], [], []>} : vector<8x32xbf16>, vector<32x32xbf16>, vector<8x32xf32> -> vector<8x32xf32>
    %254 = arith.addf %250, %253 : vector<8x32xf32>
    %c19 = arith.constant 19 : index
    %c0_125 = arith.constant 0 : index
    %c0_126 = arith.constant 0 : index
    %255 = vector.load %arg2[%c19, %c0_125, %c0_126] : memref<35x32x32xbf16, #tpu.memory_space<vmem>>, vector<1x32x32xbf16>
    %256 = vector.shape_cast %255 : vector<1x32x32xbf16> to vector<32x32xbf16>
    %cst_127 = arith.constant dense<0.000000e+00> : vector<8x32xf32>
    %257 = tpu.matmul %78, %256, %cst_127 {dimension_numbers = #tpu.dot_dimension_numbers<[1], [0], [0], [1], [0, 0, 1, 1], [], []>} : vector<8x32xbf16>, vector<32x32xbf16>, vector<8x32xf32> -> vector<8x32xf32>
    %258 = arith.addf %254, %257 : vector<8x32xf32>
    %c20 = arith.constant 20 : index
    %c0_128 = arith.constant 0 : index
    %c0_129 = arith.constant 0 : index
    %259 = vector.load %arg2[%c20, %c0_128, %c0_129] : memref<35x32x32xbf16, #tpu.memory_space<vmem>>, vector<1x32x32xbf16>
    %260 = vector.shape_cast %259 : vector<1x32x32xbf16> to vector<32x32xbf16>
    %cst_130 = arith.constant dense<0.000000e+00> : vector<8x32xf32>
    %261 = tpu.matmul %93, %260, %cst_130 {dimension_numbers = #tpu.dot_dimension_numbers<[1], [0], [0], [1], [0, 0, 1, 1], [], []>} : vector<8x32xbf16>, vector<32x32xbf16>, vector<8x32xf32> -> vector<8x32xf32>
    %262 = arith.addf %258, %261 : vector<8x32xf32>
    %c21 = arith.constant 21 : index
    %c0_131 = arith.constant 0 : index
    %c0_132 = arith.constant 0 : index
    %263 = vector.load %arg2[%c21, %c0_131, %c0_132] : memref<35x32x32xbf16, #tpu.memory_space<vmem>>, vector<1x32x32xbf16>
    %264 = vector.shape_cast %263 : vector<1x32x32xbf16> to vector<32x32xbf16>
    %cst_133 = arith.constant dense<0.000000e+00> : vector<8x32xf32>
    %265 = tpu.matmul %108, %264, %cst_133 {dimension_numbers = #tpu.dot_dimension_numbers<[1], [0], [0], [1], [0, 0, 1, 1], [], []>} : vector<8x32xbf16>, vector<32x32xbf16>, vector<8x32xf32> -> vector<8x32xf32>
    %266 = arith.addf %262, %265 : vector<8x32xf32>
    %c22 = arith.constant 22 : index
    %c0_134 = arith.constant 0 : index
    %c0_135 = arith.constant 0 : index
    %267 = vector.load %arg2[%c22, %c0_134, %c0_135] : memref<35x32x32xbf16, #tpu.memory_space<vmem>>, vector<1x32x32xbf16>
    %268 = vector.shape_cast %267 : vector<1x32x32xbf16> to vector<32x32xbf16>
    %cst_136 = arith.constant dense<0.000000e+00> : vector<8x32xf32>
    %269 = tpu.matmul %123, %268, %cst_136 {dimension_numbers = #tpu.dot_dimension_numbers<[1], [0], [0], [1], [0, 0, 1, 1], [], []>} : vector<8x32xbf16>, vector<32x32xbf16>, vector<8x32xf32> -> vector<8x32xf32>
    %270 = arith.addf %266, %269 : vector<8x32xf32>
    %c23 = arith.constant 23 : index
    %c0_137 = arith.constant 0 : index
    %c0_138 = arith.constant 0 : index
    %271 = vector.load %arg2[%c23, %c0_137, %c0_138] : memref<35x32x32xbf16, #tpu.memory_space<vmem>>, vector<1x32x32xbf16>
    %272 = vector.shape_cast %271 : vector<1x32x32xbf16> to vector<32x32xbf16>
    %cst_139 = arith.constant dense<0.000000e+00> : vector<8x32xf32>
    %273 = tpu.matmul %138, %272, %cst_139 {dimension_numbers = #tpu.dot_dimension_numbers<[1], [0], [0], [1], [0, 0, 1, 1], [], []>} : vector<8x32xbf16>, vector<32x32xbf16>, vector<8x32xf32> -> vector<8x32xf32>
    %274 = arith.addf %270, %273 : vector<8x32xf32>
    %c24 = arith.constant 24 : index
    %c0_140 = arith.constant 0 : index
    %c0_141 = arith.constant 0 : index
    %275 = vector.load %arg2[%c24, %c0_140, %c0_141] : memref<35x32x32xbf16, #tpu.memory_space<vmem>>, vector<1x32x32xbf16>
    %276 = vector.shape_cast %275 : vector<1x32x32xbf16> to vector<32x32xbf16>
    %cst_142 = arith.constant dense<0.000000e+00> : vector<8x32xf32>
    %277 = tpu.matmul %17, %276, %cst_142 {dimension_numbers = #tpu.dot_dimension_numbers<[1], [0], [0], [1], [0, 0, 1, 1], [], []>} : vector<8x32xbf16>, vector<32x32xbf16>, vector<8x32xf32> -> vector<8x32xf32>
    %278 = arith.addf %178, %277 : vector<8x32xf32>
    %c25 = arith.constant 25 : index
    %c0_143 = arith.constant 0 : index
    %c0_144 = arith.constant 0 : index
    %279 = vector.load %arg2[%c25, %c0_143, %c0_144] : memref<35x32x32xbf16, #tpu.memory_space<vmem>>, vector<1x32x32xbf16>
    %280 = vector.shape_cast %279 : vector<1x32x32xbf16> to vector<32x32xbf16>
    %cst_145 = arith.constant dense<0.000000e+00> : vector<8x32xf32>
    %281 = tpu.matmul %32, %280, %cst_145 {dimension_numbers = #tpu.dot_dimension_numbers<[1], [0], [0], [1], [0, 0, 1, 1], [], []>} : vector<8x32xbf16>, vector<32x32xbf16>, vector<8x32xf32> -> vector<8x32xf32>
    %282 = arith.addf %278, %281 : vector<8x32xf32>
    %c26 = arith.constant 26 : index
    %c0_146 = arith.constant 0 : index
    %c0_147 = arith.constant 0 : index
    %283 = vector.load %arg2[%c26, %c0_146, %c0_147] : memref<35x32x32xbf16, #tpu.memory_space<vmem>>, vector<1x32x32xbf16>
    %284 = vector.shape_cast %283 : vector<1x32x32xbf16> to vector<32x32xbf16>
    %cst_148 = arith.constant dense<0.000000e+00> : vector<8x32xf32>
    %285 = tpu.matmul %47, %284, %cst_148 {dimension_numbers = #tpu.dot_dimension_numbers<[1], [0], [0], [1], [0, 0, 1, 1], [], []>} : vector<8x32xbf16>, vector<32x32xbf16>, vector<8x32xf32> -> vector<8x32xf32>
    %286 = arith.addf %282, %285 : vector<8x32xf32>
    %c27 = arith.constant 27 : index
    %c0_149 = arith.constant 0 : index
    %c0_150 = arith.constant 0 : index
    %287 = vector.load %arg2[%c27, %c0_149, %c0_150] : memref<35x32x32xbf16, #tpu.memory_space<vmem>>, vector<1x32x32xbf16>
    %288 = vector.shape_cast %287 : vector<1x32x32xbf16> to vector<32x32xbf16>
    %cst_151 = arith.constant dense<0.000000e+00> : vector<8x32xf32>
    %289 = tpu.matmul %62, %288, %cst_151 {dimension_numbers = #tpu.dot_dimension_numbers<[1], [0], [0], [1], [0, 0, 1, 1], [], []>} : vector<8x32xbf16>, vector<32x32xbf16>, vector<8x32xf32> -> vector<8x32xf32>
    %290 = arith.addf %286, %289 : vector<8x32xf32>
    %c28 = arith.constant 28 : index
    %c0_152 = arith.constant 0 : index
    %c0_153 = arith.constant 0 : index
    %291 = vector.load %arg2[%c28, %c0_152, %c0_153] : memref<35x32x32xbf16, #tpu.memory_space<vmem>>, vector<1x32x32xbf16>
    %292 = vector.shape_cast %291 : vector<1x32x32xbf16> to vector<32x32xbf16>
    %cst_154 = arith.constant dense<0.000000e+00> : vector<8x32xf32>
    %293 = tpu.matmul %77, %292, %cst_154 {dimension_numbers = #tpu.dot_dimension_numbers<[1], [0], [0], [1], [0, 0, 1, 1], [], []>} : vector<8x32xbf16>, vector<32x32xbf16>, vector<8x32xf32> -> vector<8x32xf32>
    %294 = arith.addf %290, %293 : vector<8x32xf32>
    %c29 = arith.constant 29 : index
    %c0_155 = arith.constant 0 : index
    %c0_156 = arith.constant 0 : index
    %295 = vector.load %arg2[%c29, %c0_155, %c0_156] : memref<35x32x32xbf16, #tpu.memory_space<vmem>>, vector<1x32x32xbf16>
    %296 = vector.shape_cast %295 : vector<1x32x32xbf16> to vector<32x32xbf16>
    %cst_157 = arith.constant dense<0.000000e+00> : vector<8x32xf32>
    %297 = tpu.matmul %78, %296, %cst_157 {dimension_numbers = #tpu.dot_dimension_numbers<[1], [0], [0], [1], [0, 0, 1, 1], [], []>} : vector<8x32xbf16>, vector<32x32xbf16>, vector<8x32xf32> -> vector<8x32xf32>
    %298 = arith.addf %294, %297 : vector<8x32xf32>
    %c30 = arith.constant 30 : index
    %c0_158 = arith.constant 0 : index
    %c0_159 = arith.constant 0 : index
    %299 = vector.load %arg2[%c30, %c0_158, %c0_159] : memref<35x32x32xbf16, #tpu.memory_space<vmem>>, vector<1x32x32xbf16>
    %300 = vector.shape_cast %299 : vector<1x32x32xbf16> to vector<32x32xbf16>
    %cst_160 = arith.constant dense<0.000000e+00> : vector<8x32xf32>
    %301 = tpu.matmul %93, %300, %cst_160 {dimension_numbers = #tpu.dot_dimension_numbers<[1], [0], [0], [1], [0, 0, 1, 1], [], []>} : vector<8x32xbf16>, vector<32x32xbf16>, vector<8x32xf32> -> vector<8x32xf32>
    %302 = arith.addf %298, %301 : vector<8x32xf32>
    %c31 = arith.constant 31 : index
    %c0_161 = arith.constant 0 : index
    %c0_162 = arith.constant 0 : index
    %303 = vector.load %arg2[%c31, %c0_161, %c0_162] : memref<35x32x32xbf16, #tpu.memory_space<vmem>>, vector<1x32x32xbf16>
    %304 = vector.shape_cast %303 : vector<1x32x32xbf16> to vector<32x32xbf16>
    %cst_163 = arith.constant dense<0.000000e+00> : vector<8x32xf32>
    %305 = tpu.matmul %108, %304, %cst_163 {dimension_numbers = #tpu.dot_dimension_numbers<[1], [0], [0], [1], [0, 0, 1, 1], [], []>} : vector<8x32xbf16>, vector<32x32xbf16>, vector<8x32xf32> -> vector<8x32xf32>
    %306 = arith.addf %302, %305 : vector<8x32xf32>
    %c32 = arith.constant 32 : index
    %c0_164 = arith.constant 0 : index
    %c0_165 = arith.constant 0 : index
    %307 = vector.load %arg2[%c32, %c0_164, %c0_165] : memref<35x32x32xbf16, #tpu.memory_space<vmem>>, vector<1x32x32xbf16>
    %308 = vector.shape_cast %307 : vector<1x32x32xbf16> to vector<32x32xbf16>
    %cst_166 = arith.constant dense<0.000000e+00> : vector<8x32xf32>
    %309 = tpu.matmul %123, %308, %cst_166 {dimension_numbers = #tpu.dot_dimension_numbers<[1], [0], [0], [1], [0, 0, 1, 1], [], []>} : vector<8x32xbf16>, vector<32x32xbf16>, vector<8x32xf32> -> vector<8x32xf32>
    %310 = arith.addf %306, %309 : vector<8x32xf32>
    %c33 = arith.constant 33 : index
    %c0_167 = arith.constant 0 : index
    %c0_168 = arith.constant 0 : index
    %311 = vector.load %arg2[%c33, %c0_167, %c0_168] : memref<35x32x32xbf16, #tpu.memory_space<vmem>>, vector<1x32x32xbf16>
    %312 = vector.shape_cast %311 : vector<1x32x32xbf16> to vector<32x32xbf16>
    %cst_169 = arith.constant dense<0.000000e+00> : vector<8x32xf32>
    %313 = tpu.matmul %138, %312, %cst_169 {dimension_numbers = #tpu.dot_dimension_numbers<[1], [0], [0], [1], [0, 0, 1, 1], [], []>} : vector<8x32xbf16>, vector<32x32xbf16>, vector<8x32xf32> -> vector<8x32xf32>
    %314 = arith.addf %310, %313 : vector<8x32xf32>
    %c34 = arith.constant 34 : index
    %c0_170 = arith.constant 0 : index
    %c0_171 = arith.constant 0 : index
    %315 = vector.load %arg2[%c34, %c0_170, %c0_171] : memref<35x32x32xbf16, #tpu.memory_space<vmem>>, vector<1x32x32xbf16>
    %316 = vector.shape_cast %315 : vector<1x32x32xbf16> to vector<32x32xbf16>
    %cst_172 = arith.constant dense<0.000000e+00> : vector<8x32xf32>
    %317 = tpu.matmul %153, %316, %cst_172 {dimension_numbers = #tpu.dot_dimension_numbers<[1], [0], [0], [1], [0, 0, 1, 1], [], []>} : vector<8x32xbf16>, vector<32x32xbf16>, vector<8x32xf32> -> vector<8x32xf32>
    %318 = arith.addf %314, %317 : vector<8x32xf32>
    %cst_173 = arith.constant 0.000000e+00 : f32
    %319 = vector.broadcast %cst_173 : f32 to vector<8x32xf32>
    %320 = arith.cmpf ogt, %190, %319 : vector<8x32xf32>
    %cst_174 = arith.constant 0.00999999977 : f32
    %321 = vector.broadcast %cst_174 : f32 to vector<8x32xf32>
    %322 = arith.mulf %321, %190 : vector<8x32xf32>
    %323 = arith.select %320, %190, %322 : vector<8x32xi1>, vector<8x32xf32>
    %324 = arith.truncf %323 : vector<8x32xf32> to vector<8x32xbf16>
    %cst_175 = arith.constant 0.000000e+00 : f32
    %325 = vector.broadcast %cst_175 : f32 to vector<8x32xf32>
    %326 = arith.cmpf ogt, %210, %325 : vector<8x32xf32>
    %cst_176 = arith.constant 0.00999999977 : f32
    %327 = vector.broadcast %cst_176 : f32 to vector<8x32xf32>
    %328 = arith.mulf %327, %210 : vector<8x32xf32>
    %329 = arith.select %326, %210, %328 : vector<8x32xi1>, vector<8x32xf32>
    %330 = arith.truncf %329 : vector<8x32xf32> to vector<8x32xbf16>
    %cst_177 = arith.constant 0.000000e+00 : f32
    %331 = vector.broadcast %cst_177 : f32 to vector<8x32xf32>
    %332 = arith.cmpf ogt, %238, %331 : vector<8x32xf32>
    %cst_178 = arith.constant 0.00999999977 : f32
    %333 = vector.broadcast %cst_178 : f32 to vector<8x32xf32>
    %334 = arith.mulf %333, %238 : vector<8x32xf32>
    %335 = arith.select %332, %238, %334 : vector<8x32xi1>, vector<8x32xf32>
    %336 = arith.truncf %335 : vector<8x32xf32> to vector<8x32xbf16>
    %cst_179 = arith.constant 0.000000e+00 : f32
    %337 = vector.broadcast %cst_179 : f32 to vector<8x32xf32>
    %338 = arith.cmpf ogt, %274, %337 : vector<8x32xf32>
    %cst_180 = arith.constant 0.00999999977 : f32
    %339 = vector.broadcast %cst_180 : f32 to vector<8x32xf32>
    %340 = arith.mulf %339, %274 : vector<8x32xf32>
    %341 = arith.select %338, %274, %340 : vector<8x32xi1>, vector<8x32xf32>
    %342 = arith.truncf %341 : vector<8x32xf32> to vector<8x32xbf16>
    %cst_181 = arith.constant 0.000000e+00 : f32
    %343 = vector.broadcast %cst_181 : f32 to vector<8x32xf32>
    %344 = arith.cmpf ogt, %318, %343 : vector<8x32xf32>
    %cst_182 = arith.constant 0.00999999977 : f32
    %345 = vector.broadcast %cst_182 : f32 to vector<8x32xf32>
    %346 = arith.mulf %345, %318 : vector<8x32xf32>
    %347 = arith.select %344, %318, %346 : vector<8x32xi1>, vector<8x32xf32>
    %348 = arith.truncf %347 : vector<8x32xf32> to vector<8x32xbf16>
    %cst_183 = arith.constant 0.000000e+00 : f32
    %349 = vector.broadcast %cst_183 : f32 to vector<8x32xf32>
    %c0_184 = arith.constant 0 : index
    %c0_185 = arith.constant 0 : index
    %350 = vector.load %arg5[%c0_184, %c0_185] : memref<1x32xf32, #tpu.memory_space<vmem>>, vector<1x32xf32>
    %351 = vector.broadcast %350 : vector<1x32xf32> to vector<8x32xf32>
    %352 = arith.addf %349, %351 : vector<8x32xf32>
    %cst_186 = arith.constant 0.000000e+00 : f32
    %353 = vector.broadcast %cst_186 : f32 to vector<8x32xf32>
    %c0_187 = arith.constant 0 : index
    %c0_188 = arith.constant 0 : index
    %c0_189 = arith.constant 0 : index
    %354 = vector.load %arg4[%c0_187, %c0_188, %c0_189] : memref<15x32x32xbf16, #tpu.memory_space<vmem>>, vector<1x32x32xbf16>
    %355 = vector.shape_cast %354 : vector<1x32x32xbf16> to vector<32x32xbf16>
    %cst_190 = arith.constant dense<0.000000e+00> : vector<8x32xf32>
    %356 = tpu.matmul %324, %355, %cst_190 {dimension_numbers = #tpu.dot_dimension_numbers<[1], [0], [0], [1], [0, 0, 1, 1], [], []>} : vector<8x32xbf16>, vector<32x32xbf16>, vector<8x32xf32> -> vector<8x32xf32>
    %357 = arith.addf %353, %356 : vector<8x32xf32>
    %c1_191 = arith.constant 1 : index
    %c0_192 = arith.constant 0 : index
    %c0_193 = arith.constant 0 : index
    %358 = vector.load %arg4[%c1_191, %c0_192, %c0_193] : memref<15x32x32xbf16, #tpu.memory_space<vmem>>, vector<1x32x32xbf16>
    %359 = vector.shape_cast %358 : vector<1x32x32xbf16> to vector<32x32xbf16>
    %cst_194 = arith.constant dense<0.000000e+00> : vector<8x32xf32>
    %360 = tpu.matmul %330, %359, %cst_194 {dimension_numbers = #tpu.dot_dimension_numbers<[1], [0], [0], [1], [0, 0, 1, 1], [], []>} : vector<8x32xbf16>, vector<32x32xbf16>, vector<8x32xf32> -> vector<8x32xf32>
    %361 = arith.addf %357, %360 : vector<8x32xf32>
    %c2_195 = arith.constant 2 : index
    %c0_196 = arith.constant 0 : index
    %c0_197 = arith.constant 0 : index
    %362 = vector.load %arg4[%c2_195, %c0_196, %c0_197] : memref<15x32x32xbf16, #tpu.memory_space<vmem>>, vector<1x32x32xbf16>
    %363 = vector.shape_cast %362 : vector<1x32x32xbf16> to vector<32x32xbf16>
    %cst_198 = arith.constant dense<0.000000e+00> : vector<8x32xf32>
    %364 = tpu.matmul %336, %363, %cst_198 {dimension_numbers = #tpu.dot_dimension_numbers<[1], [0], [0], [1], [0, 0, 1, 1], [], []>} : vector<8x32xbf16>, vector<32x32xbf16>, vector<8x32xf32> -> vector<8x32xf32>
    %365 = arith.addf %361, %364 : vector<8x32xf32>
    %c3_199 = arith.constant 3 : index
    %c0_200 = arith.constant 0 : index
    %c0_201 = arith.constant 0 : index
    %366 = vector.load %arg4[%c3_199, %c0_200, %c0_201] : memref<15x32x32xbf16, #tpu.memory_space<vmem>>, vector<1x32x32xbf16>
    %367 = vector.shape_cast %366 : vector<1x32x32xbf16> to vector<32x32xbf16>
    %cst_202 = arith.constant dense<0.000000e+00> : vector<8x32xf32>
    %368 = tpu.matmul %342, %367, %cst_202 {dimension_numbers = #tpu.dot_dimension_numbers<[1], [0], [0], [1], [0, 0, 1, 1], [], []>} : vector<8x32xbf16>, vector<32x32xbf16>, vector<8x32xf32> -> vector<8x32xf32>
    %369 = arith.addf %365, %368 : vector<8x32xf32>
    %c4_203 = arith.constant 4 : index
    %c0_204 = arith.constant 0 : index
    %c0_205 = arith.constant 0 : index
    %370 = vector.load %arg4[%c4_203, %c0_204, %c0_205] : memref<15x32x32xbf16, #tpu.memory_space<vmem>>, vector<1x32x32xbf16>
    %371 = vector.shape_cast %370 : vector<1x32x32xbf16> to vector<32x32xbf16>
    %cst_206 = arith.constant dense<0.000000e+00> : vector<8x32xf32>
    %372 = tpu.matmul %348, %371, %cst_206 {dimension_numbers = #tpu.dot_dimension_numbers<[1], [0], [0], [1], [0, 0, 1, 1], [], []>} : vector<8x32xbf16>, vector<32x32xbf16>, vector<8x32xf32> -> vector<8x32xf32>
    %373 = arith.addf %369, %372 : vector<8x32xf32>
    %c1_i32_207 = arith.constant 1 : i32
    %374 = tpu.dynamic_rotate %373 by %c1_i32_207 dim 0 : vector<8x32xf32>, i32 -> vector<8x32xf32>
    %c-1_i32_208 = arith.constant -1 : i32
    %375 = vector.broadcast %c-1_i32_208 : i32 to vector<8x1xi32>
    %376 = arith.addi %2, %375 : vector<8x1xi32>
    %c0_i32_209 = arith.constant 0 : i32
    %377 = vector.broadcast %c0_i32_209 : i32 to vector<8x1xi32>
    %378 = arith.cmpi sge, %376, %377 : vector<8x1xi32>
    %c-1_i32_210 = arith.constant -1 : i32
    %379 = vector.broadcast %c-1_i32_210 : i32 to vector<8x1xi32>
    %380 = arith.addi %2, %379 : vector<8x1xi32>
    %c8_i32_211 = arith.constant 8 : i32
    %381 = vector.broadcast %c8_i32_211 : i32 to vector<8x1xi32>
    %382 = arith.cmpi slt, %380, %381 : vector<8x1xi32>
    %383 = arith.andi %378, %382 : vector<8x1xi1>
    %cst_212 = arith.constant 0.000000e+00 : f32
    %384 = vector.broadcast %cst_212 : f32 to vector<8x32xf32>
    %385 = vector.shape_cast %383 : vector<8x1xi1> to vector<8x1xi1>
    %386 = vector.broadcast %385 : vector<8x1xi1> to vector<8x32xi1>
    %387 = arith.select %386, %374, %384 : vector<8x32xi1>, vector<8x32xf32>
    %388 = arith.addf %352, %387 : vector<8x32xf32>
    %cst_213 = arith.constant 0.000000e+00 : f32
    %389 = vector.broadcast %cst_213 : f32 to vector<8x32xf32>
    %c5_214 = arith.constant 5 : index
    %c0_215 = arith.constant 0 : index
    %c0_216 = arith.constant 0 : index
    %390 = vector.load %arg4[%c5_214, %c0_215, %c0_216] : memref<15x32x32xbf16, #tpu.memory_space<vmem>>, vector<1x32x32xbf16>
    %391 = vector.shape_cast %390 : vector<1x32x32xbf16> to vector<32x32xbf16>
    %cst_217 = arith.constant dense<0.000000e+00> : vector<8x32xf32>
    %392 = tpu.matmul %324, %391, %cst_217 {dimension_numbers = #tpu.dot_dimension_numbers<[1], [0], [0], [1], [0, 0, 1, 1], [], []>} : vector<8x32xbf16>, vector<32x32xbf16>, vector<8x32xf32> -> vector<8x32xf32>
    %393 = arith.addf %389, %392 : vector<8x32xf32>
    %c6_218 = arith.constant 6 : index
    %c0_219 = arith.constant 0 : index
    %c0_220 = arith.constant 0 : index
    %394 = vector.load %arg4[%c6_218, %c0_219, %c0_220] : memref<15x32x32xbf16, #tpu.memory_space<vmem>>, vector<1x32x32xbf16>
    %395 = vector.shape_cast %394 : vector<1x32x32xbf16> to vector<32x32xbf16>
    %cst_221 = arith.constant dense<0.000000e+00> : vector<8x32xf32>
    %396 = tpu.matmul %330, %395, %cst_221 {dimension_numbers = #tpu.dot_dimension_numbers<[1], [0], [0], [1], [0, 0, 1, 1], [], []>} : vector<8x32xbf16>, vector<32x32xbf16>, vector<8x32xf32> -> vector<8x32xf32>
    %397 = arith.addf %393, %396 : vector<8x32xf32>
    %c7_222 = arith.constant 7 : index
    %c0_223 = arith.constant 0 : index
    %c0_224 = arith.constant 0 : index
    %398 = vector.load %arg4[%c7_222, %c0_223, %c0_224] : memref<15x32x32xbf16, #tpu.memory_space<vmem>>, vector<1x32x32xbf16>
    %399 = vector.shape_cast %398 : vector<1x32x32xbf16> to vector<32x32xbf16>
    %cst_225 = arith.constant dense<0.000000e+00> : vector<8x32xf32>
    %400 = tpu.matmul %336, %399, %cst_225 {dimension_numbers = #tpu.dot_dimension_numbers<[1], [0], [0], [1], [0, 0, 1, 1], [], []>} : vector<8x32xbf16>, vector<32x32xbf16>, vector<8x32xf32> -> vector<8x32xf32>
    %401 = arith.addf %397, %400 : vector<8x32xf32>
    %c8_226 = arith.constant 8 : index
    %c0_227 = arith.constant 0 : index
    %c0_228 = arith.constant 0 : index
    %402 = vector.load %arg4[%c8_226, %c0_227, %c0_228] : memref<15x32x32xbf16, #tpu.memory_space<vmem>>, vector<1x32x32xbf16>
    %403 = vector.shape_cast %402 : vector<1x32x32xbf16> to vector<32x32xbf16>
    %cst_229 = arith.constant dense<0.000000e+00> : vector<8x32xf32>
    %404 = tpu.matmul %342, %403, %cst_229 {dimension_numbers = #tpu.dot_dimension_numbers<[1], [0], [0], [1], [0, 0, 1, 1], [], []>} : vector<8x32xbf16>, vector<32x32xbf16>, vector<8x32xf32> -> vector<8x32xf32>
    %405 = arith.addf %401, %404 : vector<8x32xf32>
    %c9_230 = arith.constant 9 : index
    %c0_231 = arith.constant 0 : index
    %c0_232 = arith.constant 0 : index
    %406 = vector.load %arg4[%c9_230, %c0_231, %c0_232] : memref<15x32x32xbf16, #tpu.memory_space<vmem>>, vector<1x32x32xbf16>
    %407 = vector.shape_cast %406 : vector<1x32x32xbf16> to vector<32x32xbf16>
    %cst_233 = arith.constant dense<0.000000e+00> : vector<8x32xf32>
    %408 = tpu.matmul %348, %407, %cst_233 {dimension_numbers = #tpu.dot_dimension_numbers<[1], [0], [0], [1], [0, 0, 1, 1], [], []>} : vector<8x32xbf16>, vector<32x32xbf16>, vector<8x32xf32> -> vector<8x32xf32>
    %409 = arith.addf %405, %408 : vector<8x32xf32>
    %410 = arith.addf %388, %409 : vector<8x32xf32>
    %cst_234 = arith.constant 0.000000e+00 : f32
    %411 = vector.broadcast %cst_234 : f32 to vector<8x32xf32>
    %c10_235 = arith.constant 10 : index
    %c0_236 = arith.constant 0 : index
    %c0_237 = arith.constant 0 : index
    %412 = vector.load %arg4[%c10_235, %c0_236, %c0_237] : memref<15x32x32xbf16, #tpu.memory_space<vmem>>, vector<1x32x32xbf16>
    %413 = vector.shape_cast %412 : vector<1x32x32xbf16> to vector<32x32xbf16>
    %cst_238 = arith.constant dense<0.000000e+00> : vector<8x32xf32>
    %414 = tpu.matmul %324, %413, %cst_238 {dimension_numbers = #tpu.dot_dimension_numbers<[1], [0], [0], [1], [0, 0, 1, 1], [], []>} : vector<8x32xbf16>, vector<32x32xbf16>, vector<8x32xf32> -> vector<8x32xf32>
    %415 = arith.addf %411, %414 : vector<8x32xf32>
    %c11_239 = arith.constant 11 : index
    %c0_240 = arith.constant 0 : index
    %c0_241 = arith.constant 0 : index
    %416 = vector.load %arg4[%c11_239, %c0_240, %c0_241] : memref<15x32x32xbf16, #tpu.memory_space<vmem>>, vector<1x32x32xbf16>
    %417 = vector.shape_cast %416 : vector<1x32x32xbf16> to vector<32x32xbf16>
    %cst_242 = arith.constant dense<0.000000e+00> : vector<8x32xf32>
    %418 = tpu.matmul %330, %417, %cst_242 {dimension_numbers = #tpu.dot_dimension_numbers<[1], [0], [0], [1], [0, 0, 1, 1], [], []>} : vector<8x32xbf16>, vector<32x32xbf16>, vector<8x32xf32> -> vector<8x32xf32>
    %419 = arith.addf %415, %418 : vector<8x32xf32>
    %c12_243 = arith.constant 12 : index
    %c0_244 = arith.constant 0 : index
    %c0_245 = arith.constant 0 : index
    %420 = vector.load %arg4[%c12_243, %c0_244, %c0_245] : memref<15x32x32xbf16, #tpu.memory_space<vmem>>, vector<1x32x32xbf16>
    %421 = vector.shape_cast %420 : vector<1x32x32xbf16> to vector<32x32xbf16>
    %cst_246 = arith.constant dense<0.000000e+00> : vector<8x32xf32>
    %422 = tpu.matmul %336, %421, %cst_246 {dimension_numbers = #tpu.dot_dimension_numbers<[1], [0], [0], [1], [0, 0, 1, 1], [], []>} : vector<8x32xbf16>, vector<32x32xbf16>, vector<8x32xf32> -> vector<8x32xf32>
    %423 = arith.addf %419, %422 : vector<8x32xf32>
    %c13_247 = arith.constant 13 : index
    %c0_248 = arith.constant 0 : index
    %c0_249 = arith.constant 0 : index
    %424 = vector.load %arg4[%c13_247, %c0_248, %c0_249] : memref<15x32x32xbf16, #tpu.memory_space<vmem>>, vector<1x32x32xbf16>
    %425 = vector.shape_cast %424 : vector<1x32x32xbf16> to vector<32x32xbf16>
    %cst_250 = arith.constant dense<0.000000e+00> : vector<8x32xf32>
    %426 = tpu.matmul %342, %425, %cst_250 {dimension_numbers = #tpu.dot_dimension_numbers<[1], [0], [0], [1], [0, 0, 1, 1], [], []>} : vector<8x32xbf16>, vector<32x32xbf16>, vector<8x32xf32> -> vector<8x32xf32>
    %427 = arith.addf %423, %426 : vector<8x32xf32>
    %c14_251 = arith.constant 14 : index
    %c0_252 = arith.constant 0 : index
    %c0_253 = arith.constant 0 : index
    %428 = vector.load %arg4[%c14_251, %c0_252, %c0_253] : memref<15x32x32xbf16, #tpu.memory_space<vmem>>, vector<1x32x32xbf16>
    %429 = vector.shape_cast %428 : vector<1x32x32xbf16> to vector<32x32xbf16>
    %cst_254 = arith.constant dense<0.000000e+00> : vector<8x32xf32>
    %430 = tpu.matmul %348, %429, %cst_254 {dimension_numbers = #tpu.dot_dimension_numbers<[1], [0], [0], [1], [0, 0, 1, 1], [], []>} : vector<8x32xbf16>, vector<32x32xbf16>, vector<8x32xf32> -> vector<8x32xf32>
    %431 = arith.addf %427, %430 : vector<8x32xf32>
    %c7_i32_255 = arith.constant 7 : i32
    %432 = tpu.dynamic_rotate %431 by %c7_i32_255 dim 0 : vector<8x32xf32>, i32 -> vector<8x32xf32>
    %c1_i32_256 = arith.constant 1 : i32
    %433 = vector.broadcast %c1_i32_256 : i32 to vector<8x1xi32>
    %434 = arith.addi %2, %433 : vector<8x1xi32>
    %c0_i32_257 = arith.constant 0 : i32
    %435 = vector.broadcast %c0_i32_257 : i32 to vector<8x1xi32>
    %436 = arith.cmpi sge, %434, %435 : vector<8x1xi32>
    %c1_i32_258 = arith.constant 1 : i32
    %437 = vector.broadcast %c1_i32_258 : i32 to vector<8x1xi32>
    %438 = arith.addi %2, %437 : vector<8x1xi32>
    %c8_i32_259 = arith.constant 8 : i32
    %439 = vector.broadcast %c8_i32_259 : i32 to vector<8x1xi32>
    %440 = arith.cmpi slt, %438, %439 : vector<8x1xi32>
    %441 = arith.andi %436, %440 : vector<8x1xi1>
    %cst_260 = arith.constant 0.000000e+00 : f32
    %442 = vector.broadcast %cst_260 : f32 to vector<8x32xf32>
    %443 = vector.shape_cast %441 : vector<8x1xi1> to vector<8x1xi1>
    %444 = vector.broadcast %443 : vector<8x1xi1> to vector<8x32xi1>
    %445 = arith.select %444, %432, %442 : vector<8x32xi1>, vector<8x32xf32>
    %446 = arith.addf %410, %445 : vector<8x32xf32>
    %cst_261 = arith.constant 0.000000e+00 : f32
    %447 = vector.broadcast %cst_261 : f32 to vector<8x32xf32>
    %448 = arith.cmpf ogt, %446, %447 : vector<8x32xf32>
    %cst_262 = arith.constant 0.00999999977 : f32
    %449 = vector.broadcast %cst_262 : f32 to vector<8x32xf32>
    %450 = arith.mulf %449, %446 : vector<8x32xf32>
    %451 = arith.select %448, %446, %450 : vector<8x32xi1>, vector<8x32xf32>
    %452 = arith.addf %451, %1 : vector<8x32xf32>
    %c0_263 = arith.constant 0 : index
    %c0_264 = arith.constant 0 : index
    %453 = vector.load %arg6[%c0_263, %c0_264] : memref<1x32xf32, #tpu.memory_space<vmem>>, vector<1x32xf32>
    %c0_265 = arith.constant 0 : index
    %c0_266 = arith.constant 0 : index
    %454 = vector.load %arg7[%c0_265, %c0_266] : memref<1x32xf32, #tpu.memory_space<vmem>>, vector<1x32xf32>
    %cst_267 = arith.constant dense<0.000000e+00> : vector<8xf32>
    %455 = vector.multi_reduction <add>, %452, %cst_267 [1] : vector<8x32xf32> to vector<8xf32>
    %456 = vector.shape_cast %455 : vector<8xf32> to vector<8x1xf32>
    %cst_268 = arith.constant 3.200000e+01 : f32
    %457 = vector.broadcast %cst_268 : f32 to vector<8x1xf32>
    %458 = arith.divf %456, %457 : vector<8x1xf32>
    %459 = vector.broadcast %458 : vector<8x1xf32> to vector<8x32xf32>
    %460 = arith.subf %452, %459 : vector<8x32xf32>
    %461 = arith.mulf %460, %460 : vector<8x32xf32>
    %cst_269 = arith.constant dense<0.000000e+00> : vector<8xf32>
    %462 = vector.multi_reduction <add>, %461, %cst_269 [1] : vector<8x32xf32> to vector<8xf32>
    %463 = vector.shape_cast %462 : vector<8xf32> to vector<8x1xf32>
    %cst_270 = arith.constant 3.200000e+01 : f32
    %464 = vector.broadcast %cst_270 : f32 to vector<8x1xf32>
    %465 = arith.divf %463, %464 : vector<8x1xf32>
    %466 = vector.broadcast %458 : vector<8x1xf32> to vector<8x32xf32>
    %467 = arith.subf %452, %466 : vector<8x32xf32>
    %cst_271 = arith.constant 9.99999974E-6 : f32
    %468 = vector.broadcast %cst_271 : f32 to vector<8x1xf32>
    %469 = arith.addf %465, %468 : vector<8x1xf32>
    %470 = math.rsqrt %469 : vector<8x1xf32>
    %471 = vector.broadcast %470 : vector<8x1xf32> to vector<8x32xf32>
    %472 = arith.mulf %467, %471 : vector<8x32xf32>
    %473 = vector.broadcast %453 : vector<1x32xf32> to vector<8x32xf32>
    %474 = arith.mulf %472, %473 : vector<8x32xf32>
    %475 = vector.broadcast %454 : vector<1x32xf32> to vector<8x32xf32>
    %476 = arith.addf %474, %475 : vector<8x32xf32>
    %c0_272 = arith.constant 0 : index
    %c0_273 = arith.constant 0 : index
    %c0_274 = arith.constant 0 : index
    %477 = vector.load %arg8[%c0_272, %c0_273, %c0_274] : memref<1x8x32xf32, #tpu.memory_space<vmem>>, vector<1x8x32xf32>
    %478 = vector.shape_cast %477 : vector<1x8x32xf32> to vector<8x32xf32>
    %479 = vector.shape_cast %476 : vector<8x32xf32> to vector<1x8x32xf32>
    tpu.vector_store %arg8[%c0_272, %c0_273, %c0_274], %479 {strides = array<i32>} : memref<1x8x32xf32, #tpu.memory_space<vmem>>, vector<1x8x32xf32>,
    return
  }
  func.func @transform_0(%arg0: i32) -> (i32, i32, i32) {
    %c0_i32 = arith.constant 0 : i32
    %c0_i32_0 = arith.constant 0 : i32
    %c0_i32_1 = arith.constant 0 : i32
    return %arg0, %c0_i32, %c0_i32_0 : i32, i32, i32
  }
  func.func @transform_1(%arg0: i32) -> (i32, i32, i32) {
    %c0_i32 = arith.constant 0 : i32
    %c0_i32_0 = arith.constant 0 : i32
    %c0_i32_1 = arith.constant 0 : i32
    %c0_i32_2 = arith.constant 0 : i32
    return %c0_i32, %c0_i32_0, %c0_i32_1 : i32, i32, i32
  }
  func.func @transform_2(%arg0: i32) -> (i32, i32, i32) {
    %c0_i32 = arith.constant 0 : i32
    %c0_i32_0 = arith.constant 0 : i32
    %c0_i32_1 = arith.constant 0 : i32
    %c0_i32_2 = arith.constant 0 : i32
    return %c0_i32, %c0_i32_0, %c0_i32_1 : i32, i32, i32
  }
  func.func @transform_3(%arg0: i32) -> (i32, i32, i32) {
    %c0_i32 = arith.constant 0 : i32
    %c0_i32_0 = arith.constant 0 : i32
    %c0_i32_1 = arith.constant 0 : i32
    %c0_i32_2 = arith.constant 0 : i32
    return %c0_i32, %c0_i32_0, %c0_i32_1 : i32, i32, i32
  }
  func.func @transform_4(%arg0: i32) -> (i32, i32) {
    %c0_i32 = arith.constant 0 : i32
    %c0_i32_0 = arith.constant 0 : i32
    %c0_i32_1 = arith.constant 0 : i32
    return %c0_i32, %c0_i32_0 : i32, i32
  }
  func.func @transform_5(%arg0: i32) -> (i32, i32) {
    %c0_i32 = arith.constant 0 : i32
    %c0_i32_0 = arith.constant 0 : i32
    %c0_i32_1 = arith.constant 0 : i32
    return %c0_i32, %c0_i32_0 : i32, i32
  }
  func.func @transform_6(%arg0: i32) -> (i32, i32) {
    %c0_i32 = arith.constant 0 : i32
    %c0_i32_0 = arith.constant 0 : i32
    %c0_i32_1 = arith.constant 0 : i32
    return %c0_i32, %c0_i32_0 : i32, i32
  }
  func.func @transform_7(%arg0: i32) -> (i32, i32, i32) {
    %c0_i32 = arith.constant 0 : i32
    %c0_i32_0 = arith.constant 0 : i32
    %c0_i32_1 = arith.constant 0 : i32
    return %arg0, %c0_i32, %c0_i32_0 : i32, i32, i32
  }
}

module attributes {stable_mosaic.version = 11 : i64} {
  func.func @attn_kernel(%arg0: i32, %arg1: i32, %arg2: memref<1x8x32xf32, #tpu.memory_space<vmem>>, %arg3: memref<1x32xf32, #tpu.memory_space<vmem>>, %arg4: memref<1x32xf32, #tpu.memory_space<vmem>>, %arg5: memref<1x3x32x8xbf16, #tpu.memory_space<vmem>>, %arg6: memref<1x3x1x8xf32, #tpu.memory_space<vmem>>, %arg7: memref<1x8x32xbf16, #tpu.memory_space<vmem>>, %arg8: memref<1x32xf32, #tpu.memory_space<vmem>>, %arg9: memref<1x8x32xf32, #tpu.memory_space<vmem>>, %arg10: memref<1x8x8xf32, #tpu.memory_space<vmem>>, %arg11: memref<8x32xbf16, #tpu.memory_space<vmem>>, %arg12: memref<8x32xf32, #tpu.memory_space<vmem>>, %arg13: memref<8x8xf32, #tpu.memory_space<vmem>>) attributes {dimension_semantics = [#tpu.dimension_semantics<parallel>, #tpu.dimension_semantics<arbitrary>], iteration_bounds = array<i64: 2, 4>, scalar_prefetch = 0 : i64, scratch_operands = 3 : i64, tpu.core_type = #tpu.core_type<tc>, window_params = [{transform_indices = @transform_0, window_bounds = array<i64: 1, 8, 32>}, {pipeline_mode = #tpu.pipeline_mode<synchronous>, transform_indices = @transform_1, window_bounds = array<i64: 1, 32>}, {pipeline_mode = #tpu.pipeline_mode<synchronous>, transform_indices = @transform_2, window_bounds = array<i64: 1, 32>}, {transform_indices = @transform_3, window_bounds = array<i64: 1, 3, 32, 8>}, {transform_indices = @transform_4, window_bounds = array<i64: 1, 3, 1, 8>}, {transform_indices = @transform_5, window_bounds = array<i64: 1, 8, 32>}, {pipeline_mode = #tpu.pipeline_mode<synchronous>, transform_indices = @transform_6, window_bounds = array<i64: 1, 32>}, {transform_indices = @transform_7, window_bounds = array<i64: 1, 8, 32>}, {transform_indices = @transform_8, window_bounds = array<i64: 1, 8, 8>}]} {
    %c0_i32 = arith.constant 0 : i32
    %0 = arith.cmpi eq, %arg1, %c0_i32 : i32
    %1 = arith.extui %0 : i1 to i32
    %c0_i32_0 = arith.constant 0 : i32
    %2 = arith.cmpi ne, %1, %c0_i32_0 : i32
    scf.if %2 {
      %c0_43 = arith.constant 0 : index
      %c0_44 = arith.constant 0 : index
      %c0_45 = arith.constant 0 : index
      %54 = vector.load %arg2[%c0_43, %c0_44, %c0_45] : memref<1x8x32xf32, #tpu.memory_space<vmem>>, vector<1x8x32xf32>
      %55 = vector.shape_cast %54 : vector<1x8x32xf32> to vector<8x32xf32>
      %c0_46 = arith.constant 0 : index
      %c0_47 = arith.constant 0 : index
      %56 = vector.load %arg3[%c0_46, %c0_47] : memref<1x32xf32, #tpu.memory_space<vmem>>, vector<1x32xf32>
      %c0_48 = arith.constant 0 : index
      %c0_49 = arith.constant 0 : index
      %57 = vector.load %arg4[%c0_48, %c0_49] : memref<1x32xf32, #tpu.memory_space<vmem>>, vector<1x32xf32>
      %cst_50 = arith.constant dense<0.000000e+00> : vector<8xf32>
      %58 = vector.multi_reduction <add>, %55, %cst_50 [1] : vector<8x32xf32> to vector<8xf32>
      %59 = vector.shape_cast %58 : vector<8xf32> to vector<8x1xf32>
      %cst_51 = arith.constant 3.200000e+01 : f32
      %60 = vector.broadcast %cst_51 : f32 to vector<8x1xf32>
      %61 = arith.divf %59, %60 : vector<8x1xf32>
      %62 = vector.broadcast %61 : vector<8x1xf32> to vector<8x32xf32>
      %63 = arith.subf %55, %62 : vector<8x32xf32>
      %64 = arith.mulf %63, %63 : vector<8x32xf32>
      %cst_52 = arith.constant dense<0.000000e+00> : vector<8xf32>
      %65 = vector.multi_reduction <add>, %64, %cst_52 [1] : vector<8x32xf32> to vector<8xf32>
      %66 = vector.shape_cast %65 : vector<8xf32> to vector<8x1xf32>
      %cst_53 = arith.constant 3.200000e+01 : f32
      %67 = vector.broadcast %cst_53 : f32 to vector<8x1xf32>
      %68 = arith.divf %66, %67 : vector<8x1xf32>
      %69 = vector.broadcast %61 : vector<8x1xf32> to vector<8x32xf32>
      %70 = arith.subf %55, %69 : vector<8x32xf32>
      %cst_54 = arith.constant 9.99999974E-6 : f32
      %71 = vector.broadcast %cst_54 : f32 to vector<8x1xf32>
      %72 = arith.addf %68, %71 : vector<8x1xf32>
      %73 = math.rsqrt %72 : vector<8x1xf32>
      %74 = vector.broadcast %73 : vector<8x1xf32> to vector<8x32xf32>
      %75 = arith.mulf %70, %74 : vector<8x32xf32>
      %76 = vector.broadcast %56 : vector<1x32xf32> to vector<8x32xf32>
      %77 = arith.mulf %75, %76 : vector<8x32xf32>
      %78 = vector.broadcast %57 : vector<1x32xf32> to vector<8x32xf32>
      %79 = arith.addf %77, %78 : vector<8x32xf32>
      %80 = arith.truncf %79 : vector<8x32xf32> to vector<8x32xbf16>
      %c0_55 = arith.constant 0 : index
      %c0_56 = arith.constant 0 : index
      %81 = vector.load %arg11[%c0_55, %c0_56] : memref<8x32xbf16, #tpu.memory_space<vmem>>, vector<8x32xbf16>
      tpu.vector_store %arg11[%c0_55, %c0_56], %80 {strides = array<i32>} : memref<8x32xbf16, #tpu.memory_space<vmem>>, vector<8x32xbf16>,
      %cst_57 = arith.constant 0.000000e+00 : f32
      %82 = vector.broadcast %cst_57 : f32 to vector<8x32xf32>
      %c0_58 = arith.constant 0 : index
      %c0_59 = arith.constant 0 : index
      %83 = vector.load %arg12[%c0_58, %c0_59] : memref<8x32xf32, #tpu.memory_space<vmem>>, vector<8x32xf32>
      tpu.vector_store %arg12[%c0_58, %c0_59], %82 {strides = array<i32>} : memref<8x32xf32, #tpu.memory_space<vmem>>, vector<8x32xf32>,
      %cst_60 = arith.constant 0.000000e+00 : f32
      %84 = vector.broadcast %cst_60 : f32 to vector<8x8xf32>
      %c0_61 = arith.constant 0 : index
      %c0_62 = arith.constant 0 : index
      %85 = vector.load %arg13[%c0_61, %c0_62] : memref<8x8xf32, #tpu.memory_space<vmem>>, vector<8x8xf32>
      tpu.vector_store %arg13[%c0_61, %c0_62], %84 {strides = array<i32>} : memref<8x8xf32, #tpu.memory_space<vmem>>, vector<8x8xf32>,
    } else {
    }
    %c0 = arith.constant 0 : index
    %c0_1 = arith.constant 0 : index
    %3 = vector.load %arg11[%c0, %c0_1] : memref<8x32xbf16, #tpu.memory_space<vmem>>, vector<8x32xbf16>
    %c0_2 = arith.constant 0 : index
    %c0_3 = arith.constant 0 : index
    %c0_4 = arith.constant 0 : index
    %c0_5 = arith.constant 0 : index
    %4 = vector.load %arg5[%c0_2, %c0_3, %c0_4, %c0_5] : memref<1x3x32x8xbf16, #tpu.memory_space<vmem>>, vector<1x1x32x8xbf16>
    %5 = vector.shape_cast %4 : vector<1x1x32x8xbf16> to vector<32x8xbf16>
    %c0_6 = arith.constant 0 : index
    %c1 = arith.constant 1 : index
    %c0_7 = arith.constant 0 : index
    %c0_8 = arith.constant 0 : index
    %6 = vector.load %arg5[%c0_6, %c1, %c0_7, %c0_8] : memref<1x3x32x8xbf16, #tpu.memory_space<vmem>>, vector<1x1x32x8xbf16>
    %7 = vector.shape_cast %6 : vector<1x1x32x8xbf16> to vector<32x8xbf16>
    %c0_9 = arith.constant 0 : index
    %c2 = arith.constant 2 : index
    %c0_10 = arith.constant 0 : index
    %c0_11 = arith.constant 0 : index
    %8 = vector.load %arg5[%c0_9, %c2, %c0_10, %c0_11] : memref<1x3x32x8xbf16, #tpu.memory_space<vmem>>, vector<1x1x32x8xbf16>
    %9 = vector.shape_cast %8 : vector<1x1x32x8xbf16> to vector<32x8xbf16>
    %c0_12 = arith.constant 0 : index
    %c0_13 = arith.constant 0 : index
    %c0_14 = arith.constant 0 : index
    %c0_15 = arith.constant 0 : index
    %10 = vector.load %arg6[%c0_12, %c0_13, %c0_14, %c0_15] : memref<1x3x1x8xf32, #tpu.memory_space<vmem>>, vector<1x1x1x8xf32>
    %11 = vector.shape_cast %10 : vector<1x1x1x8xf32> to vector<1x8xf32>
    %c0_16 = arith.constant 0 : index
    %c1_17 = arith.constant 1 : index
    %c0_18 = arith.constant 0 : index
    %c0_19 = arith.constant 0 : index
    %12 = vector.load %arg6[%c0_16, %c1_17, %c0_18, %c0_19] : memref<1x3x1x8xf32, #tpu.memory_space<vmem>>, vector<1x1x1x8xf32>
    %13 = vector.shape_cast %12 : vector<1x1x1x8xf32> to vector<1x8xf32>
    %c0_20 = arith.constant 0 : index
    %c2_21 = arith.constant 2 : index
    %c0_22 = arith.constant 0 : index
    %c0_23 = arith.constant 0 : index
    %14 = vector.load %arg6[%c0_20, %c2_21, %c0_22, %c0_23] : memref<1x3x1x8xf32, #tpu.memory_space<vmem>>, vector<1x1x1x8xf32>
    %15 = vector.shape_cast %14 : vector<1x1x1x8xf32> to vector<1x8xf32>
    %cst = arith.constant dense<0.000000e+00> : vector<8x8xf32>
    %16 = tpu.matmul %3, %5, %cst {dimension_numbers = #tpu.dot_dimension_numbers<[1], [0], [0], [1], [0, 0, 1, 1], [], []>} : vector<8x32xbf16>, vector<32x8xbf16>, vector<8x8xf32> -> vector<8x8xf32>
    %17 = vector.broadcast %11 : vector<1x8xf32> to vector<8x8xf32>
    %18 = arith.addf %16, %17 : vector<8x8xf32>
    %19 = arith.truncf %18 : vector<8x8xf32> to vector<8x8xbf16>
    %cst_24 = arith.constant dense<0.000000e+00> : vector<8x8xf32>
    %20 = tpu.matmul %3, %7, %cst_24 {dimension_numbers = #tpu.dot_dimension_numbers<[1], [0], [0], [1], [0, 0, 1, 1], [], []>} : vector<8x32xbf16>, vector<32x8xbf16>, vector<8x8xf32> -> vector<8x8xf32>
    %21 = vector.broadcast %13 : vector<1x8xf32> to vector<8x8xf32>
    %22 = arith.addf %20, %21 : vector<8x8xf32>
    %23 = arith.truncf %22 : vector<8x8xf32> to vector<8x8xbf16>
    %cst_25 = arith.constant dense<0.000000e+00> : vector<8x8xf32>
    %24 = tpu.matmul %3, %9, %cst_25 {dimension_numbers = #tpu.dot_dimension_numbers<[1], [0], [0], [1], [0, 0, 1, 1], [], []>} : vector<8x32xbf16>, vector<32x8xbf16>, vector<8x8xf32> -> vector<8x8xf32>
    %25 = vector.broadcast %15 : vector<1x8xf32> to vector<8x8xf32>
    %26 = arith.addf %24, %25 : vector<8x8xf32>
    %27 = arith.truncf %26 : vector<8x8xf32> to vector<8x8xbf16>
    %cst_26 = arith.constant dense<0.000000e+00> : vector<8x8xf32>
    %28 = tpu.matmul %19, %23, %cst_26 {dimension_numbers = #tpu.dot_dimension_numbers<[1], [1], [0], [0], [0, 0, 1, 0], [], []>} : vector<8x8xbf16>, vector<8x8xbf16>, vector<8x8xf32> -> vector<8x8xf32>
    %cst_27 = arith.constant dense<0xFF800000> : vector<8xf32>
    %29 = vector.multi_reduction <maximumf>, %28, %cst_27 [1] : vector<8x8xf32> to vector<8xf32>
    %30 = vector.shape_cast %29 : vector<8xf32> to vector<8x1xf32>
    %31 = vector.broadcast %30 : vector<8x1xf32> to vector<8x8xf32>
    %32 = arith.subf %28, %31 : vector<8x8xf32>
    %33 = math.exp %32 : vector<8x8xf32>
    %cst_28 = arith.constant dense<0.000000e+00> : vector<8xf32>
    %34 = vector.multi_reduction <add>, %33, %cst_28 [1] : vector<8x8xf32> to vector<8xf32>
    %35 = vector.shape_cast %34 : vector<8xf32> to vector<8x1xf32>
    %36 = tpu.reciprocal %35 : vector<8x1xf32> -> vector<8x1xf32>
    %37 = vector.broadcast %36 : vector<8x1xf32> to vector<8x8xf32>
    %38 = arith.mulf %33, %37 : vector<8x8xf32>
    %c0_29 = arith.constant 0 : index
    %c0_30 = arith.constant 0 : index
    %39 = vector.load %arg13[%c0_29, %c0_30] : memref<8x8xf32, #tpu.memory_space<vmem>>, vector<8x8xf32>
    %40 = arith.addf %39, %38 : vector<8x8xf32>
    %c0_31 = arith.constant 0 : index
    %c0_32 = arith.constant 0 : index
    %41 = vector.load %arg13[%c0_31, %c0_32] : memref<8x8xf32, #tpu.memory_space<vmem>>, vector<8x8xf32>
    tpu.vector_store %arg13[%c0_31, %c0_32], %40 {strides = array<i32>} : memref<8x8xf32, #tpu.memory_space<vmem>>, vector<8x8xf32>,
    %42 = arith.truncf %38 : vector<8x8xf32> to vector<8x8xbf16>
    %cst_33 = arith.constant dense<0.000000e+00> : vector<8x8xf32>
    %43 = tpu.matmul %42, %27, %cst_33 {dimension_numbers = #tpu.dot_dimension_numbers<[1], [0], [0], [1], [0, 0, 1, 1], [], []>} : vector<8x8xbf16>, vector<8x8xbf16>, vector<8x8xf32> -> vector<8x8xf32>
    %c0_34 = arith.constant 0 : index
    %c0_35 = arith.constant 0 : index
    %44 = vector.load %arg12[%c0_34, %c0_35] : memref<8x32xf32, #tpu.memory_space<vmem>>, vector<8x32xf32>
    %45 = arith.truncf %43 : vector<8x8xf32> to vector<8x8xbf16>
    %c0_36 = arith.constant 0 : index
    %c0_37 = arith.constant 0 : index
    %c0_38 = arith.constant 0 : index
    %46 = vector.load %arg7[%c0_36, %c0_37, %c0_38] : memref<1x8x32xbf16, #tpu.memory_space<vmem>>, vector<1x8x32xbf16>
    %47 = vector.shape_cast %46 : vector<1x8x32xbf16> to vector<8x32xbf16>
    %cst_39 = arith.constant dense<0.000000e+00> : vector<8x32xf32>
    %48 = tpu.matmul %45, %47, %cst_39 {dimension_numbers = #tpu.dot_dimension_numbers<[1], [0], [0], [1], [0, 0, 1, 1], [], []>} : vector<8x8xbf16>, vector<8x32xbf16>, vector<8x32xf32> -> vector<8x32xf32>
    %49 = arith.addf %44, %48 : vector<8x32xf32>
    %c0_40 = arith.constant 0 : index
    %c0_41 = arith.constant 0 : index
    %50 = vector.load %arg12[%c0_40, %c0_41] : memref<8x32xf32, #tpu.memory_space<vmem>>, vector<8x32xf32>
    tpu.vector_store %arg12[%c0_40, %c0_41], %49 {strides = array<i32>} : memref<8x32xf32, #tpu.memory_space<vmem>>, vector<8x32xf32>,
    %c3_i32 = arith.constant 3 : i32
    %51 = arith.cmpi eq, %arg1, %c3_i32 : i32
    %52 = arith.extui %51 : i1 to i32
    %c0_i32_42 = arith.constant 0 : i32
    %53 = arith.cmpi ne, %52, %c0_i32_42 : i32
    scf.if %53 {
      %c0_43 = arith.constant 0 : index
      %c0_44 = arith.constant 0 : index
      %54 = vector.load %arg12[%c0_43, %c0_44] : memref<8x32xf32, #tpu.memory_space<vmem>>, vector<8x32xf32>
      %c0_45 = arith.constant 0 : index
      %c0_46 = arith.constant 0 : index
      %55 = vector.load %arg8[%c0_45, %c0_46] : memref<1x32xf32, #tpu.memory_space<vmem>>, vector<1x32xf32>
      %56 = vector.broadcast %55 : vector<1x32xf32> to vector<8x32xf32>
      %57 = arith.addf %54, %56 : vector<8x32xf32>
      %c0_47 = arith.constant 0 : index
      %c0_48 = arith.constant 0 : index
      %c0_49 = arith.constant 0 : index
      %58 = vector.load %arg2[%c0_47, %c0_48, %c0_49] : memref<1x8x32xf32, #tpu.memory_space<vmem>>, vector<1x8x32xf32>
      %59 = vector.shape_cast %58 : vector<1x8x32xf32> to vector<8x32xf32>
      %60 = arith.addf %57, %59 : vector<8x32xf32>
      %c0_50 = arith.constant 0 : index
      %c0_51 = arith.constant 0 : index
      %c0_52 = arith.constant 0 : index
      %61 = vector.load %arg9[%c0_50, %c0_51, %c0_52] : memref<1x8x32xf32, #tpu.memory_space<vmem>>, vector<1x8x32xf32>
      %62 = vector.shape_cast %61 : vector<1x8x32xf32> to vector<8x32xf32>
      %63 = vector.shape_cast %60 : vector<8x32xf32> to vector<1x8x32xf32>
      tpu.vector_store %arg9[%c0_50, %c0_51, %c0_52], %63 {strides = array<i32>} : memref<1x8x32xf32, #tpu.memory_space<vmem>>, vector<1x8x32xf32>,
      %c0_53 = arith.constant 0 : index
      %c0_54 = arith.constant 0 : index
      %64 = vector.load %arg13[%c0_53, %c0_54] : memref<8x8xf32, #tpu.memory_space<vmem>>, vector<8x8xf32>
      %cst_55 = arith.constant 2.500000e-01 : f32
      %65 = vector.broadcast %cst_55 : f32 to vector<8x8xf32>
      %66 = arith.mulf %64, %65 : vector<8x8xf32>
      %c0_56 = arith.constant 0 : index
      %c0_57 = arith.constant 0 : index
      %c0_58 = arith.constant 0 : index
      %67 = vector.load %arg10[%c0_56, %c0_57, %c0_58] : memref<1x8x8xf32, #tpu.memory_space<vmem>>, vector<1x8x8xf32>
      %68 = vector.shape_cast %67 : vector<1x8x8xf32> to vector<8x8xf32>
      %69 = vector.shape_cast %66 : vector<8x8xf32> to vector<1x8x8xf32>
      tpu.vector_store %arg10[%c0_56, %c0_57, %c0_58], %69 {strides = array<i32>} : memref<1x8x8xf32, #tpu.memory_space<vmem>>, vector<1x8x8xf32>,
    } else {
    }
    return
  }
  func.func @transform_0(%arg0: i32, %arg1: i32) -> (i32, i32, i32) {
    %c0_i32 = arith.constant 0 : i32
    %c0_i32_0 = arith.constant 0 : i32
    %c0_i32_1 = arith.constant 0 : i32
    return %arg0, %c0_i32, %c0_i32_0 : i32, i32, i32
  }
  func.func @transform_1(%arg0: i32, %arg1: i32) -> (i32, i32) {
    %c0_i32 = arith.constant 0 : i32
    %c0_i32_0 = arith.constant 0 : i32
    %c0_i32_1 = arith.constant 0 : i32
    return %c0_i32, %c0_i32_0 : i32, i32
  }
  func.func @transform_2(%arg0: i32, %arg1: i32) -> (i32, i32) {
    %c0_i32 = arith.constant 0 : i32
    %c0_i32_0 = arith.constant 0 : i32
    %c0_i32_1 = arith.constant 0 : i32
    return %c0_i32, %c0_i32_0 : i32, i32
  }
  func.func @transform_3(%arg0: i32, %arg1: i32) -> (i32, i32, i32, i32) {
    %c0_i32 = arith.constant 0 : i32
    %c0_i32_0 = arith.constant 0 : i32
    %c0_i32_1 = arith.constant 0 : i32
    %c0_i32_2 = arith.constant 0 : i32
    return %arg1, %c0_i32, %c0_i32_0, %c0_i32_1 : i32, i32, i32, i32
  }
  func.func @transform_4(%arg0: i32, %arg1: i32) -> (i32, i32, i32, i32) {
    %c0_i32 = arith.constant 0 : i32
    %c0_i32_0 = arith.constant 0 : i32
    %c0_i32_1 = arith.constant 0 : i32
    %c0_i32_2 = arith.constant 0 : i32
    return %arg1, %c0_i32, %c0_i32_0, %c0_i32_1 : i32, i32, i32, i32
  }
  func.func @transform_5(%arg0: i32, %arg1: i32) -> (i32, i32, i32) {
    %c0_i32 = arith.constant 0 : i32
    %c0_i32_0 = arith.constant 0 : i32
    %c0_i32_1 = arith.constant 0 : i32
    return %arg1, %c0_i32, %c0_i32_0 : i32, i32, i32
  }
  func.func @transform_6(%arg0: i32, %arg1: i32) -> (i32, i32) {
    %c0_i32 = arith.constant 0 : i32
    %c0_i32_0 = arith.constant 0 : i32
    %c0_i32_1 = arith.constant 0 : i32
    return %c0_i32, %c0_i32_0 : i32, i32
  }
  func.func @transform_7(%arg0: i32, %arg1: i32) -> (i32, i32, i32) {
    %c0_i32 = arith.constant 0 : i32
    %c0_i32_0 = arith.constant 0 : i32
    %c0_i32_1 = arith.constant 0 : i32
    return %arg0, %c0_i32, %c0_i32_0 : i32, i32, i32
  }
  func.func @transform_8(%arg0: i32, %arg1: i32) -> (i32, i32, i32) {
    %c0_i32 = arith.constant 0 : i32
    %c0_i32_0 = arith.constant 0 : i32
    %c0_i32_1 = arith.constant 0 : i32
    return %arg0, %c0_i32, %c0_i32_0 : i32, i32, i32
  }
}

module attributes {stable_mosaic.version = 11 : i64} {
  func.func @mlp_kernel(%arg0: i32, %arg1: memref<16x32xf32, #tpu.memory_space<vmem>>, %arg2: memref<1x32xf32, #tpu.memory_space<vmem>>, %arg3: memref<1x32xf32, #tpu.memory_space<vmem>>, %arg4: memref<32x128xbf16, #tpu.memory_space<vmem>>, %arg5: memref<1x128xf32, #tpu.memory_space<vmem>>, %arg6: memref<128x32xbf16, #tpu.memory_space<vmem>>, %arg7: memref<1x32xf32, #tpu.memory_space<vmem>>, %arg8: memref<16x32xf32, #tpu.memory_space<vmem>>) attributes {dimension_semantics = [#tpu.dimension_semantics<parallel>], iteration_bounds = array<i64: 1>, scalar_prefetch = 0 : i64, scratch_operands = 0 : i64, tpu.core_type = #tpu.core_type<tc>, window_params = [{transform_indices = @transform_0, window_bounds = array<i64: 16, 32>}, {pipeline_mode = #tpu.pipeline_mode<synchronous>, transform_indices = @transform_1, window_bounds = array<i64: 1, 32>}, {pipeline_mode = #tpu.pipeline_mode<synchronous>, transform_indices = @transform_2, window_bounds = array<i64: 1, 32>}, {pipeline_mode = #tpu.pipeline_mode<synchronous>, transform_indices = @transform_3, window_bounds = array<i64: 32, 128>}, {pipeline_mode = #tpu.pipeline_mode<synchronous>, transform_indices = @transform_4, window_bounds = array<i64: 1, 128>}, {pipeline_mode = #tpu.pipeline_mode<synchronous>, transform_indices = @transform_5, window_bounds = array<i64: 128, 32>}, {pipeline_mode = #tpu.pipeline_mode<synchronous>, transform_indices = @transform_6, window_bounds = array<i64: 1, 32>}, {transform_indices = @transform_7, window_bounds = array<i64: 16, 32>}]} {
    %c0 = arith.constant 0 : index
    %c0_0 = arith.constant 0 : index
    %0 = vector.load %arg1[%c0, %c0_0] : memref<16x32xf32, #tpu.memory_space<vmem>>, vector<16x32xf32>
    %c0_1 = arith.constant 0 : index
    %c0_2 = arith.constant 0 : index
    %1 = vector.load %arg2[%c0_1, %c0_2] : memref<1x32xf32, #tpu.memory_space<vmem>>, vector<1x32xf32>
    %c0_3 = arith.constant 0 : index
    %c0_4 = arith.constant 0 : index
    %2 = vector.load %arg3[%c0_3, %c0_4] : memref<1x32xf32, #tpu.memory_space<vmem>>, vector<1x32xf32>
    %cst = arith.constant dense<0.000000e+00> : vector<16xf32>
    %3 = vector.multi_reduction <add>, %0, %cst [1] : vector<16x32xf32> to vector<16xf32>
    %4 = vector.shape_cast %3 : vector<16xf32> to vector<16x1xf32>
    %cst_5 = arith.constant 3.200000e+01 : f32
    %5 = vector.broadcast %cst_5 : f32 to vector<16x1xf32>
    %6 = arith.divf %4, %5 : vector<16x1xf32>
    %7 = vector.broadcast %6 : vector<16x1xf32> to vector<16x32xf32>
    %8 = arith.subf %0, %7 : vector<16x32xf32>
    %9 = arith.mulf %8, %8 : vector<16x32xf32>
    %cst_6 = arith.constant dense<0.000000e+00> : vector<16xf32>
    %10 = vector.multi_reduction <add>, %9, %cst_6 [1] : vector<16x32xf32> to vector<16xf32>
    %11 = vector.shape_cast %10 : vector<16xf32> to vector<16x1xf32>
    %cst_7 = arith.constant 3.200000e+01 : f32
    %12 = vector.broadcast %cst_7 : f32 to vector<16x1xf32>
    %13 = arith.divf %11, %12 : vector<16x1xf32>
    %14 = vector.broadcast %6 : vector<16x1xf32> to vector<16x32xf32>
    %15 = arith.subf %0, %14 : vector<16x32xf32>
    %cst_8 = arith.constant 9.99999974E-6 : f32
    %16 = vector.broadcast %cst_8 : f32 to vector<16x1xf32>
    %17 = arith.addf %13, %16 : vector<16x1xf32>
    %18 = math.rsqrt %17 : vector<16x1xf32>
    %19 = vector.broadcast %18 : vector<16x1xf32> to vector<16x32xf32>
    %20 = arith.mulf %15, %19 : vector<16x32xf32>
    %21 = vector.broadcast %1 : vector<1x32xf32> to vector<16x32xf32>
    %22 = arith.mulf %20, %21 : vector<16x32xf32>
    %23 = vector.broadcast %2 : vector<1x32xf32> to vector<16x32xf32>
    %24 = arith.addf %22, %23 : vector<16x32xf32>
    %25 = arith.truncf %24 : vector<16x32xf32> to vector<16x32xbf16>
    %c0_9 = arith.constant 0 : index
    %c0_10 = arith.constant 0 : index
    %26 = vector.load %arg4[%c0_9, %c0_10] : memref<32x128xbf16, #tpu.memory_space<vmem>>, vector<32x128xbf16>
    %cst_11 = arith.constant dense<0.000000e+00> : vector<16x128xf32>
    %27 = tpu.matmul %25, %26, %cst_11 {dimension_numbers = #tpu.dot_dimension_numbers<[1], [0], [0], [1], [0, 0, 1, 1], [], []>} : vector<16x32xbf16>, vector<32x128xbf16>, vector<16x128xf32> -> vector<16x128xf32>
    %c0_12 = arith.constant 0 : index
    %c0_13 = arith.constant 0 : index
    %28 = vector.load %arg5[%c0_12, %c0_13] : memref<1x128xf32, #tpu.memory_space<vmem>>, vector<1x128xf32>
    %29 = vector.broadcast %28 : vector<1x128xf32> to vector<16x128xf32>
    %30 = arith.addf %27, %29 : vector<16x128xf32>
    %31 = arith.mulf %30, %30 : vector<16x128xf32>
    %32 = arith.mulf %30, %31 : vector<16x128xf32>
    %cst_14 = arith.constant 4.471500e-02 : f32
    %33 = vector.broadcast %cst_14 : f32 to vector<16x128xf32>
    %34 = arith.mulf %33, %32 : vector<16x128xf32>
    %35 = arith.addf %30, %34 : vector<16x128xf32>
    %cst_15 = arith.constant 0.797884583 : f32
    %36 = vector.broadcast %cst_15 : f32 to vector<16x128xf32>
    %37 = arith.mulf %36, %35 : vector<16x128xf32>
    %38 = math.tanh %37 : vector<16x128xf32>
    %cst_16 = arith.constant 1.000000e+00 : f32
    %39 = vector.broadcast %cst_16 : f32 to vector<16x128xf32>
    %40 = arith.addf %39, %38 : vector<16x128xf32>
    %cst_17 = arith.constant 5.000000e-01 : f32
    %41 = vector.broadcast %cst_17 : f32 to vector<16x128xf32>
    %42 = arith.mulf %41, %40 : vector<16x128xf32>
    %43 = arith.mulf %30, %42 : vector<16x128xf32>
    %44 = arith.truncf %43 : vector<16x128xf32> to vector<16x128xbf16>
    %c0_18 = arith.constant 0 : index
    %c0_19 = arith.constant 0 : index
    %45 = vector.load %arg6[%c0_18, %c0_19] : memref<128x32xbf16, #tpu.memory_space<vmem>>, vector<128x32xbf16>
    %cst_20 = arith.constant dense<0.000000e+00> : vector<16x32xf32>
    %46 = tpu.matmul %44, %45, %cst_20 {dimension_numbers = #tpu.dot_dimension_numbers<[1], [0], [0], [1], [0, 0, 1, 1], [], []>} : vector<16x128xbf16>, vector<128x32xbf16>, vector<16x32xf32> -> vector<16x32xf32>
    %c0_21 = arith.constant 0 : index
    %c0_22 = arith.constant 0 : index
    %47 = vector.load %arg7[%c0_21, %c0_22] : memref<1x32xf32, #tpu.memory_space<vmem>>, vector<1x32xf32>
    %48 = vector.broadcast %47 : vector<1x32xf32> to vector<16x32xf32>
    %49 = arith.addf %46, %48 : vector<16x32xf32>
    %50 = arith.addf %49, %0 : vector<16x32xf32>
    %c0_23 = arith.constant 0 : index
    %c0_24 = arith.constant 0 : index
    %51 = vector.load %arg8[%c0_23, %c0_24] : memref<16x32xf32, #tpu.memory_space<vmem>>, vector<16x32xf32>
    tpu.vector_store %arg8[%c0_23, %c0_24], %50 {strides = array<i32>} : memref<16x32xf32, #tpu.memory_space<vmem>>, vector<16x32xf32>,
    return
  }
  func.func @transform_0(%arg0: i32) -> (i32, i32) {
    %c0_i32 = arith.constant 0 : i32
    %c0_i32_0 = arith.constant 0 : i32
    return %arg0, %c0_i32 : i32, i32
  }
  func.func @transform_1(%arg0: i32) -> (i32, i32) {
    %c0_i32 = arith.constant 0 : i32
    %c0_i32_0 = arith.constant 0 : i32
    %c0_i32_1 = arith.constant 0 : i32
    return %c0_i32, %c0_i32_0 : i32, i32
  }
  func.func @transform_2(%arg0: i32) -> (i32, i32) {
    %c0_i32 = arith.constant 0 : i32
    %c0_i32_0 = arith.constant 0 : i32
    %c0_i32_1 = arith.constant 0 : i32
    return %c0_i32, %c0_i32_0 : i32, i32
  }
  func.func @transform_3(%arg0: i32) -> (i32, i32) {
    %c0_i32 = arith.constant 0 : i32
    %c0_i32_0 = arith.constant 0 : i32
    %c0_i32_1 = arith.constant 0 : i32
    return %c0_i32, %c0_i32_0 : i32, i32
  }
  func.func @transform_4(%arg0: i32) -> (i32, i32) {
    %c0_i32 = arith.constant 0 : i32
    %c0_i32_0 = arith.constant 0 : i32
    %c0_i32_1 = arith.constant 0 : i32
    return %c0_i32, %c0_i32_0 : i32, i32
  }
  func.func @transform_5(%arg0: i32) -> (i32, i32) {
    %c0_i32 = arith.constant 0 : i32
    %c0_i32_0 = arith.constant 0 : i32
    %c0_i32_1 = arith.constant 0 : i32
    return %c0_i32, %c0_i32_0 : i32, i32
  }
  func.func @transform_6(%arg0: i32) -> (i32, i32) {
    %c0_i32 = arith.constant 0 : i32
    %c0_i32_0 = arith.constant 0 : i32
    %c0_i32_1 = arith.constant 0 : i32
    return %c0_i32, %c0_i32_0 : i32, i32
  }
  func.func @transform_7(%arg0: i32) -> (i32, i32) {
    %c0_i32 = arith.constant 0 : i32
    %c0_i32_0 = arith.constant 0 : i32
    return %arg0, %c0_i32 : i32, i32
  }
}

</mosaic_0001>

<llo_original>
// kernel: transformer_block.4
$region0: #{transformer_block.4}
  #allocation0 [shape = 'u32[]', space=smem, size = 0x4, offset = 0x4, fixed_abs, tag = 'smem constant byte address 0x4 - core index']
  #allocation1 [shape = 'u32[144,128]{1,0:T(1,128)}', space=vmem, size = 0x12000, scoped, tag = 'internal scratch']
  #allocation2 [shape = 'bf16[8,32]{1,0:T(8,128)(2,1)}', space=vmem, size = 0x800, scoped, tag = 'scratch operand']
  #allocation3 [shape = 'f32[8,32]{1,0:T(8,128)}', space=vmem, size = 0x1000, scoped, tag = 'scratch operand']
  #allocation4 [shape = 'f32[8,8]{1,0:T(8,128)}', space=vmem, size = 0x1000, scoped, tag = 'scratch operand']
  %s0 = inlined_call_operand.hbm [shape: f32[2,8,32], index: 0, kind: input, shape index: {}]
  %s1 = inlined_call_operand.hbm [shape: f32[1,32], index: 1, kind: input, shape index: {}]
  %s2 = inlined_call_operand.hbm [shape: f32[1,32], index: 2, kind: input, shape index: {}]
  %s3 = inlined_call_operand.hbm [shape: bf16[4,3,32,8], index: 3, kind: input, shape index: {}]
  %s4 = inlined_call_operand.hbm [shape: f32[4,3,1,8], index: 4, kind: input, shape index: {}]
  %s5 = inlined_call_operand.hbm [shape: bf16[4,8,32], index: 5, kind: input, shape index: {}]
  %s6 = inlined_call_operand.hbm [shape: f32[1,32], index: 6, kind: input, shape index: {}]
  %s7 = inlined_call_operand.hbm [shape: f32[2,8,32], index: 7, kind: output, shape index: {0}]
  %s8 = inlined_call_operand.hbm [shape: f32[2,8,8], index: 8, kind: output, shape index: {1}]
  %9 = xla_tuple %s7, %s8
  %s10 = sld [smem:[#allocation0]]
  $region105: #{transformer_block.4} parent=0
    _
  %s12 = ssub.s32 1, %s10
  %s13 = scalar_select 0, %s12, %s10
  $region1: #{transformer_block.4} parent=0
    #allocation5 [shape = 'u8[8192]{0}', space=vmem, size = 0x2000, scoped, tag = 'input window, operand 0']
    #allocation6 [shape = 's32[2]{0}', space=sflag, size = 0x8, scoped, tag = 'scoped memory for transformer_block.4']
    #allocation7 [shape = 's32[2]{0}', space=sflag, size = 0x8, scoped, tag = 'scoped memory for transformer_block.4']
    #allocation8 [shape = 'u8[512]{0}', space=vmem, size = 0x400, scoped, tag = 'input window, operand 1, single buffered']
    #allocation9 [shape = 's32[1]{0}', space=sflag, size = 0x4, scoped, tag = 'scoped memory for transformer_block.4']
    #allocation10 [shape = 'u8[512]{0}', space=vmem, size = 0x400, scoped, tag = 'input window, operand 2, single buffered']
    #allocation11 [shape = 'u8[49152]{0}', space=vmem, size = 0xc000, scoped, tag = 'input window, operand 3']
    #allocation12 [shape = 's32[2]{0}', space=sflag, size = 0x8, scoped, tag = 'scoped memory for transformer_block.4']
    #allocation13 [shape = 'u8[3072]{0}', space=vmem, size = 0xc00, scoped, tag = 'input window, operand 4']
    #allocation14 [shape = 'u8[4096]{0}', space=vmem, size = 0x1000, scoped, tag = 'input window, operand 5']
    #allocation15 [shape = 's32[2]{0}', space=sflag, size = 0x8, scoped, tag = 'scoped memory for transformer_block.4']
    #allocation16 [shape = 'u8[512]{0}', space=vmem, size = 0x400, scoped, tag = 'input window, operand 6, single buffered']
    #allocation17 [shape = 'u8[8192]{0}', space=vmem, size = 0x2000, scoped, tag = 'output window, operand 0']
    #allocation18 [shape = 'u8[8192]{0}', space=vmem, size = 0x2000, scoped, tag = 'output window, operand 1']
    #allocation19 [shape = 's32[2]{0}', space=sflag, size = 0x8, scoped, tag = 'scoped memory for transformer_block.4']
    %14 = vsyncpa [#allocation6], 0
    %s15 = scalar_lea.sflag [#allocation6], 1
    %16 = vsyncpa %s15, 0
    %17 = vsyncpa [#allocation9], 0
    %18 = vsyncpa [#allocation12], 0
    %s19 = scalar_lea.sflag [#allocation12], 1
    %20 = vsyncpa %s19, 0
    %21 = vsyncpa [#allocation15], 0
    %s22 = scalar_lea.sflag [#allocation15], 1
    %23 = vsyncpa %s22, 0
    %24 = vsyncpa [#allocation7], 0
    %s25 = scalar_lea.sflag [#allocation7], 1
    %26 = vsyncpa %s25, 0
    %27 = vsyncpa [#allocation19], 0
    %s28 = scalar_lea.sflag [#allocation19], 1
    %29 = vsyncpa %s28, 0
    loop: start=0, step=1, limit=10
    $region2: #{transformer_block.4} parent=1 // loop_pre_header
      _
    $region3: #{transformer_block.4} parent=1 // loop_header
      %s31 = sphi 0, %s35
      %p32 = scmp.ge.s32.totalorder %s31, 10
      %s38 = sphi 0, %s50
      %s39 = sphi 0, %s46
      %s40 = sphi 0, %s38
      %s41 = sphi 0, %s39
      %s42 = sphi 0, %s40
      %s43 = sphi 0, %s41
      %s53 = sphi 0, %s55
      %s56 = sphi 0, %s53
      %s57 = sphi 0, %s56
      %s73 = sphi 0, %s57
      %s77 = sphi 0, %s77
      %s79 = sphi 0, %s77
      %s80 = sphi 0, %s79
      %s94 = sphi 0, %s80
      %s98 = sphi 0, %s98
      %s100 = sphi 0, %s98
      %s101 = sphi 0, %s100
      %s115 = sphi 0, %s101
      %s121 = sphi 0, %s123
      %s124 = sphi 0, %s121
      %s125 = sphi 0, %s124
      %s141 = sphi 0, %s125
      %s147 = sphi 0, %s149
      %s150 = sphi 0, %s147
      %s151 = sphi 0, %s150
      %s167 = sphi 0, %s151
      %s173 = sphi 0, %s175
      %s176 = sphi 0, %s173
      %s177 = sphi 0, %s176
      %s193 = sphi 0, %s177
      %s197 = sphi 0, %s197
      %s199 = sphi 0, %s197
      %s200 = sphi 0, %s199
      %s214 = sphi 0, %s200
      %s220 = sphi 0, %s222
      %s223 = sphi 0, %s220
      %s224 = sphi 0, %s223
      %s240 = sphi 0, %s224
      %s246 = sphi 0, %s248
      %s249 = sphi 0, %s246
      %s250 = sphi 0, %s249
      %s266 = sphi 0, %s250
    $region4: #{transformer_block.4} parent=1 // loop_header_branch
      %34 = sbr.rel (%p32) target = $region8
    $region5: #{transformer_block.4} parent=1 // loop_body
      %s36 = ssub.s32 %s31, 1
      %s37 = ssub.s32 %s31, 2
      %s44 = sadd.s32 1, %s39
      %p45 = scmp.ge.s32.totalorder %s44, 4
      %s46 = scalar_select %p45, 0, %s44
      %s47 = sadd.s32 1, %s38
      %s48 = scalar_select %p45, %s47, %s38
      %p49 = scmp.ge.s32.totalorder %s48, 2
      %s50 = scalar_select %p49, 0, %s48
      %s51 = ssub.s32 %s38, %s50
      %p52 = scmp.eq.s32.totalorder %s51, 0
      %s54 = sadd.s32 %s53, 1
      %s55 = scalar_select %p52, %s53, %s54
      %p58 = pneg %p52
      %p59 = scmp.eq.s32.totalorder %s31, 7
      %p60 = por %p58, %p59
      %p61 = scmp.ne.s32.totalorder %s53, %s56
      %p62 = scmp.eq.s32.totalorder %s31, 0
      %p63 = por %p61, %p62
      %p64 = scmp.ne.s32.totalorder %s53, %s56
      %p65 = scmp.eq.s32.totalorder %s36, 7
      %p66 = por %p64, %p65
      %p67 = scmp.ne.s32.totalorder %s56, %s57
      %p68 = scmp.eq.s32.totalorder %s36, 0
      %p69 = por %p67, %p68
      %p70 = scmp.ne.s32.totalorder %s56, %s57
      %p71 = scmp.eq.s32.totalorder %s37, 7
      %p72 = por %p70, %p71
      %p74 = scmp.ne.s32.totalorder %s57, %s73
      %p75 = scmp.eq.s32.totalorder %s37, 0
      %p76 = por %p74, %p75
      %s78 = sadd.s32 %s77, 1
      %p81 = scmp.eq.s32.totalorder %s31, 7
      %p82 = scmp.ne.s32.totalorder %s77, %s79
      %p83 = scmp.eq.s32.totalorder %s31, 0
      %p84 = por %p82, %p83
      %p85 = scmp.ne.s32.totalorder %s77, %s79
      %p86 = scmp.eq.s32.totalorder %s36, 7
      %p87 = por %p85, %p86
      %p88 = scmp.ne.s32.totalorder %s79, %s80
      %p89 = scmp.eq.s32.totalorder %s36, 0
      %p90 = por %p88, %p89
      %p91 = scmp.ne.s32.totalorder %s79, %s80
      %p92 = scmp.eq.s32.totalorder %s37, 7
      %p93 = por %p91, %p92
      %p95 = scmp.ne.s32.totalorder %s80, %s94
      %p96 = scmp.eq.s32.totalorder %s37, 0
      %p97 = por %p95, %p96
      %s99 = sadd.s32 %s98, 1
      %p102 = scmp.eq.s32.totalorder %s31, 7
      %p103 = scmp.ne.s32.totalorder %s98, %s100
      %p104 = scmp.eq.s32.totalorder %s31, 0
      %p105 = por %p103, %p104
      %p106 = scmp.ne.s32.totalorder %s98, %s100
      %p107 = scmp.eq.s32.totalorder %s36, 7
      %p108 = por %p106, %p107
      %p109 = scmp.ne.s32.totalorder %s100, %s101
      %p110 = scmp.eq.s32.totalorder %s36, 0
      %p111 = por %p109, %p110
      %p112 = scmp.ne.s32.totalorder %s100, %s101
      %p113 = scmp.eq.s32.totalorder %s37, 7
      %p114 = por %p112, %p113
      %p116 = scmp.ne.s32.totalorder %s101, %s115
      %p117 = scmp.eq.s32.totalorder %s37, 0
      %p118 = por %p116, %p117
      %s119 = ssub.s32 %s39, %s46
      %p120 = scmp.eq.s32.totalorder %s119, 0
      %s122 = sadd.s32 %s121, 1
      %s123 = scalar_select %p120, %s121, %s122
      %p126 = pneg %p120
      %p127 = scmp.eq.s32.totalorder %s31, 7
      %p128 = por %p126, %p127
      %p129 = scmp.ne.s32.totalorder %s121, %s124
      %p130 = scmp.eq.s32.totalorder %s31, 0
      %p131 = por %p129, %p130
      %p132 = scmp.ne.s32.totalorder %s121, %s124
      %p133 = scmp.eq.s32.totalorder %s36, 7
      %p134 = por %p132, %p133
      %p135 = scmp.ne.s32.totalorder %s124, %s125
      %p136 = scmp.eq.s32.totalorder %s36, 0
      %p137 = por %p135, %p136
      %p138 = scmp.ne.s32.totalorder %s124, %s125
      %p139 = scmp.eq.s32.totalorder %s37, 7
      %p140 = por %p138, %p139
      %p142 = scmp.ne.s32.totalorder %s125, %s141
      %p143 = scmp.eq.s32.totalorder %s37, 0
      %p144 = por %p142, %p143
      %s145 = ssub.s32 %s39, %s46
      %p146 = scmp.eq.s32.totalorder %s145, 0
      %s148 = sadd.s32 %s147, 1
      %s149 = scalar_select %p146, %s147, %s148
      %p152 = pneg %p146
      %p153 = scmp.eq.s32.totalorder %s31, 7
      %p154 = por %p152, %p153
      %p155 = scmp.ne.s32.totalorder %s147, %s150
      %p156 = scmp.eq.s32.totalorder %s31, 0
      %p157 = por %p155, %p156
      %p158 = scmp.ne.s32.totalorder %s147, %s150
      %p159 = scmp.eq.s32.totalorder %s36, 7
      %p160 = por %p158, %p159
      %p161 = scmp.ne.s32.totalorder %s150, %s151
      %p162 = scmp.eq.s32.totalorder %s36, 0
      %p163 = por %p161, %p162
      %p164 = scmp.ne.s32.totalorder %s150, %s151
      %p165 = scmp.eq.s32.totalorder %s37, 7
      %p166 = por %p164, %p165
      %p168 = scmp.ne.s32.totalorder %s151, %s167
      %p169 = scmp.eq.s32.totalorder %s37, 0
      %p170 = por %p168, %p169
      %s171 = ssub.s32 %s39, %s46
      %p172 = scmp.eq.s32.totalorder %s171, 0
      %s174 = sadd.s32 %s173, 1
      %s175 = scalar_select %p172, %s173, %s174
      %p178 = pneg %p172
      %p179 = scmp.eq.s32.totalorder %s31, 7
      %p180 = por %p178, %p179
      %p181 = scmp.ne.s32.totalorder %s173, %s176
      %p182 = scmp.eq.s32.totalorder %s31, 0
      %p183 = por %p181, %p182
      %p184 = scmp.ne.s32.totalorder %s173, %s176
      %p185 = scmp.eq.s32.totalorder %s36, 7
      %p186 = por %p184, %p185
      %p187 = scmp.ne.s32.totalorder %s176, %s177
      %p188 = scmp.eq.s32.totalorder %s36, 0
      %p189 = por %p187, %p188
      %p190 = scmp.ne.s32.totalorder %s176, %s177
      %p191 = scmp.eq.s32.totalorder %s37, 7
      %p192 = por %p190, %p191
      %p194 = scmp.ne.s32.totalorder %s177, %s193
      %p195 = scmp.eq.s32.totalorder %s37, 0
      %p196 = por %p194, %p195
      %s198 = sadd.s32 %s197, 1
      %p201 = scmp.eq.s32.totalorder %s31, 7
      %p202 = scmp.ne.s32.totalorder %s197, %s199
      %p203 = scmp.eq.s32.totalorder %s31, 0
      %p204 = por %p202, %p203
      %p205 = scmp.ne.s32.totalorder %s197, %s199
      %p206 = scmp.eq.s32.totalorder %s36, 7
      %p207 = por %p205, %p206
      %p208 = scmp.ne.s32.totalorder %s199, %s200
      %p209 = scmp.eq.s32.totalorder %s36, 0
      %p210 = por %p208, %p209
      %p211 = scmp.ne.s32.totalorder %s199, %s200
      %p212 = scmp.eq.s32.totalorder %s37, 7
      %p213 = por %p211, %p212
      %p215 = scmp.ne.s32.totalorder %s200, %s214
      %p216 = scmp.eq.s32.totalorder %s37, 0
      %p217 = por %p215, %p216
      %s218 = ssub.s32 %s38, %s50
      %p219 = scmp.eq.s32.totalorder %s218, 0
      %s221 = sadd.s32 %s220, 1
      %s222 = scalar_select %p219, %s220, %s221
      %p225 = pneg %p219
      %p226 = scmp.eq.s32.totalorder %s31, 7
      %p227 = por %p225, %p226
      %p228 = scmp.ne.s32.totalorder %s220, %s223
      %p229 = scmp.eq.s32.totalorder %s31, 0
      %p230 = por %p228, %p229
      %p231 = scmp.ne.s32.totalorder %s220, %s223
      %p232 = scmp.eq.s32.totalorder %s36, 7
      %p233 = por %p231, %p232
      %p234 = scmp.ne.s32.totalorder %s223, %s224
      %p235 = scmp.eq.s32.totalorder %s36, 0
      %p236 = por %p234, %p235
      %p237 = scmp.ne.s32.totalorder %s223, %s224
      %p238 = scmp.eq.s32.totalorder %s37, 7
      %p239 = por %p237, %p238
      %p241 = scmp.ne.s32.totalorder %s224, %s240
      %p242 = scmp.eq.s32.totalorder %s37, 0
      %p243 = por %p241, %p242
      %s244 = ssub.s32 %s38, %s50
      %p245 = scmp.eq.s32.totalorder %s244, 0
      %s247 = sadd.s32 %s246, 1
      %s248 = scalar_select %p245, %s246, %s247
      %p251 = pneg %p245
      %p252 = scmp.eq.s32.totalorder %s31, 7
      %p253 = por %p251, %p252
      %p254 = scmp.ne.s32.totalorder %s246, %s249
      %p255 = scmp.eq.s32.totalorder %s31, 0
      %p256 = por %p254, %p255
      %p257 = scmp.ne.s32.totalorder %s246, %s249
      %p258 = scmp.eq.s32.totalorder %s36, 7
      %p259 = por %p257, %p258
      %p260 = scmp.ne.s32.totalorder %s249, %s250
      %p261 = scmp.eq.s32.totalorder %s36, 0
      %p262 = por %p260, %p261
      %p263 = scmp.ne.s32.totalorder %s249, %s250
      %p264 = scmp.eq.s32.totalorder %s37, 7
      %p265 = por %p263, %p264
      %p267 = scmp.ne.s32.totalorder %s250, %s266
      %p268 = scmp.eq.s32.totalorder %s37, 0
      %p269 = por %p267, %p268
      %p270 = scmp.le.s32.totalorder 1, %s31
      %p271 = scmp.lt.s32.totalorder %s31, 9
      %p272 = pnand %p270, %p271
      %p273 = pneg %p272
      // Predicated region
      $region9: #{transformer_block.4} parent=5 // pred_check
        _
      $region10: #{transformer_block.4} parent=5 // pred_check_branch
        %275 = sbr.rel (%p272) target = $region12
      $region11: #{transformer_block.4} parent=5 // pred_region
        %s276 = ssub.s32 %s31, 1
        // Predicated region
        $region13: #{transformer_block.4} parent=11 // pred_check
          %p277 = pneg %p90
        $region14: #{transformer_block.4} parent=11 // pred_check_branch
          %279 = sbr.rel (%p277) target = $region16
        $region15: #{transformer_block.4} parent=11 // pred_region
          %s281 = ssub.s32 16, 16
          %282 = vsyncadd [#allocation9], %s281
          %s284 = sshll.u32 [#allocation8], 4
          %s285 = int_to_ptr.vmem [resolvable:$true] %s284
          %287 = dma.hbm_to_vmem [thread:$0]  %s1, 16, %s285, [#allocation9]
        $region16: #{transformer_block.4} parent=11 // pred_fallthru
          _
        // Predicated region
        $region17: #{transformer_block.4} parent=11 // pred_check
          %p288 = pneg %p111
        $region18: #{transformer_block.4} parent=11 // pred_check_branch
          %290 = sbr.rel (%p288) target = $region20
        $region19: #{transformer_block.4} parent=11 // pred_region
          %s292 = ssub.s32 16, 16
          %293 = vsyncadd [#allocation9], %s292
          %s295 = sshll.u32 [#allocation10], 4
          %s296 = int_to_ptr.vmem [resolvable:$true] %s295
          %298 = dma.hbm_to_vmem [thread:$0]  %s2, 16, %s296, [#allocation9]
        $region20: #{transformer_block.4} parent=11 // pred_fallthru
          _
        // Predicated region
        $region21: #{transformer_block.4} parent=11 // pred_check
          %p299 = pneg %p210
        $region22: #{transformer_block.4} parent=11 // pred_check_branch
          %301 = sbr.rel (%p299) target = $region24
        $region23: #{transformer_block.4} parent=11 // pred_region
          %s303 = ssub.s32 16, 16
          %304 = vsyncadd [#allocation15], %s303
          %s306 = sshll.u32 [#allocation16], 4
          %s307 = int_to_ptr.vmem [resolvable:$true] %s306
          %309 = dma.hbm_to_vmem [thread:$0]  %s6, 16, %s307, [#allocation15]
        $region24: #{transformer_block.4} parent=11 // pred_fallthru
          _
      $region12: #{transformer_block.4} parent=5 // pred_fallthru
        _
      %p310 = scmp.lt.s32.totalorder %s31, 8
      // Predicated region
      $region25: #{transformer_block.4} parent=5 // pred_check
        %p311 = pneg %p310
      $region26: #{transformer_block.4} parent=5 // pred_check_branch
        %313 = sbr.rel (%p311) target = $region28
      $region27: #{transformer_block.4} parent=5 // pred_region
        // Predicated region
        $region29: #{transformer_block.4} parent=27 // pred_check
          %p314 = pneg %p63
        $region30: #{transformer_block.4} parent=27 // pred_check_branch
          %316 = sbr.rel (%p314) target = $region32
        $region31: #{transformer_block.4} parent=27 // pred_region
          %s317 = sand.u32 %s53, 1
          %s318 = scalar_lea.sflag [#allocation6], %s317
          %s319 = sand.u32 %s53, 1
          %s320 = smul.addr %s319, 8
          %s321 = scalar_lea.vmem [#allocation5], %s320
          %s323 = ssub.s32 128, 128
          %324 = vsyncadd %s318, %s323
          %s325 = smul.addr %s38, 128
          %s326 = scalar_lea.hbm %s0, %s325
          %s328 = sshll.u32 %s321, 4
          %s329 = int_to_ptr.vmem [resolvable:$true] %s328
          %331 = dma.hbm_to_vmem [thread:$0]  %s326, 128, %s329, %s318
        $region32: #{transformer_block.4} parent=27 // pred_fallthru
          _
        // Predicated region
        $region33: #{transformer_block.4} parent=27 // pred_check
          %p332 = pneg %p131
        $region34: #{transformer_block.4} parent=27 // pred_check_branch
          %334 = sbr.rel (%p332) target = $region36
        $region35: #{transformer_block.4} parent=27 // pred_region
          %s335 = sand.u32 %s31, 1
          %s336 = scalar_lea.sflag [#allocation12], %s335
          %s337 = sand.u32 %s121, 1
          %s338 = smul.addr %s337, 48
          %s339 = scalar_lea.vmem [#allocation11], %s338
          %s341 = ssub.s32 768, 768
          %342 = vsyncadd %s336, %s341
          %s343 = smul.addr %s39, 12
          %s344 = smul.addr %s343, 64
          %s345 = scalar_lea.hbm %s3, %s344
          %s346 = sshll.u32 %s339, 4
          %s347 = int_to_ptr.vmem [resolvable:$true] %s346
          %352 = dma.hbm_to_vmem [thread:$0]  %s345, 768, %s347, %s336, 64, 64, 4
        $region36: #{transformer_block.4} parent=27 // pred_fallthru
          _
        // Predicated region
        $region37: #{transformer_block.4} parent=27 // pred_check
          %p353 = pneg %p157
        $region38: #{transformer_block.4} parent=27 // pred_check_branch
          %355 = sbr.rel (%p353) target = $region40
        $region39: #{transformer_block.4} parent=27 // pred_region
          %s356 = sand.u32 %s31, 1
          %s357 = scalar_lea.sflag [#allocation12], %s356
          %s358 = sand.u32 %s147, 1
          %s359 = smul.addr %s358, 3
          %s360 = scalar_lea.vmem [#allocation13], %s359
          %s362 = ssub.s32 48, 48
          %363 = vsyncadd %s357, %s362
          %s364 = smul.addr %s39, 3
          %s365 = smul.addr %s364, 16
          %s366 = scalar_lea.hbm %s4, %s365
          %s367 = sshll.u32 %s360, 4
          %s368 = int_to_ptr.vmem [resolvable:$true] %s367
          %373 = dma.hbm_to_vmem [thread:$0]  %s366, 48, %s368, %s357, 16, 16, 1
        $region40: #{transformer_block.4} parent=27 // pred_fallthru
          _
        // Predicated region
        $region41: #{transformer_block.4} parent=27 // pred_check
          %p374 = pneg %p183
        $region42: #{transformer_block.4} parent=27 // pred_check_branch
          %376 = sbr.rel (%p374) target = $region44
        $region43: #{transformer_block.4} parent=27 // pred_region
          %s377 = sand.u32 %s31, 1
          %s378 = scalar_lea.sflag [#allocation15], %s377
          %s379 = sand.u32 %s173, 1
          %s380 = smul.addr %s379, 4
          %s381 = scalar_lea.vmem [#allocation14], %s380
          %s383 = ssub.s32 64, 64
          %384 = vsyncadd %s378, %s383
          %s385 = smul.addr %s39, 64
          %s386 = scalar_lea.hbm %s5, %s385
          %s388 = sshll.u32 %s381, 4
          %s389 = int_to_ptr.vmem [resolvable:$true] %s388
          %391 = dma.hbm_to_vmem [thread:$0]  %s386, 64, %s389, %s378
        $region44: #{transformer_block.4} parent=27 // pred_fallthru
          _
      $region28: #{transformer_block.4} parent=5 // pred_fallthru
        _
      %p392 = scmp.le.s32.totalorder 1, %s31
      %p393 = scmp.lt.s32.totalorder %s31, 9
      %p394 = pnand %p392, %p393
      %p395 = pneg %p394
      // Predicated region
      $region45: #{transformer_block.4} parent=5 // pred_check
        _
      $region46: #{transformer_block.4} parent=5 // pred_check_branch
        %397 = sbr.rel (%p394) target = $region48
      $region47: #{transformer_block.4} parent=5 // pred_region
        %s398 = ssub.s32 %s31, 1
        %s399 = sand.u32 %s56, 1
        %s400 = scalar_lea.sflag [#allocation6], %s399
        %s401 = sand.u32 %s56, 1
        %s402 = smul.addr %s401, 8
        %s403 = scalar_lea.vmem [#allocation5], %s402
        // Predicated region
        $region49: #{transformer_block.4} parent=47 // pred_check
          %p404 = pneg %p69
        $region50: #{transformer_block.4} parent=47 // pred_check_branch
          %406 = sbr.rel (%p404) target = $region52
        $region51: #{transformer_block.4} parent=47 // pred_region
          %407 = dma.done %s400, 128
        $region52: #{transformer_block.4} parent=47 // pred_fallthru
          _
        // Predicated region
        $region53: #{transformer_block.4} parent=47 // pred_check
          %p408 = pneg %p90
        $region54: #{transformer_block.4} parent=47 // pred_check_branch
          %410 = sbr.rel (%p408) target = $region56
        $region55: #{transformer_block.4} parent=47 // pred_region
          %411 = dma.done [#allocation9], 16
        $region56: #{transformer_block.4} parent=47 // pred_fallthru
          _
        // Predicated region
        $region57: #{transformer_block.4} parent=47 // pred_check
          %p412 = pneg %p111
        $region58: #{transformer_block.4} parent=47 // pred_check_branch
          %414 = sbr.rel (%p412) target = $region60
        $region59: #{transformer_block.4} parent=47 // pred_region
          %415 = dma.done [#allocation9], 16
        $region60: #{transformer_block.4} parent=47 // pred_fallthru
          _
        %s416 = sand.u32 %s36, 1
        %s417 = scalar_lea.sflag [#allocation12], %s416
        %s418 = sand.u32 %s124, 1
        %s419 = smul.addr %s418, 48
        %s420 = scalar_lea.vmem [#allocation11], %s419
        // Predicated region
        $region61: #{transformer_block.4} parent=47 // pred_check
          %p421 = pneg %p137
        $region62: #{transformer_block.4} parent=47 // pred_check_branch
          %423 = sbr.rel (%p421) target = $region64
        $region63: #{transformer_block.4} parent=47 // pred_region
          %424 = dma.done %s417, 768
        $region64: #{transformer_block.4} parent=47 // pred_fallthru
          _
        %s425 = sand.u32 %s36, 1
        %s426 = scalar_lea.sflag [#allocation12], %s425
        %s427 = sand.u32 %s150, 1
        %s428 = smul.addr %s427, 3
        %s429 = scalar_lea.vmem [#allocation13], %s428
        // Predicated region
        $region65: #{transformer_block.4} parent=47 // pred_check
          %p430 = pneg %p163
        $region66: #{transformer_block.4} parent=47 // pred_check_branch
          %432 = sbr.rel (%p430) target = $region68
        $region67: #{transformer_block.4} parent=47 // pred_region
          %433 = dma.done %s426, 48
        $region68: #{transformer_block.4} parent=47 // pred_fallthru
          _
        %s434 = sand.u32 %s36, 1
        %s435 = scalar_lea.sflag [#allocation15], %s434
        %s436 = sand.u32 %s176, 1
        %s437 = smul.addr %s436, 4
        %s438 = scalar_lea.vmem [#allocation14], %s437
        // Predicated region
        $region69: #{transformer_block.4} parent=47 // pred_check
          %p439 = pneg %p189
        $region70: #{transformer_block.4} parent=47 // pred_check_branch
          %441 = sbr.rel (%p439) target = $region72
        $region71: #{transformer_block.4} parent=47 // pred_region
          %442 = dma.done %s435, 64
        $region72: #{transformer_block.4} parent=47 // pred_fallthru
          _
        // Predicated region
        $region73: #{transformer_block.4} parent=47 // pred_check
          %p443 = pneg %p210
        $region74: #{transformer_block.4} parent=47 // pred_check_branch
          %445 = sbr.rel (%p443) target = $region76
        $region75: #{transformer_block.4} parent=47 // pred_region
          %446 = dma.done [#allocation15], 16
        $region76: #{transformer_block.4} parent=47 // pred_fallthru
          _
        %s447 = sand.u32 %s56, 1
        %s448 = scalar_lea.sflag [#allocation6], %s447
        %s449 = sand.u32 %s56, 1
        %s450 = smul.addr %s449, 8
        %s451 = scalar_lea.vmem [#allocation5], %s450
        %p452 = pneg %p69
        %p453 = pneg %p66
        %p454 = pneg %p90
        %p455 = pneg %p87
        %p456 = pneg %p111
        %p457 = pneg %p108
        %s458 = sand.u32 %s36, 1
        %s459 = scalar_lea.sflag [#allocation12], %s458
        %s460 = sand.u32 %s124, 1
        %s461 = smul.addr %s460, 48
        %s462 = scalar_lea.vmem [#allocation11], %s461
        %p463 = pneg %p137
        %p464 = pneg %p134
        %s465 = sand.u32 %s36, 1
        %s466 = scalar_lea.sflag [#allocation12], %s465
        %s467 = sand.u32 %s150, 1
        %s468 = smul.addr %s467, 3
        %s469 = scalar_lea.vmem [#allocation13], %s468
        %p470 = pneg %p163
        %p471 = pneg %p160
        %s472 = sand.u32 %s36, 1
        %s473 = scalar_lea.sflag [#allocation15], %s472
        %s474 = sand.u32 %s176, 1
        %s475 = smul.addr %s474, 4
        %s476 = scalar_lea.vmem [#allocation14], %s475
        %p477 = pneg %p189
        %p478 = pneg %p186
        %p479 = pneg %p210
        %p480 = pneg %p207
        %p481 = pneg %p236
        %p482 = pneg %p233
        %s483 = sand.u32 %s223, 1
        %s484 = scalar_lea.sflag [#allocation7], %s483
        %s485 = sand.u32 %s223, 1
        %s486 = smul.addr %s485, 8
        %s487 = scalar_lea.vmem [#allocation17], %s486
        %p488 = pneg %p262
        %p489 = pneg %p259
        %s490 = sand.u32 %s249, 1
        %s491 = scalar_lea.sflag [#allocation19], %s490
        %s492 = sand.u32 %s249, 1
        %s493 = smul.addr %s492, 8
        %s494 = scalar_lea.vmem [#allocation18], %s493
        %p496 = scmp.eq.s32.totalorder %s41, 0
        // Predicated region
        $region77: #{transformer_block.4} parent=47 // pred_check
          %p497 = pneg %p496
        $region78: #{transformer_block.4} parent=47 // pred_check_branch
          %499 = sbr.rel (%p497) target = $region80
        $region79: #{transformer_block.4} parent=47 // pred_region
          %v500 = vld [vmem:[%s403] sm:$0xff]
          %v501 = vld [vmem:[#allocation8] sm:$0x1]
          %v502 = vld [vmem:[#allocation10] sm:$0x1]
          %vm503 = vcmask 261120
          %v504 = vsel %vm503, %v500, 0.0
          %505 = vadd.xlane.f32.xlu0 %v504
          %v506 = vpop.xlane.xlu0 %505
          %v507 = vrcp.pop 32.0
          %v508 = vmul.f32 %v506, %v507
          %v509 = vsub.f32 %v500, %v508
          %v510 = vmul.f32 %v509, %v509
          %v511 = vsel %vm503, %v510, 0.0
          %512 = vadd.xlane.f32.xlu0 %v511
          %v513 = vpop.xlane.xlu0 %512
          %v514 = vmul.f32 %v513, %v507
          %v515 = vadd.f32 %v514, 1e-05
          %v516 = vrsqrt.pop %v515
          %v517 = vmul.f32 %v509, %v516
          %v519 = vlaneseq
          %v520 = vshrl.u32 %v519, 7
          %v521 = vsub.s32 0, %v520
          %v522 = vrot.slane %v501, %v521
          %v524 = vmul.f32 %v517, %v522
          %v526 = vlaneseq
          %v527 = vshrl.u32 %v526, 7
          %v528 = vsub.s32 0, %v527
          %v529 = vrot.slane %v502, %v528
          %v531 = vadd.f32 %v524, %v529
          %v532 = vpack.c.bf16 %v531, %v531
          %vm533 = vcmask 257024
          %534 = vst.msk [vmem:[#allocation2] sm:$0xf] %vm533, %v532
          %535 = vst.msk [vmem:[#allocation3] sm:$0xff] %vm503, 0.0
          %vm536 = vcmask 64512
          %537 = vst.msk [vmem:[#allocation4] sm:$0xff] %vm536, 0.0
        $region80: #{transformer_block.4} parent=47 // pred_fallthru
          _
        %v538 = vld [vmem:[#allocation2] sm:$0xf]
        %v539 = vld [vmem:[%s420] sm:$0xf]
        %v540 = vld [vmem:[%s420 + $0x4] sm:$0xf]
        %v541 = vld [vmem:[%s420 + $0x8] sm:$0xf]
        %v542 = vld [vmem:[%s420 + $0xc] sm:$0xf]
        %s543 = scalar_lea.vmem %s420, 16 [#allocation11]
        %v544 = vld [vmem:[%s543] sm:$0xf]
        %v545 = vld [vmem:[%s543 + $0x4] sm:$0xf]
        %v546 = vld [vmem:[%s543 + $0x8] sm:$0xf]
        %v547 = vld [vmem:[%s543 + $0xc] sm:$0xf]
        %s548 = scalar_lea.vmem %s420, 32 [#allocation11]
        %v549 = vld [vmem:[%s548] sm:$0xf]
        %v550 = vld [vmem:[%s548 + $0x4] sm:$0xf]
        %v551 = vld [vmem:[%s548 + $0x8] sm:$0xf]
        %v552 = vld [vmem:[%s548 + $0xc] sm:$0xf]
        %v553 = vld [vmem:[%s429] sm:$0x1]
        %s554 = scalar_lea.vmem %s429, 1 [#allocation13]
        %v555 = vld [vmem:[%s554] sm:$0x1]
        %s556 = scalar_lea.vmem %s429, 2 [#allocation13]
        %v557 = vld [vmem:[%s556] sm:$0x1]
        %v559 = vlaneseq
        %v560 = vshrl.u32 %v559, 7
        %v561 = vsub.s32 0, %v560
        %v562 = vrot.slane %v553, %v561
        %v568 = vunpack.c.l.b16 %v539
        %v569 = vunpack.c.l.b16 %v540
        %v570 = vunpack.c.l.b16 %v541
        %v571 = vunpack.c.l.b16 %v542
        %v572 = vpack.c.b16 %v569, %v568
        %v573 = vpack.c.b16 %v571, %v570
        %vm576 = vcmask 261120
        %v578 = vsel %vm576, %v538, 0
        %580 = vmatprep.subr.bf16.mxu0 0
        %581 = vmatpush1.bf16.msra.mxu0 %v572
        %582 = vmatprep.subr.bf16.mxu0 0
        %583 = vmatpush1.bf16.msra.mxu0 %v573
        %584 = vmatprep.subr.bf16.mxu0 0
        %585 = vmatpush1.bf16.msra.mxu0 0
        %586 = vmatprep.subr.bf16.mxu0 0
        %587 = vmatpush1.bf16.msra.mxu0 0
        %588 = vmatprep.subr.bf16.mxu0 0
        %589 = vmatpush1.bf16.msra.mxu0 0
        %590 = vmatprep.subr.bf16.mxu0 0
        %591 = vmatpush1.bf16.msra.mxu0 0
        %592 = vmatprep.subr.bf16.mxu0 0
        %593 = vmatpush1.bf16.msra.mxu0 0
        %594 = vmatprep.subr.bf16.mxu0 0
        %595 = vmatpush1.bf16.msra.mxu0 0
        %596 = vmatprep.subr.bf16.mxu0 0
        %597 = vmatpush1.bf16.msra.mxu0 0
        %598 = vmatprep.subr.bf16.mxu0 0
        %599 = vmatpush1.bf16.msra.mxu0 0
        %600 = vmatprep.subr.bf16.mxu0 0
        %601 = vmatpush1.bf16.msra.mxu0 0
        %602 = vmatprep.subr.bf16.mxu0 0
        %603 = vmatpush1.bf16.msra.mxu0 0
        %604 = vmatprep.subr.bf16.mxu0 0
        %605 = vmatpush1.bf16.msra.mxu0 0
        %606 = vmatprep.subr.bf16.mxu0 0
        %607 = vmatpush1.bf16.msra.mxu0 0
        %608 = vmatprep.subr.bf16.mxu0 0
        %609 = vmatpush1.bf16.msra.mxu0 0
        %610 = vmatprep.subr.bf16.mxu0 0
        %611 = vmatpush1.bf16.msra.mxu0 0
        %612 = vmatprep.mubr.bf16.mxu0 0
        %613 = vmatmul.mubr.bf16.gmra.mrb[0].mxu0 %v578
        %v614 = vpop.f32.mrb[0].mxu0
        %v615 = vadd.f32 %v562, %v614
        %v616 = vpop.f32.mrb[0].mxu0
        %v617 = vpop.f32.mrb[0].mxu0
        %v618 = vpop.f32.mrb[0].mxu0
        %619 = vdwg.mxu0
        %v620 = vpack.c.bf16 %v615, %v615
        %v622 = vlaneseq
        %v623 = vshrl.u32 %v622, 7
        %v624 = vsub.s32 0, %v623
        %v625 = vrot.slane %v555, %v624
        %v631 = vunpack.c.l.b16 %v544
        %v632 = vunpack.c.l.b16 %v545
        %v633 = vunpack.c.l.b16 %v546
        %v634 = vunpack.c.l.b16 %v547
        %v635 = vpack.c.b16 %v632, %v631
        %v636 = vpack.c.b16 %v634, %v633
        %639 = vmatprep.subr.bf16.mxu0 0
        %640 = vmatpush1.bf16.msra.mxu0 %v635
        %641 = vmatprep.subr.bf16.mxu0 0
        %642 = vmatpush1.bf16.msra.mxu0 %v636
        %643 = vmatprep.subr.bf16.mxu0 0
        %644 = vmatpush1.bf16.msra.mxu0 0
        %645 = vmatprep.subr.bf16.mxu0 0
        %646 = vmatpush1.bf16.msra.mxu0 0
        %647 = vmatprep.subr.bf16.mxu0 0
        %648 = vmatpush1.bf16.msra.mxu0 0
        %649 = vmatprep.subr.bf16.mxu0 0
        %650 = vmatpush1.bf16.msra.mxu0 0
        %651 = vmatprep.subr.bf16.mxu0 0
        %652 = vmatpush1.bf16.msra.mxu0 0
        %653 = vmatprep.subr.bf16.mxu0 0
        %654 = vmatpush1.bf16.msra.mxu0 0
        %655 = vmatprep.subr.bf16.mxu0 0
        %656 = vmatpush1.bf16.msra.mxu0 0
        %657 = vmatprep.subr.bf16.mxu0 0
        %658 = vmatpush1.bf16.msra.mxu0 0
        %659 = vmatprep.subr.bf16.mxu0 0
        %660 = vmatpush1.bf16.msra.mxu0 0
        %661 = vmatprep.subr.bf16.mxu0 0
        %662 = vmatpush1.bf16.msra.mxu0 0
        %663 = vmatprep.subr.bf16.mxu0 0
        %664 = vmatpush1.bf16.msra.mxu0 0
        %665 = vmatprep.subr.bf16.mxu0 0
        %666 = vmatpush1.bf16.msra.mxu0 0
        %667 = vmatprep.subr.bf16.mxu0 0
        %668 = vmatpush1.bf16.msra.mxu0 0
        %669 = vmatprep.subr.bf16.mxu0 0
        %670 = vmatpush1.bf16.msra.mxu0 0
        %671 = vmatprep.mubr.bf16.mxu0 0
        %672 = vmatmul.mubr.bf16.gmra.mrb[0].mxu0 %v578
        %v673 = vpop.f32.mrb[0].mxu0
        %v674 = vadd.f32 %v625, %v673
        %v675 = vpop.f32.mrb[0].mxu0
        %v676 = vpop.f32.mrb[0].mxu0
        %v677 = vpop.f32.mrb[0].mxu0
        %678 = vdwg.mxu0
        %v679 = vpack.c.bf16 %v674, %v674
        %v681 = vlaneseq
        %v682 = vshrl.u32 %v681, 7
        %v683 = vsub.s32 0, %v682
        %v684 = vrot.slane %v557, %v683
        %v690 = vunpack.c.l.b16 %v549
        %v691 = vunpack.c.l.b16 %v550
        %v692 = vunpack.c.l.b16 %v551
        %v693 = vunpack.c.l.b16 %v552
        %v694 = vpack.c.b16 %v691, %v690
        %v695 = vpack.c.b16 %v693, %v692
        %698 = vmatprep.subr.bf16.mxu0 0
        %699 = vmatpush1.bf16.msra.mxu0 %v694
        %700 = vmatprep.subr.bf16.mxu0 0
        %701 = vmatpush1.bf16.msra.mxu0 %v695
        %702 = vmatprep.subr.bf16.mxu0 0
        %703 = vmatpush1.bf16.msra.mxu0 0
        %704 = vmatprep.subr.bf16.mxu0 0
        %705 = vmatpush1.bf16.msra.mxu0 0
        %706 = vmatprep.subr.bf16.mxu0 0
        %707 = vmatpush1.bf16.msra.mxu0 0
        %708 = vmatprep.subr.bf16.mxu0 0
        %709 = vmatpush1.bf16.msra.mxu0 0
        %710 = vmatprep.subr.bf16.mxu0 0
        %711 = vmatpush1.bf16.msra.mxu0 0
        %712 = vmatprep.subr.bf16.mxu0 0
        %713 = vmatpush1.bf16.msra.mxu0 0
        %714 = vmatprep.subr.bf16.mxu0 0
        %715 = vmatpush1.bf16.msra.mxu0 0
        %716 = vmatprep.subr.bf16.mxu0 0
        %717 = vmatpush1.bf16.msra.mxu0 0
        %718 = vmatprep.subr.bf16.mxu0 0
        %719 = vmatpush1.bf16.msra.mxu0 0
        %720 = vmatprep.subr.bf16.mxu0 0
        %721 = vmatpush1.bf16.msra.mxu0 0
        %722 = vmatprep.subr.bf16.mxu0 0
        %723 = vmatpush1.bf16.msra.mxu0 0
        %724 = vmatprep.subr.bf16.mxu0 0
        %725 = vmatpush1.bf16.msra.mxu0 0
        %726 = vmatprep.subr.bf16.mxu0 0
        %727 = vmatpush1.bf16.msra.mxu0 0
        %728 = vmatprep.subr.bf16.mxu0 0
        %729 = vmatpush1.bf16.msra.mxu0 0
        %730 = vmatprep.mubr.bf16.mxu0 0
        %731 = vmatmul.mubr.bf16.gmra.mrb[0].mxu0 %v578
        %v732 = vpop.f32.mrb[0].mxu0
        %v733 = vadd.f32 %v684, %v732
        %v734 = vpop.f32.mrb[0].mxu0
        %v735 = vpop.f32.mrb[0].mxu0
        %v736 = vpop.f32.mrb[0].mxu0
        %737 = vdwg.mxu0
        %v738 = vpack.c.bf16 %v733, %v733
        %vm739 = vcmask 64512
        %v741 = vsel %vm739, %v620, 0
        %v744 = vsel %vm739, %v679, 0
        %746 = vmatprep.subr.bf16.mxu0 0
        %747 = vmatpush1.bf16.xpose.msra.mxu0 %v744
        %748 = vmatprep.subr.bf16.mxu0 0
        %749 = vmatpush1.bf16.xpose.msra.mxu0 0
        %750 = vmatprep.subr.bf16.mxu0 0
        %751 = vmatpush1.bf16.xpose.msra.mxu0 0
        %752 = vmatprep.subr.bf16.mxu0 0
        %753 = vmatpush1.bf16.xpose.msra.mxu0 0
        %754 = vmatprep.subr.bf16.mxu0 0
        %755 = vmatpush1.bf16.xpose.msra.mxu0 0
        %756 = vmatprep.subr.bf16.mxu0 0
        %757 = vmatpush1.bf16.xpose.msra.mxu0 0
        %758 = vmatprep.subr.bf16.mxu0 0
        %759 = vmatpush1.bf16.xpose.msra.mxu0 0
        %760 = vmatprep.subr.bf16.mxu0 0
        %761 = vmatpush1.bf16.xpose.msra.mxu0 0
        %762 = vmatprep.subr.bf16.mxu0 0
        %763 = vmatpush1.bf16.xpose.msra.mxu0 0
        %764 = vmatprep.subr.bf16.mxu0 0
        %765 = vmatpush1.bf16.xpose.msra.mxu0 0
        %766 = vmatprep.subr.bf16.mxu0 0
        %767 = vmatpush1.bf16.xpose.msra.mxu0 0
        %768 = vmatprep.subr.bf16.mxu0 0
        %769 = vmatpush1.bf16.xpose.msra.mxu0 0
        %770 = vmatprep.subr.bf16.mxu0 0
        %771 = vmatpush1.bf16.xpose.msra.mxu0 0
        %772 = vmatprep.subr.bf16.mxu0 0
        %773 = vmatpush1.bf16.xpose.msra.mxu0 0
        %774 = vmatprep.subr.bf16.mxu0 0
        %775 = vmatpush1.bf16.xpose.msra.mxu0 0
        %776 = vmatprep.subr.bf16.mxu0 0
        %777 = vmatpush1.bf16.xpose.msra.mxu0 0
        %778 = vmatprep.mubr.bf16.mxu0 0
        %779 = vmatmul.mubr.bf16.gmra.mrb[0].mxu0 %v741
        %v780 = vpop.f32.mrb[0].mxu0
        %v781 = vadd.f32 0.0, %v780
        %v782 = vpop.f32.mrb[0].mxu0
        %v783 = vpop.f32.mrb[0].mxu0
        %v784 = vpop.f32.mrb[0].mxu0
        %785 = vdwg.mxu0
        %v786 = vsel %vm739, %v781, -inf
        %787 = vmax.xlane.f32.xlu0 %v786
        %v788 = vpop.xlane.xlu0 %787
        %v789 = vsub.f32 %v781, %v788
        %v790 = vmul.f32 %v789, 1.442695
        %v791 = vpow.pop %v790
        %v792 = vsel %vm739, %v791, 0.0
        %793 = vadd.xlane.f32.xlu0 %v792
        %v794 = vpop.xlane.xlu0 %793
        %v795 = vrcp.pop %v794
        %v796 = vmul.f32 %v791, %v795
        %v797 = vld [vmem:[#allocation4] sm:$0xff]
        %v798 = vadd.f32 %v797, %v796
        %799 = vst.msk [vmem:[#allocation4] sm:$0xff] %vm739, %v798
        %v800 = vpack.c.bf16 %v796, %v796
        %v802 = vsel %vm739, %v800, 0
        %vm804 = vcmask 1043456
        %v806 = vsel %vm804, %v738, 0
        %808 = vmatprep.subr.bf16.mxu0 0
        %809 = vmatpush1.bf16.msra.mxu0 %v806
        %810 = vmatprep.subr.bf16.mxu0 0
        %811 = vmatpush1.bf16.msra.mxu0 0
        %812 = vmatprep.subr.bf16.mxu0 0
        %813 = vmatpush1.bf16.msra.mxu0 0
        %814 = vmatprep.subr.bf16.mxu0 0
        %815 = vmatpush1.bf16.msra.mxu0 0
        %816 = vmatprep.subr.bf16.mxu0 0
        %817 = vmatpush1.bf16.msra.mxu0 0
        %818 = vmatprep.subr.bf16.mxu0 0
        %819 = vmatpush1.bf16.msra.mxu0 0
        %820 = vmatprep.subr.bf16.mxu0 0
        %821 = vmatpush1.bf16.msra.mxu0 0
        %822 = vmatprep.subr.bf16.mxu0 0
        %823 = vmatpush1.bf16.msra.mxu0 0
        %824 = vmatprep.subr.bf16.mxu0 0
        %825 = vmatpush1.bf16.msra.mxu0 0
        %826 = vmatprep.subr.bf16.mxu0 0
        %827 = vmatpush1.bf16.msra.mxu0 0
        %828 = vmatprep.subr.bf16.mxu0 0
        %829 = vmatpush1.bf16.msra.mxu0 0
        %830 = vmatprep.subr.bf16.mxu0 0
        %831 = vmatpush1.bf16.msra.mxu0 0
        %832 = vmatprep.subr.bf16.mxu0 0
        %833 = vmatpush1.bf16.msra.mxu0 0
        %834 = vmatprep.subr.bf16.mxu0 0
        %835 = vmatpush1.bf16.msra.mxu0 0
        %836 = vmatprep.subr.bf16.mxu0 0
        %837 = vmatpush1.bf16.msra.mxu0 0
        %838 = vmatprep.subr.bf16.mxu0 0
        %839 = vmatpush1.bf16.msra.mxu0 0
        %840 = vmatprep.mubr.bf16.mxu0 0
        %841 = vmatmul.mubr.bf16.gmra.mrb[0].mxu0 %v802
        %v842 = vpop.f32.mrb[0].mxu0
        %v843 = vadd.f32 0.0, %v842
        %v844 = vpop.f32.mrb[0].mxu0
        %v845 = vpop.f32.mrb[0].mxu0
        %v846 = vpop.f32.mrb[0].mxu0
        %847 = vdwg.mxu0
        %v848 = vld [vmem:[#allocation3] sm:$0xff]
        %v849 = vpack.c.bf16 %v843, %v843
        %v850 = vld [vmem:[%s438] sm:$0xf]
        %v852 = vsel %vm739, %v849, 0
        %v855 = vsel %vm804, %v850, 0
        %857 = vmatprep.subr.bf16.mxu0 0
        %858 = vmatpush1.bf16.msra.mxu0 %v855
        %859 = vmatprep.subr.bf16.mxu0 0
        %860 = vmatpush1.bf16.msra.mxu0 0
        %861 = vmatprep.subr.bf16.mxu0 0
        %862 = vmatpush1.bf16.msra.mxu0 0
        %863 = vmatprep.subr.bf16.mxu0 0
        %864 = vmatpush1.bf16.msra.mxu0 0
        %865 = vmatprep.subr.bf16.mxu0 0
        %866 = vmatpush1.bf16.msra.mxu0 0
        %867 = vmatprep.subr.bf16.mxu0 0
        %868 = vmatpush1.bf16.msra.mxu0 0
        %869 = vmatprep.subr.bf16.mxu0 0
        %870 = vmatpush1.bf16.msra.mxu0 0
        %871 = vmatprep.subr.bf16.mxu0 0
        %872 = vmatpush1.bf16.msra.mxu0 0
        %873 = vmatprep.subr.bf16.mxu0 0
        %874 = vmatpush1.bf16.msra.mxu0 0
        %875 = vmatprep.subr.bf16.mxu0 0
        %876 = vmatpush1.bf16.msra.mxu0 0
        %877 = vmatprep.subr.bf16.mxu0 0
        %878 = vmatpush1.bf16.msra.mxu0 0
        %879 = vmatprep.subr.bf16.mxu0 0
        %880 = vmatpush1.bf16.msra.mxu0 0
        %881 = vmatprep.subr.bf16.mxu0 0
        %882 = vmatpush1.bf16.msra.mxu0 0
        %883 = vmatprep.subr.bf16.mxu0 0
        %884 = vmatpush1.bf16.msra.mxu0 0
        %885 = vmatprep.subr.bf16.mxu0 0
        %886 = vmatpush1.bf16.msra.mxu0 0
        %887 = vmatprep.subr.bf16.mxu0 0
        %888 = vmatpush1.bf16.msra.mxu0 0
        %889 = vmatprep.mubr.bf16.mxu0 0
        %890 = vmatmul.mubr.bf16.gmra.mrb[0].mxu0 %v852
        %v891 = vpop.f32.mrb[0].mxu0
        %v892 = vadd.f32 0.0, %v891
        %v893 = vpop.f32.mrb[0].mxu0
        %v894 = vpop.f32.mrb[0].mxu0
        %v895 = vpop.f32.mrb[0].mxu0
        %896 = vdwg.mxu0
        %v897 = vadd.f32 %v848, %v892
        %898 = vst.msk [vmem:[#allocation3] sm:$0xff] %vm576, %v897
        %p899 = scmp.eq.s32.totalorder %s41, 3
        // Predicated region
        $region81: #{transformer_block.4} parent=47 // pred_check
          %p900 = pneg %p899
        $region82: #{transformer_block.4} parent=47 // pred_check_branch
          %902 = sbr.rel (%p900) target = $region84
        $region83: #{transformer_block.4} parent=47 // pred_region
          %v903 = vld [vmem:[#allocation3] sm:$0xff]
          %v904 = vld [vmem:[#allocation16] sm:$0x1]
          %v906 = vlaneseq
          %v907 = vshrl.u32 %v906, 7
          %v908 = vsub.s32 0, %v907
          %v909 = vrot.slane %v904, %v908
          %v911 = vadd.f32 %v903, %v909
          %v912 = vld [vmem:[%s403] sm:$0xff]
          %v913 = vadd.f32 %v911, %v912
          %914 = vst.msk [vmem:[%s487] sm:$0xff] %vm576, %v913
          %v915 = vld [vmem:[#allocation4] sm:$0xff]
          %v916 = vmul.f32 %v915, 0.25
          %917 = vst.msk [vmem:[%s494] sm:$0xff] %vm739, %v916
        $region84: #{transformer_block.4} parent=47 // pred_fallthru
          _
        %s918 = sand.u32 %s223, 1
        %s919 = scalar_lea.sflag [#allocation7], %s918
        %s920 = sand.u32 %s223, 1
        %s921 = smul.addr %s920, 8
        %s922 = scalar_lea.vmem [#allocation17], %s921
        %s923 = sand.u32 %s249, 1
        %s924 = scalar_lea.sflag [#allocation19], %s923
        %s925 = sand.u32 %s249, 1
        %s926 = smul.addr %s925, 8
        %s927 = scalar_lea.vmem [#allocation18], %s926
        // Predicated region
        $region85: #{transformer_block.4} parent=47 // pred_check
          %p928 = pneg %p233
        $region86: #{transformer_block.4} parent=47 // pred_check_branch
          %930 = sbr.rel (%p928) target = $region88
        $region87: #{transformer_block.4} parent=47 // pred_region
          %s932 = ssub.s32 128, 128
          %933 = vsyncadd %s919, %s932
          %s934 = smul.addr %s40, 128
          %s935 = scalar_lea.hbm %s7, %s934
          %s937 = sshll.u32 %s922, 4
          %s938 = int_to_ptr.vmem [resolvable:$true] %s937
          %940 = dma.vmem_to_hbm [thread:$0]  %s938, 128, %s935, %s919
        $region88: #{transformer_block.4} parent=47 // pred_fallthru
          _
        // Predicated region
        $region89: #{transformer_block.4} parent=47 // pred_check
          %p941 = pneg %p259
        $region90: #{transformer_block.4} parent=47 // pred_check_branch
          %943 = sbr.rel (%p941) target = $region92
        $region91: #{transformer_block.4} parent=47 // pred_region
          %s945 = ssub.s32 128, 128
          %946 = vsyncadd %s924, %s945
          %s947 = smul.addr %s40, 128
          %s948 = scalar_lea.hbm %s8, %s947
          %s950 = sshll.u32 %s927, 4
          %s951 = int_to_ptr.vmem [resolvable:$true] %s950
          %953 = dma.vmem_to_hbm [thread:$0]  %s951, 128, %s948, %s924
        $region92: #{transformer_block.4} parent=47 // pred_fallthru
          _
      $region48: #{transformer_block.4} parent=5 // pred_fallthru
        _
      %p954 = scmp.le.s32.totalorder 2, %s31
      // Predicated region
      $region93: #{transformer_block.4} parent=5 // pred_check
        %p955 = pneg %p954
      $region94: #{transformer_block.4} parent=5 // pred_check_branch
        %957 = sbr.rel (%p955) target = $region96
      $region95: #{transformer_block.4} parent=5 // pred_region
        %s958 = ssub.s32 %s31, 2
        // Predicated region
        $region97: #{transformer_block.4} parent=95 // pred_check
          %p959 = pneg %p239
        $region98: #{transformer_block.4} parent=95 // pred_check_branch
          %961 = sbr.rel (%p959) target = $region100
        $region99: #{transformer_block.4} parent=95 // pred_region
          %s962 = sand.u32 %s224, 1
          %s963 = scalar_lea.sflag [#allocation7], %s962
          %s964 = sand.u32 %s224, 1
          %s965 = smul.addr %s964, 8
          %s966 = scalar_lea.vmem [#allocation17], %s965
          %967 = dma.done %s963, 128
        $region100: #{transformer_block.4} parent=95 // pred_fallthru
          _
        // Predicated region
        $region101: #{transformer_block.4} parent=95 // pred_check
          %p968 = pneg %p265
        $region102: #{transformer_block.4} parent=95 // pred_check_branch
          %970 = sbr.rel (%p968) target = $region104
        $region103: #{transformer_block.4} parent=95 // pred_region
          %s971 = sand.u32 %s250, 1
          %s972 = scalar_lea.sflag [#allocation19], %s971
          %s973 = sand.u32 %s250, 1
          %s974 = smul.addr %s973, 8
          %s975 = scalar_lea.vmem [#allocation18], %s974
          %976 = dma.done %s972, 128
        $region104: #{transformer_block.4} parent=95 // pred_fallthru
          _
      $region96: #{transformer_block.4} parent=5 // pred_fallthru
        _
    $region6: #{transformer_block.4} parent=1 // loop_footer
      %s35 = sadd.s32 1, %s31
    $region7: #{transformer_block.4} parent=1 // loop_footer_branch
      %30 = sbr.rel target = $region3
    $region8: #{transformer_block.4} parent=1 // loop_exit
      _
    %977 = vsyncpa [#allocation6], 1
    %s978 = scalar_lea.sflag [#allocation6], 1
    %979 = vsyncpa %s978, 1
    %980 = vsyncpa [#allocation9], 1
    %981 = vsyncpa [#allocation12], 1
    %s982 = scalar_lea.sflag [#allocation12], 1
    %983 = vsyncpa %s982, 1
    %984 = vsyncpa [#allocation15], 1
    %s985 = scalar_lea.sflag [#allocation15], 1
    %986 = vsyncpa %s985, 1
    %987 = vsyncpa [#allocation7], 1
    %s988 = scalar_lea.sflag [#allocation7], 1
    %989 = vsyncpa %s988, 1
    %990 = vsyncpa [#allocation19], 1
    %s991 = scalar_lea.sflag [#allocation19], 1
    %992 = vsyncpa %s991, 1

// kernel: transformer_block.5
$region0: #{transformer_block.5}
  #allocation0 [shape = 'u32[]', space=smem, size = 0x4, offset = 0x4, fixed_abs, tag = 'smem constant byte address 0x4 - core index']
  #allocation1 [shape = 'u32[144,128]{1,0:T(1,128)}', space=vmem, size = 0x12000, scoped, tag = 'internal scratch']
  %s0 = inlined_call_operand.hbm [shape: f32[16,32], index: 0, kind: input, shape index: {}]
  %s1 = inlined_call_operand.hbm [shape: f32[1,32], index: 1, kind: input, shape index: {}]
  %s2 = inlined_call_operand.hbm [shape: f32[1,32], index: 2, kind: input, shape index: {}]
  %s3 = inlined_call_operand.hbm [shape: bf16[32,128], index: 3, kind: input, shape index: {}]
  %s4 = inlined_call_operand.hbm [shape: f32[1,128], index: 4, kind: input, shape index: {}]
  %s5 = inlined_call_operand.hbm [shape: bf16[128,32], index: 5, kind: input, shape index: {}]
  %s6 = inlined_call_operand.hbm [shape: f32[1,32], index: 6, kind: input, shape index: {}]
  %s7 = inlined_call_operand.hbm [shape: f32[16,32], index: 7, kind: output, shape index: {}]
  %s8 = sld [smem:[#allocation0]]
  $region66: #{transformer_block.5} parent=0
    _
  %s10 = ssub.s32 1, %s8
  %s11 = scalar_select 0, %s10, %s8
  $region1: #{transformer_block.5} parent=0
    #allocation2 [shape = 'u8[8192]{0}', space=vmem, size = 0x2000, scoped, tag = 'input window, operand 0, single buffered']
    #allocation3 [shape = 's32[1]{0}', space=sflag, size = 0x4, scoped, tag = 'scoped memory for transformer_block.5']
    #allocation4 [shape = 's32[1]{0}', space=sflag, size = 0x4, scoped, tag = 'scoped memory for transformer_block.5']
    #allocation5 [shape = 'u8[512]{0}', space=vmem, size = 0x400, scoped, tag = 'input window, operand 1, single buffered']
    #allocation6 [shape = 's32[1]{0}', space=sflag, size = 0x4, scoped, tag = 'scoped memory for transformer_block.5']
    #allocation7 [shape = 'u8[512]{0}', space=vmem, size = 0x400, scoped, tag = 'input window, operand 2, single buffered']
    #allocation8 [shape = 'u8[8192]{0}', space=vmem, size = 0x2000, scoped, tag = 'input window, operand 3, single buffered']
    #allocation9 [shape = 's32[1]{0}', space=sflag, size = 0x4, scoped, tag = 'scoped memory for transformer_block.5']
    #allocation10 [shape = 'u8[512]{0}', space=vmem, size = 0x400, scoped, tag = 'input window, operand 4, single buffered']
    #allocation11 [shape = 'u8[32768]{0}', space=vmem, size = 0x8000, scoped, tag = 'input window, operand 5, single buffered']
    #allocation12 [shape = 's32[1]{0}', space=sflag, size = 0x4, scoped, tag = 'scoped memory for transformer_block.5']
    #allocation13 [shape = 'u8[512]{0}', space=vmem, size = 0x400, scoped, tag = 'input window, operand 6, single buffered']
    #allocation14 [shape = 'u8[8192]{0}', space=vmem, size = 0x2000, scoped, tag = 'output window, operand 0, single buffered']
    %12 = vsyncpa [#allocation3], 0
    %13 = vsyncpa [#allocation6], 0
    %14 = vsyncpa [#allocation9], 0
    %15 = vsyncpa [#allocation12], 0
    %16 = vsyncpa [#allocation4], 0
    // Predicated region
    $region2: #{transformer_block.5} parent=1 // pred_check
      _
    $region3: #{transformer_block.5} parent=1 // pred_check_branch
      %18 = sbr.rel (0) target = $region5
    $region4: #{transformer_block.5} parent=1 // pred_region
      %s20 = ssub.s32 256, 256
      %21 = vsyncadd [#allocation3], %s20
      %s22 = sshll.u32 [#allocation2], 4
      %s23 = int_to_ptr.vmem [resolvable:$true] %s22
      %28 = dma.hbm_to_vmem [thread:$0]  %s0, 256, %s23, [#allocation3], 128, 128, 8
    $region5: #{transformer_block.5} parent=1 // pred_fallthru
      _
    // Predicated region
    $region6: #{transformer_block.5} parent=1 // pred_check
      _
    $region7: #{transformer_block.5} parent=1 // pred_check_branch
      %30 = sbr.rel (0) target = $region9
    $region8: #{transformer_block.5} parent=1 // pred_region
      %s32 = ssub.s32 16, 16
      %33 = vsyncadd [#allocation6], %s32
      %s35 = sshll.u32 [#allocation5], 4
      %s36 = int_to_ptr.vmem [resolvable:$true] %s35
      %38 = dma.hbm_to_vmem [thread:$0]  %s1, 16, %s36, [#allocation6]
    $region9: #{transformer_block.5} parent=1 // pred_fallthru
      _
    // Predicated region
    $region10: #{transformer_block.5} parent=1 // pred_check
      _
    $region11: #{transformer_block.5} parent=1 // pred_check_branch
      %40 = sbr.rel (0) target = $region13
    $region12: #{transformer_block.5} parent=1 // pred_region
      %s42 = ssub.s32 16, 16
      %43 = vsyncadd [#allocation6], %s42
      %s45 = sshll.u32 [#allocation7], 4
      %s46 = int_to_ptr.vmem [resolvable:$true] %s45
      %48 = dma.hbm_to_vmem [thread:$0]  %s2, 16, %s46, [#allocation6]
    $region13: #{transformer_block.5} parent=1 // pred_fallthru
      _
    // Predicated region
    $region14: #{transformer_block.5} parent=1 // pred_check
      _
    $region15: #{transformer_block.5} parent=1 // pred_check_branch
      %50 = sbr.rel (0) target = $region17
    $region16: #{transformer_block.5} parent=1 // pred_region
      %s52 = ssub.s32 256, 256
      %53 = vsyncadd [#allocation9], %s52
      %s54 = sshll.u32 [#allocation8], 4
      %s55 = int_to_ptr.vmem [resolvable:$true] %s54
      %60 = dma.hbm_to_vmem [thread:$0]  %s3, 256, %s55, [#allocation9], 64, 64, 4
    $region17: #{transformer_block.5} parent=1 // pred_fallthru
      _
    // Predicated region
    $region18: #{transformer_block.5} parent=1 // pred_check
      _
    $region19: #{transformer_block.5} parent=1 // pred_check_branch
      %62 = sbr.rel (0) target = $region21
    $region20: #{transformer_block.5} parent=1 // pred_region
      %s64 = ssub.s32 16, 16
      %65 = vsyncadd [#allocation9], %s64
      %s67 = sshll.u32 [#allocation10], 4
      %s68 = int_to_ptr.vmem [resolvable:$true] %s67
      %70 = dma.hbm_to_vmem [thread:$0]  %s4, 16, %s68, [#allocation9]
    $region21: #{transformer_block.5} parent=1 // pred_fallthru
      _
    // Predicated region
    $region22: #{transformer_block.5} parent=1 // pred_check
      _
    $region23: #{transformer_block.5} parent=1 // pred_check_branch
      %72 = sbr.rel (0) target = $region25
    $region24: #{transformer_block.5} parent=1 // pred_region
      %s74 = ssub.s32 1024, 1024
      %75 = vsyncadd [#allocation12], %s74
      %s76 = sshll.u32 [#allocation11], 4
      %s77 = int_to_ptr.vmem [resolvable:$true] %s76
      %82 = dma.hbm_to_vmem [thread:$0]  %s5, 1024, %s77, [#allocation12], 64, 64, 4
    $region25: #{transformer_block.5} parent=1 // pred_fallthru
      _
    // Predicated region
    $region26: #{transformer_block.5} parent=1 // pred_check
      _
    $region27: #{transformer_block.5} parent=1 // pred_check_branch
      %84 = sbr.rel (0) target = $region29
    $region28: #{transformer_block.5} parent=1 // pred_region
      %s86 = ssub.s32 16, 16
      %87 = vsyncadd [#allocation12], %s86
      %s89 = sshll.u32 [#allocation13], 4
      %s90 = int_to_ptr.vmem [resolvable:$true] %s89
      %92 = dma.hbm_to_vmem [thread:$0]  %s6, 16, %s90, [#allocation12]
    $region29: #{transformer_block.5} parent=1 // pred_fallthru
      _
    // Predicated region
    $region30: #{transformer_block.5} parent=1 // pred_check
      _
    $region31: #{transformer_block.5} parent=1 // pred_check_branch
      %94 = sbr.rel (0) target = $region33
    $region32: #{transformer_block.5} parent=1 // pred_region
      %95 = dma.done [#allocation3], 256
    $region33: #{transformer_block.5} parent=1 // pred_fallthru
      _
    // Predicated region
    $region34: #{transformer_block.5} parent=1 // pred_check
      _
    $region35: #{transformer_block.5} parent=1 // pred_check_branch
      %97 = sbr.rel (0) target = $region37
    $region36: #{transformer_block.5} parent=1 // pred_region
      %98 = dma.done [#allocation6], 16
    $region37: #{transformer_block.5} parent=1 // pred_fallthru
      _
    // Predicated region
    $region38: #{transformer_block.5} parent=1 // pred_check
      _
    $region39: #{transformer_block.5} parent=1 // pred_check_branch
      %100 = sbr.rel (0) target = $region41
    $region40: #{transformer_block.5} parent=1 // pred_region
      %101 = dma.done [#allocation6], 16
    $region41: #{transformer_block.5} parent=1 // pred_fallthru
      _
    // Predicated region
    $region42: #{transformer_block.5} parent=1 // pred_check
      _
    $region43: #{transformer_block.5} parent=1 // pred_check_branch
      %103 = sbr.rel (0) target = $region45
    $region44: #{transformer_block.5} parent=1 // pred_region
      %104 = dma.done [#allocation9], 256
    $region45: #{transformer_block.5} parent=1 // pred_fallthru
      _
    // Predicated region
    $region46: #{transformer_block.5} parent=1 // pred_check
      _
    $region47: #{transformer_block.5} parent=1 // pred_check_branch
      %106 = sbr.rel (0) target = $region49
    $region48: #{transformer_block.5} parent=1 // pred_region
      %107 = dma.done [#allocation9], 16
    $region49: #{transformer_block.5} parent=1 // pred_fallthru
      _
    // Predicated region
    $region50: #{transformer_block.5} parent=1 // pred_check
      _
    $region51: #{transformer_block.5} parent=1 // pred_check_branch
      %109 = sbr.rel (0) target = $region53
    $region52: #{transformer_block.5} parent=1 // pred_region
      %110 = dma.done [#allocation12], 1024
    $region53: #{transformer_block.5} parent=1 // pred_fallthru
      _
    // Predicated region
    $region54: #{transformer_block.5} parent=1 // pred_check
      _
    $region55: #{transformer_block.5} parent=1 // pred_check_branch
      %112 = sbr.rel (0) target = $region57
    $region56: #{transformer_block.5} parent=1 // pred_region
      %113 = dma.done [#allocation12], 16
    $region57: #{transformer_block.5} parent=1 // pred_fallthru
      _
    %v115 = vld [vmem:[#allocation2] sm:$0xff]
    %v116 = vld [vmem:[#allocation2 + $0x8] sm:$0xff]
    %v117 = vld [vmem:[#allocation5] sm:$0x1]
    %v118 = vld [vmem:[#allocation7] sm:$0x1]
    %vm119 = vcmask 261120
    %v120 = vsel %vm119, %v115, 0.0
    %121 = vadd.xlane.f32.xlu0 %v120
    %v122 = vpop.xlane.xlu0 %121
    %v123 = vsel %vm119, %v116, 0.0
    %124 = vadd.xlane.f32.xlu0 %v123
    %v125 = vpop.xlane.xlu0 %124
    %v126 = vrcp.pop 32.0
    %v127 = vmul.f32 %v122, %v126
    %v128 = vmul.f32 %v125, %v126
    %v129 = vsub.f32 %v115, %v127
    %v130 = vsub.f32 %v116, %v128
    %v131 = vmul.f32 %v129, %v129
    %v132 = vmul.f32 %v130, %v130
    %v133 = vsel %vm119, %v131, 0.0
    %134 = vadd.xlane.f32.xlu0 %v133
    %v135 = vpop.xlane.xlu0 %134
    %v136 = vsel %vm119, %v132, 0.0
    %137 = vadd.xlane.f32.xlu0 %v136
    %v138 = vpop.xlane.xlu0 %137
    %v139 = vmul.f32 %v135, %v126
    %v140 = vmul.f32 %v138, %v126
    %v141 = vadd.f32 %v139, 1e-05
    %v142 = vadd.f32 %v140, 1e-05
    %v143 = vrsqrt.pop %v141
    %v144 = vrsqrt.pop %v142
    %v145 = vmul.f32 %v129, %v143
    %v146 = vmul.f32 %v130, %v144
    %v148 = vlaneseq
    %v149 = vshrl.u32 %v148, 7
    %v150 = vsub.s32 0, %v149
    %v151 = vrot.slane %v117, %v150
    %v153 = vmul.f32 %v145, %v151
    %v154 = vmul.f32 %v146, %v151
    %v156 = vlaneseq
    %v157 = vshrl.u32 %v156, 7
    %v158 = vsub.s32 0, %v157
    %v159 = vrot.slane %v118, %v158
    %v161 = vadd.f32 %v153, %v159
    %v162 = vadd.f32 %v154, %v159
    %v163 = vpack.c.bf16 %v162, %v161
    %v164 = vld [vmem:[#allocation8] sm:$0xf]
    %v165 = vld [vmem:[#allocation8 + $0x4] sm:$0xf]
    %v166 = vld [vmem:[#allocation8 + $0x8] sm:$0xf]
    %v167 = vld [vmem:[#allocation8 + $0xc] sm:$0xf]
    %v168 = vld [vmem:[#allocation10] sm:$0x1]
    %v170 = vlaneseq
    %v171 = vshrl.u32 %v170, 7
    %v172 = vsub.s32 0, %v171
    %v173 = vrot.slane %v168, %v172
    %v179 = vunpack.c.l.b16 %v164
    %v180 = vunpack.c.l.b16 %v165
    %v181 = vunpack.c.l.b16 %v166
    %v182 = vunpack.c.l.b16 %v167
    %v183 = vpack.c.b16 %v180, %v179
    %v184 = vpack.c.b16 %v182, %v181
    %v188 = vsel %vm119, %v163, 0
    %190 = vmatprep.subr.bf16.mxu0 0
    %191 = vmatpush1.bf16.msra.mxu0 %v183
    %192 = vmatprep.subr.bf16.mxu0 0
    %193 = vmatpush1.bf16.msra.mxu0 %v184
    %194 = vmatprep.subr.bf16.mxu0 0
    %195 = vmatpush1.bf16.msra.mxu0 0
    %196 = vmatprep.subr.bf16.mxu0 0
    %197 = vmatpush1.bf16.msra.mxu0 0
    %198 = vmatprep.subr.bf16.mxu0 0
    %199 = vmatpush1.bf16.msra.mxu0 0
    %200 = vmatprep.subr.bf16.mxu0 0
    %201 = vmatpush1.bf16.msra.mxu0 0
    %202 = vmatprep.subr.bf16.mxu0 0
    %203 = vmatpush1.bf16.msra.mxu0 0
    %204 = vmatprep.subr.bf16.mxu0 0
    %205 = vmatpush1.bf16.msra.mxu0 0
    %206 = vmatprep.subr.bf16.mxu0 0
    %207 = vmatpush1.bf16.msra.mxu0 0
    %208 = vmatprep.subr.bf16.mxu0 0
    %209 = vmatpush1.bf16.msra.mxu0 0
    %210 = vmatprep.subr.bf16.mxu0 0
    %211 = vmatpush1.bf16.msra.mxu0 0
    %212 = vmatprep.subr.bf16.mxu0 0
    %213 = vmatpush1.bf16.msra.mxu0 0
    %214 = vmatprep.subr.bf16.mxu0 0
    %215 = vmatpush1.bf16.msra.mxu0 0
    %216 = vmatprep.subr.bf16.mxu0 0
    %217 = vmatpush1.bf16.msra.mxu0 0
    %218 = vmatprep.subr.bf16.mxu0 0
    %219 = vmatpush1.bf16.msra.mxu0 0
    %220 = vmatprep.subr.bf16.mxu0 0
    %221 = vmatpush1.bf16.msra.mxu0 0
    %222 = vmatprep.mubr.bf16.mxu0 0
    %223 = vmatmul.mubr.bf16.gmra.mrb[0].mxu0 %v188
    %v224 = vpop.f32.mrb[0].mxu0
    %v225 = vadd.f32 %v173, %v224
    %v226 = vpop.f32.mrb[0].mxu0
    %v227 = vpop.f32.mrb[0].mxu0
    %v228 = vadd.f32 %v173, %v227
    %v229 = vpop.f32.mrb[0].mxu0
    %230 = vdwg.mxu0
    %v231 = vmul.f32 %v225, %v225
    %v232 = vmul.f32 %v228, %v228
    %v233 = vmul.f32 %v225, %v231
    %v234 = vmul.f32 %v228, %v232
    %v235 = vmul.f32 %v233, 0.044715
    %v236 = vmul.f32 %v234, 0.044715
    %v237 = vadd.f32 %v225, %v235
    %v238 = vadd.f32 %v228, %v236
    %v239 = vmul.f32 %v237, 0.7978846
    %v240 = vmul.f32 %v238, 0.7978846
    %v241 = vtanh.pop %v239
    %v242 = vtanh.pop %v240
    %v243 = vadd.f32 %v241, 1.0
    %v244 = vadd.f32 %v242, 1.0
    %v245 = vmul.f32 %v243, 0.5
    %v246 = vmul.f32 %v244, 0.5
    %v247 = vmul.f32 %v225, %v245
    %v248 = vmul.f32 %v228, %v246
    %v249 = vpack.c.bf16 %v248, %v247
    %v250 = vld [vmem:[#allocation11] sm:$0xf]
    %v251 = vld [vmem:[#allocation11 + $0x4] sm:$0xf]
    %v252 = vld [vmem:[#allocation11 + $0x8] sm:$0xf]
    %v253 = vld [vmem:[#allocation11 + $0xc] sm:$0xf]
    %v254 = vld [vmem:[#allocation11 + $0x10] sm:$0xf]
    %v255 = vld [vmem:[#allocation11 + $0x14] sm:$0xf]
    %v256 = vld [vmem:[#allocation11 + $0x18] sm:$0xf]
    %v257 = vld [vmem:[#allocation11 + $0x1c] sm:$0xf]
    %v258 = vld [vmem:[#allocation11 + $0x20] sm:$0xf]
    %v259 = vld [vmem:[#allocation11 + $0x24] sm:$0xf]
    %v260 = vld [vmem:[#allocation11 + $0x28] sm:$0xf]
    %v261 = vld [vmem:[#allocation11 + $0x2c] sm:$0xf]
    %v262 = vld [vmem:[#allocation11 + $0x30] sm:$0xf]
    %v263 = vld [vmem:[#allocation11 + $0x34] sm:$0xf]
    %v264 = vld [vmem:[#allocation11 + $0x38] sm:$0xf]
    %v265 = vld [vmem:[#allocation11 + $0x3c] sm:$0xf]
    %v266 = vld [vmem:[#allocation13] sm:$0x1]
    %v268 = vlaneseq
    %v269 = vshrl.u32 %v268, 7
    %v270 = vsub.s32 0, %v269
    %v271 = vrot.slane %v266, %v270
    %v289 = vunpack.c.l.b16 %v250
    %v290 = vunpack.c.l.b16 %v251
    %v291 = vunpack.c.l.b16 %v252
    %v292 = vunpack.c.l.b16 %v253
    %v293 = vunpack.c.l.b16 %v254
    %v294 = vunpack.c.l.b16 %v255
    %v295 = vunpack.c.l.b16 %v256
    %v296 = vunpack.c.l.b16 %v257
    %v297 = vunpack.c.l.b16 %v258
    %v298 = vunpack.c.l.b16 %v259
    %v299 = vunpack.c.l.b16 %v260
    %v300 = vunpack.c.l.b16 %v261
    %v301 = vunpack.c.l.b16 %v262
    %v302 = vunpack.c.l.b16 %v263
    %v303 = vunpack.c.l.b16 %v264
    %v304 = vunpack.c.l.b16 %v265
    %v305 = vpack.c.b16 %v290, %v289
    %v306 = vpack.c.b16 %v292, %v291
    %v307 = vpack.c.b16 %v294, %v293
    %v308 = vpack.c.b16 %v296, %v295
    %v309 = vpack.c.b16 %v298, %v297
    %v310 = vpack.c.b16 %v300, %v299
    %v311 = vpack.c.b16 %v302, %v301
    %v312 = vpack.c.b16 %v304, %v303
    %321 = vmatprep.subr.bf16.mxu0 0
    %322 = vmatpush1.bf16.msra.mxu0 %v305
    %323 = vmatprep.subr.bf16.mxu0 0
    %324 = vmatpush1.bf16.msra.mxu0 %v306
    %325 = vmatprep.subr.bf16.mxu0 0
    %326 = vmatpush1.bf16.msra.mxu0 %v307
    %327 = vmatprep.subr.bf16.mxu0 0
    %328 = vmatpush1.bf16.msra.mxu0 %v308
    %329 = vmatprep.subr.bf16.mxu0 0
    %330 = vmatpush1.bf16.msra.mxu0 %v309
    %331 = vmatprep.subr.bf16.mxu0 0
    %332 = vmatpush1.bf16.msra.mxu0 %v310
    %333 = vmatprep.subr.bf16.mxu0 0
    %334 = vmatpush1.bf16.msra.mxu0 %v311
    %335 = vmatprep.subr.bf16.mxu0 0
    %336 = vmatpush1.bf16.msra.mxu0 %v312
    %337 = vmatprep.subr.bf16.mxu0 0
    %338 = vmatpush1.bf16.msra.mxu0 0
    %339 = vmatprep.subr.bf16.mxu0 0
    %340 = vmatpush1.bf16.msra.mxu0 0
    %341 = vmatprep.subr.bf16.mxu0 0
    %342 = vmatpush1.bf16.msra.mxu0 0
    %343 = vmatprep.subr.bf16.mxu0 0
    %344 = vmatpush1.bf16.msra.mxu0 0
    %345 = vmatprep.subr.bf16.mxu0 0
    %346 = vmatpush1.bf16.msra.mxu0 0
    %347 = vmatprep.subr.bf16.mxu0 0
    %348 = vmatpush1.bf16.msra.mxu0 0
    %349 = vmatprep.subr.bf16.mxu0 0
    %350 = vmatpush1.bf16.msra.mxu0 0
    %351 = vmatprep.subr.bf16.mxu0 0
    %352 = vmatpush1.bf16.msra.mxu0 0
    %353 = vmatprep.mubr.bf16.mxu0 0
    %354 = vmatmul.mubr.bf16.gmra.mrb[0].mxu0 %v249
    %v355 = vpop.f32.mrb[0].mxu0
    %v356 = vadd.f32 %v271, %v355
    %v357 = vpop.f32.mrb[0].mxu0
    %v358 = vpop.f32.mrb[0].mxu0
    %v359 = vadd.f32 %v271, %v358
    %v360 = vpop.f32.mrb[0].mxu0
    %361 = vdwg.mxu0
    %v362 = vadd.f32 %v356, %v115
    %v363 = vadd.f32 %v359, %v116
    %364 = vst.msk [vmem:[#allocation14] sm:$0xff] %vm119, %v362
    %365 = vst.msk [vmem:[#allocation14 + $0x8] sm:$0xff] %vm119, %v363
    // Predicated region
    $region58: #{transformer_block.5} parent=1 // pred_check
      _
    $region59: #{transformer_block.5} parent=1 // pred_check_branch
      %367 = sbr.rel (0) target = $region61
    $region60: #{transformer_block.5} parent=1 // pred_region
      %s369 = ssub.s32 256, 256
      %370 = vsyncadd [#allocation4], %s369
      %s371 = sshll.u32 [#allocation14], 4
      %s372 = int_to_ptr.vmem [resolvable:$true] %s371
      %377 = dma.vmem_to_hbm [thread:$0]  %s372, 256, %s7, [#allocation4], 128, 128, 8
    $region61: #{transformer_block.5} parent=1 // pred_fallthru
      _
    // Predicated region
    $region62: #{transformer_block.5} parent=1 // pred_check
      _
    $region63: #{transformer_block.5} parent=1 // pred_check_branch
      %379 = sbr.rel (0) target = $region65
    $region64: #{transformer_block.5} parent=1 // pred_region
      %380 = dma.done [#allocation4], 256
    $region65: #{transformer_block.5} parent=1 // pred_fallthru
      _
    %381 = vsyncpa [#allocation3], 1
    %382 = vsyncpa [#allocation6], 1
    %383 = vsyncpa [#allocation9], 1
    %384 = vsyncpa [#allocation12], 1
    %385 = vsyncpa [#allocation4], 1

// kernel: transformer_block.3
$region0: #{transformer_block.3}
  #allocation0 [shape = 'u32[]', space=smem, size = 0x4, offset = 0x4, fixed_abs, tag = 'smem constant byte address 0x4 - core index']
  #allocation1 [shape = 'u32[144,128]{1,0:T(1,128)}', space=vmem, size = 0x12000, scoped, tag = 'internal scratch']
  %s0 = inlined_call_operand.hbm [shape: f32[2,8,32], index: 0, kind: input, shape index: {}]
  %s1 = inlined_call_operand.hbm [shape: bf16[35,32,32], index: 1, kind: input, shape index: {}]
  %s2 = inlined_call_operand.hbm [shape: f32[5,1,32], index: 2, kind: input, shape index: {}]
  %s3 = inlined_call_operand.hbm [shape: bf16[15,32,32], index: 3, kind: input, shape index: {}]
  %s4 = inlined_call_operand.hbm [shape: f32[1,32], index: 4, kind: input, shape index: {}]
  %s5 = inlined_call_operand.hbm [shape: f32[1,32], index: 5, kind: input, shape index: {}]
  %s6 = inlined_call_operand.hbm [shape: f32[1,32], index: 6, kind: input, shape index: {}]
  %s7 = inlined_call_operand.hbm [shape: f32[2,8,32], index: 7, kind: output, shape index: {}]
  %s8 = sld [smem:[#allocation0]]
  $region89: #{transformer_block.3} parent=0
    _
  %s10 = ssub.s32 1, %s8
  %s11 = scalar_select 0, %s10, %s8
  $region1: #{transformer_block.3} parent=0
    #allocation2 [shape = 'u8[8192]{0}', space=vmem, size = 0x2000, scoped, tag = 'input window, operand 0']
    #allocation3 [shape = 's32[2]{0}', space=sflag, size = 0x8, scoped, tag = 'scoped memory for transformer_block.3']
    #allocation4 [shape = 's32[2]{0}', space=sflag, size = 0x8, scoped, tag = 'scoped memory for transformer_block.3']
    #allocation5 [shape = 'u8[286720]{0}', space=vmem, size = 0x46000, scoped, tag = 'input window, operand 1, single buffered']
    #allocation6 [shape = 's32[1]{0}', space=sflag, size = 0x4, scoped, tag = 'scoped memory for transformer_block.3']
    #allocation7 [shape = 'u8[2560]{0}', space=vmem, size = 0xc00, scoped, tag = 'input window, operand 2, single buffered']
    #allocation8 [shape = 'u8[122880]{0}', space=vmem, size = 0x1e000, scoped, tag = 'input window, operand 3, single buffered']
    #allocation9 [shape = 's32[1]{0}', space=sflag, size = 0x4, scoped, tag = 'scoped memory for transformer_block.3']
    #allocation10 [shape = 'u8[512]{0}', space=vmem, size = 0x400, scoped, tag = 'input window, operand 4, single buffered']
    #allocation11 [shape = 'u8[512]{0}', space=vmem, size = 0x400, scoped, tag = 'input window, operand 5, single buffered']
    #allocation12 [shape = 's32[1]{0}', space=sflag, size = 0x4, scoped, tag = 'scoped memory for transformer_block.3']
    #allocation13 [shape = 'u8[512]{0}', space=vmem, size = 0x400, scoped, tag = 'input window, operand 6, single buffered']
    #allocation14 [shape = 'u8[8192]{0}', space=vmem, size = 0x2000, scoped, tag = 'output window, operand 0']
    %12 = vsyncpa [#allocation3], 0
    %s13 = scalar_lea.sflag [#allocation3], 1
    %14 = vsyncpa %s13, 0
    %15 = vsyncpa [#allocation6], 0
    %16 = vsyncpa [#allocation9], 0
    %17 = vsyncpa [#allocation12], 0
    %18 = vsyncpa [#allocation4], 0
    %s19 = scalar_lea.sflag [#allocation4], 1
    %20 = vsyncpa %s19, 0
    loop: start=0, step=1, limit=4
    $region2: #{transformer_block.3} parent=1 // loop_pre_header
      _
    $region3: #{transformer_block.3} parent=1 // loop_header
      %s22 = sphi 0, %s26
      %p23 = scmp.ge.s32.totalorder %s22, 4
      %s32 = sphi 0, %s34
      %s35 = sphi 0, %s32
      %s36 = sphi 0, %s35
      %s52 = sphi 0, %s36
      %s56 = sphi 0, %s56
      %s58 = sphi 0, %s56
      %s59 = sphi 0, %s58
      %s73 = sphi 0, %s59
      %s77 = sphi 0, %s77
      %s79 = sphi 0, %s77
      %s80 = sphi 0, %s79
      %s94 = sphi 0, %s80
      %s98 = sphi 0, %s98
      %s100 = sphi 0, %s98
      %s101 = sphi 0, %s100
      %s115 = sphi 0, %s101
      %s119 = sphi 0, %s119
      %s121 = sphi 0, %s119
      %s122 = sphi 0, %s121
      %s136 = sphi 0, %s122
      %s140 = sphi 0, %s140
      %s142 = sphi 0, %s140
      %s143 = sphi 0, %s142
      %s157 = sphi 0, %s143
      %s161 = sphi 0, %s161
      %s163 = sphi 0, %s161
      %s164 = sphi 0, %s163
      %s178 = sphi 0, %s164
      %s184 = sphi 0, %s186
      %s187 = sphi 0, %s184
      %s188 = sphi 0, %s187
      %s204 = sphi 0, %s188
    $region4: #{transformer_block.3} parent=1 // loop_header_branch
      %25 = sbr.rel (%p23) target = $region8
    $region5: #{transformer_block.3} parent=1 // loop_body
      %s27 = ssub.s32 %s22, 1
      %s28 = ssub.s32 %s22, 2
      %s29 = sadd.s32 %s22, 1
      %s30 = ssub.s32 %s22, %s29
      %p31 = scmp.eq.s32.totalorder %s30, 0
      %s33 = sadd.s32 %s32, 1
      %s34 = scalar_select %p31, %s32, %s33
      %p37 = pneg %p31
      %p38 = scmp.eq.s32.totalorder %s22, 1
      %p39 = por %p37, %p38
      %p40 = scmp.ne.s32.totalorder %s32, %s35
      %p41 = scmp.eq.s32.totalorder %s22, 0
      %p42 = por %p40, %p41
      %p43 = scmp.ne.s32.totalorder %s32, %s35
      %p44 = scmp.eq.s32.totalorder %s27, 1
      %p45 = por %p43, %p44
      %p46 = scmp.ne.s32.totalorder %s35, %s36
      %p47 = scmp.eq.s32.totalorder %s27, 0
      %p48 = por %p46, %p47
      %p49 = scmp.ne.s32.totalorder %s35, %s36
      %p50 = scmp.eq.s32.totalorder %s28, 1
      %p51 = por %p49, %p50
      %p53 = scmp.ne.s32.totalorder %s36, %s52
      %p54 = scmp.eq.s32.totalorder %s28, 0
      %p55 = por %p53, %p54
      %s57 = sadd.s32 %s56, 1
      %p60 = scmp.eq.s32.totalorder %s22, 1
      %p61 = scmp.ne.s32.totalorder %s56, %s58
      %p62 = scmp.eq.s32.totalorder %s22, 0
      %p63 = por %p61, %p62
      %p64 = scmp.ne.s32.totalorder %s56, %s58
      %p65 = scmp.eq.s32.totalorder %s27, 1
      %p66 = por %p64, %p65
      %p67 = scmp.ne.s32.totalorder %s58, %s59
      %p68 = scmp.eq.s32.totalorder %s27, 0
      %p69 = por %p67, %p68
      %p70 = scmp.ne.s32.totalorder %s58, %s59
      %p71 = scmp.eq.s32.totalorder %s28, 1
      %p72 = por %p70, %p71
      %p74 = scmp.ne.s32.totalorder %s59, %s73
      %p75 = scmp.eq.s32.totalorder %s28, 0
      %p76 = por %p74, %p75
      %s78 = sadd.s32 %s77, 1
      %p81 = scmp.eq.s32.totalorder %s22, 1
      %p82 = scmp.ne.s32.totalorder %s77, %s79
      %p83 = scmp.eq.s32.totalorder %s22, 0
      %p84 = por %p82, %p83
      %p85 = scmp.ne.s32.totalorder %s77, %s79
      %p86 = scmp.eq.s32.totalorder %s27, 1
      %p87 = por %p85, %p86
      %p88 = scmp.ne.s32.totalorder %s79, %s80
      %p89 = scmp.eq.s32.totalorder %s27, 0
      %p90 = por %p88, %p89
      %p91 = scmp.ne.s32.totalorder %s79, %s80
      %p92 = scmp.eq.s32.totalorder %s28, 1
      %p93 = por %p91, %p92
      %p95 = scmp.ne.s32.totalorder %s80, %s94
      %p96 = scmp.eq.s32.totalorder %s28, 0
      %p97 = por %p95, %p96
      %s99 = sadd.s32 %s98, 1
      %p102 = scmp.eq.s32.totalorder %s22, 1
      %p103 = scmp.ne.s32.totalorder %s98, %s100
      %p104 = scmp.eq.s32.totalorder %s22, 0
      %p105 = por %p103, %p104
      %p106 = scmp.ne.s32.totalorder %s98, %s100
      %p107 = scmp.eq.s32.totalorder %s27, 1
      %p108 = por %p106, %p107
      %p109 = scmp.ne.s32.totalorder %s100, %s101
      %p110 = scmp.eq.s32.totalorder %s27, 0
      %p111 = por %p109, %p110
      %p112 = scmp.ne.s32.totalorder %s100, %s101
      %p113 = scmp.eq.s32.totalorder %s28, 1
      %p114 = por %p112, %p113
      %p116 = scmp.ne.s32.totalorder %s101, %s115
      %p117 = scmp.eq.s32.totalorder %s28, 0
      %p118 = por %p116, %p117
      %s120 = sadd.s32 %s119, 1
      %p123 = scmp.eq.s32.totalorder %s22, 1
      %p124 = scmp.ne.s32.totalorder %s119, %s121
      %p125 = scmp.eq.s32.totalorder %s22, 0
      %p126 = por %p124, %p125
      %p127 = scmp.ne.s32.totalorder %s119, %s121
      %p128 = scmp.eq.s32.totalorder %s27, 1
      %p129 = por %p127, %p128
      %p130 = scmp.ne.s32.totalorder %s121, %s122
      %p131 = scmp.eq.s32.totalorder %s27, 0
      %p132 = por %p130, %p131
      %p133 = scmp.ne.s32.totalorder %s121, %s122
      %p134 = scmp.eq.s32.totalorder %s28, 1
      %p135 = por %p133, %p134
      %p137 = scmp.ne.s32.totalorder %s122, %s136
      %p138 = scmp.eq.s32.totalorder %s28, 0
      %p139 = por %p137, %p138
      %s141 = sadd.s32 %s140, 1
      %p144 = scmp.eq.s32.totalorder %s22, 1
      %p145 = scmp.ne.s32.totalorder %s140, %s142
      %p146 = scmp.eq.s32.totalorder %s22, 0
      %p147 = por %p145, %p146
      %p148 = scmp.ne.s32.totalorder %s140, %s142
      %p149 = scmp.eq.s32.totalorder %s27, 1
      %p150 = por %p148, %p149
      %p151 = scmp.ne.s32.totalorder %s142, %s143
      %p152 = scmp.eq.s32.totalorder %s27, 0
      %p153 = por %p151, %p152
      %p154 = scmp.ne.s32.totalorder %s142, %s143
      %p155 = scmp.eq.s32.totalorder %s28, 1
      %p156 = por %p154, %p155
      %p158 = scmp.ne.s32.totalorder %s143, %s157
      %p159 = scmp.eq.s32.totalorder %s28, 0
      %p160 = por %p158, %p159
      %s162 = sadd.s32 %s161, 1
      %p165 = scmp.eq.s32.totalorder %s22, 1
      %p166 = scmp.ne.s32.totalorder %s161, %s163
      %p167 = scmp.eq.s32.totalorder %s22, 0
      %p168 = por %p166, %p167
      %p169 = scmp.ne.s32.totalorder %s161, %s163
      %p170 = scmp.eq.s32.totalorder %s27, 1
      %p171 = por %p169, %p170
      %p172 = scmp.ne.s32.totalorder %s163, %s164
      %p173 = scmp.eq.s32.totalorder %s27, 0
      %p174 = por %p172, %p173
      %p175 = scmp.ne.s32.totalorder %s163, %s164
      %p176 = scmp.eq.s32.totalorder %s28, 1
      %p177 = por %p175, %p176
      %p179 = scmp.ne.s32.totalorder %s164, %s178
      %p180 = scmp.eq.s32.totalorder %s28, 0
      %p181 = por %p179, %p180
      %s182 = ssub.s32 %s22, %s29
      %p183 = scmp.eq.s32.totalorder %s182, 0
      %s185 = sadd.s32 %s184, 1
      %s186 = scalar_select %p183, %s184, %s185
      %p189 = pneg %p183
      %p190 = scmp.eq.s32.totalorder %s22, 1
      %p191 = por %p189, %p190
      %p192 = scmp.ne.s32.totalorder %s184, %s187
      %p193 = scmp.eq.s32.totalorder %s22, 0
      %p194 = por %p192, %p193
      %p195 = scmp.ne.s32.totalorder %s184, %s187
      %p196 = scmp.eq.s32.totalorder %s27, 1
      %p197 = por %p195, %p196
      %p198 = scmp.ne.s32.totalorder %s187, %s188
      %p199 = scmp.eq.s32.totalorder %s27, 0
      %p200 = por %p198, %p199
      %p201 = scmp.ne.s32.totalorder %s187, %s188
      %p202 = scmp.eq.s32.totalorder %s28, 1
      %p203 = por %p201, %p202
      %p205 = scmp.ne.s32.totalorder %s188, %s204
      %p206 = scmp.eq.s32.totalorder %s28, 0
      %p207 = por %p205, %p206
      %p208 = scmp.le.s32.totalorder 1, %s22
      %p209 = scmp.lt.s32.totalorder %s22, 3
      %p210 = pnand %p208, %p209
      %p211 = pneg %p210
      // Predicated region
      $region9: #{transformer_block.3} parent=5 // pred_check
        _
      $region10: #{transformer_block.3} parent=5 // pred_check_branch
        %213 = sbr.rel (%p210) target = $region12
      $region11: #{transformer_block.3} parent=5 // pred_region
        %s214 = ssub.s32 %s22, 1
        // Predicated region
        $region13: #{transformer_block.3} parent=11 // pred_check
          %p215 = pneg %p69
        $region14: #{transformer_block.3} parent=11 // pred_check_branch
          %217 = sbr.rel (%p215) target = $region16
        $region15: #{transformer_block.3} parent=11 // pred_region
          %s219 = ssub.s32 8960, 8960
          %220 = vsyncadd [#allocation6], %s219
          %s221 = sshll.u32 [#allocation5], 4
          %s222 = int_to_ptr.vmem [resolvable:$true] %s221
          %227 = dma.hbm_to_vmem [thread:$0]  %s1, 8960, %s222, [#allocation6], 64, 64, 4
        $region16: #{transformer_block.3} parent=11 // pred_fallthru
          _
        // Predicated region
        $region17: #{transformer_block.3} parent=11 // pred_check
          %p228 = pneg %p90
        $region18: #{transformer_block.3} parent=11 // pred_check_branch
          %230 = sbr.rel (%p228) target = $region20
        $region19: #{transformer_block.3} parent=11 // pred_region
          %s232 = ssub.s32 80, 80
          %233 = vsyncadd [#allocation6], %s232
          %s234 = sshll.u32 [#allocation7], 4
          %s235 = int_to_ptr.vmem [resolvable:$true] %s234
          %240 = dma.hbm_to_vmem [thread:$0]  %s2, 80, %s235, [#allocation6], 16, 16, 1
        $region20: #{transformer_block.3} parent=11 // pred_fallthru
          _
        // Predicated region
        $region21: #{transformer_block.3} parent=11 // pred_check
          %p241 = pneg %p111
        $region22: #{transformer_block.3} parent=11 // pred_check_branch
          %243 = sbr.rel (%p241) target = $region24
        $region23: #{transformer_block.3} parent=11 // pred_region
          %s245 = ssub.s32 3840, 3840
          %246 = vsyncadd [#allocation9], %s245
          %s247 = sshll.u32 [#allocation8], 4
          %s248 = int_to_ptr.vmem [resolvable:$true] %s247
          %253 = dma.hbm_to_vmem [thread:$0]  %s3, 3840, %s248, [#allocation9], 64, 64, 4
        $region24: #{transformer_block.3} parent=11 // pred_fallthru
          _
        // Predicated region
        $region25: #{transformer_block.3} parent=11 // pred_check
          %p254 = pneg %p132
        $region26: #{transformer_block.3} parent=11 // pred_check_branch
          %256 = sbr.rel (%p254) target = $region28
        $region27: #{transformer_block.3} parent=11 // pred_region
          %s258 = ssub.s32 16, 16
          %259 = vsyncadd [#allocation9], %s258
          %s261 = sshll.u32 [#allocation10], 4
          %s262 = int_to_ptr.vmem [resolvable:$true] %s261
          %264 = dma.hbm_to_vmem [thread:$0]  %s4, 16, %s262, [#allocation9]
        $region28: #{transformer_block.3} parent=11 // pred_fallthru
          _
        // Predicated region
        $region29: #{transformer_block.3} parent=11 // pred_check
          %p265 = pneg %p153
        $region30: #{transformer_block.3} parent=11 // pred_check_branch
          %267 = sbr.rel (%p265) target = $region32
        $region31: #{transformer_block.3} parent=11 // pred_region
          %s269 = ssub.s32 16, 16
          %270 = vsyncadd [#allocation12], %s269
          %s272 = sshll.u32 [#allocation11], 4
          %s273 = int_to_ptr.vmem [resolvable:$true] %s272
          %275 = dma.hbm_to_vmem [thread:$0]  %s5, 16, %s273, [#allocation12]
        $region32: #{transformer_block.3} parent=11 // pred_fallthru
          _
        // Predicated region
        $region33: #{transformer_block.3} parent=11 // pred_check
          %p276 = pneg %p174
        $region34: #{transformer_block.3} parent=11 // pred_check_branch
          %278 = sbr.rel (%p276) target = $region36
        $region35: #{transformer_block.3} parent=11 // pred_region
          %s280 = ssub.s32 16, 16
          %281 = vsyncadd [#allocation12], %s280
          %s283 = sshll.u32 [#allocation13], 4
          %s284 = int_to_ptr.vmem [resolvable:$true] %s283
          %286 = dma.hbm_to_vmem [thread:$0]  %s6, 16, %s284, [#allocation12]
        $region36: #{transformer_block.3} parent=11 // pred_fallthru
          _
      $region12: #{transformer_block.3} parent=5 // pred_fallthru
        _
      %p287 = scmp.lt.s32.totalorder %s22, 2
      // Predicated region
      $region37: #{transformer_block.3} parent=5 // pred_check
        %p288 = pneg %p287
      $region38: #{transformer_block.3} parent=5 // pred_check_branch
        %290 = sbr.rel (%p288) target = $region40
      $region39: #{transformer_block.3} parent=5 // pred_region
        // Predicated region
        $region41: #{transformer_block.3} parent=39 // pred_check
          %p291 = pneg %p42
        $region42: #{transformer_block.3} parent=39 // pred_check_branch
          %293 = sbr.rel (%p291) target = $region44
        $region43: #{transformer_block.3} parent=39 // pred_region
          %s294 = sand.u32 %s32, 1
          %s295 = scalar_lea.sflag [#allocation3], %s294
          %s296 = sand.u32 %s32, 1
          %s297 = smul.addr %s296, 8
          %s298 = scalar_lea.vmem [#allocation2], %s297
          %s300 = ssub.s32 128, 128
          %301 = vsyncadd %s295, %s300
          %s302 = smul.addr %s22, 128
          %s303 = scalar_lea.hbm %s0, %s302
          %s305 = sshll.u32 %s298, 4
          %s306 = int_to_ptr.vmem [resolvable:$true] %s305
          %308 = dma.hbm_to_vmem [thread:$0]  %s303, 128, %s306, %s295
        $region44: #{transformer_block.3} parent=39 // pred_fallthru
          _
      $region40: #{transformer_block.3} parent=5 // pred_fallthru
        _
      %p309 = scmp.le.s32.totalorder 1, %s22
      %p310 = scmp.lt.s32.totalorder %s22, 3
      %p311 = pnand %p309, %p310
      %p312 = pneg %p311
      // Predicated region
      $region45: #{transformer_block.3} parent=5 // pred_check
        _
      $region46: #{transformer_block.3} parent=5 // pred_check_branch
        %314 = sbr.rel (%p311) target = $region48
      $region47: #{transformer_block.3} parent=5 // pred_region
        %s315 = ssub.s32 %s22, 1
        %s316 = sand.u32 %s35, 1
        %s317 = scalar_lea.sflag [#allocation3], %s316
        %s318 = sand.u32 %s35, 1
        %s319 = smul.addr %s318, 8
        %s320 = scalar_lea.vmem [#allocation2], %s319
        // Predicated region
        $region49: #{transformer_block.3} parent=47 // pred_check
          %p321 = pneg %p48
        $region50: #{transformer_block.3} parent=47 // pred_check_branch
          %323 = sbr.rel (%p321) target = $region52
        $region51: #{transformer_block.3} parent=47 // pred_region
          %324 = dma.done %s317, 128
        $region52: #{transformer_block.3} parent=47 // pred_fallthru
          _
        // Predicated region
        $region53: #{transformer_block.3} parent=47 // pred_check
          %p325 = pneg %p69
        $region54: #{transformer_block.3} parent=47 // pred_check_branch
          %327 = sbr.rel (%p325) target = $region56
        $region55: #{transformer_block.3} parent=47 // pred_region
          %328 = dma.done [#allocation6], 8960
        $region56: #{transformer_block.3} parent=47 // pred_fallthru
          _
        // Predicated region
        $region57: #{transformer_block.3} parent=47 // pred_check
          %p329 = pneg %p90
        $region58: #{transformer_block.3} parent=47 // pred_check_branch
          %331 = sbr.rel (%p329) target = $region60
        $region59: #{transformer_block.3} parent=47 // pred_region
          %332 = dma.done [#allocation6], 80
        $region60: #{transformer_block.3} parent=47 // pred_fallthru
          _
        // Predicated region
        $region61: #{transformer_block.3} parent=47 // pred_check
          %p333 = pneg %p111
        $region62: #{transformer_block.3} parent=47 // pred_check_branch
          %335 = sbr.rel (%p333) target = $region64
        $region63: #{transformer_block.3} parent=47 // pred_region
          %336 = dma.done [#allocation9], 3840
        $region64: #{transformer_block.3} parent=47 // pred_fallthru
          _
        // Predicated region
        $region65: #{transformer_block.3} parent=47 // pred_check
          %p337 = pneg %p132
        $region66: #{transformer_block.3} parent=47 // pred_check_branch
          %339 = sbr.rel (%p337) target = $region68
        $region67: #{transformer_block.3} parent=47 // pred_region
          %340 = dma.done [#allocation9], 16
        $region68: #{transformer_block.3} parent=47 // pred_fallthru
          _
        // Predicated region
        $region69: #{transformer_block.3} parent=47 // pred_check
          %p341 = pneg %p153
        $region70: #{transformer_block.3} parent=47 // pred_check_branch
          %343 = sbr.rel (%p341) target = $region72
        $region71: #{transformer_block.3} parent=47 // pred_region
          %344 = dma.done [#allocation12], 16
        $region72: #{transformer_block.3} parent=47 // pred_fallthru
          _
        // Predicated region
        $region73: #{transformer_block.3} parent=47 // pred_check
          %p345 = pneg %p174
        $region74: #{transformer_block.3} parent=47 // pred_check_branch
          %347 = sbr.rel (%p345) target = $region76
        $region75: #{transformer_block.3} parent=47 // pred_region
          %348 = dma.done [#allocation12], 16
        $region76: #{transformer_block.3} parent=47 // pred_fallthru
          _
        %s349 = sand.u32 %s35, 1
        %s350 = scalar_lea.sflag [#allocation3], %s349
        %s351 = sand.u32 %s35, 1
        %s352 = smul.addr %s351, 8
        %s353 = scalar_lea.vmem [#allocation2], %s352
        %p354 = pneg %p48
        %p355 = pneg %p45
        %p356 = pneg %p69
        %p357 = pneg %p66
        %p358 = pneg %p90
        %p359 = pneg %p87
        %p360 = pneg %p111
        %p361 = pneg %p108
        %p362 = pneg %p132
        %p363 = pneg %p129
        %p364 = pneg %p153
        %p365 = pneg %p150
        %p366 = pneg %p174
        %p367 = pneg %p171
        %p368 = pneg %p200
        %p369 = pneg %p197
        %s370 = sand.u32 %s187, 1
        %s371 = scalar_lea.sflag [#allocation4], %s370
        %s372 = sand.u32 %s187, 1
        %s373 = smul.addr %s372, 8
        %s374 = scalar_lea.vmem [#allocation14], %s373
        %v376 = vld [vmem:[%s320] sm:$0xff]
        %v377 = vlaneseq
        %v378 = vshrl.u32 %v377, 7
        %v379 = vrot.slane %v376, 3
        %v380 = vadd.s32 %v378, 4294967291
        %vm381 = vcmp.ge.s32.totalorder %v380, 0
        %vm382 = vcmp.lt.s32.totalorder %v380, 8
        %vm383 = vmand %vm381, %vm382
        %v384 = vsel %vm383, 1, 0
        %vm385 = vcmp.eq.s32.totalorder %v384, 1
        %v386 = vsel %vm385, %v379, 0.0
        %v387 = vpack.c.bf16 %v386, %v386
        %v388 = vrot.slane %v376, 4
        %v389 = vadd.s32 %v378, 4294967292
        %vm390 = vcmp.ge.s32.totalorder %v389, 0
        %vm391 = vcmp.lt.s32.totalorder %v389, 8
        %vm392 = vmand %vm390, %vm391
        %v393 = vsel %vm392, 1, 0
        %vm394 = vcmp.eq.s32.totalorder %v393, 1
        %v395 = vsel %vm394, %v388, 0.0
        %v396 = vpack.c.bf16 %v395, %v395
        %v397 = vrot.slane %v376, 5
        %v398 = vadd.s32 %v378, 4294967293
        %vm399 = vcmp.ge.s32.totalorder %v398, 0
        %vm400 = vcmp.lt.s32.totalorder %v398, 8
        %vm401 = vmand %vm399, %vm400
        %v402 = vsel %vm401, 1, 0
        %vm403 = vcmp.eq.s32.totalorder %v402, 1
        %v404 = vsel %vm403, %v397, 0.0
        %v405 = vpack.c.bf16 %v404, %v404
        %v406 = vrot.slane %v376, 6
        %v407 = vadd.s32 %v378, 4294967294
        %vm408 = vcmp.ge.s32.totalorder %v407, 0
        %vm409 = vcmp.lt.s32.totalorder %v407, 8
        %vm410 = vmand %vm408, %vm409
        %v411 = vsel %vm410, 1, 0
        %vm412 = vcmp.eq.s32.totalorder %v411, 1
        %v413 = vsel %vm412, %v406, 0.0
        %v414 = vpack.c.bf16 %v413, %v413
        %v415 = vrot.slane %v376, 7
        %v416 = vadd.s32 %v378, 4294967295
        %vm417 = vcmp.ge.s32.totalorder %v416, 0
        %vm418 = vcmp.lt.s32.totalorder %v416, 8
        %vm419 = vmand %vm417, %vm418
        %v420 = vsel %vm419, 1, 0
        %vm421 = vcmp.eq.s32.totalorder %v420, 1
        %v422 = vsel %vm421, %v415, 0.0
        %v423 = vpack.c.bf16 %v422, %v422
        %v424 = vpack.c.bf16 %v376, %v376
        %v425 = vrot.slane %v376, 1
        %v426 = vadd.s32 %v378, 1
        %vm427 = vcmp.ge.s32.totalorder %v426, 0
        %vm428 = vcmp.lt.s32.totalorder %v426, 8
        %vm429 = vmand %vm427, %vm428
        %v430 = vsel %vm429, 1, 0
        %vm431 = vcmp.eq.s32.totalorder %v430, 1
        %v432 = vsel %vm431, %v425, 0.0
        %v433 = vpack.c.bf16 %v432, %v432
        %v434 = vrot.slane %v376, 2
        %v435 = vadd.s32 %v378, 2
        %vm436 = vcmp.ge.s32.totalorder %v435, 0
        %vm437 = vcmp.lt.s32.totalorder %v435, 8
        %vm438 = vmand %vm436, %vm437
        %v439 = vsel %vm438, 1, 0
        %vm440 = vcmp.eq.s32.totalorder %v439, 1
        %v441 = vsel %vm440, %v434, 0.0
        %v442 = vpack.c.bf16 %v441, %v441
        %v443 = vadd.s32 %v378, 3
        %vm444 = vcmp.ge.s32.totalorder %v443, 0
        %vm445 = vcmp.lt.s32.totalorder %v443, 8
        %vm446 = vmand %vm444, %vm445
        %v447 = vsel %vm446, 1, 0
        %vm448 = vcmp.eq.s32.totalorder %v447, 1
        %v449 = vsel %vm448, %v379, 0.0
        %v450 = vpack.c.bf16 %v449, %v449
        %v451 = vadd.s32 %v378, 4
        %vm452 = vcmp.ge.s32.totalorder %v451, 0
        %vm453 = vcmp.lt.s32.totalorder %v451, 8
        %vm454 = vmand %vm452, %vm453
        %v455 = vsel %vm454, 1, 0
        %vm456 = vcmp.eq.s32.totalorder %v455, 1
        %v457 = vsel %vm456, %v388, 0.0
        %v458 = vpack.c.bf16 %v457, %v457
        %v459 = vadd.s32 %v378, 5
        %vm460 = vcmp.ge.s32.totalorder %v459, 0
        %vm461 = vcmp.lt.s32.totalorder %v459, 8
        %vm462 = vmand %vm460, %vm461
        %v463 = vsel %vm462, 1, 0
        %vm464 = vcmp.eq.s32.totalorder %v463, 1
        %v465 = vsel %vm464, %v397, 0.0
        %v466 = vpack.c.bf16 %v465, %v465
        %v467 = vld [vmem:[#allocation7] sm:$0x1]
        %v469 = vlaneseq
        %v470 = vshrl.u32 %v469, 7
        %v471 = vsub.s32 0, %v470
        %v472 = vrot.slane %v467, %v471
        %v474 = vadd.f32 %v472, 0.0
        %s475 = scalar_lea.vmem [#allocation7], 1
        %v476 = vld [vmem:[%s475] sm:$0x1]
        %v478 = vlaneseq
        %v479 = vshrl.u32 %v478, 7
        %v480 = vsub.s32 0, %v479
        %v481 = vrot.slane %v476, %v480
        %v483 = vadd.f32 %v481, 0.0
        %s484 = scalar_lea.vmem [#allocation7], 2
        %v485 = vld [vmem:[%s484] sm:$0x1]
        %v487 = vlaneseq
        %v488 = vshrl.u32 %v487, 7
        %v489 = vsub.s32 0, %v488
        %v490 = vrot.slane %v485, %v489
        %v492 = vadd.f32 %v490, 0.0
        %s493 = scalar_lea.vmem [#allocation7], 3
        %v494 = vld [vmem:[%s493] sm:$0x1]
        %v496 = vlaneseq
        %v497 = vshrl.u32 %v496, 7
        %v498 = vsub.s32 0, %v497
        %v499 = vrot.slane %v494, %v498
        %v501 = vadd.f32 %v499, 0.0
        %s502 = scalar_lea.vmem [#allocation7], 4
        %v503 = vld [vmem:[%s502] sm:$0x1]
        %v505 = vlaneseq
        %v506 = vshrl.u32 %v505, 7
        %v507 = vsub.s32 0, %v506
        %v508 = vrot.slane %v503, %v507
        %v510 = vadd.f32 %v508, 0.0
        %v511 = vld [vmem:[#allocation5] sm:$0xf]
        %v512 = vld [vmem:[#allocation5 + $0x4] sm:$0xf]
        %v513 = vld [vmem:[#allocation5 + $0x8] sm:$0xf]
        %v514 = vld [vmem:[#allocation5 + $0xc] sm:$0xf]
        %v519 = vunpack.c.l.b16 %v511
        %v520 = vunpack.c.l.b16 %v512
        %v521 = vunpack.c.l.b16 %v513
        %v522 = vunpack.c.l.b16 %v514
        %v523 = vpack.c.b16 %v520, %v519
        %v524 = vpack.c.b16 %v522, %v521
        %vm527 = vcmask 261120
        %v529 = vsel %vm527, %v423, 0
        %531 = vmatprep.subr.bf16.mxu0 0
        %532 = vmatpush1.bf16.msra.mxu0 %v523
        %533 = vmatprep.subr.bf16.mxu0 0
        %534 = vmatpush1.bf16.msra.mxu0 %v524
        %535 = vmatprep.subr.bf16.mxu0 0
        %536 = vmatpush1.bf16.msra.mxu0 0
        %537 = vmatprep.subr.bf16.mxu0 0
        %538 = vmatpush1.bf16.msra.mxu0 0
        %539 = vmatprep.subr.bf16.mxu0 0
        %540 = vmatpush1.bf16.msra.mxu0 0
        %541 = vmatprep.subr.bf16.mxu0 0
        %542 = vmatpush1.bf16.msra.mxu0 0
        %543 = vmatprep.subr.bf16.mxu0 0
        %544 = vmatpush1.bf16.msra.mxu0 0
        %545 = vmatprep.subr.bf16.mxu0 0
        %546 = vmatpush1.bf16.msra.mxu0 0
        %547 = vmatprep.subr.bf16.mxu0 0
        %548 = vmatpush1.bf16.msra.mxu0 0
        %549 = vmatprep.subr.bf16.mxu0 0
        %550 = vmatpush1.bf16.msra.mxu0 0
        %551 = vmatprep.subr.bf16.mxu0 0
        %552 = vmatpush1.bf16.msra.mxu0 0
        %553 = vmatprep.subr.bf16.mxu0 0
        %554 = vmatpush1.bf16.msra.mxu0 0
        %555 = vmatprep.subr.bf16.mxu0 0
        %556 = vmatpush1.bf16.msra.mxu0 0
        %557 = vmatprep.subr.bf16.mxu0 0
        %558 = vmatpush1.bf16.msra.mxu0 0
        %559 = vmatprep.subr.bf16.mxu0 0
        %560 = vmatpush1.bf16.msra.mxu0 0
        %561 = vmatprep.subr.bf16.mxu0 0
        %562 = vmatpush1.bf16.msra.mxu0 0
        %563 = vmatprep.mubr.bf16.mxu0 0
        %564 = vmatmul.mubr.bf16.gmra.mrb[0].mxu0 %v529
        %v565 = vpop.f32.mrb[0].mxu0
        %v566 = vadd.f32 0.0, %v565
        %v567 = vpop.f32.mrb[0].mxu0
        %v568 = vpop.f32.mrb[0].mxu0
        %v569 = vpop.f32.mrb[0].mxu0
        %570 = vdwg.mxu0
        %v571 = vadd.f32 %v474, %v566
        %s572 = scalar_lea.vmem [#allocation5], 16
        %v573 = vld [vmem:[%s572] sm:$0xf]
        %v574 = vld [vmem:[%s572 + $0x4] sm:$0xf]
        %v575 = vld [vmem:[%s572 + $0x8] sm:$0xf]
        %v576 = vld [vmem:[%s572 + $0xc] sm:$0xf]
        %v581 = vunpack.c.l.b16 %v573
        %v582 = vunpack.c.l.b16 %v574
        %v583 = vunpack.c.l.b16 %v575
        %v584 = vunpack.c.l.b16 %v576
        %v585 = vpack.c.b16 %v582, %v581
        %v586 = vpack.c.b16 %v584, %v583
        %v590 = vsel %vm527, %v424, 0
        %592 = vmatprep.subr.bf16.mxu0 0
        %593 = vmatpush1.bf16.msra.mxu0 %v585
        %594 = vmatprep.subr.bf16.mxu0 0
        %595 = vmatpush1.bf16.msra.mxu0 %v586
        %596 = vmatprep.subr.bf16.mxu0 0
        %597 = vmatpush1.bf16.msra.mxu0 0
        %598 = vmatprep.subr.bf16.mxu0 0
        %599 = vmatpush1.bf16.msra.mxu0 0
        %600 = vmatprep.subr.bf16.mxu0 0
        %601 = vmatpush1.bf16.msra.mxu0 0
        %602 = vmatprep.subr.bf16.mxu0 0
        %603 = vmatpush1.bf16.msra.mxu0 0
        %604 = vmatprep.subr.bf16.mxu0 0
        %605 = vmatpush1.bf16.msra.mxu0 0
        %606 = vmatprep.subr.bf16.mxu0 0
        %607 = vmatpush1.bf16.msra.mxu0 0
        %608 = vmatprep.subr.bf16.mxu0 0
        %609 = vmatpush1.bf16.msra.mxu0 0
        %610 = vmatprep.subr.bf16.mxu0 0
        %611 = vmatpush1.bf16.msra.mxu0 0
        %612 = vmatprep.subr.bf16.mxu0 0
        %613 = vmatpush1.bf16.msra.mxu0 0
        %614 = vmatprep.subr.bf16.mxu0 0
        %615 = vmatpush1.bf16.msra.mxu0 0
        %616 = vmatprep.subr.bf16.mxu0 0
        %617 = vmatpush1.bf16.msra.mxu0 0
        %618 = vmatprep.subr.bf16.mxu0 0
        %619 = vmatpush1.bf16.msra.mxu0 0
        %620 = vmatprep.subr.bf16.mxu0 0
        %621 = vmatpush1.bf16.msra.mxu0 0
        %622 = vmatprep.subr.bf16.mxu0 0
        %623 = vmatpush1.bf16.msra.mxu0 0
        %624 = vmatprep.mubr.bf16.mxu0 0
        %625 = vmatmul.mubr.bf16.gmra.mrb[0].mxu0 %v590
        %v626 = vpop.f32.mrb[0].mxu0
        %v627 = vadd.f32 0.0, %v626
        %v628 = vpop.f32.mrb[0].mxu0
        %v629 = vpop.f32.mrb[0].mxu0
        %v630 = vpop.f32.mrb[0].mxu0
        %631 = vdwg.mxu0
        %v632 = vadd.f32 %v571, %v627
        %s633 = scalar_lea.vmem [#allocation5], 32
        %v634 = vld [vmem:[%s633] sm:$0xf]
        %v635 = vld [vmem:[%s633 + $0x4] sm:$0xf]
        %v636 = vld [vmem:[%s633 + $0x8] sm:$0xf]
        %v637 = vld [vmem:[%s633 + $0xc] sm:$0xf]
        %v642 = vunpack.c.l.b16 %v634
        %v643 = vunpack.c.l.b16 %v635
        %v644 = vunpack.c.l.b16 %v636
        %v645 = vunpack.c.l.b16 %v637
        %v646 = vpack.c.b16 %v643, %v642
        %v647 = vpack.c.b16 %v645, %v644
        %v651 = vsel %vm527, %v433, 0
        %653 = vmatprep.subr.bf16.mxu0 0
        %654 = vmatpush1.bf16.msra.mxu0 %v646
        %655 = vmatprep.subr.bf16.mxu0 0
        %656 = vmatpush1.bf16.msra.mxu0 %v647
        %657 = vmatprep.subr.bf16.mxu0 0
        %658 = vmatpush1.bf16.msra.mxu0 0
        %659 = vmatprep.subr.bf16.mxu0 0
        %660 = vmatpush1.bf16.msra.mxu0 0
        %661 = vmatprep.subr.bf16.mxu0 0
        %662 = vmatpush1.bf16.msra.mxu0 0
        %663 = vmatprep.subr.bf16.mxu0 0
        %664 = vmatpush1.bf16.msra.mxu0 0
        %665 = vmatprep.subr.bf16.mxu0 0
        %666 = vmatpush1.bf16.msra.mxu0 0
        %667 = vmatprep.subr.bf16.mxu0 0
        %668 = vmatpush1.bf16.msra.mxu0 0
        %669 = vmatprep.subr.bf16.mxu0 0
        %670 = vmatpush1.bf16.msra.mxu0 0
        %671 = vmatprep.subr.bf16.mxu0 0
        %672 = vmatpush1.bf16.msra.mxu0 0
        %673 = vmatprep.subr.bf16.mxu0 0
        %674 = vmatpush1.bf16.msra.mxu0 0
        %675 = vmatprep.subr.bf16.mxu0 0
        %676 = vmatpush1.bf16.msra.mxu0 0
        %677 = vmatprep.subr.bf16.mxu0 0
        %678 = vmatpush1.bf16.msra.mxu0 0
        %679 = vmatprep.subr.bf16.mxu0 0
        %680 = vmatpush1.bf16.msra.mxu0 0
        %681 = vmatprep.subr.bf16.mxu0 0
        %682 = vmatpush1.bf16.msra.mxu0 0
        %683 = vmatprep.subr.bf16.mxu0 0
        %684 = vmatpush1.bf16.msra.mxu0 0
        %685 = vmatprep.mubr.bf16.mxu0 0
        %686 = vmatmul.mubr.bf16.gmra.mrb[0].mxu0 %v651
        %v687 = vpop.f32.mrb[0].mxu0
        %v688 = vadd.f32 0.0, %v687
        %v689 = vpop.f32.mrb[0].mxu0
        %v690 = vpop.f32.mrb[0].mxu0
        %v691 = vpop.f32.mrb[0].mxu0
        %692 = vdwg.mxu0
        %v693 = vadd.f32 %v632, %v688
        %s694 = scalar_lea.vmem [#allocation5], 48
        %v695 = vld [vmem:[%s694] sm:$0xf]
        %v696 = vld [vmem:[%s694 + $0x4] sm:$0xf]
        %v697 = vld [vmem:[%s694 + $0x8] sm:$0xf]
        %v698 = vld [vmem:[%s694 + $0xc] sm:$0xf]
        %v703 = vunpack.c.l.b16 %v695
        %v704 = vunpack.c.l.b16 %v696
        %v705 = vunpack.c.l.b16 %v697
        %v706 = vunpack.c.l.b16 %v698
        %v707 = vpack.c.b16 %v704, %v703
        %v708 = vpack.c.b16 %v706, %v705
        %v712 = vsel %vm527, %v414, 0
        %714 = vmatprep.subr.bf16.mxu0 0
        %715 = vmatpush1.bf16.msra.mxu0 %v707
        %716 = vmatprep.subr.bf16.mxu0 0
        %717 = vmatpush1.bf16.msra.mxu0 %v708
        %718 = vmatprep.subr.bf16.mxu0 0
        %719 = vmatpush1.bf16.msra.mxu0 0
        %720 = vmatprep.subr.bf16.mxu0 0
        %721 = vmatpush1.bf16.msra.mxu0 0
        %722 = vmatprep.subr.bf16.mxu0 0
        %723 = vmatpush1.bf16.msra.mxu0 0
        %724 = vmatprep.subr.bf16.mxu0 0
        %725 = vmatpush1.bf16.msra.mxu0 0
        %726 = vmatprep.subr.bf16.mxu0 0
        %727 = vmatpush1.bf16.msra.mxu0 0
        %728 = vmatprep.subr.bf16.mxu0 0
        %729 = vmatpush1.bf16.msra.mxu0 0
        %730 = vmatprep.subr.bf16.mxu0 0
        %731 = vmatpush1.bf16.msra.mxu0 0
        %732 = vmatprep.subr.bf16.mxu0 0
        %733 = vmatpush1.bf16.msra.mxu0 0
        %734 = vmatprep.subr.bf16.mxu0 0
        %735 = vmatpush1.bf16.msra.mxu0 0
        %736 = vmatprep.subr.bf16.mxu0 0
        %737 = vmatpush1.bf16.msra.mxu0 0
        %738 = vmatprep.subr.bf16.mxu0 0
        %739 = vmatpush1.bf16.msra.mxu0 0
        %740 = vmatprep.subr.bf16.mxu0 0
        %741 = vmatpush1.bf16.msra.mxu0 0
        %742 = vmatprep.subr.bf16.mxu0 0
        %743 = vmatpush1.bf16.msra.mxu0 0
        %744 = vmatprep.subr.bf16.mxu0 0
        %745 = vmatpush1.bf16.msra.mxu0 0
        %746 = vmatprep.mubr.bf16.mxu0 0
        %747 = vmatmul.mubr.bf16.gmra.mrb[0].mxu0 %v712
        %v748 = vpop.f32.mrb[0].mxu0
        %v749 = vadd.f32 0.0, %v748
        %v750 = vpop.f32.mrb[0].mxu0
        %v751 = vpop.f32.mrb[0].mxu0
        %v752 = vpop.f32.mrb[0].mxu0
        %753 = vdwg.mxu0
        %v754 = vadd.f32 %v483, %v749
        %s755 = scalar_lea.vmem [#allocation5], 64
        %v756 = vld [vmem:[%s755] sm:$0xf]
        %v757 = vld [vmem:[%s755 + $0x4] sm:$0xf]
        %v758 = vld [vmem:[%s755 + $0x8] sm:$0xf]
        %v759 = vld [vmem:[%s755 + $0xc] sm:$0xf]
        %v764 = vunpack.c.l.b16 %v756
        %v765 = vunpack.c.l.b16 %v757
        %v766 = vunpack.c.l.b16 %v758
        %v767 = vunpack.c.l.b16 %v759
        %v768 = vpack.c.b16 %v765, %v764
        %v769 = vpack.c.b16 %v767, %v766
        %772 = vmatprep.subr.bf16.mxu0 0
        %773 = vmatpush1.bf16.msra.mxu0 %v768
        %774 = vmatprep.subr.bf16.mxu0 0
        %775 = vmatpush1.bf16.msra.mxu0 %v769
        %776 = vmatprep.subr.bf16.mxu0 0
        %777 = vmatpush1.bf16.msra.mxu0 0
        %778 = vmatprep.subr.bf16.mxu0 0
        %779 = vmatpush1.bf16.msra.mxu0 0
        %780 = vmatprep.subr.bf16.mxu0 0
        %781 = vmatpush1.bf16.msra.mxu0 0
        %782 = vmatprep.subr.bf16.mxu0 0
        %783 = vmatpush1.bf16.msra.mxu0 0
        %784 = vmatprep.subr.bf16.mxu0 0
        %785 = vmatpush1.bf16.msra.mxu0 0
        %786 = vmatprep.subr.bf16.mxu0 0
        %787 = vmatpush1.bf16.msra.mxu0 0
        %788 = vmatprep.subr.bf16.mxu0 0
        %789 = vmatpush1.bf16.msra.mxu0 0
        %790 = vmatprep.subr.bf16.mxu0 0
        %791 = vmatpush1.bf16.msra.mxu0 0
        %792 = vmatprep.subr.bf16.mxu0 0
        %793 = vmatpush1.bf16.msra.mxu0 0
        %794 = vmatprep.subr.bf16.mxu0 0
        %795 = vmatpush1.bf16.msra.mxu0 0
        %796 = vmatprep.subr.bf16.mxu0 0
        %797 = vmatpush1.bf16.msra.mxu0 0
        %798 = vmatprep.subr.bf16.mxu0 0
        %799 = vmatpush1.bf16.msra.mxu0 0
        %800 = vmatprep.subr.bf16.mxu0 0
        %801 = vmatpush1.bf16.msra.mxu0 0
        %802 = vmatprep.subr.bf16.mxu0 0
        %803 = vmatpush1.bf16.msra.mxu0 0
        %804 = vmatprep.mubr.bf16.mxu0 0
        %805 = vmatmul.mubr.bf16.gmra.mrb[0].mxu0 %v529
        %v806 = vpop.f32.mrb[0].mxu0
        %v807 = vadd.f32 0.0, %v806
        %v808 = vpop.f32.mrb[0].mxu0
        %v809 = vpop.f32.mrb[0].mxu0
        %v810 = vpop.f32.mrb[0].mxu0
        %811 = vdwg.mxu0
        %v812 = vadd.f32 %v754, %v807
        %s813 = scalar_lea.vmem [#allocation5], 80
        %v814 = vld [vmem:[%s813] sm:$0xf]
        %v815 = vld [vmem:[%s813 + $0x4] sm:$0xf]
        %v816 = vld [vmem:[%s813 + $0x8] sm:$0xf]
        %v817 = vld [vmem:[%s813 + $0xc] sm:$0xf]
        %v822 = vunpack.c.l.b16 %v814
        %v823 = vunpack.c.l.b16 %v815
        %v824 = vunpack.c.l.b16 %v816
        %v825 = vunpack.c.l.b16 %v817
        %v826 = vpack.c.b16 %v823, %v822
        %v827 = vpack.c.b16 %v825, %v824
        %830 = vmatprep.subr.bf16.mxu0 0
        %831 = vmatpush1.bf16.msra.mxu0 %v826
        %832 = vmatprep.subr.bf16.mxu0 0
        %833 = vmatpush1.bf16.msra.mxu0 %v827
        %834 = vmatprep.subr.bf16.mxu0 0
        %835 = vmatpush1.bf16.msra.mxu0 0
        %836 = vmatprep.subr.bf16.mxu0 0
        %837 = vmatpush1.bf16.msra.mxu0 0
        %838 = vmatprep.subr.bf16.mxu0 0
        %839 = vmatpush1.bf16.msra.mxu0 0
        %840 = vmatprep.subr.bf16.mxu0 0
        %841 = vmatpush1.bf16.msra.mxu0 0
        %842 = vmatprep.subr.bf16.mxu0 0
        %843 = vmatpush1.bf16.msra.mxu0 0
        %844 = vmatprep.subr.bf16.mxu0 0
        %845 = vmatpush1.bf16.msra.mxu0 0
        %846 = vmatprep.subr.bf16.mxu0 0
        %847 = vmatpush1.bf16.msra.mxu0 0
        %848 = vmatprep.subr.bf16.mxu0 0
        %849 = vmatpush1.bf16.msra.mxu0 0
        %850 = vmatprep.subr.bf16.mxu0 0
        %851 = vmatpush1.bf16.msra.mxu0 0
        %852 = vmatprep.subr.bf16.mxu0 0
        %853 = vmatpush1.bf16.msra.mxu0 0
        %854 = vmatprep.subr.bf16.mxu0 0
        %855 = vmatpush1.bf16.msra.mxu0 0
        %856 = vmatprep.subr.bf16.mxu0 0
        %857 = vmatpush1.bf16.msra.mxu0 0
        %858 = vmatprep.subr.bf16.mxu0 0
        %859 = vmatpush1.bf16.msra.mxu0 0
        %860 = vmatprep.subr.bf16.mxu0 0
        %861 = vmatpush1.bf16.msra.mxu0 0
        %862 = vmatprep.mubr.bf16.mxu0 0
        %863 = vmatmul.mubr.bf16.gmra.mrb[0].mxu0 %v590
        %v864 = vpop.f32.mrb[0].mxu0
        %v865 = vadd.f32 0.0, %v864
        %v866 = vpop.f32.mrb[0].mxu0
        %v867 = vpop.f32.mrb[0].mxu0
        %v868 = vpop.f32.mrb[0].mxu0
        %869 = vdwg.mxu0
        %v870 = vadd.f32 %v812, %v865
        %s871 = scalar_lea.vmem [#allocation5], 96
        %v872 = vld [vmem:[%s871] sm:$0xf]
        %v873 = vld [vmem:[%s871 + $0x4] sm:$0xf]
        %v874 = vld [vmem:[%s871 + $0x8] sm:$0xf]
        %v875 = vld [vmem:[%s871 + $0xc] sm:$0xf]
        %v880 = vunpack.c.l.b16 %v872
        %v881 = vunpack.c.l.b16 %v873
        %v882 = vunpack.c.l.b16 %v874
        %v883 = vunpack.c.l.b16 %v875
        %v884 = vpack.c.b16 %v881, %v880
        %v885 = vpack.c.b16 %v883, %v882
        %888 = vmatprep.subr.bf16.mxu0 0
        %889 = vmatpush1.bf16.msra.mxu0 %v884
        %890 = vmatprep.subr.bf16.mxu0 0
        %891 = vmatpush1.bf16.msra.mxu0 %v885
        %892 = vmatprep.subr.bf16.mxu0 0
        %893 = vmatpush1.bf16.msra.mxu0 0
        %894 = vmatprep.subr.bf16.mxu0 0
        %895 = vmatpush1.bf16.msra.mxu0 0
        %896 = vmatprep.subr.bf16.mxu0 0
        %897 = vmatpush1.bf16.msra.mxu0 0
        %898 = vmatprep.subr.bf16.mxu0 0
        %899 = vmatpush1.bf16.msra.mxu0 0
        %900 = vmatprep.subr.bf16.mxu0 0
        %901 = vmatpush1.bf16.msra.mxu0 0
        %902 = vmatprep.subr.bf16.mxu0 0
        %903 = vmatpush1.bf16.msra.mxu0 0
        %904 = vmatprep.subr.bf16.mxu0 0
        %905 = vmatpush1.bf16.msra.mxu0 0
        %906 = vmatprep.subr.bf16.mxu0 0
        %907 = vmatpush1.bf16.msra.mxu0 0
        %908 = vmatprep.subr.bf16.mxu0 0
        %909 = vmatpush1.bf16.msra.mxu0 0
        %910 = vmatprep.subr.bf16.mxu0 0
        %911 = vmatpush1.bf16.msra.mxu0 0
        %912 = vmatprep.subr.bf16.mxu0 0
        %913 = vmatpush1.bf16.msra.mxu0 0
        %914 = vmatprep.subr.bf16.mxu0 0
        %915 = vmatpush1.bf16.msra.mxu0 0
        %916 = vmatprep.subr.bf16.mxu0 0
        %917 = vmatpush1.bf16.msra.mxu0 0
        %918 = vmatprep.subr.bf16.mxu0 0
        %919 = vmatpush1.bf16.msra.mxu0 0
        %920 = vmatprep.mubr.bf16.mxu0 0
        %921 = vmatmul.mubr.bf16.gmra.mrb[0].mxu0 %v651
        %v922 = vpop.f32.mrb[0].mxu0
        %v923 = vadd.f32 0.0, %v922
        %v924 = vpop.f32.mrb[0].mxu0
        %v925 = vpop.f32.mrb[0].mxu0
        %v926 = vpop.f32.mrb[0].mxu0
        %927 = vdwg.mxu0
        %v928 = vadd.f32 %v870, %v923
        %s929 = scalar_lea.vmem [#allocation5], 112
        %v930 = vld [vmem:[%s929] sm:$0xf]
        %v931 = vld [vmem:[%s929 + $0x4] sm:$0xf]
        %v932 = vld [vmem:[%s929 + $0x8] sm:$0xf]
        %v933 = vld [vmem:[%s929 + $0xc] sm:$0xf]
        %v938 = vunpack.c.l.b16 %v930
        %v939 = vunpack.c.l.b16 %v931
        %v940 = vunpack.c.l.b16 %v932
        %v941 = vunpack.c.l.b16 %v933
        %v942 = vpack.c.b16 %v939, %v938
        %v943 = vpack.c.b16 %v941, %v940
        %v947 = vsel %vm527, %v442, 0
        %949 = vmatprep.subr.bf16.mxu0 0
        %950 = vmatpush1.bf16.msra.mxu0 %v942
        %951 = vmatprep.subr.bf16.mxu0 0
        %952 = vmatpush1.bf16.msra.mxu0 %v943
        %953 = vmatprep.subr.bf16.mxu0 0
        %954 = vmatpush1.bf16.msra.mxu0 0
        %955 = vmatprep.subr.bf16.mxu0 0
        %956 = vmatpush1.bf16.msra.mxu0 0
        %957 = vmatprep.subr.bf16.mxu0 0
        %958 = vmatpush1.bf16.msra.mxu0 0
        %959 = vmatprep.subr.bf16.mxu0 0
        %960 = vmatpush1.bf16.msra.mxu0 0
        %961 = vmatprep.subr.bf16.mxu0 0
        %962 = vmatpush1.bf16.msra.mxu0 0
        %963 = vmatprep.subr.bf16.mxu0 0
        %964 = vmatpush1.bf16.msra.mxu0 0
        %965 = vmatprep.subr.bf16.mxu0 0
        %966 = vmatpush1.bf16.msra.mxu0 0
        %967 = vmatprep.subr.bf16.mxu0 0
        %968 = vmatpush1.bf16.msra.mxu0 0
        %969 = vmatprep.subr.bf16.mxu0 0
        %970 = vmatpush1.bf16.msra.mxu0 0
        %971 = vmatprep.subr.bf16.mxu0 0
        %972 = vmatpush1.bf16.msra.mxu0 0
        %973 = vmatprep.subr.bf16.mxu0 0
        %974 = vmatpush1.bf16.msra.mxu0 0
        %975 = vmatprep.subr.bf16.mxu0 0
        %976 = vmatpush1.bf16.msra.mxu0 0
        %977 = vmatprep.subr.bf16.mxu0 0
        %978 = vmatpush1.bf16.msra.mxu0 0
        %979 = vmatprep.subr.bf16.mxu0 0
        %980 = vmatpush1.bf16.msra.mxu0 0
        %981 = vmatprep.mubr.bf16.mxu0 0
        %982 = vmatmul.mubr.bf16.gmra.mrb[0].mxu0 %v947
        %v983 = vpop.f32.mrb[0].mxu0
        %v984 = vadd.f32 0.0, %v983
        %v985 = vpop.f32.mrb[0].mxu0
        %v986 = vpop.f32.mrb[0].mxu0
        %v987 = vpop.f32.mrb[0].mxu0
        %988 = vdwg.mxu0
        %v989 = vadd.f32 %v928, %v984
        %s990 = scalar_lea.vmem [#allocation5], 128
        %v991 = vld [vmem:[%s990] sm:$0xf]
        %v992 = vld [vmem:[%s990 + $0x4] sm:$0xf]
        %v993 = vld [vmem:[%s990 + $0x8] sm:$0xf]
        %v994 = vld [vmem:[%s990 + $0xc] sm:$0xf]
        %v999 = vunpack.c.l.b16 %v991
        %v1000 = vunpack.c.l.b16 %v992
        %v1001 = vunpack.c.l.b16 %v993
        %v1002 = vunpack.c.l.b16 %v994
        %v1003 = vpack.c.b16 %v1000, %v999
        %v1004 = vpack.c.b16 %v1002, %v1001
        %v1008 = vsel %vm527, %v405, 0
        %1010 = vmatprep.subr.bf16.mxu0 0
        %1011 = vmatpush1.bf16.msra.mxu0 %v1003
        %1012 = vmatprep.subr.bf16.mxu0 0
        %1013 = vmatpush1.bf16.msra.mxu0 %v1004
        %1014 = vmatprep.subr.bf16.mxu0 0
        %1015 = vmatpush1.bf16.msra.mxu0 0
        %1016 = vmatprep.subr.bf16.mxu0 0
        %1017 = vmatpush1.bf16.msra.mxu0 0
        %1018 = vmatprep.subr.bf16.mxu0 0
        %1019 = vmatpush1.bf16.msra.mxu0 0
        %1020 = vmatprep.subr.bf16.mxu0 0
        %1021 = vmatpush1.bf16.msra.mxu0 0
        %1022 = vmatprep.subr.bf16.mxu0 0
        %1023 = vmatpush1.bf16.msra.mxu0 0
        %1024 = vmatprep.subr.bf16.mxu0 0
        %1025 = vmatpush1.bf16.msra.mxu0 0
        %1026 = vmatprep.subr.bf16.mxu0 0
        %1027 = vmatpush1.bf16.msra.mxu0 0
        %1028 = vmatprep.subr.bf16.mxu0 0
        %1029 = vmatpush1.bf16.msra.mxu0 0
        %1030 = vmatprep.subr.bf16.mxu0 0
        %1031 = vmatpush1.bf16.msra.mxu0 0
        %1032 = vmatprep.subr.bf16.mxu0 0
        %1033 = vmatpush1.bf16.msra.mxu0 0
        %1034 = vmatprep.subr.bf16.mxu0 0
        %1035 = vmatpush1.bf16.msra.mxu0 0
        %1036 = vmatprep.subr.bf16.mxu0 0
        %1037 = vmatpush1.bf16.msra.mxu0 0
        %1038 = vmatprep.subr.bf16.mxu0 0
        %1039 = vmatpush1.bf16.msra.mxu0 0
        %1040 = vmatprep.subr.bf16.mxu0 0
        %1041 = vmatpush1.bf16.msra.mxu0 0
        %1042 = vmatprep.mubr.bf16.mxu0 0
        %1043 = vmatmul.mubr.bf16.gmra.mrb[0].mxu0 %v1008
        %v1044 = vpop.f32.mrb[0].mxu0
        %v1045 = vadd.f32 0.0, %v1044
        %v1046 = vpop.f32.mrb[0].mxu0
        %v1047 = vpop.f32.mrb[0].mxu0
        %v1048 = vpop.f32.mrb[0].mxu0
        %1049 = vdwg.mxu0
        %v1050 = vadd.f32 %v492, %v1045
        %s1051 = scalar_lea.vmem [#allocation5], 144
        %v1052 = vld [vmem:[%s1051] sm:$0xf]
        %v1053 = vld [vmem:[%s1051 + $0x4] sm:$0xf]
        %v1054 = vld [vmem:[%s1051 + $0x8] sm:$0xf]
        %v1055 = vld [vmem:[%s1051 + $0xc] sm:$0xf]
        %v1060 = vunpack.c.l.b16 %v1052
        %v1061 = vunpack.c.l.b16 %v1053
        %v1062 = vunpack.c.l.b16 %v1054
        %v1063 = vunpack.c.l.b16 %v1055
        %v1064 = vpack.c.b16 %v1061, %v1060
        %v1065 = vpack.c.b16 %v1063, %v1062
        %1068 = vmatprep.subr.bf16.mxu0 0
        %1069 = vmatpush1.bf16.msra.mxu0 %v1064
        %1070 = vmatprep.subr.bf16.mxu0 0
        %1071 = vmatpush1.bf16.msra.mxu0 %v1065
        %1072 = vmatprep.subr.bf16.mxu0 0
        %1073 = vmatpush1.bf16.msra.mxu0 0
        %1074 = vmatprep.subr.bf16.mxu0 0
        %1075 = vmatpush1.bf16.msra.mxu0 0
        %1076 = vmatprep.subr.bf16.mxu0 0
        %1077 = vmatpush1.bf16.msra.mxu0 0
        %1078 = vmatprep.subr.bf16.mxu0 0
        %1079 = vmatpush1.bf16.msra.mxu0 0
        %1080 = vmatprep.subr.bf16.mxu0 0
        %1081 = vmatpush1.bf16.msra.mxu0 0
        %1082 = vmatprep.subr.bf16.mxu0 0
        %1083 = vmatpush1.bf16.msra.mxu0 0
        %1084 = vmatprep.subr.bf16.mxu0 0
        %1085 = vmatpush1.bf16.msra.mxu0 0
        %1086 = vmatprep.subr.bf16.mxu0 0
        %1087 = vmatpush1.bf16.msra.mxu0 0
        %1088 = vmatprep.subr.bf16.mxu0 0
        %1089 = vmatpush1.bf16.msra.mxu0 0
        %1090 = vmatprep.subr.bf16.mxu0 0
        %1091 = vmatpush1.bf16.msra.mxu0 0
        %1092 = vmatprep.subr.bf16.mxu0 0
        %1093 = vmatpush1.bf16.msra.mxu0 0
        %1094 = vmatprep.subr.bf16.mxu0 0
        %1095 = vmatpush1.bf16.msra.mxu0 0
        %1096 = vmatprep.subr.bf16.mxu0 0
        %1097 = vmatpush1.bf16.msra.mxu0 0
        %1098 = vmatprep.subr.bf16.mxu0 0
        %1099 = vmatpush1.bf16.msra.mxu0 0
        %1100 = vmatprep.mubr.bf16.mxu0 0
        %1101 = vmatmul.mubr.bf16.gmra.mrb[0].mxu0 %v712
        %v1102 = vpop.f32.mrb[0].mxu0
        %v1103 = vadd.f32 0.0, %v1102
        %v1104 = vpop.f32.mrb[0].mxu0
        %v1105 = vpop.f32.mrb[0].mxu0
        %v1106 = vpop.f32.mrb[0].mxu0
        %1107 = vdwg.mxu0
        %v1108 = vadd.f32 %v1050, %v1103
        %s1109 = scalar_lea.vmem [#allocation5], 160
        %v1110 = vld [vmem:[%s1109] sm:$0xf]
        %v1111 = vld [vmem:[%s1109 + $0x4] sm:$0xf]
        %v1112 = vld [vmem:[%s1109 + $0x8] sm:$0xf]
        %v1113 = vld [vmem:[%s1109 + $0xc] sm:$0xf]
        %v1118 = vunpack.c.l.b16 %v1110
        %v1119 = vunpack.c.l.b16 %v1111
        %v1120 = vunpack.c.l.b16 %v1112
        %v1121 = vunpack.c.l.b16 %v1113
        %v1122 = vpack.c.b16 %v1119, %v1118
        %v1123 = vpack.c.b16 %v1121, %v1120
        %1126 = vmatprep.subr.bf16.mxu0 0
        %1127 = vmatpush1.bf16.msra.mxu0 %v1122
        %1128 = vmatprep.subr.bf16.mxu0 0
        %1129 = vmatpush1.bf16.msra.mxu0 %v1123
        %1130 = vmatprep.subr.bf16.mxu0 0
        %1131 = vmatpush1.bf16.msra.mxu0 0
        %1132 = vmatprep.subr.bf16.mxu0 0
        %1133 = vmatpush1.bf16.msra.mxu0 0
        %1134 = vmatprep.subr.bf16.mxu0 0
        %1135 = vmatpush1.bf16.msra.mxu0 0
        %1136 = vmatprep.subr.bf16.mxu0 0
        %1137 = vmatpush1.bf16.msra.mxu0 0
        %1138 = vmatprep.subr.bf16.mxu0 0
        %1139 = vmatpush1.bf16.msra.mxu0 0
        %1140 = vmatprep.subr.bf16.mxu0 0
        %1141 = vmatpush1.bf16.msra.mxu0 0
        %1142 = vmatprep.subr.bf16.mxu0 0
        %1143 = vmatpush1.bf16.msra.mxu0 0
        %1144 = vmatprep.subr.bf16.mxu0 0
        %1145 = vmatpush1.bf16.msra.mxu0 0
        %1146 = vmatprep.subr.bf16.mxu0 0
        %1147 = vmatpush1.bf16.msra.mxu0 0
        %1148 = vmatprep.subr.bf16.mxu0 0
        %1149 = vmatpush1.bf16.msra.mxu0 0
        %1150 = vmatprep.subr.bf16.mxu0 0
        %1151 = vmatpush1.bf16.msra.mxu0 0
        %1152 = vmatprep.subr.bf16.mxu0 0
        %1153 = vmatpush1.bf16.msra.mxu0 0
        %1154 = vmatprep.subr.bf16.mxu0 0
        %1155 = vmatpush1.bf16.msra.mxu0 0
        %1156 = vmatprep.subr.bf16.mxu0 0
        %1157 = vmatpush1.bf16.msra.mxu0 0
        %1158 = vmatprep.mubr.bf16.mxu0 0
        %1159 = vmatmul.mubr.bf16.gmra.mrb[0].mxu0 %v529
        %v1160 = vpop.f32.mrb[0].mxu0
        %v1161 = vadd.f32 0.0, %v1160
        %v1162 = vpop.f32.mrb[0].mxu0
        %v1163 = vpop.f32.mrb[0].mxu0
        %v1164 = vpop.f32.mrb[0].mxu0
        %1165 = vdwg.mxu0
        %v1166 = vadd.f32 %v1108, %v1161
        %s1167 = scalar_lea.vmem [#allocation5], 176
        %v1168 = vld [vmem:[%s1167] sm:$0xf]
        %v1169 = vld [vmem:[%s1167 + $0x4] sm:$0xf]
        %v1170 = vld [vmem:[%s1167 + $0x8] sm:$0xf]
        %v1171 = vld [vmem:[%s1167 + $0xc] sm:$0xf]
        %v1176 = vunpack.c.l.b16 %v1168
        %v1177 = vunpack.c.l.b16 %v1169
        %v1178 = vunpack.c.l.b16 %v1170
        %v1179 = vunpack.c.l.b16 %v1171
        %v1180 = vpack.c.b16 %v1177, %v1176
        %v1181 = vpack.c.b16 %v1179, %v1178
        %1184 = vmatprep.subr.bf16.mxu0 0
        %1185 = vmatpush1.bf16.msra.mxu0 %v1180
        %1186 = vmatprep.subr.bf16.mxu0 0
        %1187 = vmatpush1.bf16.msra.mxu0 %v1181
        %1188 = vmatprep.subr.bf16.mxu0 0
        %1189 = vmatpush1.bf16.msra.mxu0 0
        %1190 = vmatprep.subr.bf16.mxu0 0
        %1191 = vmatpush1.bf16.msra.mxu0 0
        %1192 = vmatprep.subr.bf16.mxu0 0
        %1193 = vmatpush1.bf16.msra.mxu0 0
        %1194 = vmatprep.subr.bf16.mxu0 0
        %1195 = vmatpush1.bf16.msra.mxu0 0
        %1196 = vmatprep.subr.bf16.mxu0 0
        %1197 = vmatpush1.bf16.msra.mxu0 0
        %1198 = vmatprep.subr.bf16.mxu0 0
        %1199 = vmatpush1.bf16.msra.mxu0 0
        %1200 = vmatprep.subr.bf16.mxu0 0
        %1201 = vmatpush1.bf16.msra.mxu0 0
        %1202 = vmatprep.subr.bf16.mxu0 0
        %1203 = vmatpush1.bf16.msra.mxu0 0
        %1204 = vmatprep.subr.bf16.mxu0 0
        %1205 = vmatpush1.bf16.msra.mxu0 0
        %1206 = vmatprep.subr.bf16.mxu0 0
        %1207 = vmatpush1.bf16.msra.mxu0 0
        %1208 = vmatprep.subr.bf16.mxu0 0
        %1209 = vmatpush1.bf16.msra.mxu0 0
        %1210 = vmatprep.subr.bf16.mxu0 0
        %1211 = vmatpush1.bf16.msra.mxu0 0
        %1212 = vmatprep.subr.bf16.mxu0 0
        %1213 = vmatpush1.bf16.msra.mxu0 0
        %1214 = vmatprep.subr.bf16.mxu0 0
        %1215 = vmatpush1.bf16.msra.mxu0 0
        %1216 = vmatprep.mubr.bf16.mxu0 0
        %1217 = vmatmul.mubr.bf16.gmra.mrb[0].mxu0 %v590
        %v1218 = vpop.f32.mrb[0].mxu0
        %v1219 = vadd.f32 0.0, %v1218
        %v1220 = vpop.f32.mrb[0].mxu0
        %v1221 = vpop.f32.mrb[0].mxu0
        %v1222 = vpop.f32.mrb[0].mxu0
        %1223 = vdwg.mxu0
        %v1224 = vadd.f32 %v1166, %v1219
        %s1225 = scalar_lea.vmem [#allocation5], 192
        %v1226 = vld [vmem:[%s1225] sm:$0xf]
        %v1227 = vld [vmem:[%s1225 + $0x4] sm:$0xf]
        %v1228 = vld [vmem:[%s1225 + $0x8] sm:$0xf]
        %v1229 = vld [vmem:[%s1225 + $0xc] sm:$0xf]
        %v1234 = vunpack.c.l.b16 %v1226
        %v1235 = vunpack.c.l.b16 %v1227
        %v1236 = vunpack.c.l.b16 %v1228
        %v1237 = vunpack.c.l.b16 %v1229
        %v1238 = vpack.c.b16 %v1235, %v1234
        %v1239 = vpack.c.b16 %v1237, %v1236
        %1242 = vmatprep.subr.bf16.mxu0 0
        %1243 = vmatpush1.bf16.msra.mxu0 %v1238
        %1244 = vmatprep.subr.bf16.mxu0 0
        %1245 = vmatpush1.bf16.msra.mxu0 %v1239
        %1246 = vmatprep.subr.bf16.mxu0 0
        %1247 = vmatpush1.bf16.msra.mxu0 0
        %1248 = vmatprep.subr.bf16.mxu0 0
        %1249 = vmatpush1.bf16.msra.mxu0 0
        %1250 = vmatprep.subr.bf16.mxu0 0
        %1251 = vmatpush1.bf16.msra.mxu0 0
        %1252 = vmatprep.subr.bf16.mxu0 0
        %1253 = vmatpush1.bf16.msra.mxu0 0
        %1254 = vmatprep.subr.bf16.mxu0 0
        %1255 = vmatpush1.bf16.msra.mxu0 0
        %1256 = vmatprep.subr.bf16.mxu0 0
        %1257 = vmatpush1.bf16.msra.mxu0 0
        %1258 = vmatprep.subr.bf16.mxu0 0
        %1259 = vmatpush1.bf16.msra.mxu0 0
        %1260 = vmatprep.subr.bf16.mxu0 0
        %1261 = vmatpush1.bf16.msra.mxu0 0
        %1262 = vmatprep.subr.bf16.mxu0 0
        %1263 = vmatpush1.bf16.msra.mxu0 0
        %1264 = vmatprep.subr.bf16.mxu0 0
        %1265 = vmatpush1.bf16.msra.mxu0 0
        %1266 = vmatprep.subr.bf16.mxu0 0
        %1267 = vmatpush1.bf16.msra.mxu0 0
        %1268 = vmatprep.subr.bf16.mxu0 0
        %1269 = vmatpush1.bf16.msra.mxu0 0
        %1270 = vmatprep.subr.bf16.mxu0 0
        %1271 = vmatpush1.bf16.msra.mxu0 0
        %1272 = vmatprep.subr.bf16.mxu0 0
        %1273 = vmatpush1.bf16.msra.mxu0 0
        %1274 = vmatprep.mubr.bf16.mxu0 0
        %1275 = vmatmul.mubr.bf16.gmra.mrb[0].mxu0 %v651
        %v1276 = vpop.f32.mrb[0].mxu0
        %v1277 = vadd.f32 0.0, %v1276
        %v1278 = vpop.f32.mrb[0].mxu0
        %v1279 = vpop.f32.mrb[0].mxu0
        %v1280 = vpop.f32.mrb[0].mxu0
        %1281 = vdwg.mxu0
        %v1282 = vadd.f32 %v1224, %v1277
        %s1283 = scalar_lea.vmem [#allocation5], 208
        %v1284 = vld [vmem:[%s1283] sm:$0xf]
        %v1285 = vld [vmem:[%s1283 + $0x4] sm:$0xf]
        %v1286 = vld [vmem:[%s1283 + $0x8] sm:$0xf]
        %v1287 = vld [vmem:[%s1283 + $0xc] sm:$0xf]
        %v1292 = vunpack.c.l.b16 %v1284
        %v1293 = vunpack.c.l.b16 %v1285
        %v1294 = vunpack.c.l.b16 %v1286
        %v1295 = vunpack.c.l.b16 %v1287
        %v1296 = vpack.c.b16 %v1293, %v1292
        %v1297 = vpack.c.b16 %v1295, %v1294
        %1300 = vmatprep.subr.bf16.mxu0 0
        %1301 = vmatpush1.bf16.msra.mxu0 %v1296
        %1302 = vmatprep.subr.bf16.mxu0 0
        %1303 = vmatpush1.bf16.msra.mxu0 %v1297
        %1304 = vmatprep.subr.bf16.mxu0 0
        %1305 = vmatpush1.bf16.msra.mxu0 0
        %1306 = vmatprep.subr.bf16.mxu0 0
        %1307 = vmatpush1.bf16.msra.mxu0 0
        %1308 = vmatprep.subr.bf16.mxu0 0
        %1309 = vmatpush1.bf16.msra.mxu0 0
        %1310 = vmatprep.subr.bf16.mxu0 0
        %1311 = vmatpush1.bf16.msra.mxu0 0
        %1312 = vmatprep.subr.bf16.mxu0 0
        %1313 = vmatpush1.bf16.msra.mxu0 0
        %1314 = vmatprep.subr.bf16.mxu0 0
        %1315 = vmatpush1.bf16.msra.mxu0 0
        %1316 = vmatprep.subr.bf16.mxu0 0
        %1317 = vmatpush1.bf16.msra.mxu0 0
        %1318 = vmatprep.subr.bf16.mxu0 0
        %1319 = vmatpush1.bf16.msra.mxu0 0
        %1320 = vmatprep.subr.bf16.mxu0 0
        %1321 = vmatpush1.bf16.msra.mxu0 0
        %1322 = vmatprep.subr.bf16.mxu0 0
        %1323 = vmatpush1.bf16.msra.mxu0 0
        %1324 = vmatprep.subr.bf16.mxu0 0
        %1325 = vmatpush1.bf16.msra.mxu0 0
        %1326 = vmatprep.subr.bf16.mxu0 0
        %1327 = vmatpush1.bf16.msra.mxu0 0
        %1328 = vmatprep.subr.bf16.mxu0 0
        %1329 = vmatpush1.bf16.msra.mxu0 0
        %1330 = vmatprep.subr.bf16.mxu0 0
        %1331 = vmatpush1.bf16.msra.mxu0 0
        %1332 = vmatprep.mubr.bf16.mxu0 0
        %1333 = vmatmul.mubr.bf16.gmra.mrb[0].mxu0 %v947
        %v1334 = vpop.f32.mrb[0].mxu0
        %v1335 = vadd.f32 0.0, %v1334
        %v1336 = vpop.f32.mrb[0].mxu0
        %v1337 = vpop.f32.mrb[0].mxu0
        %v1338 = vpop.f32.mrb[0].mxu0
        %1339 = vdwg.mxu0
        %v1340 = vadd.f32 %v1282, %v1335
        %s1341 = scalar_lea.vmem [#allocation5], 224
        %v1342 = vld [vmem:[%s1341] sm:$0xf]
        %v1343 = vld [vmem:[%s1341 + $0x4] sm:$0xf]
        %v1344 = vld [vmem:[%s1341 + $0x8] sm:$0xf]
        %v1345 = vld [vmem:[%s1341 + $0xc] sm:$0xf]
        %v1350 = vunpack.c.l.b16 %v1342
        %v1351 = vunpack.c.l.b16 %v1343
        %v1352 = vunpack.c.l.b16 %v1344
        %v1353 = vunpack.c.l.b16 %v1345
        %v1354 = vpack.c.b16 %v1351, %v1350
        %v1355 = vpack.c.b16 %v1353, %v1352
        %v1359 = vsel %vm527, %v450, 0
        %1361 = vmatprep.subr.bf16.mxu0 0
        %1362 = vmatpush1.bf16.msra.mxu0 %v1354
        %1363 = vmatprep.subr.bf16.mxu0 0
        %1364 = vmatpush1.bf16.msra.mxu0 %v1355
        %1365 = vmatprep.subr.bf16.mxu0 0
        %1366 = vmatpush1.bf16.msra.mxu0 0
        %1367 = vmatprep.subr.bf16.mxu0 0
        %1368 = vmatpush1.bf16.msra.mxu0 0
        %1369 = vmatprep.subr.bf16.mxu0 0
        %1370 = vmatpush1.bf16.msra.mxu0 0
        %1371 = vmatprep.subr.bf16.mxu0 0
        %1372 = vmatpush1.bf16.msra.mxu0 0
        %1373 = vmatprep.subr.bf16.mxu0 0
        %1374 = vmatpush1.bf16.msra.mxu0 0
        %1375 = vmatprep.subr.bf16.mxu0 0
        %1376 = vmatpush1.bf16.msra.mxu0 0
        %1377 = vmatprep.subr.bf16.mxu0 0
        %1378 = vmatpush1.bf16.msra.mxu0 0
        %1379 = vmatprep.subr.bf16.mxu0 0
        %1380 = vmatpush1.bf16.msra.mxu0 0
        %1381 = vmatprep.subr.bf16.mxu0 0
        %1382 = vmatpush1.bf16.msra.mxu0 0
        %1383 = vmatprep.subr.bf16.mxu0 0
        %1384 = vmatpush1.bf16.msra.mxu0 0
        %1385 = vmatprep.subr.bf16.mxu0 0
        %1386 = vmatpush1.bf16.msra.mxu0 0
        %1387 = vmatprep.subr.bf16.mxu0 0
        %1388 = vmatpush1.bf16.msra.mxu0 0
        %1389 = vmatprep.subr.bf16.mxu0 0
        %1390 = vmatpush1.bf16.msra.mxu0 0
        %1391 = vmatprep.subr.bf16.mxu0 0
        %1392 = vmatpush1.bf16.msra.mxu0 0
        %1393 = vmatprep.mubr.bf16.mxu0 0
        %1394 = vmatmul.mubr.bf16.gmra.mrb[0].mxu0 %v1359
        %v1395 = vpop.f32.mrb[0].mxu0
        %v1396 = vadd.f32 0.0, %v1395
        %v1397 = vpop.f32.mrb[0].mxu0
        %v1398 = vpop.f32.mrb[0].mxu0
        %v1399 = vpop.f32.mrb[0].mxu0
        %1400 = vdwg.mxu0
        %v1401 = vadd.f32 %v1340, %v1396
        %s1402 = scalar_lea.vmem [#allocation5], 240
        %v1403 = vld [vmem:[%s1402] sm:$0xf]
        %v1404 = vld [vmem:[%s1402 + $0x4] sm:$0xf]
        %v1405 = vld [vmem:[%s1402 + $0x8] sm:$0xf]
        %v1406 = vld [vmem:[%s1402 + $0xc] sm:$0xf]
        %v1411 = vunpack.c.l.b16 %v1403
        %v1412 = vunpack.c.l.b16 %v1404
        %v1413 = vunpack.c.l.b16 %v1405
        %v1414 = vunpack.c.l.b16 %v1406
        %v1415 = vpack.c.b16 %v1412, %v1411
        %v1416 = vpack.c.b16 %v1414, %v1413
        %v1420 = vsel %vm527, %v396, 0
        %1422 = vmatprep.subr.bf16.mxu0 0
        %1423 = vmatpush1.bf16.msra.mxu0 %v1415
        %1424 = vmatprep.subr.bf16.mxu0 0
        %1425 = vmatpush1.bf16.msra.mxu0 %v1416
        %1426 = vmatprep.subr.bf16.mxu0 0
        %1427 = vmatpush1.bf16.msra.mxu0 0
        %1428 = vmatprep.subr.bf16.mxu0 0
        %1429 = vmatpush1.bf16.msra.mxu0 0
        %1430 = vmatprep.subr.bf16.mxu0 0
        %1431 = vmatpush1.bf16.msra.mxu0 0
        %1432 = vmatprep.subr.bf16.mxu0 0
        %1433 = vmatpush1.bf16.msra.mxu0 0
        %1434 = vmatprep.subr.bf16.mxu0 0
        %1435 = vmatpush1.bf16.msra.mxu0 0
        %1436 = vmatprep.subr.bf16.mxu0 0
        %1437 = vmatpush1.bf16.msra.mxu0 0
        %1438 = vmatprep.subr.bf16.mxu0 0
        %1439 = vmatpush1.bf16.msra.mxu0 0
        %1440 = vmatprep.subr.bf16.mxu0 0
        %1441 = vmatpush1.bf16.msra.mxu0 0
        %1442 = vmatprep.subr.bf16.mxu0 0
        %1443 = vmatpush1.bf16.msra.mxu0 0
        %1444 = vmatprep.subr.bf16.mxu0 0
        %1445 = vmatpush1.bf16.msra.mxu0 0
        %1446 = vmatprep.subr.bf16.mxu0 0
        %1447 = vmatpush1.bf16.msra.mxu0 0
        %1448 = vmatprep.subr.bf16.mxu0 0
        %1449 = vmatpush1.bf16.msra.mxu0 0
        %1450 = vmatprep.subr.bf16.mxu0 0
        %1451 = vmatpush1.bf16.msra.mxu0 0
        %1452 = vmatprep.subr.bf16.mxu0 0
        %1453 = vmatpush1.bf16.msra.mxu0 0
        %1454 = vmatprep.mubr.bf16.mxu0 0
        %1455 = vmatmul.mubr.bf16.gmra.mrb[0].mxu0 %v1420
        %v1456 = vpop.f32.mrb[0].mxu0
        %v1457 = vadd.f32 0.0, %v1456
        %v1458 = vpop.f32.mrb[0].mxu0
        %v1459 = vpop.f32.mrb[0].mxu0
        %v1460 = vpop.f32.mrb[0].mxu0
        %1461 = vdwg.mxu0
        %v1462 = vadd.f32 %v501, %v1457
        %s1463 = scalar_lea.vmem [#allocation5], 256
        %v1464 = vld [vmem:[%s1463] sm:$0xf]
        %v1465 = vld [vmem:[%s1463 + $0x4] sm:$0xf]
        %v1466 = vld [vmem:[%s1463 + $0x8] sm:$0xf]
        %v1467 = vld [vmem:[%s1463 + $0xc] sm:$0xf]
        %v1472 = vunpack.c.l.b16 %v1464
        %v1473 = vunpack.c.l.b16 %v1465
        %v1474 = vunpack.c.l.b16 %v1466
        %v1475 = vunpack.c.l.b16 %v1467
        %v1476 = vpack.c.b16 %v1473, %v1472
        %v1477 = vpack.c.b16 %v1475, %v1474
        %1480 = vmatprep.subr.bf16.mxu0 0
        %1481 = vmatpush1.bf16.msra.mxu0 %v1476
        %1482 = vmatprep.subr.bf16.mxu0 0
        %1483 = vmatpush1.bf16.msra.mxu0 %v1477
        %1484 = vmatprep.subr.bf16.mxu0 0
        %1485 = vmatpush1.bf16.msra.mxu0 0
        %1486 = vmatprep.subr.bf16.mxu0 0
        %1487 = vmatpush1.bf16.msra.mxu0 0
        %1488 = vmatprep.subr.bf16.mxu0 0
        %1489 = vmatpush1.bf16.msra.mxu0 0
        %1490 = vmatprep.subr.bf16.mxu0 0
        %1491 = vmatpush1.bf16.msra.mxu0 0
        %1492 = vmatprep.subr.bf16.mxu0 0
        %1493 = vmatpush1.bf16.msra.mxu0 0
        %1494 = vmatprep.subr.bf16.mxu0 0
        %1495 = vmatpush1.bf16.msra.mxu0 0
        %1496 = vmatprep.subr.bf16.mxu0 0
        %1497 = vmatpush1.bf16.msra.mxu0 0
        %1498 = vmatprep.subr.bf16.mxu0 0
        %1499 = vmatpush1.bf16.msra.mxu0 0
        %1500 = vmatprep.subr.bf16.mxu0 0
        %1501 = vmatpush1.bf16.msra.mxu0 0
        %1502 = vmatprep.subr.bf16.mxu0 0
        %1503 = vmatpush1.bf16.msra.mxu0 0
        %1504 = vmatprep.subr.bf16.mxu0 0
        %1505 = vmatpush1.bf16.msra.mxu0 0
        %1506 = vmatprep.subr.bf16.mxu0 0
        %1507 = vmatpush1.bf16.msra.mxu0 0
        %1508 = vmatprep.subr.bf16.mxu0 0
        %1509 = vmatpush1.bf16.msra.mxu0 0
        %1510 = vmatprep.subr.bf16.mxu0 0
        %1511 = vmatpush1.bf16.msra.mxu0 0
        %1512 = vmatprep.mubr.bf16.mxu0 0
        %1513 = vmatmul.mubr.bf16.gmra.mrb[0].mxu0 %v1008
        %v1514 = vpop.f32.mrb[0].mxu0
        %v1515 = vadd.f32 0.0, %v1514
        %v1516 = vpop.f32.mrb[0].mxu0
        %v1517 = vpop.f32.mrb[0].mxu0
        %v1518 = vpop.f32.mrb[0].mxu0
        %1519 = vdwg.mxu0
        %v1520 = vadd.f32 %v1462, %v1515
        %s1521 = scalar_lea.vmem [#allocation5], 272
        %v1522 = vld [vmem:[%s1521] sm:$0xf]
        %v1523 = vld [vmem:[%s1521 + $0x4] sm:$0xf]
        %v1524 = vld [vmem:[%s1521 + $0x8] sm:$0xf]
        %v1525 = vld [vmem:[%s1521 + $0xc] sm:$0xf]
        %v1530 = vunpack.c.l.b16 %v1522
        %v1531 = vunpack.c.l.b16 %v1523
        %v1532 = vunpack.c.l.b16 %v1524
        %v1533 = vunpack.c.l.b16 %v1525
        %v1534 = vpack.c.b16 %v1531, %v1530
        %v1535 = vpack.c.b16 %v1533, %v1532
        %1538 = vmatprep.subr.bf16.mxu0 0
        %1539 = vmatpush1.bf16.msra.mxu0 %v1534
        %1540 = vmatprep.subr.bf16.mxu0 0
        %1541 = vmatpush1.bf16.msra.mxu0 %v1535
        %1542 = vmatprep.subr.bf16.mxu0 0
        %1543 = vmatpush1.bf16.msra.mxu0 0
        %1544 = vmatprep.subr.bf16.mxu0 0
        %1545 = vmatpush1.bf16.msra.mxu0 0
        %1546 = vmatprep.subr.bf16.mxu0 0
        %1547 = vmatpush1.bf16.msra.mxu0 0
        %1548 = vmatprep.subr.bf16.mxu0 0
        %1549 = vmatpush1.bf16.msra.mxu0 0
        %1550 = vmatprep.subr.bf16.mxu0 0
        %1551 = vmatpush1.bf16.msra.mxu0 0
        %1552 = vmatprep.subr.bf16.mxu0 0
        %1553 = vmatpush1.bf16.msra.mxu0 0
        %1554 = vmatprep.subr.bf16.mxu0 0
        %1555 = vmatpush1.bf16.msra.mxu0 0
        %1556 = vmatprep.subr.bf16.mxu0 0
        %1557 = vmatpush1.bf16.msra.mxu0 0
        %1558 = vmatprep.subr.bf16.mxu0 0
        %1559 = vmatpush1.bf16.msra.mxu0 0
        %1560 = vmatprep.subr.bf16.mxu0 0
        %1561 = vmatpush1.bf16.msra.mxu0 0
        %1562 = vmatprep.subr.bf16.mxu0 0
        %1563 = vmatpush1.bf16.msra.mxu0 0
        %1564 = vmatprep.subr.bf16.mxu0 0
        %1565 = vmatpush1.bf16.msra.mxu0 0
        %1566 = vmatprep.subr.bf16.mxu0 0
        %1567 = vmatpush1.bf16.msra.mxu0 0
        %1568 = vmatprep.subr.bf16.mxu0 0
        %1569 = vmatpush1.bf16.msra.mxu0 0
        %1570 = vmatprep.mubr.bf16.mxu0 0
        %1571 = vmatmul.mubr.bf16.gmra.mrb[0].mxu0 %v712
        %v1572 = vpop.f32.mrb[0].mxu0
        %v1573 = vadd.f32 0.0, %v1572
        %v1574 = vpop.f32.mrb[0].mxu0
        %v1575 = vpop.f32.mrb[0].mxu0
        %v1576 = vpop.f32.mrb[0].mxu0
        %1577 = vdwg.mxu0
        %v1578 = vadd.f32 %v1520, %v1573
        %s1579 = scalar_lea.vmem [#allocation5], 288
        %v1580 = vld [vmem:[%s1579] sm:$0xf]
        %v1581 = vld [vmem:[%s1579 + $0x4] sm:$0xf]
        %v1582 = vld [vmem:[%s1579 + $0x8] sm:$0xf]
        %v1583 = vld [vmem:[%s1579 + $0xc] sm:$0xf]
        %v1588 = vunpack.c.l.b16 %v1580
        %v1589 = vunpack.c.l.b16 %v1581
        %v1590 = vunpack.c.l.b16 %v1582
        %v1591 = vunpack.c.l.b16 %v1583
        %v1592 = vpack.c.b16 %v1589, %v1588
        %v1593 = vpack.c.b16 %v1591, %v1590
        %1596 = vmatprep.subr.bf16.mxu0 0
        %1597 = vmatpush1.bf16.msra.mxu0 %v1592
        %1598 = vmatprep.subr.bf16.mxu0 0
        %1599 = vmatpush1.bf16.msra.mxu0 %v1593
        %1600 = vmatprep.subr.bf16.mxu0 0
        %1601 = vmatpush1.bf16.msra.mxu0 0
        %1602 = vmatprep.subr.bf16.mxu0 0
        %1603 = vmatpush1.bf16.msra.mxu0 0
        %1604 = vmatprep.subr.bf16.mxu0 0
        %1605 = vmatpush1.bf16.msra.mxu0 0
        %1606 = vmatprep.subr.bf16.mxu0 0
        %1607 = vmatpush1.bf16.msra.mxu0 0
        %1608 = vmatprep.subr.bf16.mxu0 0
        %1609 = vmatpush1.bf16.msra.mxu0 0
        %1610 = vmatprep.subr.bf16.mxu0 0
        %1611 = vmatpush1.bf16.msra.mxu0 0
        %1612 = vmatprep.subr.bf16.mxu0 0
        %1613 = vmatpush1.bf16.msra.mxu0 0
        %1614 = vmatprep.subr.bf16.mxu0 0
        %1615 = vmatpush1.bf16.msra.mxu0 0
        %1616 = vmatprep.subr.bf16.mxu0 0
        %1617 = vmatpush1.bf16.msra.mxu0 0
        %1618 = vmatprep.subr.bf16.mxu0 0
        %1619 = vmatpush1.bf16.msra.mxu0 0
        %1620 = vmatprep.subr.bf16.mxu0 0
        %1621 = vmatpush1.bf16.msra.mxu0 0
        %1622 = vmatprep.subr.bf16.mxu0 0
        %1623 = vmatpush1.bf16.msra.mxu0 0
        %1624 = vmatprep.subr.bf16.mxu0 0
        %1625 = vmatpush1.bf16.msra.mxu0 0
        %1626 = vmatprep.subr.bf16.mxu0 0
        %1627 = vmatpush1.bf16.msra.mxu0 0
        %1628 = vmatprep.mubr.bf16.mxu0 0
        %1629 = vmatmul.mubr.bf16.gmra.mrb[0].mxu0 %v529
        %v1630 = vpop.f32.mrb[0].mxu0
        %v1631 = vadd.f32 0.0, %v1630
        %v1632 = vpop.f32.mrb[0].mxu0
        %v1633 = vpop.f32.mrb[0].mxu0
        %v1634 = vpop.f32.mrb[0].mxu0
        %1635 = vdwg.mxu0
        %v1636 = vadd.f32 %v1578, %v1631
        %s1637 = scalar_lea.vmem [#allocation5], 304
        %v1638 = vld [vmem:[%s1637] sm:$0xf]
        %v1639 = vld [vmem:[%s1637 + $0x4] sm:$0xf]
        %v1640 = vld [vmem:[%s1637 + $0x8] sm:$0xf]
        %v1641 = vld [vmem:[%s1637 + $0xc] sm:$0xf]
        %v1646 = vunpack.c.l.b16 %v1638
        %v1647 = vunpack.c.l.b16 %v1639
        %v1648 = vunpack.c.l.b16 %v1640
        %v1649 = vunpack.c.l.b16 %v1641
        %v1650 = vpack.c.b16 %v1647, %v1646
        %v1651 = vpack.c.b16 %v1649, %v1648
        %1654 = vmatprep.subr.bf16.mxu0 0
        %1655 = vmatpush1.bf16.msra.mxu0 %v1650
        %1656 = vmatprep.subr.bf16.mxu0 0
        %1657 = vmatpush1.bf16.msra.mxu0 %v1651
        %1658 = vmatprep.subr.bf16.mxu0 0
        %1659 = vmatpush1.bf16.msra.mxu0 0
        %1660 = vmatprep.subr.bf16.mxu0 0
        %1661 = vmatpush1.bf16.msra.mxu0 0
        %1662 = vmatprep.subr.bf16.mxu0 0
        %1663 = vmatpush1.bf16.msra.mxu0 0
        %1664 = vmatprep.subr.bf16.mxu0 0
        %1665 = vmatpush1.bf16.msra.mxu0 0
        %1666 = vmatprep.subr.bf16.mxu0 0
        %1667 = vmatpush1.bf16.msra.mxu0 0
        %1668 = vmatprep.subr.bf16.mxu0 0
        %1669 = vmatpush1.bf16.msra.mxu0 0
        %1670 = vmatprep.subr.bf16.mxu0 0
        %1671 = vmatpush1.bf16.msra.mxu0 0
        %1672 = vmatprep.subr.bf16.mxu0 0
        %1673 = vmatpush1.bf16.msra.mxu0 0
        %1674 = vmatprep.subr.bf16.mxu0 0
        %1675 = vmatpush1.bf16.msra.mxu0 0
        %1676 = vmatprep.subr.bf16.mxu0 0
        %1677 = vmatpush1.bf16.msra.mxu0 0
        %1678 = vmatprep.subr.bf16.mxu0 0
        %1679 = vmatpush1.bf16.msra.mxu0 0
        %1680 = vmatprep.subr.bf16.mxu0 0
        %1681 = vmatpush1.bf16.msra.mxu0 0
        %1682 = vmatprep.subr.bf16.mxu0 0
        %1683 = vmatpush1.bf16.msra.mxu0 0
        %1684 = vmatprep.subr.bf16.mxu0 0
        %1685 = vmatpush1.bf16.msra.mxu0 0
        %1686 = vmatprep.mubr.bf16.mxu0 0
        %1687 = vmatmul.mubr.bf16.gmra.mrb[0].mxu0 %v590
        %v1688 = vpop.f32.mrb[0].mxu0
        %v1689 = vadd.f32 0.0, %v1688
        %v1690 = vpop.f32.mrb[0].mxu0
        %v1691 = vpop.f32.mrb[0].mxu0
        %v1692 = vpop.f32.mrb[0].mxu0
        %1693 = vdwg.mxu0
        %v1694 = vadd.f32 %v1636, %v1689
        %s1695 = scalar_lea.vmem [#allocation5], 320
        %v1696 = vld [vmem:[%s1695] sm:$0xf]
        %v1697 = vld [vmem:[%s1695 + $0x4] sm:$0xf]
        %v1698 = vld [vmem:[%s1695 + $0x8] sm:$0xf]
        %v1699 = vld [vmem:[%s1695 + $0xc] sm:$0xf]
        %v1704 = vunpack.c.l.b16 %v1696
        %v1705 = vunpack.c.l.b16 %v1697
        %v1706 = vunpack.c.l.b16 %v1698
        %v1707 = vunpack.c.l.b16 %v1699
        %v1708 = vpack.c.b16 %v1705, %v1704
        %v1709 = vpack.c.b16 %v1707, %v1706
        %1712 = vmatprep.subr.bf16.mxu0 0
        %1713 = vmatpush1.bf16.msra.mxu0 %v1708
        %1714 = vmatprep.subr.bf16.mxu0 0
        %1715 = vmatpush1.bf16.msra.mxu0 %v1709
        %1716 = vmatprep.subr.bf16.mxu0 0
        %1717 = vmatpush1.bf16.msra.mxu0 0
        %1718 = vmatprep.subr.bf16.mxu0 0
        %1719 = vmatpush1.bf16.msra.mxu0 0
        %1720 = vmatprep.subr.bf16.mxu0 0
        %1721 = vmatpush1.bf16.msra.mxu0 0
        %1722 = vmatprep.subr.bf16.mxu0 0
        %1723 = vmatpush1.bf16.msra.mxu0 0
        %1724 = vmatprep.subr.bf16.mxu0 0
        %1725 = vmatpush1.bf16.msra.mxu0 0
        %1726 = vmatprep.subr.bf16.mxu0 0
        %1727 = vmatpush1.bf16.msra.mxu0 0
        %1728 = vmatprep.subr.bf16.mxu0 0
        %1729 = vmatpush1.bf16.msra.mxu0 0
        %1730 = vmatprep.subr.bf16.mxu0 0
        %1731 = vmatpush1.bf16.msra.mxu0 0
        %1732 = vmatprep.subr.bf16.mxu0 0
        %1733 = vmatpush1.bf16.msra.mxu0 0
        %1734 = vmatprep.subr.bf16.mxu0 0
        %1735 = vmatpush1.bf16.msra.mxu0 0
        %1736 = vmatprep.subr.bf16.mxu0 0
        %1737 = vmatpush1.bf16.msra.mxu0 0
        %1738 = vmatprep.subr.bf16.mxu0 0
        %1739 = vmatpush1.bf16.msra.mxu0 0
        %1740 = vmatprep.subr.bf16.mxu0 0
        %1741 = vmatpush1.bf16.msra.mxu0 0
        %1742 = vmatprep.subr.bf16.mxu0 0
        %1743 = vmatpush1.bf16.msra.mxu0 0
        %1744 = vmatprep.mubr.bf16.mxu0 0
        %1745 = vmatmul.mubr.bf16.gmra.mrb[0].mxu0 %v651
        %v1746 = vpop.f32.mrb[0].mxu0
        %v1747 = vadd.f32 0.0, %v1746
        %v1748 = vpop.f32.mrb[0].mxu0
        %v1749 = vpop.f32.mrb[0].mxu0
        %v1750 = vpop.f32.mrb[0].mxu0
        %1751 = vdwg.mxu0
        %v1752 = vadd.f32 %v1694, %v1747
        %s1753 = scalar_lea.vmem [#allocation5], 336
        %v1754 = vld [vmem:[%s1753] sm:$0xf]
        %v1755 = vld [vmem:[%s1753 + $0x4] sm:$0xf]
        %v1756 = vld [vmem:[%s1753 + $0x8] sm:$0xf]
        %v1757 = vld [vmem:[%s1753 + $0xc] sm:$0xf]
        %v1762 = vunpack.c.l.b16 %v1754
        %v1763 = vunpack.c.l.b16 %v1755
        %v1764 = vunpack.c.l.b16 %v1756
        %v1765 = vunpack.c.l.b16 %v1757
        %v1766 = vpack.c.b16 %v1763, %v1762
        %v1767 = vpack.c.b16 %v1765, %v1764
        %1770 = vmatprep.subr.bf16.mxu0 0
        %1771 = vmatpush1.bf16.msra.mxu0 %v1766
        %1772 = vmatprep.subr.bf16.mxu0 0
        %1773 = vmatpush1.bf16.msra.mxu0 %v1767
        %1774 = vmatprep.subr.bf16.mxu0 0
        %1775 = vmatpush1.bf16.msra.mxu0 0
        %1776 = vmatprep.subr.bf16.mxu0 0
        %1777 = vmatpush1.bf16.msra.mxu0 0
        %1778 = vmatprep.subr.bf16.mxu0 0
        %1779 = vmatpush1.bf16.msra.mxu0 0
        %1780 = vmatprep.subr.bf16.mxu0 0
        %1781 = vmatpush1.bf16.msra.mxu0 0
        %1782 = vmatprep.subr.bf16.mxu0 0
        %1783 = vmatpush1.bf16.msra.mxu0 0
        %1784 = vmatprep.subr.bf16.mxu0 0
        %1785 = vmatpush1.bf16.msra.mxu0 0
        %1786 = vmatprep.subr.bf16.mxu0 0
        %1787 = vmatpush1.bf16.msra.mxu0 0
        %1788 = vmatprep.subr.bf16.mxu0 0
        %1789 = vmatpush1.bf16.msra.mxu0 0
        %1790 = vmatprep.subr.bf16.mxu0 0
        %1791 = vmatpush1.bf16.msra.mxu0 0
        %1792 = vmatprep.subr.bf16.mxu0 0
        %1793 = vmatpush1.bf16.msra.mxu0 0
        %1794 = vmatprep.subr.bf16.mxu0 0
        %1795 = vmatpush1.bf16.msra.mxu0 0
        %1796 = vmatprep.subr.bf16.mxu0 0
        %1797 = vmatpush1.bf16.msra.mxu0 0
        %1798 = vmatprep.subr.bf16.mxu0 0
        %1799 = vmatpush1.bf16.msra.mxu0 0
        %1800 = vmatprep.subr.bf16.mxu0 0
        %1801 = vmatpush1.bf16.msra.mxu0 0
        %1802 = vmatprep.mubr.bf16.mxu0 0
        %1803 = vmatmul.mubr.bf16.gmra.mrb[0].mxu0 %v947
        %v1804 = vpop.f32.mrb[0].mxu0
        %v1805 = vadd.f32 0.0, %v1804
        %v1806 = vpop.f32.mrb[0].mxu0
        %v1807 = vpop.f32.mrb[0].mxu0
        %v1808 = vpop.f32.mrb[0].mxu0
        %1809 = vdwg.mxu0
        %v1810 = vadd.f32 %v1752, %v1805
        %s1811 = scalar_lea.vmem [#allocation5], 352
        %v1812 = vld [vmem:[%s1811] sm:$0xf]
        %v1813 = vld [vmem:[%s1811 + $0x4] sm:$0xf]
        %v1814 = vld [vmem:[%s1811 + $0x8] sm:$0xf]
        %v1815 = vld [vmem:[%s1811 + $0xc] sm:$0xf]
        %v1820 = vunpack.c.l.b16 %v1812
        %v1821 = vunpack.c.l.b16 %v1813
        %v1822 = vunpack.c.l.b16 %v1814
        %v1823 = vunpack.c.l.b16 %v1815
        %v1824 = vpack.c.b16 %v1821, %v1820
        %v1825 = vpack.c.b16 %v1823, %v1822
        %1828 = vmatprep.subr.bf16.mxu0 0
        %1829 = vmatpush1.bf16.msra.mxu0 %v1824
        %1830 = vmatprep.subr.bf16.mxu0 0
        %1831 = vmatpush1.bf16.msra.mxu0 %v1825
        %1832 = vmatprep.subr.bf16.mxu0 0
        %1833 = vmatpush1.bf16.msra.mxu0 0
        %1834 = vmatprep.subr.bf16.mxu0 0
        %1835 = vmatpush1.bf16.msra.mxu0 0
        %1836 = vmatprep.subr.bf16.mxu0 0
        %1837 = vmatpush1.bf16.msra.mxu0 0
        %1838 = vmatprep.subr.bf16.mxu0 0
        %1839 = vmatpush1.bf16.msra.mxu0 0
        %1840 = vmatprep.subr.bf16.mxu0 0
        %1841 = vmatpush1.bf16.msra.mxu0 0
        %1842 = vmatprep.subr.bf16.mxu0 0
        %1843 = vmatpush1.bf16.msra.mxu0 0
        %1844 = vmatprep.subr.bf16.mxu0 0
        %1845 = vmatpush1.bf16.msra.mxu0 0
        %1846 = vmatprep.subr.bf16.mxu0 0
        %1847 = vmatpush1.bf16.msra.mxu0 0
        %1848 = vmatprep.subr.bf16.mxu0 0
        %1849 = vmatpush1.bf16.msra.mxu0 0
        %1850 = vmatprep.subr.bf16.mxu0 0
        %1851 = vmatpush1.bf16.msra.mxu0 0
        %1852 = vmatprep.subr.bf16.mxu0 0
        %1853 = vmatpush1.bf16.msra.mxu0 0
        %1854 = vmatprep.subr.bf16.mxu0 0
        %1855 = vmatpush1.bf16.msra.mxu0 0
        %1856 = vmatprep.subr.bf16.mxu0 0
        %1857 = vmatpush1.bf16.msra.mxu0 0
        %1858 = vmatprep.subr.bf16.mxu0 0
        %1859 = vmatpush1.bf16.msra.mxu0 0
        %1860 = vmatprep.mubr.bf16.mxu0 0
        %1861 = vmatmul.mubr.bf16.gmra.mrb[0].mxu0 %v1359
        %v1862 = vpop.f32.mrb[0].mxu0
        %v1863 = vadd.f32 0.0, %v1862
        %v1864 = vpop.f32.mrb[0].mxu0
        %v1865 = vpop.f32.mrb[0].mxu0
        %v1866 = vpop.f32.mrb[0].mxu0
        %1867 = vdwg.mxu0
        %v1868 = vadd.f32 %v1810, %v1863
        %s1869 = scalar_lea.vmem [#allocation5], 368
        %v1870 = vld [vmem:[%s1869] sm:$0xf]
        %v1871 = vld [vmem:[%s1869 + $0x4] sm:$0xf]
        %v1872 = vld [vmem:[%s1869 + $0x8] sm:$0xf]
        %v1873 = vld [vmem:[%s1869 + $0xc] sm:$0xf]
        %v1878 = vunpack.c.l.b16 %v1870
        %v1879 = vunpack.c.l.b16 %v1871
        %v1880 = vunpack.c.l.b16 %v1872
        %v1881 = vunpack.c.l.b16 %v1873
        %v1882 = vpack.c.b16 %v1879, %v1878
        %v1883 = vpack.c.b16 %v1881, %v1880
        %v1887 = vsel %vm527, %v458, 0
        %1889 = vmatprep.subr.bf16.mxu0 0
        %1890 = vmatpush1.bf16.msra.mxu0 %v1882
        %1891 = vmatprep.subr.bf16.mxu0 0
        %1892 = vmatpush1.bf16.msra.mxu0 %v1883
        %1893 = vmatprep.subr.bf16.mxu0 0
        %1894 = vmatpush1.bf16.msra.mxu0 0
        %1895 = vmatprep.subr.bf16.mxu0 0
        %1896 = vmatpush1.bf16.msra.mxu0 0
        %1897 = vmatprep.subr.bf16.mxu0 0
        %1898 = vmatpush1.bf16.msra.mxu0 0
        %1899 = vmatprep.subr.bf16.mxu0 0
        %1900 = vmatpush1.bf16.msra.mxu0 0
        %1901 = vmatprep.subr.bf16.mxu0 0
        %1902 = vmatpush1.bf16.msra.mxu0 0
        %1903 = vmatprep.subr.bf16.mxu0 0
        %1904 = vmatpush1.bf16.msra.mxu0 0
        %1905 = vmatprep.subr.bf16.mxu0 0
        %1906 = vmatpush1.bf16.msra.mxu0 0
        %1907 = vmatprep.subr.bf16.mxu0 0
        %1908 = vmatpush1.bf16.msra.mxu0 0
        %1909 = vmatprep.subr.bf16.mxu0 0
        %1910 = vmatpush1.bf16.msra.mxu0 0
        %1911 = vmatprep.subr.bf16.mxu0 0
        %1912 = vmatpush1.bf16.msra.mxu0 0
        %1913 = vmatprep.subr.bf16.mxu0 0
        %1914 = vmatpush1.bf16.msra.mxu0 0
        %1915 = vmatprep.subr.bf16.mxu0 0
        %1916 = vmatpush1.bf16.msra.mxu0 0
        %1917 = vmatprep.subr.bf16.mxu0 0
        %1918 = vmatpush1.bf16.msra.mxu0 0
        %1919 = vmatprep.subr.bf16.mxu0 0
        %1920 = vmatpush1.bf16.msra.mxu0 0
        %1921 = vmatprep.mubr.bf16.mxu0 0
        %1922 = vmatmul.mubr.bf16.gmra.mrb[0].mxu0 %v1887
        %v1923 = vpop.f32.mrb[0].mxu0
        %v1924 = vadd.f32 0.0, %v1923
        %v1925 = vpop.f32.mrb[0].mxu0
        %v1926 = vpop.f32.mrb[0].mxu0
        %v1927 = vpop.f32.mrb[0].mxu0
        %1928 = vdwg.mxu0
        %v1929 = vadd.f32 %v1868, %v1924
        %s1930 = scalar_lea.vmem [#allocation5], 384
        %v1931 = vld [vmem:[%s1930] sm:$0xf]
        %v1932 = vld [vmem:[%s1930 + $0x4] sm:$0xf]
        %v1933 = vld [vmem:[%s1930 + $0x8] sm:$0xf]
        %v1934 = vld [vmem:[%s1930 + $0xc] sm:$0xf]
        %v1939 = vunpack.c.l.b16 %v1931
        %v1940 = vunpack.c.l.b16 %v1932
        %v1941 = vunpack.c.l.b16 %v1933
        %v1942 = vunpack.c.l.b16 %v1934
        %v1943 = vpack.c.b16 %v1940, %v1939
        %v1944 = vpack.c.b16 %v1942, %v1941
        %v1948 = vsel %vm527, %v387, 0
        %1950 = vmatprep.subr.bf16.mxu0 0
        %1951 = vmatpush1.bf16.msra.mxu0 %v1943
        %1952 = vmatprep.subr.bf16.mxu0 0
        %1953 = vmatpush1.bf16.msra.mxu0 %v1944
        %1954 = vmatprep.subr.bf16.mxu0 0
        %1955 = vmatpush1.bf16.msra.mxu0 0
        %1956 = vmatprep.subr.bf16.mxu0 0
        %1957 = vmatpush1.bf16.msra.mxu0 0
        %1958 = vmatprep.subr.bf16.mxu0 0
        %1959 = vmatpush1.bf16.msra.mxu0 0
        %1960 = vmatprep.subr.bf16.mxu0 0
        %1961 = vmatpush1.bf16.msra.mxu0 0
        %1962 = vmatprep.subr.bf16.mxu0 0
        %1963 = vmatpush1.bf16.msra.mxu0 0
        %1964 = vmatprep.subr.bf16.mxu0 0
        %1965 = vmatpush1.bf16.msra.mxu0 0
        %1966 = vmatprep.subr.bf16.mxu0 0
        %1967 = vmatpush1.bf16.msra.mxu0 0
        %1968 = vmatprep.subr.bf16.mxu0 0
        %1969 = vmatpush1.bf16.msra.mxu0 0
        %1970 = vmatprep.subr.bf16.mxu0 0
        %1971 = vmatpush1.bf16.msra.mxu0 0
        %1972 = vmatprep.subr.bf16.mxu0 0
        %1973 = vmatpush1.bf16.msra.mxu0 0
        %1974 = vmatprep.subr.bf16.mxu0 0
        %1975 = vmatpush1.bf16.msra.mxu0 0
        %1976 = vmatprep.subr.bf16.mxu0 0
        %1977 = vmatpush1.bf16.msra.mxu0 0
        %1978 = vmatprep.subr.bf16.mxu0 0
        %1979 = vmatpush1.bf16.msra.mxu0 0
        %1980 = vmatprep.subr.bf16.mxu0 0
        %1981 = vmatpush1.bf16.msra.mxu0 0
        %1982 = vmatprep.mubr.bf16.mxu0 0
        %1983 = vmatmul.mubr.bf16.gmra.mrb[0].mxu0 %v1948
        %v1984 = vpop.f32.mrb[0].mxu0
        %v1985 = vadd.f32 0.0, %v1984
        %v1986 = vpop.f32.mrb[0].mxu0
        %v1987 = vpop.f32.mrb[0].mxu0
        %v1988 = vpop.f32.mrb[0].mxu0
        %1989 = vdwg.mxu0
        %v1990 = vadd.f32 %v510, %v1985
        %s1991 = scalar_lea.vmem [#allocation5], 400
        %v1992 = vld [vmem:[%s1991] sm:$0xf]
        %v1993 = vld [vmem:[%s1991 + $0x4] sm:$0xf]
        %v1994 = vld [vmem:[%s1991 + $0x8] sm:$0xf]
        %v1995 = vld [vmem:[%s1991 + $0xc] sm:$0xf]
        %v2000 = vunpack.c.l.b16 %v1992
        %v2001 = vunpack.c.l.b16 %v1993
        %v2002 = vunpack.c.l.b16 %v1994
        %v2003 = vunpack.c.l.b16 %v1995
        %v2004 = vpack.c.b16 %v2001, %v2000
        %v2005 = vpack.c.b16 %v2003, %v2002
        %2008 = vmatprep.subr.bf16.mxu0 0
        %2009 = vmatpush1.bf16.msra.mxu0 %v2004
        %2010 = vmatprep.subr.bf16.mxu0 0
        %2011 = vmatpush1.bf16.msra.mxu0 %v2005
        %2012 = vmatprep.subr.bf16.mxu0 0
        %2013 = vmatpush1.bf16.msra.mxu0 0
        %2014 = vmatprep.subr.bf16.mxu0 0
        %2015 = vmatpush1.bf16.msra.mxu0 0
        %2016 = vmatprep.subr.bf16.mxu0 0
        %2017 = vmatpush1.bf16.msra.mxu0 0
        %2018 = vmatprep.subr.bf16.mxu0 0
        %2019 = vmatpush1.bf16.msra.mxu0 0
        %2020 = vmatprep.subr.bf16.mxu0 0
        %2021 = vmatpush1.bf16.msra.mxu0 0
        %2022 = vmatprep.subr.bf16.mxu0 0
        %2023 = vmatpush1.bf16.msra.mxu0 0
        %2024 = vmatprep.subr.bf16.mxu0 0
        %2025 = vmatpush1.bf16.msra.mxu0 0
        %2026 = vmatprep.subr.bf16.mxu0 0
        %2027 = vmatpush1.bf16.msra.mxu0 0
        %2028 = vmatprep.subr.bf16.mxu0 0
        %2029 = vmatpush1.bf16.msra.mxu0 0
        %2030 = vmatprep.subr.bf16.mxu0 0
        %2031 = vmatpush1.bf16.msra.mxu0 0
        %2032 = vmatprep.subr.bf16.mxu0 0
        %2033 = vmatpush1.bf16.msra.mxu0 0
        %2034 = vmatprep.subr.bf16.mxu0 0
        %2035 = vmatpush1.bf16.msra.mxu0 0
        %2036 = vmatprep.subr.bf16.mxu0 0
        %2037 = vmatpush1.bf16.msra.mxu0 0
        %2038 = vmatprep.subr.bf16.mxu0 0
        %2039 = vmatpush1.bf16.msra.mxu0 0
        %2040 = vmatprep.mubr.bf16.mxu0 0
        %2041 = vmatmul.mubr.bf16.gmra.mrb[0].mxu0 %v1420
        %v2042 = vpop.f32.mrb[0].mxu0
        %v2043 = vadd.f32 0.0, %v2042
        %v2044 = vpop.f32.mrb[0].mxu0
        %v2045 = vpop.f32.mrb[0].mxu0
        %v2046 = vpop.f32.mrb[0].mxu0
        %2047 = vdwg.mxu0
        %v2048 = vadd.f32 %v1990, %v2043
        %s2049 = scalar_lea.vmem [#allocation5], 416
        %v2050 = vld [vmem:[%s2049] sm:$0xf]
        %v2051 = vld [vmem:[%s2049 + $0x4] sm:$0xf]
        %v2052 = vld [vmem:[%s2049 + $0x8] sm:$0xf]
        %v2053 = vld [vmem:[%s2049 + $0xc] sm:$0xf]
        %v2058 = vunpack.c.l.b16 %v2050
        %v2059 = vunpack.c.l.b16 %v2051
        %v2060 = vunpack.c.l.b16 %v2052
        %v2061 = vunpack.c.l.b16 %v2053
        %v2062 = vpack.c.b16 %v2059, %v2058
        %v2063 = vpack.c.b16 %v2061, %v2060
        %2066 = vmatprep.subr.bf16.mxu0 0
        %2067 = vmatpush1.bf16.msra.mxu0 %v2062
        %2068 = vmatprep.subr.bf16.mxu0 0
        %2069 = vmatpush1.bf16.msra.mxu0 %v2063
        %2070 = vmatprep.subr.bf16.mxu0 0
        %2071 = vmatpush1.bf16.msra.mxu0 0
        %2072 = vmatprep.subr.bf16.mxu0 0
        %2073 = vmatpush1.bf16.msra.mxu0 0
        %2074 = vmatprep.subr.bf16.mxu0 0
        %2075 = vmatpush1.bf16.msra.mxu0 0
        %2076 = vmatprep.subr.bf16.mxu0 0
        %2077 = vmatpush1.bf16.msra.mxu0 0
        %2078 = vmatprep.subr.bf16.mxu0 0
        %2079 = vmatpush1.bf16.msra.mxu0 0
        %2080 = vmatprep.subr.bf16.mxu0 0
        %2081 = vmatpush1.bf16.msra.mxu0 0
        %2082 = vmatprep.subr.bf16.mxu0 0
        %2083 = vmatpush1.bf16.msra.mxu0 0
        %2084 = vmatprep.subr.bf16.mxu0 0
        %2085 = vmatpush1.bf16.msra.mxu0 0
        %2086 = vmatprep.subr.bf16.mxu0 0
        %2087 = vmatpush1.bf16.msra.mxu0 0
        %2088 = vmatprep.subr.bf16.mxu0 0
        %2089 = vmatpush1.bf16.msra.mxu0 0
        %2090 = vmatprep.subr.bf16.mxu0 0
        %2091 = vmatpush1.bf16.msra.mxu0 0
        %2092 = vmatprep.subr.bf16.mxu0 0
        %2093 = vmatpush1.bf16.msra.mxu0 0
        %2094 = vmatprep.subr.bf16.mxu0 0
        %2095 = vmatpush1.bf16.msra.mxu0 0
        %2096 = vmatprep.subr.bf16.mxu0 0
        %2097 = vmatpush1.bf16.msra.mxu0 0
        %2098 = vmatprep.mubr.bf16.mxu0 0
        %2099 = vmatmul.mubr.bf16.gmra.mrb[0].mxu0 %v1008
        %v2100 = vpop.f32.mrb[0].mxu0
        %v2101 = vadd.f32 0.0, %v2100
        %v2102 = vpop.f32.mrb[0].mxu0
        %v2103 = vpop.f32.mrb[0].mxu0
        %v2104 = vpop.f32.mrb[0].mxu0
        %2105 = vdwg.mxu0
        %v2106 = vadd.f32 %v2048, %v2101
        %s2107 = scalar_lea.vmem [#allocation5], 432
        %v2108 = vld [vmem:[%s2107] sm:$0xf]
        %v2109 = vld [vmem:[%s2107 + $0x4] sm:$0xf]
        %v2110 = vld [vmem:[%s2107 + $0x8] sm:$0xf]
        %v2111 = vld [vmem:[%s2107 + $0xc] sm:$0xf]
        %v2116 = vunpack.c.l.b16 %v2108
        %v2117 = vunpack.c.l.b16 %v2109
        %v2118 = vunpack.c.l.b16 %v2110
        %v2119 = vunpack.c.l.b16 %v2111
        %v2120 = vpack.c.b16 %v2117, %v2116
        %v2121 = vpack.c.b16 %v2119, %v2118
        %2124 = vmatprep.subr.bf16.mxu0 0
        %2125 = vmatpush1.bf16.msra.mxu0 %v2120
        %2126 = vmatprep.subr.bf16.mxu0 0
        %2127 = vmatpush1.bf16.msra.mxu0 %v2121
        %2128 = vmatprep.subr.bf16.mxu0 0
        %2129 = vmatpush1.bf16.msra.mxu0 0
        %2130 = vmatprep.subr.bf16.mxu0 0
        %2131 = vmatpush1.bf16.msra.mxu0 0
        %2132 = vmatprep.subr.bf16.mxu0 0
        %2133 = vmatpush1.bf16.msra.mxu0 0
        %2134 = vmatprep.subr.bf16.mxu0 0
        %2135 = vmatpush1.bf16.msra.mxu0 0
        %2136 = vmatprep.subr.bf16.mxu0 0
        %2137 = vmatpush1.bf16.msra.mxu0 0
        %2138 = vmatprep.subr.bf16.mxu0 0
        %2139 = vmatpush1.bf16.msra.mxu0 0
        %2140 = vmatprep.subr.bf16.mxu0 0
        %2141 = vmatpush1.bf16.msra.mxu0 0
        %2142 = vmatprep.subr.bf16.mxu0 0
        %2143 = vmatpush1.bf16.msra.mxu0 0
        %2144 = vmatprep.subr.bf16.mxu0 0
        %2145 = vmatpush1.bf16.msra.mxu0 0
        %2146 = vmatprep.subr.bf16.mxu0 0
        %2147 = vmatpush1.bf16.msra.mxu0 0
        %2148 = vmatprep.subr.bf16.mxu0 0
        %2149 = vmatpush1.bf16.msra.mxu0 0
        %2150 = vmatprep.subr.bf16.mxu0 0
        %2151 = vmatpush1.bf16.msra.mxu0 0
        %2152 = vmatprep.subr.bf16.mxu0 0
        %2153 = vmatpush1.bf16.msra.mxu0 0
        %2154 = vmatprep.subr.bf16.mxu0 0
        %2155 = vmatpush1.bf16.msra.mxu0 0
        %2156 = vmatprep.mubr.bf16.mxu0 0
        %2157 = vmatmul.mubr.bf16.gmra.mrb[0].mxu0 %v712
        %v2158 = vpop.f32.mrb[0].mxu0
        %v2159 = vadd.f32 0.0, %v2158
        %v2160 = vpop.f32.mrb[0].mxu0
        %v2161 = vpop.f32.mrb[0].mxu0
        %v2162 = vpop.f32.mrb[0].mxu0
        %2163 = vdwg.mxu0
        %v2164 = vadd.f32 %v2106, %v2159
        %s2165 = scalar_lea.vmem [#allocation5], 448
        %v2166 = vld [vmem:[%s2165] sm:$0xf]
        %v2167 = vld [vmem:[%s2165 + $0x4] sm:$0xf]
        %v2168 = vld [vmem:[%s2165 + $0x8] sm:$0xf]
        %v2169 = vld [vmem:[%s2165 + $0xc] sm:$0xf]
        %v2174 = vunpack.c.l.b16 %v2166
        %v2175 = vunpack.c.l.b16 %v2167
        %v2176 = vunpack.c.l.b16 %v2168
        %v2177 = vunpack.c.l.b16 %v2169
        %v2178 = vpack.c.b16 %v2175, %v2174
        %v2179 = vpack.c.b16 %v2177, %v2176
        %2182 = vmatprep.subr.bf16.mxu0 0
        %2183 = vmatpush1.bf16.msra.mxu0 %v2178
        %2184 = vmatprep.subr.bf16.mxu0 0
        %2185 = vmatpush1.bf16.msra.mxu0 %v2179
        %2186 = vmatprep.subr.bf16.mxu0 0
        %2187 = vmatpush1.bf16.msra.mxu0 0
        %2188 = vmatprep.subr.bf16.mxu0 0
        %2189 = vmatpush1.bf16.msra.mxu0 0
        %2190 = vmatprep.subr.bf16.mxu0 0
        %2191 = vmatpush1.bf16.msra.mxu0 0
        %2192 = vmatprep.subr.bf16.mxu0 0
        %2193 = vmatpush1.bf16.msra.mxu0 0
        %2194 = vmatprep.subr.bf16.mxu0 0
        %2195 = vmatpush1.bf16.msra.mxu0 0
        %2196 = vmatprep.subr.bf16.mxu0 0
        %2197 = vmatpush1.bf16.msra.mxu0 0
        %2198 = vmatprep.subr.bf16.mxu0 0
        %2199 = vmatpush1.bf16.msra.mxu0 0
        %2200 = vmatprep.subr.bf16.mxu0 0
        %2201 = vmatpush1.bf16.msra.mxu0 0
        %2202 = vmatprep.subr.bf16.mxu0 0
        %2203 = vmatpush1.bf16.msra.mxu0 0
        %2204 = vmatprep.subr.bf16.mxu0 0
        %2205 = vmatpush1.bf16.msra.mxu0 0
        %2206 = vmatprep.subr.bf16.mxu0 0
        %2207 = vmatpush1.bf16.msra.mxu0 0
        %2208 = vmatprep.subr.bf16.mxu0 0
        %2209 = vmatpush1.bf16.msra.mxu0 0
        %2210 = vmatprep.subr.bf16.mxu0 0
        %2211 = vmatpush1.bf16.msra.mxu0 0
        %2212 = vmatprep.subr.bf16.mxu0 0
        %2213 = vmatpush1.bf16.msra.mxu0 0
        %2214 = vmatprep.mubr.bf16.mxu0 0
        %2215 = vmatmul.mubr.bf16.gmra.mrb[0].mxu0 %v529
        %v2216 = vpop.f32.mrb[0].mxu0
        %v2217 = vadd.f32 0.0, %v2216
        %v2218 = vpop.f32.mrb[0].mxu0
        %v2219 = vpop.f32.mrb[0].mxu0
        %v2220 = vpop.f32.mrb[0].mxu0
        %2221 = vdwg.mxu0
        %v2222 = vadd.f32 %v2164, %v2217
        %s2223 = scalar_lea.vmem [#allocation5], 464
        %v2224 = vld [vmem:[%s2223] sm:$0xf]
        %v2225 = vld [vmem:[%s2223 + $0x4] sm:$0xf]
        %v2226 = vld [vmem:[%s2223 + $0x8] sm:$0xf]
        %v2227 = vld [vmem:[%s2223 + $0xc] sm:$0xf]
        %v2232 = vunpack.c.l.b16 %v2224
        %v2233 = vunpack.c.l.b16 %v2225
        %v2234 = vunpack.c.l.b16 %v2226
        %v2235 = vunpack.c.l.b16 %v2227
        %v2236 = vpack.c.b16 %v2233, %v2232
        %v2237 = vpack.c.b16 %v2235, %v2234
        %2240 = vmatprep.subr.bf16.mxu0 0
        %2241 = vmatpush1.bf16.msra.mxu0 %v2236
        %2242 = vmatprep.subr.bf16.mxu0 0
        %2243 = vmatpush1.bf16.msra.mxu0 %v2237
        %2244 = vmatprep.subr.bf16.mxu0 0
        %2245 = vmatpush1.bf16.msra.mxu0 0
        %2246 = vmatprep.subr.bf16.mxu0 0
        %2247 = vmatpush1.bf16.msra.mxu0 0
        %2248 = vmatprep.subr.bf16.mxu0 0
        %2249 = vmatpush1.bf16.msra.mxu0 0
        %2250 = vmatprep.subr.bf16.mxu0 0
        %2251 = vmatpush1.bf16.msra.mxu0 0
        %2252 = vmatprep.subr.bf16.mxu0 0
        %2253 = vmatpush1.bf16.msra.mxu0 0
        %2254 = vmatprep.subr.bf16.mxu0 0
        %2255 = vmatpush1.bf16.msra.mxu0 0
        %2256 = vmatprep.subr.bf16.mxu0 0
        %2257 = vmatpush1.bf16.msra.mxu0 0
        %2258 = vmatprep.subr.bf16.mxu0 0
        %2259 = vmatpush1.bf16.msra.mxu0 0
        %2260 = vmatprep.subr.bf16.mxu0 0
        %2261 = vmatpush1.bf16.msra.mxu0 0
        %2262 = vmatprep.subr.bf16.mxu0 0
        %2263 = vmatpush1.bf16.msra.mxu0 0
        %2264 = vmatprep.subr.bf16.mxu0 0
        %2265 = vmatpush1.bf16.msra.mxu0 0
        %2266 = vmatprep.subr.bf16.mxu0 0
        %2267 = vmatpush1.bf16.msra.mxu0 0
        %2268 = vmatprep.subr.bf16.mxu0 0
        %2269 = vmatpush1.bf16.msra.mxu0 0
        %2270 = vmatprep.subr.bf16.mxu0 0
        %2271 = vmatpush1.bf16.msra.mxu0 0
        %2272 = vmatprep.mubr.bf16.mxu0 0
        %2273 = vmatmul.mubr.bf16.gmra.mrb[0].mxu0 %v590
        %v2274 = vpop.f32.mrb[0].mxu0
        %v2275 = vadd.f32 0.0, %v2274
        %v2276 = vpop.f32.mrb[0].mxu0
        %v2277 = vpop.f32.mrb[0].mxu0
        %v2278 = vpop.f32.mrb[0].mxu0
        %2279 = vdwg.mxu0
        %v2280 = vadd.f32 %v2222, %v2275
        %s2281 = scalar_lea.vmem [#allocation5], 480
        %v2282 = vld [vmem:[%s2281] sm:$0xf]
        %v2283 = vld [vmem:[%s2281 + $0x4] sm:$0xf]
        %v2284 = vld [vmem:[%s2281 + $0x8] sm:$0xf]
        %v2285 = vld [vmem:[%s2281 + $0xc] sm:$0xf]
        %v2290 = vunpack.c.l.b16 %v2282
        %v2291 = vunpack.c.l.b16 %v2283
        %v2292 = vunpack.c.l.b16 %v2284
        %v2293 = vunpack.c.l.b16 %v2285
        %v2294 = vpack.c.b16 %v2291, %v2290
        %v2295 = vpack.c.b16 %v2293, %v2292
        %2298 = vmatprep.subr.bf16.mxu0 0
        %2299 = vmatpush1.bf16.msra.mxu0 %v2294
        %2300 = vmatprep.subr.bf16.mxu0 0
        %2301 = vmatpush1.bf16.msra.mxu0 %v2295
        %2302 = vmatprep.subr.bf16.mxu0 0
        %2303 = vmatpush1.bf16.msra.mxu0 0
        %2304 = vmatprep.subr.bf16.mxu0 0
        %2305 = vmatpush1.bf16.msra.mxu0 0
        %2306 = vmatprep.subr.bf16.mxu0 0
        %2307 = vmatpush1.bf16.msra.mxu0 0
        %2308 = vmatprep.subr.bf16.mxu0 0
        %2309 = vmatpush1.bf16.msra.mxu0 0
        %2310 = vmatprep.subr.bf16.mxu0 0
        %2311 = vmatpush1.bf16.msra.mxu0 0
        %2312 = vmatprep.subr.bf16.mxu0 0
        %2313 = vmatpush1.bf16.msra.mxu0 0
        %2314 = vmatprep.subr.bf16.mxu0 0
        %2315 = vmatpush1.bf16.msra.mxu0 0
        %2316 = vmatprep.subr.bf16.mxu0 0
        %2317 = vmatpush1.bf16.msra.mxu0 0
        %2318 = vmatprep.subr.bf16.mxu0 0
        %2319 = vmatpush1.bf16.msra.mxu0 0
        %2320 = vmatprep.subr.bf16.mxu0 0
        %2321 = vmatpush1.bf16.msra.mxu0 0
        %2322 = vmatprep.subr.bf16.mxu0 0
        %2323 = vmatpush1.bf16.msra.mxu0 0
        %2324 = vmatprep.subr.bf16.mxu0 0
        %2325 = vmatpush1.bf16.msra.mxu0 0
        %2326 = vmatprep.subr.bf16.mxu0 0
        %2327 = vmatpush1.bf16.msra.mxu0 0
        %2328 = vmatprep.subr.bf16.mxu0 0
        %2329 = vmatpush1.bf16.msra.mxu0 0
        %2330 = vmatprep.mubr.bf16.mxu0 0
        %2331 = vmatmul.mubr.bf16.gmra.mrb[0].mxu0 %v651
        %v2332 = vpop.f32.mrb[0].mxu0
        %v2333 = vadd.f32 0.0, %v2332
        %v2334 = vpop.f32.mrb[0].mxu0
        %v2335 = vpop.f32.mrb[0].mxu0
        %v2336 = vpop.f32.mrb[0].mxu0
        %2337 = vdwg.mxu0
        %v2338 = vadd.f32 %v2280, %v2333
        %s2339 = scalar_lea.vmem [#allocation5], 496
        %v2340 = vld [vmem:[%s2339] sm:$0xf]
        %v2341 = vld [vmem:[%s2339 + $0x4] sm:$0xf]
        %v2342 = vld [vmem:[%s2339 + $0x8] sm:$0xf]
        %v2343 = vld [vmem:[%s2339 + $0xc] sm:$0xf]
        %v2348 = vunpack.c.l.b16 %v2340
        %v2349 = vunpack.c.l.b16 %v2341
        %v2350 = vunpack.c.l.b16 %v2342
        %v2351 = vunpack.c.l.b16 %v2343
        %v2352 = vpack.c.b16 %v2349, %v2348
        %v2353 = vpack.c.b16 %v2351, %v2350
        %2356 = vmatprep.subr.bf16.mxu0 0
        %2357 = vmatpush1.bf16.msra.mxu0 %v2352
        %2358 = vmatprep.subr.bf16.mxu0 0
        %2359 = vmatpush1.bf16.msra.mxu0 %v2353
        %2360 = vmatprep.subr.bf16.mxu0 0
        %2361 = vmatpush1.bf16.msra.mxu0 0
        %2362 = vmatprep.subr.bf16.mxu0 0
        %2363 = vmatpush1.bf16.msra.mxu0 0
        %2364 = vmatprep.subr.bf16.mxu0 0
        %2365 = vmatpush1.bf16.msra.mxu0 0
        %2366 = vmatprep.subr.bf16.mxu0 0
        %2367 = vmatpush1.bf16.msra.mxu0 0
        %2368 = vmatprep.subr.bf16.mxu0 0
        %2369 = vmatpush1.bf16.msra.mxu0 0
        %2370 = vmatprep.subr.bf16.mxu0 0
        %2371 = vmatpush1.bf16.msra.mxu0 0
        %2372 = vmatprep.subr.bf16.mxu0 0
        %2373 = vmatpush1.bf16.msra.mxu0 0
        %2374 = vmatprep.subr.bf16.mxu0 0
        %2375 = vmatpush1.bf16.msra.mxu0 0
        %2376 = vmatprep.subr.bf16.mxu0 0
        %2377 = vmatpush1.bf16.msra.mxu0 0
        %2378 = vmatprep.subr.bf16.mxu0 0
        %2379 = vmatpush1.bf16.msra.mxu0 0
        %2380 = vmatprep.subr.bf16.mxu0 0
        %2381 = vmatpush1.bf16.msra.mxu0 0
        %2382 = vmatprep.subr.bf16.mxu0 0
        %2383 = vmatpush1.bf16.msra.mxu0 0
        %2384 = vmatprep.subr.bf16.mxu0 0
        %2385 = vmatpush1.bf16.msra.mxu0 0
        %2386 = vmatprep.subr.bf16.mxu0 0
        %2387 = vmatpush1.bf16.msra.mxu0 0
        %2388 = vmatprep.mubr.bf16.mxu0 0
        %2389 = vmatmul.mubr.bf16.gmra.mrb[0].mxu0 %v947
        %v2390 = vpop.f32.mrb[0].mxu0
        %v2391 = vadd.f32 0.0, %v2390
        %v2392 = vpop.f32.mrb[0].mxu0
        %v2393 = vpop.f32.mrb[0].mxu0
        %v2394 = vpop.f32.mrb[0].mxu0
        %2395 = vdwg.mxu0
        %v2396 = vadd.f32 %v2338, %v2391
        %s2397 = scalar_lea.vmem [#allocation5], 512
        %v2398 = vld [vmem:[%s2397] sm:$0xf]
        %v2399 = vld [vmem:[%s2397 + $0x4] sm:$0xf]
        %v2400 = vld [vmem:[%s2397 + $0x8] sm:$0xf]
        %v2401 = vld [vmem:[%s2397 + $0xc] sm:$0xf]
        %v2406 = vunpack.c.l.b16 %v2398
        %v2407 = vunpack.c.l.b16 %v2399
        %v2408 = vunpack.c.l.b16 %v2400
        %v2409 = vunpack.c.l.b16 %v2401
        %v2410 = vpack.c.b16 %v2407, %v2406
        %v2411 = vpack.c.b16 %v2409, %v2408
        %2414 = vmatprep.subr.bf16.mxu0 0
        %2415 = vmatpush1.bf16.msra.mxu0 %v2410
        %2416 = vmatprep.subr.bf16.mxu0 0
        %2417 = vmatpush1.bf16.msra.mxu0 %v2411
        %2418 = vmatprep.subr.bf16.mxu0 0
        %2419 = vmatpush1.bf16.msra.mxu0 0
        %2420 = vmatprep.subr.bf16.mxu0 0
        %2421 = vmatpush1.bf16.msra.mxu0 0
        %2422 = vmatprep.subr.bf16.mxu0 0
        %2423 = vmatpush1.bf16.msra.mxu0 0
        %2424 = vmatprep.subr.bf16.mxu0 0
        %2425 = vmatpush1.bf16.msra.mxu0 0
        %2426 = vmatprep.subr.bf16.mxu0 0
        %2427 = vmatpush1.bf16.msra.mxu0 0
        %2428 = vmatprep.subr.bf16.mxu0 0
        %2429 = vmatpush1.bf16.msra.mxu0 0
        %2430 = vmatprep.subr.bf16.mxu0 0
        %2431 = vmatpush1.bf16.msra.mxu0 0
        %2432 = vmatprep.subr.bf16.mxu0 0
        %2433 = vmatpush1.bf16.msra.mxu0 0
        %2434 = vmatprep.subr.bf16.mxu0 0
        %2435 = vmatpush1.bf16.msra.mxu0 0
        %2436 = vmatprep.subr.bf16.mxu0 0
        %2437 = vmatpush1.bf16.msra.mxu0 0
        %2438 = vmatprep.subr.bf16.mxu0 0
        %2439 = vmatpush1.bf16.msra.mxu0 0
        %2440 = vmatprep.subr.bf16.mxu0 0
        %2441 = vmatpush1.bf16.msra.mxu0 0
        %2442 = vmatprep.subr.bf16.mxu0 0
        %2443 = vmatpush1.bf16.msra.mxu0 0
        %2444 = vmatprep.subr.bf16.mxu0 0
        %2445 = vmatpush1.bf16.msra.mxu0 0
        %2446 = vmatprep.mubr.bf16.mxu0 0
        %2447 = vmatmul.mubr.bf16.gmra.mrb[0].mxu0 %v1359
        %v2448 = vpop.f32.mrb[0].mxu0
        %v2449 = vadd.f32 0.0, %v2448
        %v2450 = vpop.f32.mrb[0].mxu0
        %v2451 = vpop.f32.mrb[0].mxu0
        %v2452 = vpop.f32.mrb[0].mxu0
        %2453 = vdwg.mxu0
        %v2454 = vadd.f32 %v2396, %v2449
        %s2455 = scalar_lea.vmem [#allocation5], 528
        %v2456 = vld [vmem:[%s2455] sm:$0xf]
        %v2457 = vld [vmem:[%s2455 + $0x4] sm:$0xf]
        %v2458 = vld [vmem:[%s2455 + $0x8] sm:$0xf]
        %v2459 = vld [vmem:[%s2455 + $0xc] sm:$0xf]
        %v2464 = vunpack.c.l.b16 %v2456
        %v2465 = vunpack.c.l.b16 %v2457
        %v2466 = vunpack.c.l.b16 %v2458
        %v2467 = vunpack.c.l.b16 %v2459
        %v2468 = vpack.c.b16 %v2465, %v2464
        %v2469 = vpack.c.b16 %v2467, %v2466
        %2472 = vmatprep.subr.bf16.mxu0 0
        %2473 = vmatpush1.bf16.msra.mxu0 %v2468
        %2474 = vmatprep.subr.bf16.mxu0 0
        %2475 = vmatpush1.bf16.msra.mxu0 %v2469
        %2476 = vmatprep.subr.bf16.mxu0 0
        %2477 = vmatpush1.bf16.msra.mxu0 0
        %2478 = vmatprep.subr.bf16.mxu0 0
        %2479 = vmatpush1.bf16.msra.mxu0 0
        %2480 = vmatprep.subr.bf16.mxu0 0
        %2481 = vmatpush1.bf16.msra.mxu0 0
        %2482 = vmatprep.subr.bf16.mxu0 0
        %2483 = vmatpush1.bf16.msra.mxu0 0
        %2484 = vmatprep.subr.bf16.mxu0 0
        %2485 = vmatpush1.bf16.msra.mxu0 0
        %2486 = vmatprep.subr.bf16.mxu0 0
        %2487 = vmatpush1.bf16.msra.mxu0 0
        %2488 = vmatprep.subr.bf16.mxu0 0
        %2489 = vmatpush1.bf16.msra.mxu0 0
        %2490 = vmatprep.subr.bf16.mxu0 0
        %2491 = vmatpush1.bf16.msra.mxu0 0
        %2492 = vmatprep.subr.bf16.mxu0 0
        %2493 = vmatpush1.bf16.msra.mxu0 0
        %2494 = vmatprep.subr.bf16.mxu0 0
        %2495 = vmatpush1.bf16.msra.mxu0 0
        %2496 = vmatprep.subr.bf16.mxu0 0
        %2497 = vmatpush1.bf16.msra.mxu0 0
        %2498 = vmatprep.subr.bf16.mxu0 0
        %2499 = vmatpush1.bf16.msra.mxu0 0
        %2500 = vmatprep.subr.bf16.mxu0 0
        %2501 = vmatpush1.bf16.msra.mxu0 0
        %2502 = vmatprep.subr.bf16.mxu0 0
        %2503 = vmatpush1.bf16.msra.mxu0 0
        %2504 = vmatprep.mubr.bf16.mxu0 0
        %2505 = vmatmul.mubr.bf16.gmra.mrb[0].mxu0 %v1887
        %v2506 = vpop.f32.mrb[0].mxu0
        %v2507 = vadd.f32 0.0, %v2506
        %v2508 = vpop.f32.mrb[0].mxu0
        %v2509 = vpop.f32.mrb[0].mxu0
        %v2510 = vpop.f32.mrb[0].mxu0
        %2511 = vdwg.mxu0
        %v2512 = vadd.f32 %v2454, %v2507
        %s2513 = scalar_lea.vmem [#allocation5], 544
        %v2514 = vld [vmem:[%s2513] sm:$0xf]
        %v2515 = vld [vmem:[%s2513 + $0x4] sm:$0xf]
        %v2516 = vld [vmem:[%s2513 + $0x8] sm:$0xf]
        %v2517 = vld [vmem:[%s2513 + $0xc] sm:$0xf]
        %v2522 = vunpack.c.l.b16 %v2514
        %v2523 = vunpack.c.l.b16 %v2515
        %v2524 = vunpack.c.l.b16 %v2516
        %v2525 = vunpack.c.l.b16 %v2517
        %v2526 = vpack.c.b16 %v2523, %v2522
        %v2527 = vpack.c.b16 %v2525, %v2524
        %v2531 = vsel %vm527, %v466, 0
        %2533 = vmatprep.subr.bf16.mxu0 0
        %2534 = vmatpush1.bf16.msra.mxu0 %v2526
        %2535 = vmatprep.subr.bf16.mxu0 0
        %2536 = vmatpush1.bf16.msra.mxu0 %v2527
        %2537 = vmatprep.subr.bf16.mxu0 0
        %2538 = vmatpush1.bf16.msra.mxu0 0
        %2539 = vmatprep.subr.bf16.mxu0 0
        %2540 = vmatpush1.bf16.msra.mxu0 0
        %2541 = vmatprep.subr.bf16.mxu0 0
        %2542 = vmatpush1.bf16.msra.mxu0 0
        %2543 = vmatprep.subr.bf16.mxu0 0
        %2544 = vmatpush1.bf16.msra.mxu0 0
        %2545 = vmatprep.subr.bf16.mxu0 0
        %2546 = vmatpush1.bf16.msra.mxu0 0
        %2547 = vmatprep.subr.bf16.mxu0 0
        %2548 = vmatpush1.bf16.msra.mxu0 0
        %2549 = vmatprep.subr.bf16.mxu0 0
        %2550 = vmatpush1.bf16.msra.mxu0 0
        %2551 = vmatprep.subr.bf16.mxu0 0
        %2552 = vmatpush1.bf16.msra.mxu0 0
        %2553 = vmatprep.subr.bf16.mxu0 0
        %2554 = vmatpush1.bf16.msra.mxu0 0
        %2555 = vmatprep.subr.bf16.mxu0 0
        %2556 = vmatpush1.bf16.msra.mxu0 0
        %2557 = vmatprep.subr.bf16.mxu0 0
        %2558 = vmatpush1.bf16.msra.mxu0 0
        %2559 = vmatprep.subr.bf16.mxu0 0
        %2560 = vmatpush1.bf16.msra.mxu0 0
        %2561 = vmatprep.subr.bf16.mxu0 0
        %2562 = vmatpush1.bf16.msra.mxu0 0
        %2563 = vmatprep.subr.bf16.mxu0 0
        %2564 = vmatpush1.bf16.msra.mxu0 0
        %2565 = vmatprep.mubr.bf16.mxu0 0
        %2566 = vmatmul.mubr.bf16.gmra.mrb[0].mxu0 %v2531
        %v2567 = vpop.f32.mrb[0].mxu0
        %v2568 = vadd.f32 0.0, %v2567
        %v2569 = vpop.f32.mrb[0].mxu0
        %v2570 = vpop.f32.mrb[0].mxu0
        %v2571 = vpop.f32.mrb[0].mxu0
        %2572 = vdwg.mxu0
        %v2573 = vadd.f32 %v2512, %v2568
        %vm2574 = vcmp.gt.f32.partialorder %v693, 0.0
        %v2575 = vmul.f32 %v693, 0.01
        %v2576 = vsel %vm2574, %v693, %v2575
        %v2577 = vpack.c.bf16 %v2576, %v2576
        %vm2578 = vcmp.gt.f32.partialorder %v989, 0.0
        %v2579 = vmul.f32 %v989, 0.01
        %v2580 = vsel %vm2578, %v989, %v2579
        %v2581 = vpack.c.bf16 %v2580, %v2580
        %vm2582 = vcmp.gt.f32.partialorder %v1401, 0.0
        %v2583 = vmul.f32 %v1401, 0.01
        %v2584 = vsel %vm2582, %v1401, %v2583
        %v2585 = vpack.c.bf16 %v2584, %v2584
        %vm2586 = vcmp.gt.f32.partialorder %v1929, 0.0
        %v2587 = vmul.f32 %v1929, 0.01
        %v2588 = vsel %vm2586, %v1929, %v2587
        %v2589 = vpack.c.bf16 %v2588, %v2588
        %vm2590 = vcmp.gt.f32.partialorder %v2573, 0.0
        %v2591 = vmul.f32 %v2573, 0.01
        %v2592 = vsel %vm2590, %v2573, %v2591
        %v2593 = vpack.c.bf16 %v2592, %v2592
        %v2594 = vld [vmem:[#allocation10] sm:$0x1]
        %v2596 = vlaneseq
        %v2597 = vshrl.u32 %v2596, 7
        %v2598 = vsub.s32 0, %v2597
        %v2599 = vrot.slane %v2594, %v2598
        %v2601 = vadd.f32 %v2599, 0.0
        %v2602 = vld [vmem:[#allocation8] sm:$0xf]
        %v2603 = vld [vmem:[#allocation8 + $0x4] sm:$0xf]
        %v2604 = vld [vmem:[#allocation8 + $0x8] sm:$0xf]
        %v2605 = vld [vmem:[#allocation8 + $0xc] sm:$0xf]
        %s2606 = scalar_lea.vmem [#allocation8], 16
        %v2607 = vld [vmem:[%s2606] sm:$0xf]
        %v2608 = vld [vmem:[%s2606 + $0x4] sm:$0xf]
        %v2609 = vld [vmem:[%s2606 + $0x8] sm:$0xf]
        %v2610 = vld [vmem:[%s2606 + $0xc] sm:$0xf]
        %v2615 = vunpack.c.l.b16 %v2607
        %v2616 = vunpack.c.l.b16 %v2608
        %v2617 = vunpack.c.l.b16 %v2609
        %v2618 = vunpack.c.l.b16 %v2610
        %v2619 = vpack.c.b16 %v2616, %v2615
        %v2620 = vpack.c.b16 %v2618, %v2617
        %v2624 = vsel %vm527, %v2581, 0
        %2626 = vmatprep.subr.bf16.mxu0 0
        %2627 = vmatpush1.bf16.msra.mxu0 %v2619
        %2628 = vmatprep.subr.bf16.mxu0 0
        %2629 = vmatpush1.bf16.msra.mxu0 %v2620
        %2630 = vmatprep.subr.bf16.mxu0 0
        %2631 = vmatpush1.bf16.msra.mxu0 0
        %2632 = vmatprep.subr.bf16.mxu0 0
        %2633 = vmatpush1.bf16.msra.mxu0 0
        %2634 = vmatprep.subr.bf16.mxu0 0
        %2635 = vmatpush1.bf16.msra.mxu0 0
        %2636 = vmatprep.subr.bf16.mxu0 0
        %2637 = vmatpush1.bf16.msra.mxu0 0
        %2638 = vmatprep.subr.bf16.mxu0 0
        %2639 = vmatpush1.bf16.msra.mxu0 0
        %2640 = vmatprep.subr.bf16.mxu0 0
        %2641 = vmatpush1.bf16.msra.mxu0 0
        %2642 = vmatprep.subr.bf16.mxu0 0
        %2643 = vmatpush1.bf16.msra.mxu0 0
        %2644 = vmatprep.subr.bf16.mxu0 0
        %2645 = vmatpush1.bf16.msra.mxu0 0
        %2646 = vmatprep.subr.bf16.mxu0 0
        %2647 = vmatpush1.bf16.msra.mxu0 0
        %2648 = vmatprep.subr.bf16.mxu0 0
        %2649 = vmatpush1.bf16.msra.mxu0 0
        %2650 = vmatprep.subr.bf16.mxu0 0
        %2651 = vmatpush1.bf16.msra.mxu0 0
        %2652 = vmatprep.subr.bf16.mxu0 0
        %2653 = vmatpush1.bf16.msra.mxu0 0
        %2654 = vmatprep.subr.bf16.mxu0 0
        %2655 = vmatpush1.bf16.msra.mxu0 0
        %2656 = vmatprep.subr.bf16.mxu0 0
        %2657 = vmatpush1.bf16.msra.mxu0 0
        %2658 = vmatprep.mubr.bf16.mxu0 0
        %2659 = vmatmul.mubr.bf16.gmra.mrb[0].mxu0 %v2624
        %v2660 = vpop.f32.mrb[0].mxu0
        %v2661 = vadd.f32 0.0, %v2660
        %v2662 = vpop.f32.mrb[0].mxu0
        %v2663 = vpop.f32.mrb[0].mxu0
        %v2664 = vpop.f32.mrb[0].mxu0
        %2665 = vdwg.mxu0
        %v2670 = vunpack.c.l.b16 %v2602
        %v2671 = vunpack.c.l.b16 %v2603
        %v2672 = vunpack.c.l.b16 %v2604
        %v2673 = vunpack.c.l.b16 %v2605
        %v2674 = vpack.c.b16 %v2671, %v2670
        %v2675 = vpack.c.b16 %v2673, %v2672
        %v2679 = vsel %vm527, %v2577, 0
        %2681 = vmatprep.subr.bf16.mxu0 0
        %2682 = vmatpush1.bf16.msra.mxu0 %v2674
        %2683 = vmatprep.subr.bf16.mxu0 0
        %2684 = vmatpush1.bf16.msra.mxu0 %v2675
        %2685 = vmatprep.subr.bf16.mxu0 0
        %2686 = vmatpush1.bf16.msra.mxu0 0
        %2687 = vmatprep.subr.bf16.mxu0 0
        %2688 = vmatpush1.bf16.msra.mxu0 0
        %2689 = vmatprep.subr.bf16.mxu0 0
        %2690 = vmatpush1.bf16.msra.mxu0 0
        %2691 = vmatprep.subr.bf16.mxu0 0
        %2692 = vmatpush1.bf16.msra.mxu0 0
        %2693 = vmatprep.subr.bf16.mxu0 0
        %2694 = vmatpush1.bf16.msra.mxu0 0
        %2695 = vmatprep.subr.bf16.mxu0 0
        %2696 = vmatpush1.bf16.msra.mxu0 0
        %2697 = vmatprep.subr.bf16.mxu0 0
        %2698 = vmatpush1.bf16.msra.mxu0 0
        %2699 = vmatprep.subr.bf16.mxu0 0
        %2700 = vmatpush1.bf16.msra.mxu0 0
        %2701 = vmatprep.subr.bf16.mxu0 0
        %2702 = vmatpush1.bf16.msra.mxu0 0
        %2703 = vmatprep.subr.bf16.mxu0 0
        %2704 = vmatpush1.bf16.msra.mxu0 0
        %2705 = vmatprep.subr.bf16.mxu0 0
        %2706 = vmatpush1.bf16.msra.mxu0 0
        %2707 = vmatprep.subr.bf16.mxu0 0
        %2708 = vmatpush1.bf16.msra.mxu0 0
        %2709 = vmatprep.subr.bf16.mxu0 0
        %2710 = vmatpush1.bf16.msra.mxu0 0
        %2711 = vmatprep.subr.bf16.mxu0 0
        %2712 = vmatpush1.bf16.msra.mxu0 0
        %2713 = vmatprep.mubr.bf16.mxu0 0
        %2714 = vmatmul.mubr.bf16.gmra.mrb[0].mxu0 %v2679
        %v2715 = vpop.f32.mrb[0].mxu0
        %v2716 = vadd.f32 %v2661, %v2715
        %v2717 = vpop.f32.mrb[0].mxu0
        %v2718 = vpop.f32.mrb[0].mxu0
        %v2719 = vpop.f32.mrb[0].mxu0
        %2720 = vdwg.mxu0
        %s2721 = scalar_lea.vmem [#allocation8], 32
        %v2722 = vld [vmem:[%s2721] sm:$0xf]
        %v2723 = vld [vmem:[%s2721 + $0x4] sm:$0xf]
        %v2724 = vld [vmem:[%s2721 + $0x8] sm:$0xf]
        %v2725 = vld [vmem:[%s2721 + $0xc] sm:$0xf]
        %v2730 = vunpack.c.l.b16 %v2722
        %v2731 = vunpack.c.l.b16 %v2723
        %v2732 = vunpack.c.l.b16 %v2724
        %v2733 = vunpack.c.l.b16 %v2725
        %v2734 = vpack.c.b16 %v2731, %v2730
        %v2735 = vpack.c.b16 %v2733, %v2732
        %v2739 = vsel %vm527, %v2585, 0
        %2741 = vmatprep.subr.bf16.mxu0 0
        %2742 = vmatpush1.bf16.msra.mxu0 %v2734
        %2743 = vmatprep.subr.bf16.mxu0 0
        %2744 = vmatpush1.bf16.msra.mxu0 %v2735
        %2745 = vmatprep.subr.bf16.mxu0 0
        %2746 = vmatpush1.bf16.msra.mxu0 0
        %2747 = vmatprep.subr.bf16.mxu0 0
        %2748 = vmatpush1.bf16.msra.mxu0 0
        %2749 = vmatprep.subr.bf16.mxu0 0
        %2750 = vmatpush1.bf16.msra.mxu0 0
        %2751 = vmatprep.subr.bf16.mxu0 0
        %2752 = vmatpush1.bf16.msra.mxu0 0
        %2753 = vmatprep.subr.bf16.mxu0 0
        %2754 = vmatpush1.bf16.msra.mxu0 0
        %2755 = vmatprep.subr.bf16.mxu0 0
        %2756 = vmatpush1.bf16.msra.mxu0 0
        %2757 = vmatprep.subr.bf16.mxu0 0
        %2758 = vmatpush1.bf16.msra.mxu0 0
        %2759 = vmatprep.subr.bf16.mxu0 0
        %2760 = vmatpush1.bf16.msra.mxu0 0
        %2761 = vmatprep.subr.bf16.mxu0 0
        %2762 = vmatpush1.bf16.msra.mxu0 0
        %2763 = vmatprep.subr.bf16.mxu0 0
        %2764 = vmatpush1.bf16.msra.mxu0 0
        %2765 = vmatprep.subr.bf16.mxu0 0
        %2766 = vmatpush1.bf16.msra.mxu0 0
        %2767 = vmatprep.subr.bf16.mxu0 0
        %2768 = vmatpush1.bf16.msra.mxu0 0
        %2769 = vmatprep.subr.bf16.mxu0 0
        %2770 = vmatpush1.bf16.msra.mxu0 0
        %2771 = vmatprep.subr.bf16.mxu0 0
        %2772 = vmatpush1.bf16.msra.mxu0 0
        %2773 = vmatprep.mubr.bf16.mxu0 0
        %2774 = vmatmul.mubr.bf16.gmra.mrb[0].mxu0 %v2739
        %v2775 = vpop.f32.mrb[0].mxu0
        %v2776 = vadd.f32 0.0, %v2775
        %v2777 = vpop.f32.mrb[0].mxu0
        %v2778 = vpop.f32.mrb[0].mxu0
        %v2779 = vpop.f32.mrb[0].mxu0
        %2780 = vdwg.mxu0
        %v2781 = vadd.f32 %v2716, %v2776
        %s2782 = scalar_lea.vmem [#allocation8], 48
        %v2783 = vld [vmem:[%s2782] sm:$0xf]
        %v2784 = vld [vmem:[%s2782 + $0x4] sm:$0xf]
        %v2785 = vld [vmem:[%s2782 + $0x8] sm:$0xf]
        %v2786 = vld [vmem:[%s2782 + $0xc] sm:$0xf]
        %v2791 = vunpack.c.l.b16 %v2783
        %v2792 = vunpack.c.l.b16 %v2784
        %v2793 = vunpack.c.l.b16 %v2785
        %v2794 = vunpack.c.l.b16 %v2786
        %v2795 = vpack.c.b16 %v2792, %v2791
        %v2796 = vpack.c.b16 %v2794, %v2793
        %v2800 = vsel %vm527, %v2589, 0
        %2802 = vmatprep.subr.bf16.mxu0 0
        %2803 = vmatpush1.bf16.msra.mxu0 %v2795
        %2804 = vmatprep.subr.bf16.mxu0 0
        %2805 = vmatpush1.bf16.msra.mxu0 %v2796
        %2806 = vmatprep.subr.bf16.mxu0 0
        %2807 = vmatpush1.bf16.msra.mxu0 0
        %2808 = vmatprep.subr.bf16.mxu0 0
        %2809 = vmatpush1.bf16.msra.mxu0 0
        %2810 = vmatprep.subr.bf16.mxu0 0
        %2811 = vmatpush1.bf16.msra.mxu0 0
        %2812 = vmatprep.subr.bf16.mxu0 0
        %2813 = vmatpush1.bf16.msra.mxu0 0
        %2814 = vmatprep.subr.bf16.mxu0 0
        %2815 = vmatpush1.bf16.msra.mxu0 0
        %2816 = vmatprep.subr.bf16.mxu0 0
        %2817 = vmatpush1.bf16.msra.mxu0 0
        %2818 = vmatprep.subr.bf16.mxu0 0
        %2819 = vmatpush1.bf16.msra.mxu0 0
        %2820 = vmatprep.subr.bf16.mxu0 0
        %2821 = vmatpush1.bf16.msra.mxu0 0
        %2822 = vmatprep.subr.bf16.mxu0 0
        %2823 = vmatpush1.bf16.msra.mxu0 0
        %2824 = vmatprep.subr.bf16.mxu0 0
        %2825 = vmatpush1.bf16.msra.mxu0 0
        %2826 = vmatprep.subr.bf16.mxu0 0
        %2827 = vmatpush1.bf16.msra.mxu0 0
        %2828 = vmatprep.subr.bf16.mxu0 0
        %2829 = vmatpush1.bf16.msra.mxu0 0
        %2830 = vmatprep.subr.bf16.mxu0 0
        %2831 = vmatpush1.bf16.msra.mxu0 0
        %2832 = vmatprep.subr.bf16.mxu0 0
        %2833 = vmatpush1.bf16.msra.mxu0 0
        %2834 = vmatprep.mubr.bf16.mxu0 0
        %2835 = vmatmul.mubr.bf16.gmra.mrb[0].mxu0 %v2800
        %v2836 = vpop.f32.mrb[0].mxu0
        %v2837 = vadd.f32 0.0, %v2836
        %v2838 = vpop.f32.mrb[0].mxu0
        %v2839 = vpop.f32.mrb[0].mxu0
        %v2840 = vpop.f32.mrb[0].mxu0
        %2841 = vdwg.mxu0
        %v2842 = vadd.f32 %v2781, %v2837
        %s2843 = scalar_lea.vmem [#allocation8], 64
        %v2844 = vld [vmem:[%s2843] sm:$0xf]
        %v2845 = vld [vmem:[%s2843 + $0x4] sm:$0xf]
        %v2846 = vld [vmem:[%s2843 + $0x8] sm:$0xf]
        %v2847 = vld [vmem:[%s2843 + $0xc] sm:$0xf]
        %v2852 = vunpack.c.l.b16 %v2844
        %v2853 = vunpack.c.l.b16 %v2845
        %v2854 = vunpack.c.l.b16 %v2846
        %v2855 = vunpack.c.l.b16 %v2847
        %v2856 = vpack.c.b16 %v2853, %v2852
        %v2857 = vpack.c.b16 %v2855, %v2854
        %v2861 = vsel %vm527, %v2593, 0
        %2863 = vmatprep.subr.bf16.mxu0 0
        %2864 = vmatpush1.bf16.msra.mxu0 %v2856
        %2865 = vmatprep.subr.bf16.mxu0 0
        %2866 = vmatpush1.bf16.msra.mxu0 %v2857
        %2867 = vmatprep.subr.bf16.mxu0 0
        %2868 = vmatpush1.bf16.msra.mxu0 0
        %2869 = vmatprep.subr.bf16.mxu0 0
        %2870 = vmatpush1.bf16.msra.mxu0 0
        %2871 = vmatprep.subr.bf16.mxu0 0
        %2872 = vmatpush1.bf16.msra.mxu0 0
        %2873 = vmatprep.subr.bf16.mxu0 0
        %2874 = vmatpush1.bf16.msra.mxu0 0
        %2875 = vmatprep.subr.bf16.mxu0 0
        %2876 = vmatpush1.bf16.msra.mxu0 0
        %2877 = vmatprep.subr.bf16.mxu0 0
        %2878 = vmatpush1.bf16.msra.mxu0 0
        %2879 = vmatprep.subr.bf16.mxu0 0
        %2880 = vmatpush1.bf16.msra.mxu0 0
        %2881 = vmatprep.subr.bf16.mxu0 0
        %2882 = vmatpush1.bf16.msra.mxu0 0
        %2883 = vmatprep.subr.bf16.mxu0 0
        %2884 = vmatpush1.bf16.msra.mxu0 0
        %2885 = vmatprep.subr.bf16.mxu0 0
        %2886 = vmatpush1.bf16.msra.mxu0 0
        %2887 = vmatprep.subr.bf16.mxu0 0
        %2888 = vmatpush1.bf16.msra.mxu0 0
        %2889 = vmatprep.subr.bf16.mxu0 0
        %2890 = vmatpush1.bf16.msra.mxu0 0
        %2891 = vmatprep.subr.bf16.mxu0 0
        %2892 = vmatpush1.bf16.msra.mxu0 0
        %2893 = vmatprep.subr.bf16.mxu0 0
        %2894 = vmatpush1.bf16.msra.mxu0 0
        %2895 = vmatprep.mubr.bf16.mxu0 0
        %2896 = vmatmul.mubr.bf16.gmra.mrb[0].mxu0 %v2861
        %v2897 = vpop.f32.mrb[0].mxu0
        %v2898 = vadd.f32 0.0, %v2897
        %v2899 = vpop.f32.mrb[0].mxu0
        %v2900 = vpop.f32.mrb[0].mxu0
        %v2901 = vpop.f32.mrb[0].mxu0
        %2902 = vdwg.mxu0
        %v2903 = vadd.f32 %v2842, %v2898
        %v2904 = vrot.slane %v2903, 7
        %v2905 = vsel %vm421, %v2904, 0.0
        %v2906 = vadd.f32 %v2601, %v2905
        %s2907 = scalar_lea.vmem [#allocation8], 80
        %v2908 = vld [vmem:[%s2907] sm:$0xf]
        %v2909 = vld [vmem:[%s2907 + $0x4] sm:$0xf]
        %v2910 = vld [vmem:[%s2907 + $0x8] sm:$0xf]
        %v2911 = vld [vmem:[%s2907 + $0xc] sm:$0xf]
        %s2912 = scalar_lea.vmem [#allocation8], 96
        %v2913 = vld [vmem:[%s2912] sm:$0xf]
        %v2914 = vld [vmem:[%s2912 + $0x4] sm:$0xf]
        %v2915 = vld [vmem:[%s2912 + $0x8] sm:$0xf]
        %v2916 = vld [vmem:[%s2912 + $0xc] sm:$0xf]
        %v2921 = vunpack.c.l.b16 %v2913
        %v2922 = vunpack.c.l.b16 %v2914
        %v2923 = vunpack.c.l.b16 %v2915
        %v2924 = vunpack.c.l.b16 %v2916
        %v2925 = vpack.c.b16 %v2922, %v2921
        %v2926 = vpack.c.b16 %v2924, %v2923
        %2929 = vmatprep.subr.bf16.mxu0 0
        %2930 = vmatpush1.bf16.msra.mxu0 %v2925
        %2931 = vmatprep.subr.bf16.mxu0 0
        %2932 = vmatpush1.bf16.msra.mxu0 %v2926
        %2933 = vmatprep.subr.bf16.mxu0 0
        %2934 = vmatpush1.bf16.msra.mxu0 0
        %2935 = vmatprep.subr.bf16.mxu0 0
        %2936 = vmatpush1.bf16.msra.mxu0 0
        %2937 = vmatprep.subr.bf16.mxu0 0
        %2938 = vmatpush1.bf16.msra.mxu0 0
        %2939 = vmatprep.subr.bf16.mxu0 0
        %2940 = vmatpush1.bf16.msra.mxu0 0
        %2941 = vmatprep.subr.bf16.mxu0 0
        %2942 = vmatpush1.bf16.msra.mxu0 0
        %2943 = vmatprep.subr.bf16.mxu0 0
        %2944 = vmatpush1.bf16.msra.mxu0 0
        %2945 = vmatprep.subr.bf16.mxu0 0
        %2946 = vmatpush1.bf16.msra.mxu0 0
        %2947 = vmatprep.subr.bf16.mxu0 0
        %2948 = vmatpush1.bf16.msra.mxu0 0
        %2949 = vmatprep.subr.bf16.mxu0 0
        %2950 = vmatpush1.bf16.msra.mxu0 0
        %2951 = vmatprep.subr.bf16.mxu0 0
        %2952 = vmatpush1.bf16.msra.mxu0 0
        %2953 = vmatprep.subr.bf16.mxu0 0
        %2954 = vmatpush1.bf16.msra.mxu0 0
        %2955 = vmatprep.subr.bf16.mxu0 0
        %2956 = vmatpush1.bf16.msra.mxu0 0
        %2957 = vmatprep.subr.bf16.mxu0 0
        %2958 = vmatpush1.bf16.msra.mxu0 0
        %2959 = vmatprep.subr.bf16.mxu0 0
        %2960 = vmatpush1.bf16.msra.mxu0 0
        %2961 = vmatprep.mubr.bf16.mxu0 0
        %2962 = vmatmul.mubr.bf16.gmra.mrb[0].mxu0 %v2624
        %v2963 = vpop.f32.mrb[0].mxu0
        %v2964 = vadd.f32 0.0, %v2963
        %v2965 = vpop.f32.mrb[0].mxu0
        %v2966 = vpop.f32.mrb[0].mxu0
        %v2967 = vpop.f32.mrb[0].mxu0
        %2968 = vdwg.mxu0
        %v2973 = vunpack.c.l.b16 %v2908
        %v2974 = vunpack.c.l.b16 %v2909
        %v2975 = vunpack.c.l.b16 %v2910
        %v2976 = vunpack.c.l.b16 %v2911
        %v2977 = vpack.c.b16 %v2974, %v2973
        %v2978 = vpack.c.b16 %v2976, %v2975
        %2981 = vmatprep.subr.bf16.mxu0 0
        %2982 = vmatpush1.bf16.msra.mxu0 %v2977
        %2983 = vmatprep.subr.bf16.mxu0 0
        %2984 = vmatpush1.bf16.msra.mxu0 %v2978
        %2985 = vmatprep.subr.bf16.mxu0 0
        %2986 = vmatpush1.bf16.msra.mxu0 0
        %2987 = vmatprep.subr.bf16.mxu0 0
        %2988 = vmatpush1.bf16.msra.mxu0 0
        %2989 = vmatprep.subr.bf16.mxu0 0
        %2990 = vmatpush1.bf16.msra.mxu0 0
        %2991 = vmatprep.subr.bf16.mxu0 0
        %2992 = vmatpush1.bf16.msra.mxu0 0
        %2993 = vmatprep.subr.bf16.mxu0 0
        %2994 = vmatpush1.bf16.msra.mxu0 0
        %2995 = vmatprep.subr.bf16.mxu0 0
        %2996 = vmatpush1.bf16.msra.mxu0 0
        %2997 = vmatprep.subr.bf16.mxu0 0
        %2998 = vmatpush1.bf16.msra.mxu0 0
        %2999 = vmatprep.subr.bf16.mxu0 0
        %3000 = vmatpush1.bf16.msra.mxu0 0
        %3001 = vmatprep.subr.bf16.mxu0 0
        %3002 = vmatpush1.bf16.msra.mxu0 0
        %3003 = vmatprep.subr.bf16.mxu0 0
        %3004 = vmatpush1.bf16.msra.mxu0 0
        %3005 = vmatprep.subr.bf16.mxu0 0
        %3006 = vmatpush1.bf16.msra.mxu0 0
        %3007 = vmatprep.subr.bf16.mxu0 0
        %3008 = vmatpush1.bf16.msra.mxu0 0
        %3009 = vmatprep.subr.bf16.mxu0 0
        %3010 = vmatpush1.bf16.msra.mxu0 0
        %3011 = vmatprep.subr.bf16.mxu0 0
        %3012 = vmatpush1.bf16.msra.mxu0 0
        %3013 = vmatprep.mubr.bf16.mxu0 0
        %3014 = vmatmul.mubr.bf16.gmra.mrb[0].mxu0 %v2679
        %v3015 = vpop.f32.mrb[0].mxu0
        %v3016 = vadd.f32 %v2964, %v3015
        %v3017 = vpop.f32.mrb[0].mxu0
        %v3018 = vpop.f32.mrb[0].mxu0
        %v3019 = vpop.f32.mrb[0].mxu0
        %3020 = vdwg.mxu0
        %s3021 = scalar_lea.vmem [#allocation8], 112
        %v3022 = vld [vmem:[%s3021] sm:$0xf]
        %v3023 = vld [vmem:[%s3021 + $0x4] sm:$0xf]
        %v3024 = vld [vmem:[%s3021 + $0x8] sm:$0xf]
        %v3025 = vld [vmem:[%s3021 + $0xc] sm:$0xf]
        %v3030 = vunpack.c.l.b16 %v3022
        %v3031 = vunpack.c.l.b16 %v3023
        %v3032 = vunpack.c.l.b16 %v3024
        %v3033 = vunpack.c.l.b16 %v3025
        %v3034 = vpack.c.b16 %v3031, %v3030
        %v3035 = vpack.c.b16 %v3033, %v3032
        %3038 = vmatprep.subr.bf16.mxu0 0
        %3039 = vmatpush1.bf16.msra.mxu0 %v3034
        %3040 = vmatprep.subr.bf16.mxu0 0
        %3041 = vmatpush1.bf16.msra.mxu0 %v3035
        %3042 = vmatprep.subr.bf16.mxu0 0
        %3043 = vmatpush1.bf16.msra.mxu0 0
        %3044 = vmatprep.subr.bf16.mxu0 0
        %3045 = vmatpush1.bf16.msra.mxu0 0
        %3046 = vmatprep.subr.bf16.mxu0 0
        %3047 = vmatpush1.bf16.msra.mxu0 0
        %3048 = vmatprep.subr.bf16.mxu0 0
        %3049 = vmatpush1.bf16.msra.mxu0 0
        %3050 = vmatprep.subr.bf16.mxu0 0
        %3051 = vmatpush1.bf16.msra.mxu0 0
        %3052 = vmatprep.subr.bf16.mxu0 0
        %3053 = vmatpush1.bf16.msra.mxu0 0
        %3054 = vmatprep.subr.bf16.mxu0 0
        %3055 = vmatpush1.bf16.msra.mxu0 0
        %3056 = vmatprep.subr.bf16.mxu0 0
        %3057 = vmatpush1.bf16.msra.mxu0 0
        %3058 = vmatprep.subr.bf16.mxu0 0
        %3059 = vmatpush1.bf16.msra.mxu0 0
        %3060 = vmatprep.subr.bf16.mxu0 0
        %3061 = vmatpush1.bf16.msra.mxu0 0
        %3062 = vmatprep.subr.bf16.mxu0 0
        %3063 = vmatpush1.bf16.msra.mxu0 0
        %3064 = vmatprep.subr.bf16.mxu0 0
        %3065 = vmatpush1.bf16.msra.mxu0 0
        %3066 = vmatprep.subr.bf16.mxu0 0
        %3067 = vmatpush1.bf16.msra.mxu0 0
        %3068 = vmatprep.subr.bf16.mxu0 0
        %3069 = vmatpush1.bf16.msra.mxu0 0
        %3070 = vmatprep.mubr.bf16.mxu0 0
        %3071 = vmatmul.mubr.bf16.gmra.mrb[0].mxu0 %v2739
        %v3072 = vpop.f32.mrb[0].mxu0
        %v3073 = vadd.f32 0.0, %v3072
        %v3074 = vpop.f32.mrb[0].mxu0
        %v3075 = vpop.f32.mrb[0].mxu0
        %v3076 = vpop.f32.mrb[0].mxu0
        %3077 = vdwg.mxu0
        %v3078 = vadd.f32 %v3016, %v3073
        %s3079 = scalar_lea.vmem [#allocation8], 128
        %v3080 = vld [vmem:[%s3079] sm:$0xf]
        %v3081 = vld [vmem:[%s3079 + $0x4] sm:$0xf]
        %v3082 = vld [vmem:[%s3079 + $0x8] sm:$0xf]
        %v3083 = vld [vmem:[%s3079 + $0xc] sm:$0xf]
        %v3088 = vunpack.c.l.b16 %v3080
        %v3089 = vunpack.c.l.b16 %v3081
        %v3090 = vunpack.c.l.b16 %v3082
        %v3091 = vunpack.c.l.b16 %v3083
        %v3092 = vpack.c.b16 %v3089, %v3088
        %v3093 = vpack.c.b16 %v3091, %v3090
        %3096 = vmatprep.subr.bf16.mxu0 0
        %3097 = vmatpush1.bf16.msra.mxu0 %v3092
        %3098 = vmatprep.subr.bf16.mxu0 0
        %3099 = vmatpush1.bf16.msra.mxu0 %v3093
        %3100 = vmatprep.subr.bf16.mxu0 0
        %3101 = vmatpush1.bf16.msra.mxu0 0
        %3102 = vmatprep.subr.bf16.mxu0 0
        %3103 = vmatpush1.bf16.msra.mxu0 0
        %3104 = vmatprep.subr.bf16.mxu0 0
        %3105 = vmatpush1.bf16.msra.mxu0 0
        %3106 = vmatprep.subr.bf16.mxu0 0
        %3107 = vmatpush1.bf16.msra.mxu0 0
        %3108 = vmatprep.subr.bf16.mxu0 0
        %3109 = vmatpush1.bf16.msra.mxu0 0
        %3110 = vmatprep.subr.bf16.mxu0 0
        %3111 = vmatpush1.bf16.msra.mxu0 0
        %3112 = vmatprep.subr.bf16.mxu0 0
        %3113 = vmatpush1.bf16.msra.mxu0 0
        %3114 = vmatprep.subr.bf16.mxu0 0
        %3115 = vmatpush1.bf16.msra.mxu0 0
        %3116 = vmatprep.subr.bf16.mxu0 0
        %3117 = vmatpush1.bf16.msra.mxu0 0
        %3118 = vmatprep.subr.bf16.mxu0 0
        %3119 = vmatpush1.bf16.msra.mxu0 0
        %3120 = vmatprep.subr.bf16.mxu0 0
        %3121 = vmatpush1.bf16.msra.mxu0 0
        %3122 = vmatprep.subr.bf16.mxu0 0
        %3123 = vmatpush1.bf16.msra.mxu0 0
        %3124 = vmatprep.subr.bf16.mxu0 0
        %3125 = vmatpush1.bf16.msra.mxu0 0
        %3126 = vmatprep.subr.bf16.mxu0 0
        %3127 = vmatpush1.bf16.msra.mxu0 0
        %3128 = vmatprep.mubr.bf16.mxu0 0
        %3129 = vmatmul.mubr.bf16.gmra.mrb[0].mxu0 %v2800
        %v3130 = vpop.f32.mrb[0].mxu0
        %v3131 = vadd.f32 0.0, %v3130
        %v3132 = vpop.f32.mrb[0].mxu0
        %v3133 = vpop.f32.mrb[0].mxu0
        %v3134 = vpop.f32.mrb[0].mxu0
        %3135 = vdwg.mxu0
        %v3136 = vadd.f32 %v3078, %v3131
        %s3137 = scalar_lea.vmem [#allocation8], 144
        %v3138 = vld [vmem:[%s3137] sm:$0xf]
        %v3139 = vld [vmem:[%s3137 + $0x4] sm:$0xf]
        %v3140 = vld [vmem:[%s3137 + $0x8] sm:$0xf]
        %v3141 = vld [vmem:[%s3137 + $0xc] sm:$0xf]
        %v3146 = vunpack.c.l.b16 %v3138
        %v3147 = vunpack.c.l.b16 %v3139
        %v3148 = vunpack.c.l.b16 %v3140
        %v3149 = vunpack.c.l.b16 %v3141
        %v3150 = vpack.c.b16 %v3147, %v3146
        %v3151 = vpack.c.b16 %v3149, %v3148
        %3154 = vmatprep.subr.bf16.mxu0 0
        %3155 = vmatpush1.bf16.msra.mxu0 %v3150
        %3156 = vmatprep.subr.bf16.mxu0 0
        %3157 = vmatpush1.bf16.msra.mxu0 %v3151
        %3158 = vmatprep.subr.bf16.mxu0 0
        %3159 = vmatpush1.bf16.msra.mxu0 0
        %3160 = vmatprep.subr.bf16.mxu0 0
        %3161 = vmatpush1.bf16.msra.mxu0 0
        %3162 = vmatprep.subr.bf16.mxu0 0
        %3163 = vmatpush1.bf16.msra.mxu0 0
        %3164 = vmatprep.subr.bf16.mxu0 0
        %3165 = vmatpush1.bf16.msra.mxu0 0
        %3166 = vmatprep.subr.bf16.mxu0 0
        %3167 = vmatpush1.bf16.msra.mxu0 0
        %3168 = vmatprep.subr.bf16.mxu0 0
        %3169 = vmatpush1.bf16.msra.mxu0 0
        %3170 = vmatprep.subr.bf16.mxu0 0
        %3171 = vmatpush1.bf16.msra.mxu0 0
        %3172 = vmatprep.subr.bf16.mxu0 0
        %3173 = vmatpush1.bf16.msra.mxu0 0
        %3174 = vmatprep.subr.bf16.mxu0 0
        %3175 = vmatpush1.bf16.msra.mxu0 0
        %3176 = vmatprep.subr.bf16.mxu0 0
        %3177 = vmatpush1.bf16.msra.mxu0 0
        %3178 = vmatprep.subr.bf16.mxu0 0
        %3179 = vmatpush1.bf16.msra.mxu0 0
        %3180 = vmatprep.subr.bf16.mxu0 0
        %3181 = vmatpush1.bf16.msra.mxu0 0
        %3182 = vmatprep.subr.bf16.mxu0 0
        %3183 = vmatpush1.bf16.msra.mxu0 0
        %3184 = vmatprep.subr.bf16.mxu0 0
        %3185 = vmatpush1.bf16.msra.mxu0 0
        %3186 = vmatprep.mubr.bf16.mxu0 0
        %3187 = vmatmul.mubr.bf16.gmra.mrb[0].mxu0 %v2861
        %v3188 = vpop.f32.mrb[0].mxu0
        %v3189 = vadd.f32 0.0, %v3188
        %v3190 = vpop.f32.mrb[0].mxu0
        %v3191 = vpop.f32.mrb[0].mxu0
        %v3192 = vpop.f32.mrb[0].mxu0
        %3193 = vdwg.mxu0
        %v3194 = vadd.f32 %v3136, %v3189
        %v3195 = vadd.f32 %v2906, %v3194
        %s3196 = scalar_lea.vmem [#allocation8], 160
        %v3197 = vld [vmem:[%s3196] sm:$0xf]
        %v3198 = vld [vmem:[%s3196 + $0x4] sm:$0xf]
        %v3199 = vld [vmem:[%s3196 + $0x8] sm:$0xf]
        %v3200 = vld [vmem:[%s3196 + $0xc] sm:$0xf]
        %s3201 = scalar_lea.vmem [#allocation8], 176
        %v3202 = vld [vmem:[%s3201] sm:$0xf]
        %v3203 = vld [vmem:[%s3201 + $0x4] sm:$0xf]
        %v3204 = vld [vmem:[%s3201 + $0x8] sm:$0xf]
        %v3205 = vld [vmem:[%s3201 + $0xc] sm:$0xf]
        %v3210 = vunpack.c.l.b16 %v3202
        %v3211 = vunpack.c.l.b16 %v3203
        %v3212 = vunpack.c.l.b16 %v3204
        %v3213 = vunpack.c.l.b16 %v3205
        %v3214 = vpack.c.b16 %v3211, %v3210
        %v3215 = vpack.c.b16 %v3213, %v3212
        %3218 = vmatprep.subr.bf16.mxu0 0
        %3219 = vmatpush1.bf16.msra.mxu0 %v3214
        %3220 = vmatprep.subr.bf16.mxu0 0
        %3221 = vmatpush1.bf16.msra.mxu0 %v3215
        %3222 = vmatprep.subr.bf16.mxu0 0
        %3223 = vmatpush1.bf16.msra.mxu0 0
        %3224 = vmatprep.subr.bf16.mxu0 0
        %3225 = vmatpush1.bf16.msra.mxu0 0
        %3226 = vmatprep.subr.bf16.mxu0 0
        %3227 = vmatpush1.bf16.msra.mxu0 0
        %3228 = vmatprep.subr.bf16.mxu0 0
        %3229 = vmatpush1.bf16.msra.mxu0 0
        %3230 = vmatprep.subr.bf16.mxu0 0
        %3231 = vmatpush1.bf16.msra.mxu0 0
        %3232 = vmatprep.subr.bf16.mxu0 0
        %3233 = vmatpush1.bf16.msra.mxu0 0
        %3234 = vmatprep.subr.bf16.mxu0 0
        %3235 = vmatpush1.bf16.msra.mxu0 0
        %3236 = vmatprep.subr.bf16.mxu0 0
        %3237 = vmatpush1.bf16.msra.mxu0 0
        %3238 = vmatprep.subr.bf16.mxu0 0
        %3239 = vmatpush1.bf16.msra.mxu0 0
        %3240 = vmatprep.subr.bf16.mxu0 0
        %3241 = vmatpush1.bf16.msra.mxu0 0
        %3242 = vmatprep.subr.bf16.mxu0 0
        %3243 = vmatpush1.bf16.msra.mxu0 0
        %3244 = vmatprep.subr.bf16.mxu0 0
        %3245 = vmatpush1.bf16.msra.mxu0 0
        %3246 = vmatprep.subr.bf16.mxu0 0
        %3247 = vmatpush1.bf16.msra.mxu0 0
        %3248 = vmatprep.subr.bf16.mxu0 0
        %3249 = vmatpush1.bf16.msra.mxu0 0
        %3250 = vmatprep.mubr.bf16.mxu0 0
        %3251 = vmatmul.mubr.bf16.gmra.mrb[0].mxu0 %v2624
        %v3252 = vpop.f32.mrb[0].mxu0
        %v3253 = vadd.f32 0.0, %v3252
        %v3254 = vpop.f32.mrb[0].mxu0
        %v3255 = vpop.f32.mrb[0].mxu0
        %v3256 = vpop.f32.mrb[0].mxu0
        %3257 = vdwg.mxu0
        %v3262 = vunpack.c.l.b16 %v3197
        %v3263 = vunpack.c.l.b16 %v3198
        %v3264 = vunpack.c.l.b16 %v3199
        %v3265 = vunpack.c.l.b16 %v3200
        %v3266 = vpack.c.b16 %v3263, %v3262
        %v3267 = vpack.c.b16 %v3265, %v3264
        %3270 = vmatprep.subr.bf16.mxu0 0
        %3271 = vmatpush1.bf16.msra.mxu0 %v3266
        %3272 = vmatprep.subr.bf16.mxu0 0
        %3273 = vmatpush1.bf16.msra.mxu0 %v3267
        %3274 = vmatprep.subr.bf16.mxu0 0
        %3275 = vmatpush1.bf16.msra.mxu0 0
        %3276 = vmatprep.subr.bf16.mxu0 0
        %3277 = vmatpush1.bf16.msra.mxu0 0
        %3278 = vmatprep.subr.bf16.mxu0 0
        %3279 = vmatpush1.bf16.msra.mxu0 0
        %3280 = vmatprep.subr.bf16.mxu0 0
        %3281 = vmatpush1.bf16.msra.mxu0 0
        %3282 = vmatprep.subr.bf16.mxu0 0
        %3283 = vmatpush1.bf16.msra.mxu0 0
        %3284 = vmatprep.subr.bf16.mxu0 0
        %3285 = vmatpush1.bf16.msra.mxu0 0
        %3286 = vmatprep.subr.bf16.mxu0 0
        %3287 = vmatpush1.bf16.msra.mxu0 0
        %3288 = vmatprep.subr.bf16.mxu0 0
        %3289 = vmatpush1.bf16.msra.mxu0 0
        %3290 = vmatprep.subr.bf16.mxu0 0
        %3291 = vmatpush1.bf16.msra.mxu0 0
        %3292 = vmatprep.subr.bf16.mxu0 0
        %3293 = vmatpush1.bf16.msra.mxu0 0
        %3294 = vmatprep.subr.bf16.mxu0 0
        %3295 = vmatpush1.bf16.msra.mxu0 0
        %3296 = vmatprep.subr.bf16.mxu0 0
        %3297 = vmatpush1.bf16.msra.mxu0 0
        %3298 = vmatprep.subr.bf16.mxu0 0
        %3299 = vmatpush1.bf16.msra.mxu0 0
        %3300 = vmatprep.subr.bf16.mxu0 0
        %3301 = vmatpush1.bf16.msra.mxu0 0
        %3302 = vmatprep.mubr.bf16.mxu0 0
        %3303 = vmatmul.mubr.bf16.gmra.mrb[0].mxu0 %v2679
        %v3304 = vpop.f32.mrb[0].mxu0
        %v3305 = vadd.f32 %v3253, %v3304
        %v3306 = vpop.f32.mrb[0].mxu0
        %v3307 = vpop.f32.mrb[0].mxu0
        %v3308 = vpop.f32.mrb[0].mxu0
        %3309 = vdwg.mxu0
        %s3310 = scalar_lea.vmem [#allocation8], 192
        %v3311 = vld [vmem:[%s3310] sm:$0xf]
        %v3312 = vld [vmem:[%s3310 + $0x4] sm:$0xf]
        %v3313 = vld [vmem:[%s3310 + $0x8] sm:$0xf]
        %v3314 = vld [vmem:[%s3310 + $0xc] sm:$0xf]
        %v3319 = vunpack.c.l.b16 %v3311
        %v3320 = vunpack.c.l.b16 %v3312
        %v3321 = vunpack.c.l.b16 %v3313
        %v3322 = vunpack.c.l.b16 %v3314
        %v3323 = vpack.c.b16 %v3320, %v3319
        %v3324 = vpack.c.b16 %v3322, %v3321
        %3327 = vmatprep.subr.bf16.mxu0 0
        %3328 = vmatpush1.bf16.msra.mxu0 %v3323
        %3329 = vmatprep.subr.bf16.mxu0 0
        %3330 = vmatpush1.bf16.msra.mxu0 %v3324
        %3331 = vmatprep.subr.bf16.mxu0 0
        %3332 = vmatpush1.bf16.msra.mxu0 0
        %3333 = vmatprep.subr.bf16.mxu0 0
        %3334 = vmatpush1.bf16.msra.mxu0 0
        %3335 = vmatprep.subr.bf16.mxu0 0
        %3336 = vmatpush1.bf16.msra.mxu0 0
        %3337 = vmatprep.subr.bf16.mxu0 0
        %3338 = vmatpush1.bf16.msra.mxu0 0
        %3339 = vmatprep.subr.bf16.mxu0 0
        %3340 = vmatpush1.bf16.msra.mxu0 0
        %3341 = vmatprep.subr.bf16.mxu0 0
        %3342 = vmatpush1.bf16.msra.mxu0 0
        %3343 = vmatprep.subr.bf16.mxu0 0
        %3344 = vmatpush1.bf16.msra.mxu0 0
        %3345 = vmatprep.subr.bf16.mxu0 0
        %3346 = vmatpush1.bf16.msra.mxu0 0
        %3347 = vmatprep.subr.bf16.mxu0 0
        %3348 = vmatpush1.bf16.msra.mxu0 0
        %3349 = vmatprep.subr.bf16.mxu0 0
        %3350 = vmatpush1.bf16.msra.mxu0 0
        %3351 = vmatprep.subr.bf16.mxu0 0
        %3352 = vmatpush1.bf16.msra.mxu0 0
        %3353 = vmatprep.subr.bf16.mxu0 0
        %3354 = vmatpush1.bf16.msra.mxu0 0
        %3355 = vmatprep.subr.bf16.mxu0 0
        %3356 = vmatpush1.bf16.msra.mxu0 0
        %3357 = vmatprep.subr.bf16.mxu0 0
        %3358 = vmatpush1.bf16.msra.mxu0 0
        %3359 = vmatprep.mubr.bf16.mxu0 0
        %3360 = vmatmul.mubr.bf16.gmra.mrb[0].mxu0 %v2739
        %v3361 = vpop.f32.mrb[0].mxu0
        %v3362 = vadd.f32 0.0, %v3361
        %v3363 = vpop.f32.mrb[0].mxu0
        %v3364 = vpop.f32.mrb[0].mxu0
        %v3365 = vpop.f32.mrb[0].mxu0
        %3366 = vdwg.mxu0
        %v3367 = vadd.f32 %v3305, %v3362
        %s3368 = scalar_lea.vmem [#allocation8], 208
        %v3369 = vld [vmem:[%s3368] sm:$0xf]
        %v3370 = vld [vmem:[%s3368 + $0x4] sm:$0xf]
        %v3371 = vld [vmem:[%s3368 + $0x8] sm:$0xf]
        %v3372 = vld [vmem:[%s3368 + $0xc] sm:$0xf]
        %v3377 = vunpack.c.l.b16 %v3369
        %v3378 = vunpack.c.l.b16 %v3370
        %v3379 = vunpack.c.l.b16 %v3371
        %v3380 = vunpack.c.l.b16 %v3372
        %v3381 = vpack.c.b16 %v3378, %v3377
        %v3382 = vpack.c.b16 %v3380, %v3379
        %3385 = vmatprep.subr.bf16.mxu0 0
        %3386 = vmatpush1.bf16.msra.mxu0 %v3381
        %3387 = vmatprep.subr.bf16.mxu0 0
        %3388 = vmatpush1.bf16.msra.mxu0 %v3382
        %3389 = vmatprep.subr.bf16.mxu0 0
        %3390 = vmatpush1.bf16.msra.mxu0 0
        %3391 = vmatprep.subr.bf16.mxu0 0
        %3392 = vmatpush1.bf16.msra.mxu0 0
        %3393 = vmatprep.subr.bf16.mxu0 0
        %3394 = vmatpush1.bf16.msra.mxu0 0
        %3395 = vmatprep.subr.bf16.mxu0 0
        %3396 = vmatpush1.bf16.msra.mxu0 0
        %3397 = vmatprep.subr.bf16.mxu0 0
        %3398 = vmatpush1.bf16.msra.mxu0 0
        %3399 = vmatprep.subr.bf16.mxu0 0
        %3400 = vmatpush1.bf16.msra.mxu0 0
        %3401 = vmatprep.subr.bf16.mxu0 0
        %3402 = vmatpush1.bf16.msra.mxu0 0
        %3403 = vmatprep.subr.bf16.mxu0 0
        %3404 = vmatpush1.bf16.msra.mxu0 0
        %3405 = vmatprep.subr.bf16.mxu0 0
        %3406 = vmatpush1.bf16.msra.mxu0 0
        %3407 = vmatprep.subr.bf16.mxu0 0
        %3408 = vmatpush1.bf16.msra.mxu0 0
        %3409 = vmatprep.subr.bf16.mxu0 0
        %3410 = vmatpush1.bf16.msra.mxu0 0
        %3411 = vmatprep.subr.bf16.mxu0 0
        %3412 = vmatpush1.bf16.msra.mxu0 0
        %3413 = vmatprep.subr.bf16.mxu0 0
        %3414 = vmatpush1.bf16.msra.mxu0 0
        %3415 = vmatprep.subr.bf16.mxu0 0
        %3416 = vmatpush1.bf16.msra.mxu0 0
        %3417 = vmatprep.mubr.bf16.mxu0 0
        %3418 = vmatmul.mubr.bf16.gmra.mrb[0].mxu0 %v2800
        %v3419 = vpop.f32.mrb[0].mxu0
        %v3420 = vadd.f32 0.0, %v3419
        %v3421 = vpop.f32.mrb[0].mxu0
        %v3422 = vpop.f32.mrb[0].mxu0
        %v3423 = vpop.f32.mrb[0].mxu0
        %3424 = vdwg.mxu0
        %v3425 = vadd.f32 %v3367, %v3420
        %s3426 = scalar_lea.vmem [#allocation8], 224
        %v3427 = vld [vmem:[%s3426] sm:$0xf]
        %v3428 = vld [vmem:[%s3426 + $0x4] sm:$0xf]
        %v3429 = vld [vmem:[%s3426 + $0x8] sm:$0xf]
        %v3430 = vld [vmem:[%s3426 + $0xc] sm:$0xf]
        %v3435 = vunpack.c.l.b16 %v3427
        %v3436 = vunpack.c.l.b16 %v3428
        %v3437 = vunpack.c.l.b16 %v3429
        %v3438 = vunpack.c.l.b16 %v3430
        %v3439 = vpack.c.b16 %v3436, %v3435
        %v3440 = vpack.c.b16 %v3438, %v3437
        %3443 = vmatprep.subr.bf16.mxu0 0
        %3444 = vmatpush1.bf16.msra.mxu0 %v3439
        %3445 = vmatprep.subr.bf16.mxu0 0
        %3446 = vmatpush1.bf16.msra.mxu0 %v3440
        %3447 = vmatprep.subr.bf16.mxu0 0
        %3448 = vmatpush1.bf16.msra.mxu0 0
        %3449 = vmatprep.subr.bf16.mxu0 0
        %3450 = vmatpush1.bf16.msra.mxu0 0
        %3451 = vmatprep.subr.bf16.mxu0 0
        %3452 = vmatpush1.bf16.msra.mxu0 0
        %3453 = vmatprep.subr.bf16.mxu0 0
        %3454 = vmatpush1.bf16.msra.mxu0 0
        %3455 = vmatprep.subr.bf16.mxu0 0
        %3456 = vmatpush1.bf16.msra.mxu0 0
        %3457 = vmatprep.subr.bf16.mxu0 0
        %3458 = vmatpush1.bf16.msra.mxu0 0
        %3459 = vmatprep.subr.bf16.mxu0 0
        %3460 = vmatpush1.bf16.msra.mxu0 0
        %3461 = vmatprep.subr.bf16.mxu0 0
        %3462 = vmatpush1.bf16.msra.mxu0 0
        %3463 = vmatprep.subr.bf16.mxu0 0
        %3464 = vmatpush1.bf16.msra.mxu0 0
        %3465 = vmatprep.subr.bf16.mxu0 0
        %3466 = vmatpush1.bf16.msra.mxu0 0
        %3467 = vmatprep.subr.bf16.mxu0 0
        %3468 = vmatpush1.bf16.msra.mxu0 0
        %3469 = vmatprep.subr.bf16.mxu0 0
        %3470 = vmatpush1.bf16.msra.mxu0 0
        %3471 = vmatprep.subr.bf16.mxu0 0
        %3472 = vmatpush1.bf16.msra.mxu0 0
        %3473 = vmatprep.subr.bf16.mxu0 0
        %3474 = vmatpush1.bf16.msra.mxu0 0
        %3475 = vmatprep.mubr.bf16.mxu0 0
        %3476 = vmatmul.mubr.bf16.gmra.mrb[0].mxu0 %v2861
        %v3477 = vpop.f32.mrb[0].mxu0
        %v3478 = vadd.f32 0.0, %v3477
        %v3479 = vpop.f32.mrb[0].mxu0
        %v3480 = vpop.f32.mrb[0].mxu0
        %v3481 = vpop.f32.mrb[0].mxu0
        %3482 = vdwg.mxu0
        %v3483 = vadd.f32 %v3425, %v3478
        %v3484 = vrot.slane %v3483, 1
        %v3485 = vsel %vm431, %v3484, 0.0
        %v3486 = vadd.f32 %v3195, %v3485
        %vm3487 = vcmp.gt.f32.partialorder %v3486, 0.0
        %v3488 = vmul.f32 %v3486, 0.01
        %v3489 = vsel %vm3487, %v3486, %v3488
        %v3490 = vadd.f32 %v3489, %v376
        %v3491 = vld [vmem:[#allocation11] sm:$0x1]
        %v3492 = vld [vmem:[#allocation13] sm:$0x1]
        %v3493 = vsel %vm527, %v3490, 0.0
        %3494 = vadd.xlane.f32.xlu0 %v3493
        %v3495 = vpop.xlane.xlu0 %3494
        %v3496 = vrcp.pop 32.0
        %v3497 = vmul.f32 %v3495, %v3496
        %v3498 = vsub.f32 %v3490, %v3497
        %v3499 = vmul.f32 %v3498, %v3498
        %v3500 = vsel %vm527, %v3499, 0.0
        %3501 = vadd.xlane.f32.xlu0 %v3500
        %v3502 = vpop.xlane.xlu0 %3501
        %v3503 = vmul.f32 %v3502, %v3496
        %v3504 = vadd.f32 %v3503, 1e-05
        %v3505 = vrsqrt.pop %v3504
        %v3506 = vmul.f32 %v3498, %v3505
        %v3508 = vlaneseq
        %v3509 = vshrl.u32 %v3508, 7
        %v3510 = vsub.s32 0, %v3509
        %v3511 = vrot.slane %v3491, %v3510
        %v3513 = vmul.f32 %v3506, %v3511
        %v3515 = vlaneseq
        %v3516 = vshrl.u32 %v3515, 7
        %v3517 = vsub.s32 0, %v3516
        %v3518 = vrot.slane %v3492, %v3517
        %v3520 = vadd.f32 %v3513, %v3518
        %3521 = vst.msk [vmem:[%s374] sm:$0xff] %vm527, %v3520
        %s3522 = sand.u32 %s187, 1
        %s3523 = scalar_lea.sflag [#allocation4], %s3522
        %s3524 = sand.u32 %s187, 1
        %s3525 = smul.addr %s3524, 8
        %s3526 = scalar_lea.vmem [#allocation14], %s3525
        // Predicated region
        $region77: #{transformer_block.3} parent=47 // pred_check
          %p3527 = pneg %p197
        $region78: #{transformer_block.3} parent=47 // pred_check_branch
          %3529 = sbr.rel (%p3527) target = $region80
        $region79: #{transformer_block.3} parent=47 // pred_region
          %s3531 = ssub.s32 128, 128
          %3532 = vsyncadd %s3523, %s3531
          %s3533 = smul.addr %s27, 128
          %s3534 = scalar_lea.hbm %s7, %s3533
          %s3536 = sshll.u32 %s3526, 4
          %s3537 = int_to_ptr.vmem [resolvable:$true] %s3536
          %3539 = dma.vmem_to_hbm [thread:$0]  %s3537, 128, %s3534, %s3523
        $region80: #{transformer_block.3} parent=47 // pred_fallthru
          _
      $region48: #{transformer_block.3} parent=5 // pred_fallthru
        _
      %p3540 = scmp.le.s32.totalorder 2, %s22
      // Predicated region
      $region81: #{transformer_block.3} parent=5 // pred_check
        %p3541 = pneg %p3540
      $region82: #{transformer_block.3} parent=5 // pred_check_branch
        %3543 = sbr.rel (%p3541) target = $region84
      $region83: #{transformer_block.3} parent=5 // pred_region
        %s3544 = ssub.s32 %s22, 2
        // Predicated region
        $region85: #{transformer_block.3} parent=83 // pred_check
          %p3545 = pneg %p203
        $region86: #{transformer_block.3} parent=83 // pred_check_branch
          %3547 = sbr.rel (%p3545) target = $region88
        $region87: #{transformer_block.3} parent=83 // pred_region
          %s3548 = sand.u32 %s188, 1
          %s3549 = scalar_lea.sflag [#allocation4], %s3548
          %s3550 = sand.u32 %s188, 1
          %s3551 = smul.addr %s3550, 8
          %s3552 = scalar_lea.vmem [#allocation14], %s3551
          %3553 = dma.done %s3549, 128
        $region88: #{transformer_block.3} parent=83 // pred_fallthru
          _
      $region84: #{transformer_block.3} parent=5 // pred_fallthru
        _
    $region6: #{transformer_block.3} parent=1 // loop_footer
      %s26 = sadd.s32 1, %s22
    $region7: #{transformer_block.3} parent=1 // loop_footer_branch
      %21 = sbr.rel target = $region3
    $region8: #{transformer_block.3} parent=1 // loop_exit
      _
    %3554 = vsyncpa [#allocation3], 1
    %s3555 = scalar_lea.sflag [#allocation3], 1
    %3556 = vsyncpa %s3555, 1
    %3557 = vsyncpa [#allocation6], 1
    %3558 = vsyncpa [#allocation9], 1
    %3559 = vsyncpa [#allocation12], 1
    %3560 = vsyncpa [#allocation4], 1
    %s3561 = scalar_lea.sflag [#allocation4], 1
    %3562 = vsyncpa %s3561, 1

</llo_original>
